<compile_context>
chip_gen: v7x
topology: tpu7x:2x2x1
jax: 0.10.0
libtpu: 0.0.40
codegen_flags: <defaults>
</compile_context>

<pallas_src>
import functools

import jax
import jax.numpy as jnp
from jax import lax
from jax.experimental import pallas as pl
from jax.experimental.pallas import tpu as pltpu


def _round_up(x, m):
    return ((x + m - 1) // m) * m


def din_encoder_kernel(x_ref, w0_ref, w1_ref, w2_ref, w3_ref, out_ref, x0p_ref,
                       *, H, W, HWp, dilations, pad, b_tile):
    # x_ref:   (b_tile, Cin, HWp)    channels on sublanes, flat spatial on lanes
    # w0_ref:  (Cout, Cin)           conv1x1 weight
    # wN_ref:  (9, Cout, Cout)       dilated 3x3 weights, tap index t = ky*3 + kx
    # out_ref: (b_tile, Cout, HWp)
    # x0p_ref: (Cout, HWp + 2*pad)   persistent padded scratch for the conv0 output
    Cout = w0_ref.shape[0]

    # Re-zero the halo every grid step (cheap: 2*pad lanes) so correctness does not depend
    # on which TensorCore ran grid step 0 when the "parallel" axis is split (megacore).
    halo = jnp.zeros((Cout, pad), jnp.float32)
    x0p_ref[:, :pad] = halo
    x0p_ref[:, pad + HWp:] = halo

    # Small weights: load once per grid step, reuse for every image in the batch tile.
    w0 = w0_ref[...].astype(jnp.float32)
    w_branches = [w_ref[...].astype(jnp.float32) for w_ref in (w1_ref, w2_ref, w3_ref)]

    # Hoisted column-edge masks: only two distinct masks per branch (dx = -d / dx = +d).
    col = lax.broadcasted_iota(jnp.int32, (Cout, HWp), 1) % W
    branch_masks = [(col >= d, col < W - d) for d in dilations]

    for b in range(b_tile):                                   # static unroll over batch tile
        x = x_ref[b].astype(jnp.float32)                      # (Cin, HWp)

        # conv0 (1x1, no bias) + ReLU:  (Cout, Cin) @ (Cin, HWp) -> (Cout, HWp)
        x0 = jnp.maximum(
            lax.dot_general(w0, x, (((1,), (0,)), ((), ())),
                            preferred_element_type=jnp.float32),
            0.0)

        # Write x0 into the center of the padded slab (lane-aligned: pad % 128 == 0).
        # Row shifts dy*W then read zeros from the halo instead of going out of bounds.
        x0p_ref[:, pad:pad + HWp] = x0

        out = None
        for bi, d in enumerate(dilations):
            m_lo, m_hi = branch_masks[bi]
            wb = w_branches[bi]                               # (9, Cout, Cout)
            acc = None
            for ky in range(3):
                for kx in range(3):
                    dy = (ky - 1) * d
                    dx = (kx - 1) * d
                    start = pad + dy * W + dx                 # static slice offset
                    tap = x0p_ref[:, start:start + HWp]       # (Cout, HWp), register-resident
                    if dx < 0:
                        tap = jnp.where(m_lo, tap, 0.0)       # keep where c + dx >= 0
                    elif dx > 0:
                        tap = jnp.where(m_hi, tap, 0.0)       # keep where c + dx <  W
                    wt = wb[ky * 3 + kx]                      # (Cout, Cout)
                    y = lax.dot_general(wt, tap, (((1,), (0,)), ((), ())),
                                        preferred_element_type=jnp.float32)
                    acc = y if acc is None else acc + y
            acc = jnp.maximum(acc, 0.0)                       # per-branch ReLU
            out = acc if out is None else out + acc

        out_ref[b] = out.astype(out_ref.dtype)                # full-width lane-dense store


def din_encoder_pallas(x_nchw, w0, w1, w2, w3, dilations=(4, 8, 16), b_tile=None):
    """x_nchw: (N, Cin, H, W) NCHW.  Weights in PyTorch layout:
       w0: (Cout, Cin, 1, 1); w1/w2/w3: (Cout, Cout, 3, 3).  Returns NCHW output."""
    N, Cin, H, W = x_nchw.shape
    Cout = w0.shape[0]
    HW = H * W
    HWp = _round_up(HW, 128)                                  # lane-dense / aligned tiles
    dmax = max(dilations)
    pad = _round_up(dmax * W + dmax, 128)                     # flat halo, lane-tile aligned

    # Batch tile per grid step: amortize the ~0.35us/step overhead, but keep >= 2
    # "parallel" steps when possible so both v7x TensorCores get work.
    if b_tile is None:
        b_tile = 1
        for cand in (4, 2):
            if N % cand == 0 and N // cand >= 2:
                b_tile = cand
                break
    assert N % b_tile == 0, "choose b_tile dividing the batch size"

    x_flat = x_nchw.reshape(N, Cin, HW)                       # free row-major reshape
    if HWp != HW:
        x_flat = jnp.pad(x_flat, ((0, 0), (0, 0), (0, HWp - HW)))
    w0_mat = w0[:, :, 0, 0]                                   # (Cout, Cin)

    def prep3x3(w):
        # OIHW (Cout, Cout, 3, 3) -> (9, Cout, Cout), tap index t = ky*3 + kx.
        co, ci = w.shape[0], w.shape[1]
        return jnp.transpose(w, (2, 3, 0, 1)).reshape(9, co, ci)

    kernel = functools.partial(din_encoder_kernel, H=H, W=W, HWp=HWp,
                               dilations=tuple(dilations), pad=pad, b_tile=b_tile)

    out_flat = pl.pallas_call(
        kernel,
        out_shape=jax.ShapeDtypeStruct((N, Cout, HWp), x_nchw.dtype),
        grid_spec=pltpu.PrefetchScalarGridSpec(
            num_scalar_prefetch=0,
            grid=(N // b_tile,),
            in_specs=[
                pl.BlockSpec((b_tile, Cin, HWp), lambda b: (b, 0, 0)),
                pl.BlockSpec((Cout, Cin), lambda b: (0, 0)),
                pl.BlockSpec((9, Cout, Cout), lambda b: (0, 0, 0)),
                pl.BlockSpec((9, Cout, Cout), lambda b: (0, 0, 0)),
                pl.BlockSpec((9, Cout, Cout), lambda b: (0, 0, 0)),
            ],
            out_specs=pl.BlockSpec((b_tile, Cout, HWp), lambda b: (b, 0, 0)),
            scratch_shapes=[pltpu.VMEM((Cout, HWp + 2 * pad), jnp.float32)],
        ),
        compiler_params=pltpu.CompilerParams(
            dimension_semantics=("parallel",)),
    )(x_flat, w0_mat, prep3x3(w1), prep3x3(w2), prep3x3(w3))

    out = out_flat[:, :, :HW] if HWp != HW else out_flat
    return out.reshape(N, Cout, H, W)


def din_encoder_ref(x, w0, w1, w2, w3, dilations=(4, 8, 16)):
    """Pure-JAX reference matching the PyTorch forward (NCHW, OIHW)."""
    dn = ("NCHW", "OIHW", "NCHW")
    y = lax.conv_general_dilated(
        x, w0, (1, 1), "VALID",
        dimension_numbers=lax.conv_dimension_numbers(x.shape, w0.shape, dn))
    y = jnp.maximum(y, 0.0)
    out = None
    for w, d in zip((w1, w2, w3), dilations):
        z = lax.conv_general_dilated(
            y, w, (1, 1), ((d, d), (d, d)), rhs_dilation=(d, d),
            dimension_numbers=lax.conv_dimension_numbers(y.shape, w.shape, dn))
        z = jnp.maximum(z, 0.0)
        out = z if out is None else out + z
    return out


if __name__ == "__main__":
    # Small shapes consistent with the module (spatial kept >= 2*max_dilation so every
    # dilated tap partially contributes).
    N, Cin, Cout, H, W = 2, 4, 8, 32, 32

    key = jax.random.PRNGKey(0)
    kx, k0, k1, k2, k3 = jax.random.split(key, 5)
    x = jax.random.normal(kx, (N, Cin, H, W), dtype=jnp.float32)
    w0 = jax.random.normal(k0, (Cout, Cin, 1, 1), dtype=jnp.float32) * 0.2
    w1 = jax.random.normal(k1, (Cout, Cout, 3, 3), dtype=jnp.float32) * 0.1
    w2 = jax.random.normal(k2, (Cout, Cout, 3, 3), dtype=jnp.float32) * 0.1
    w3 = jax.random.normal(k3, (Cout, Cout, 3, 3), dtype=jnp.float32) * 0.1

    out = jax.block_until_ready(din_encoder_pallas(x, w0, w1, w2, w3))
    ref = jax.block_until_ready(din_encoder_ref(x, w0, w1, w2, w3))

    err = float(jnp.max(jnp.abs(out - ref)))
    assert out.shape == (N, Cout, H, W), out.shape
    assert err < 2e-3, f"max abs error {err}"
    print("KERNEL_OK")
</pallas_src>

<mosaic_0001>
module attributes {stable_mosaic.version = 11 : i64} {
  func.func @din_encoder_kernel(%arg0: i32, %arg1: memref<1x4x1024xf32, #tpu.memory_space<vmem>>, %arg2: memref<8x4xf32, #tpu.memory_space<vmem>>, %arg3: memref<9x8x8xf32, #tpu.memory_space<vmem>>, %arg4: memref<9x8x8xf32, #tpu.memory_space<vmem>>, %arg5: memref<9x8x8xf32, #tpu.memory_space<vmem>>, %arg6: memref<1x8x1024xf32, #tpu.memory_space<vmem>>, %arg7: memref<8x2304xf32, #tpu.memory_space<vmem>>) attributes {dimension_semantics = [#tpu.dimension_semantics<parallel>], iteration_bounds = array<i64: 2>, scalar_prefetch = 0 : i64, scratch_operands = 1 : i64, tpu.core_type = #tpu.core_type<tc>, window_params = [{transform_indices = @transform_0, window_bounds = array<i64: 1, 4, 1024>}, {pipeline_mode = #tpu.pipeline_mode<synchronous>, transform_indices = @transform_1, window_bounds = array<i64: 8, 4>}, {pipeline_mode = #tpu.pipeline_mode<synchronous>, transform_indices = @transform_2, window_bounds = array<i64: 9, 8, 8>}, {pipeline_mode = #tpu.pipeline_mode<synchronous>, transform_indices = @transform_3, window_bounds = array<i64: 9, 8, 8>}, {pipeline_mode = #tpu.pipeline_mode<synchronous>, transform_indices = @transform_4, window_bounds = array<i64: 9, 8, 8>}, {transform_indices = @transform_5, window_bounds = array<i64: 1, 8, 1024>}]} {
    %cst = arith.constant 0.000000e+00 : f32
    %0 = vector.broadcast %cst : f32 to vector<8x640xf32>
    %c0 = arith.constant 0 : index
    %c0_0 = arith.constant 0 : index
    %1 = vector.load %arg7[%c0, %c0_0] : memref<8x2304xf32, #tpu.memory_space<vmem>>, vector<8x640xf32>
    tpu.vector_store %arg7[%c0, %c0_0], %0 {strides = array<i32>} : memref<8x2304xf32, #tpu.memory_space<vmem>>, vector<8x640xf32>,
    %c0_1 = arith.constant 0 : index
    %c1664 = arith.constant 1664 : index
    %2 = vector.load %arg7[%c0_1, %c1664] : memref<8x2304xf32, #tpu.memory_space<vmem>>, vector<8x640xf32>
    tpu.vector_store %arg7[%c0_1, %c1664], %0 {strides = array<i32>} : memref<8x2304xf32, #tpu.memory_space<vmem>>, vector<8x640xf32>,
    %c0_2 = arith.constant 0 : index
    %c0_3 = arith.constant 0 : index
    %3 = vector.load %arg2[%c0_2, %c0_3] : memref<8x4xf32, #tpu.memory_space<vmem>>, vector<8x4xf32>
    %c0_4 = arith.constant 0 : index
    %c0_5 = arith.constant 0 : index
    %c0_6 = arith.constant 0 : index
    %4 = vector.load %arg3[%c0_4, %c0_5, %c0_6] : memref<9x8x8xf32, #tpu.memory_space<vmem>>, vector<9x8x8xf32>
    %c0_7 = arith.constant 0 : index
    %c0_8 = arith.constant 0 : index
    %c0_9 = arith.constant 0 : index
    %5 = vector.load %arg4[%c0_7, %c0_8, %c0_9] : memref<9x8x8xf32, #tpu.memory_space<vmem>>, vector<9x8x8xf32>
    %c0_10 = arith.constant 0 : index
    %c0_11 = arith.constant 0 : index
    %c0_12 = arith.constant 0 : index
    %6 = vector.load %arg5[%c0_10, %c0_11, %c0_12] : memref<9x8x8xf32, #tpu.memory_space<vmem>>, vector<9x8x8xf32>
    %7 = tpu.iota {dimensions = array<i32: 1>} : vector<8x1024xi32>
    %c32_i32 = arith.constant 32 : i32
    %c0_i32 = arith.constant 0 : i32
    %8 = arith.cmpi eq, %c32_i32, %c0_i32 : i32
    %c1_i32 = arith.constant 1 : i32
    %9 = arith.select %8, %c1_i32, %c32_i32 : i32
    %10 = vector.broadcast %9 : i32 to vector<8x1024xi32>
    %11 = arith.remsi %7, %10 : vector<8x1024xi32>
    %c0_i32_13 = arith.constant 0 : i32
    %12 = vector.broadcast %c0_i32_13 : i32 to vector<8x1024xi32>
    %13 = arith.cmpi ne, %11, %12 : vector<8x1024xi32>
    %c0_i32_14 = arith.constant 0 : i32
    %14 = vector.broadcast %c0_i32_14 : i32 to vector<8x1024xi32>
    %15 = arith.cmpi slt, %11, %14 : vector<8x1024xi32>
    %c0_i32_15 = arith.constant 0 : i32
    %16 = arith.cmpi slt, %9, %c0_i32_15 : i32
    %17 = vector.broadcast %16 : i1 to vector<8x1024xi1>
    %18 = vector.broadcast %17 : vector<8x1024xi1> to vector<8x1024xi1>
    %19 = arith.xori %15, %18 : vector<8x1024xi1>
    %20 = arith.andi %19, %13 : vector<8x1024xi1>
    %21 = vector.broadcast %9 : i32 to vector<8x1024xi32>
    %22 = arith.addi %11, %21 : vector<8x1024xi32>
    %23 = arith.select %20, %22, %11 : vector<8x1024xi1>, vector<8x1024xi32>
    %c4_i32 = arith.constant 4 : i32
    %24 = vector.broadcast %c4_i32 : i32 to vector<8x1024xi32>
    %25 = arith.cmpi sge, %23, %24 : vector<8x1024xi32>
    %c28_i32 = arith.constant 28 : i32
    %26 = vector.broadcast %c28_i32 : i32 to vector<8x1024xi32>
    %27 = arith.cmpi slt, %23, %26 : vector<8x1024xi32>
    %c8_i32 = arith.constant 8 : i32
    %28 = vector.broadcast %c8_i32 : i32 to vector<8x1024xi32>
    %29 = arith.cmpi sge, %23, %28 : vector<8x1024xi32>
    %c24_i32 = arith.constant 24 : i32
    %30 = vector.broadcast %c24_i32 : i32 to vector<8x1024xi32>
    %31 = arith.cmpi slt, %23, %30 : vector<8x1024xi32>
    %c16_i32 = arith.constant 16 : i32
    %32 = vector.broadcast %c16_i32 : i32 to vector<8x1024xi32>
    %33 = arith.cmpi sge, %23, %32 : vector<8x1024xi32>
    %c16_i32_16 = arith.constant 16 : i32
    %34 = vector.broadcast %c16_i32_16 : i32 to vector<8x1024xi32>
    %35 = arith.cmpi slt, %23, %34 : vector<8x1024xi32>
    %c0_17 = arith.constant 0 : index
    %c0_18 = arith.constant 0 : index
    %c0_19 = arith.constant 0 : index
    %36 = vector.load %arg1[%c0_17, %c0_18, %c0_19] : memref<1x4x1024xf32, #tpu.memory_space<vmem>>, vector<1x4x1024xf32>
    %37 = vector.shape_cast %36 : vector<1x4x1024xf32> to vector<4x1024xf32>
    %cst_20 = arith.constant dense<0.000000e+00> : vector<8x1024xf32>
    %38 = tpu.matmul %3, %37, %cst_20 {dimension_numbers = #tpu.dot_dimension_numbers<[1], [0], [0], [1], [0, 0, 1, 1], [], []>} : vector<8x4xf32>, vector<4x1024xf32>, vector<8x1024xf32> -> vector<8x1024xf32>
    %cst_21 = arith.constant 0.000000e+00 : f32
    %39 = vector.broadcast %cst_21 : f32 to vector<8x1024xf32>
    %40 = arith.maximumf %38, %39 : vector<8x1024xf32>
    %c0_22 = arith.constant 0 : index
    %c640 = arith.constant 640 : index
    %41 = vector.load %arg7[%c0_22, %c640] : memref<8x2304xf32, #tpu.memory_space<vmem>>, vector<8x1024xf32>
    tpu.vector_store %arg7[%c0_22, %c640], %40 {strides = array<i32>} : memref<8x2304xf32, #tpu.memory_space<vmem>>, vector<8x1024xf32>,
    %c0_23 = arith.constant 0 : index
    %c508 = arith.constant 508 : index
    %42 = vector.load %arg7[%c0_23, %c508] : memref<8x2304xf32, #tpu.memory_space<vmem>>, vector<8x1024xf32>
    %cst_24 = arith.constant 0.000000e+00 : f32
    %43 = vector.broadcast %cst_24 : f32 to vector<8x1024xf32>
    %44 = arith.select %25, %42, %43 : vector<8x1024xi1>, vector<8x1024xf32>
    %45 = vector.extract_strided_slice %4 {offsets = [0, 0, 0], sizes = [1, 8, 8], strides = [1, 1, 1]} : vector<9x8x8xf32> to vector<1x8x8xf32>
    %46 = vector.shape_cast %45 : vector<1x8x8xf32> to vector<8x8xf32>
    %cst_25 = arith.constant dense<0.000000e+00> : vector<8x1024xf32>
    %47 = tpu.matmul %46, %44, %cst_25 {dimension_numbers = #tpu.dot_dimension_numbers<[1], [0], [0], [1], [0, 0, 1, 1], [], []>} : vector<8x8xf32>, vector<8x1024xf32>, vector<8x1024xf32> -> vector<8x1024xf32>
    %c0_26 = arith.constant 0 : index
    %c512 = arith.constant 512 : index
    %48 = vector.load %arg7[%c0_26, %c512] : memref<8x2304xf32, #tpu.memory_space<vmem>>, vector<8x1024xf32>
    %49 = vector.extract_strided_slice %4 {offsets = [1, 0, 0], sizes = [1, 8, 8], strides = [1, 1, 1]} : vector<9x8x8xf32> to vector<1x8x8xf32>
    %50 = vector.shape_cast %49 : vector<1x8x8xf32> to vector<8x8xf32>
    %cst_27 = arith.constant dense<0.000000e+00> : vector<8x1024xf32>
    %51 = tpu.matmul %50, %48, %cst_27 {dimension_numbers = #tpu.dot_dimension_numbers<[1], [0], [0], [1], [0, 0, 1, 1], [], []>} : vector<8x8xf32>, vector<8x1024xf32>, vector<8x1024xf32> -> vector<8x1024xf32>
    %52 = arith.addf %47, %51 : vector<8x1024xf32>
    %c0_28 = arith.constant 0 : index
    %c516 = arith.constant 516 : index
    %53 = vector.load %arg7[%c0_28, %c516] : memref<8x2304xf32, #tpu.memory_space<vmem>>, vector<8x1024xf32>
    %cst_29 = arith.constant 0.000000e+00 : f32
    %54 = vector.broadcast %cst_29 : f32 to vector<8x1024xf32>
    %55 = arith.select %27, %53, %54 : vector<8x1024xi1>, vector<8x1024xf32>
    %56 = vector.extract_strided_slice %4 {offsets = [2, 0, 0], sizes = [1, 8, 8], strides = [1, 1, 1]} : vector<9x8x8xf32> to vector<1x8x8xf32>
    %57 = vector.shape_cast %56 : vector<1x8x8xf32> to vector<8x8xf32>
    %cst_30 = arith.constant dense<0.000000e+00> : vector<8x1024xf32>
    %58 = tpu.matmul %57, %55, %cst_30 {dimension_numbers = #tpu.dot_dimension_numbers<[1], [0], [0], [1], [0, 0, 1, 1], [], []>} : vector<8x8xf32>, vector<8x1024xf32>, vector<8x1024xf32> -> vector<8x1024xf32>
    %59 = arith.addf %52, %58 : vector<8x1024xf32>
    %c0_31 = arith.constant 0 : index
    %c636 = arith.constant 636 : index
    %60 = vector.load %arg7[%c0_31, %c636] : memref<8x2304xf32, #tpu.memory_space<vmem>>, vector<8x1024xf32>
    %cst_32 = arith.constant 0.000000e+00 : f32
    %61 = vector.broadcast %cst_32 : f32 to vector<8x1024xf32>
    %62 = arith.select %25, %60, %61 : vector<8x1024xi1>, vector<8x1024xf32>
    %63 = vector.extract_strided_slice %4 {offsets = [3, 0, 0], sizes = [1, 8, 8], strides = [1, 1, 1]} : vector<9x8x8xf32> to vector<1x8x8xf32>
    %64 = vector.shape_cast %63 : vector<1x8x8xf32> to vector<8x8xf32>
    %cst_33 = arith.constant dense<0.000000e+00> : vector<8x1024xf32>
    %65 = tpu.matmul %64, %62, %cst_33 {dimension_numbers = #tpu.dot_dimension_numbers<[1], [0], [0], [1], [0, 0, 1, 1], [], []>} : vector<8x8xf32>, vector<8x1024xf32>, vector<8x1024xf32> -> vector<8x1024xf32>
    %66 = arith.addf %59, %65 : vector<8x1024xf32>
    %c0_34 = arith.constant 0 : index
    %c640_35 = arith.constant 640 : index
    %67 = vector.load %arg7[%c0_34, %c640_35] : memref<8x2304xf32, #tpu.memory_space<vmem>>, vector<8x1024xf32>
    %68 = vector.extract_strided_slice %4 {offsets = [4, 0, 0], sizes = [1, 8, 8], strides = [1, 1, 1]} : vector<9x8x8xf32> to vector<1x8x8xf32>
    %69 = vector.shape_cast %68 : vector<1x8x8xf32> to vector<8x8xf32>
    %cst_36 = arith.constant dense<0.000000e+00> : vector<8x1024xf32>
    %70 = tpu.matmul %69, %67, %cst_36 {dimension_numbers = #tpu.dot_dimension_numbers<[1], [0], [0], [1], [0, 0, 1, 1], [], []>} : vector<8x8xf32>, vector<8x1024xf32>, vector<8x1024xf32> -> vector<8x1024xf32>
    %71 = arith.addf %66, %70 : vector<8x1024xf32>
    %c0_37 = arith.constant 0 : index
    %c644 = arith.constant 644 : index
    %72 = vector.load %arg7[%c0_37, %c644] : memref<8x2304xf32, #tpu.memory_space<vmem>>, vector<8x1024xf32>
    %cst_38 = arith.constant 0.000000e+00 : f32
    %73 = vector.broadcast %cst_38 : f32 to vector<8x1024xf32>
    %74 = arith.select %27, %72, %73 : vector<8x1024xi1>, vector<8x1024xf32>
    %75 = vector.extract_strided_slice %4 {offsets = [5, 0, 0], sizes = [1, 8, 8], strides = [1, 1, 1]} : vector<9x8x8xf32> to vector<1x8x8xf32>
    %76 = vector.shape_cast %75 : vector<1x8x8xf32> to vector<8x8xf32>
    %cst_39 = arith.constant dense<0.000000e+00> : vector<8x1024xf32>
    %77 = tpu.matmul %76, %74, %cst_39 {dimension_numbers = #tpu.dot_dimension_numbers<[1], [0], [0], [1], [0, 0, 1, 1], [], []>} : vector<8x8xf32>, vector<8x1024xf32>, vector<8x1024xf32> -> vector<8x1024xf32>
    %78 = arith.addf %71, %77 : vector<8x1024xf32>
    %c0_40 = arith.constant 0 : index
    %c764 = arith.constant 764 : index
    %79 = vector.load %arg7[%c0_40, %c764] : memref<8x2304xf32, #tpu.memory_space<vmem>>, vector<8x1024xf32>
    %cst_41 = arith.constant 0.000000e+00 : f32
    %80 = vector.broadcast %cst_41 : f32 to vector<8x1024xf32>
    %81 = arith.select %25, %79, %80 : vector<8x1024xi1>, vector<8x1024xf32>
    %82 = vector.extract_strided_slice %4 {offsets = [6, 0, 0], sizes = [1, 8, 8], strides = [1, 1, 1]} : vector<9x8x8xf32> to vector<1x8x8xf32>
    %83 = vector.shape_cast %82 : vector<1x8x8xf32> to vector<8x8xf32>
    %cst_42 = arith.constant dense<0.000000e+00> : vector<8x1024xf32>
    %84 = tpu.matmul %83, %81, %cst_42 {dimension_numbers = #tpu.dot_dimension_numbers<[1], [0], [0], [1], [0, 0, 1, 1], [], []>} : vector<8x8xf32>, vector<8x1024xf32>, vector<8x1024xf32> -> vector<8x1024xf32>
    %85 = arith.addf %78, %84 : vector<8x1024xf32>
    %c0_43 = arith.constant 0 : index
    %c768 = arith.constant 768 : index
    %86 = vector.load %arg7[%c0_43, %c768] : memref<8x2304xf32, #tpu.memory_space<vmem>>, vector<8x1024xf32>
    %87 = vector.extract_strided_slice %4 {offsets = [7, 0, 0], sizes = [1, 8, 8], strides = [1, 1, 1]} : vector<9x8x8xf32> to vector<1x8x8xf32>
    %88 = vector.shape_cast %87 : vector<1x8x8xf32> to vector<8x8xf32>
    %cst_44 = arith.constant dense<0.000000e+00> : vector<8x1024xf32>
    %89 = tpu.matmul %88, %86, %cst_44 {dimension_numbers = #tpu.dot_dimension_numbers<[1], [0], [0], [1], [0, 0, 1, 1], [], []>} : vector<8x8xf32>, vector<8x1024xf32>, vector<8x1024xf32> -> vector<8x1024xf32>
    %90 = arith.addf %85, %89 : vector<8x1024xf32>
    %c0_45 = arith.constant 0 : index
    %c772 = arith.constant 772 : index
    %91 = vector.load %arg7[%c0_45, %c772] : memref<8x2304xf32, #tpu.memory_space<vmem>>, vector<8x1024xf32>
    %cst_46 = arith.constant 0.000000e+00 : f32
    %92 = vector.broadcast %cst_46 : f32 to vector<8x1024xf32>
    %93 = arith.select %27, %91, %92 : vector<8x1024xi1>, vector<8x1024xf32>
    %94 = vector.extract_strided_slice %4 {offsets = [8, 0, 0], sizes = [1, 8, 8], strides = [1, 1, 1]} : vector<9x8x8xf32> to vector<1x8x8xf32>
    %95 = vector.shape_cast %94 : vector<1x8x8xf32> to vector<8x8xf32>
    %cst_47 = arith.constant dense<0.000000e+00> : vector<8x1024xf32>
    %96 = tpu.matmul %95, %93, %cst_47 {dimension_numbers = #tpu.dot_dimension_numbers<[1], [0], [0], [1], [0, 0, 1, 1], [], []>} : vector<8x8xf32>, vector<8x1024xf32>, vector<8x1024xf32> -> vector<8x1024xf32>
    %97 = arith.addf %90, %96 : vector<8x1024xf32>
    %cst_48 = arith.constant 0.000000e+00 : f32
    %98 = vector.broadcast %cst_48 : f32 to vector<8x1024xf32>
    %99 = arith.maximumf %97, %98 : vector<8x1024xf32>
    %c0_49 = arith.constant 0 : index
    %c376 = arith.constant 376 : index
    %100 = vector.load %arg7[%c0_49, %c376] : memref<8x2304xf32, #tpu.memory_space<vmem>>, vector<8x1024xf32>
    %cst_50 = arith.constant 0.000000e+00 : f32
    %101 = vector.broadcast %cst_50 : f32 to vector<8x1024xf32>
    %102 = arith.select %29, %100, %101 : vector<8x1024xi1>, vector<8x1024xf32>
    %103 = vector.extract_strided_slice %5 {offsets = [0, 0, 0], sizes = [1, 8, 8], strides = [1, 1, 1]} : vector<9x8x8xf32> to vector<1x8x8xf32>
    %104 = vector.shape_cast %103 : vector<1x8x8xf32> to vector<8x8xf32>
    %cst_51 = arith.constant dense<0.000000e+00> : vector<8x1024xf32>
    %105 = tpu.matmul %104, %102, %cst_51 {dimension_numbers = #tpu.dot_dimension_numbers<[1], [0], [0], [1], [0, 0, 1, 1], [], []>} : vector<8x8xf32>, vector<8x1024xf32>, vector<8x1024xf32> -> vector<8x1024xf32>
    %c0_52 = arith.constant 0 : index
    %c384 = arith.constant 384 : index
    %106 = vector.load %arg7[%c0_52, %c384] : memref<8x2304xf32, #tpu.memory_space<vmem>>, vector<8x1024xf32>
    %107 = vector.extract_strided_slice %5 {offsets = [1, 0, 0], sizes = [1, 8, 8], strides = [1, 1, 1]} : vector<9x8x8xf32> to vector<1x8x8xf32>
    %108 = vector.shape_cast %107 : vector<1x8x8xf32> to vector<8x8xf32>
    %cst_53 = arith.constant dense<0.000000e+00> : vector<8x1024xf32>
    %109 = tpu.matmul %108, %106, %cst_53 {dimension_numbers = #tpu.dot_dimension_numbers<[1], [0], [0], [1], [0, 0, 1, 1], [], []>} : vector<8x8xf32>, vector<8x1024xf32>, vector<8x1024xf32> -> vector<8x1024xf32>
    %110 = arith.addf %105, %109 : vector<8x1024xf32>
    %c0_54 = arith.constant 0 : index
    %c392 = arith.constant 392 : index
    %111 = vector.load %arg7[%c0_54, %c392] : memref<8x2304xf32, #tpu.memory_space<vmem>>, vector<8x1024xf32>
    %cst_55 = arith.constant 0.000000e+00 : f32
    %112 = vector.broadcast %cst_55 : f32 to vector<8x1024xf32>
    %113 = arith.select %31, %111, %112 : vector<8x1024xi1>, vector<8x1024xf32>
    %114 = vector.extract_strided_slice %5 {offsets = [2, 0, 0], sizes = [1, 8, 8], strides = [1, 1, 1]} : vector<9x8x8xf32> to vector<1x8x8xf32>
    %115 = vector.shape_cast %114 : vector<1x8x8xf32> to vector<8x8xf32>
    %cst_56 = arith.constant dense<0.000000e+00> : vector<8x1024xf32>
    %116 = tpu.matmul %115, %113, %cst_56 {dimension_numbers = #tpu.dot_dimension_numbers<[1], [0], [0], [1], [0, 0, 1, 1], [], []>} : vector<8x8xf32>, vector<8x1024xf32>, vector<8x1024xf32> -> vector<8x1024xf32>
    %117 = arith.addf %110, %116 : vector<8x1024xf32>
    %c0_57 = arith.constant 0 : index
    %c632 = arith.constant 632 : index
    %118 = vector.load %arg7[%c0_57, %c632] : memref<8x2304xf32, #tpu.memory_space<vmem>>, vector<8x1024xf32>
    %cst_58 = arith.constant 0.000000e+00 : f32
    %119 = vector.broadcast %cst_58 : f32 to vector<8x1024xf32>
    %120 = arith.select %29, %118, %119 : vector<8x1024xi1>, vector<8x1024xf32>
    %121 = vector.extract_strided_slice %5 {offsets = [3, 0, 0], sizes = [1, 8, 8], strides = [1, 1, 1]} : vector<9x8x8xf32> to vector<1x8x8xf32>
    %122 = vector.shape_cast %121 : vector<1x8x8xf32> to vector<8x8xf32>
    %cst_59 = arith.constant dense<0.000000e+00> : vector<8x1024xf32>
    %123 = tpu.matmul %122, %120, %cst_59 {dimension_numbers = #tpu.dot_dimension_numbers<[1], [0], [0], [1], [0, 0, 1, 1], [], []>} : vector<8x8xf32>, vector<8x1024xf32>, vector<8x1024xf32> -> vector<8x1024xf32>
    %124 = arith.addf %117, %123 : vector<8x1024xf32>
    %c0_60 = arith.constant 0 : index
    %c640_61 = arith.constant 640 : index
    %125 = vector.load %arg7[%c0_60, %c640_61] : memref<8x2304xf32, #tpu.memory_space<vmem>>, vector<8x1024xf32>
    %126 = vector.extract_strided_slice %5 {offsets = [4, 0, 0], sizes = [1, 8, 8], strides = [1, 1, 1]} : vector<9x8x8xf32> to vector<1x8x8xf32>
    %127 = vector.shape_cast %126 : vector<1x8x8xf32> to vector<8x8xf32>
    %cst_62 = arith.constant dense<0.000000e+00> : vector<8x1024xf32>
    %128 = tpu.matmul %127, %125, %cst_62 {dimension_numbers = #tpu.dot_dimension_numbers<[1], [0], [0], [1], [0, 0, 1, 1], [], []>} : vector<8x8xf32>, vector<8x1024xf32>, vector<8x1024xf32> -> vector<8x1024xf32>
    %129 = arith.addf %124, %128 : vector<8x1024xf32>
    %c0_63 = arith.constant 0 : index
    %c648 = arith.constant 648 : index
    %130 = vector.load %arg7[%c0_63, %c648] : memref<8x2304xf32, #tpu.memory_space<vmem>>, vector<8x1024xf32>
    %cst_64 = arith.constant 0.000000e+00 : f32
    %131 = vector.broadcast %cst_64 : f32 to vector<8x1024xf32>
    %132 = arith.select %31, %130, %131 : vector<8x1024xi1>, vector<8x1024xf32>
    %133 = vector.extract_strided_slice %5 {offsets = [5, 0, 0], sizes = [1, 8, 8], strides = [1, 1, 1]} : vector<9x8x8xf32> to vector<1x8x8xf32>
    %134 = vector.shape_cast %133 : vector<1x8x8xf32> to vector<8x8xf32>
    %cst_65 = arith.constant dense<0.000000e+00> : vector<8x1024xf32>
    %135 = tpu.matmul %134, %132, %cst_65 {dimension_numbers = #tpu.dot_dimension_numbers<[1], [0], [0], [1], [0, 0, 1, 1], [], []>} : vector<8x8xf32>, vector<8x1024xf32>, vector<8x1024xf32> -> vector<8x1024xf32>
    %136 = arith.addf %129, %135 : vector<8x1024xf32>
    %c0_66 = arith.constant 0 : index
    %c888 = arith.constant 888 : index
    %137 = vector.load %arg7[%c0_66, %c888] : memref<8x2304xf32, #tpu.memory_space<vmem>>, vector<8x1024xf32>
    %cst_67 = arith.constant 0.000000e+00 : f32
    %138 = vector.broadcast %cst_67 : f32 to vector<8x1024xf32>
    %139 = arith.select %29, %137, %138 : vector<8x1024xi1>, vector<8x1024xf32>
    %140 = vector.extract_strided_slice %5 {offsets = [6, 0, 0], sizes = [1, 8, 8], strides = [1, 1, 1]} : vector<9x8x8xf32> to vector<1x8x8xf32>
    %141 = vector.shape_cast %140 : vector<1x8x8xf32> to vector<8x8xf32>
    %cst_68 = arith.constant dense<0.000000e+00> : vector<8x1024xf32>
    %142 = tpu.matmul %141, %139, %cst_68 {dimension_numbers = #tpu.dot_dimension_numbers<[1], [0], [0], [1], [0, 0, 1, 1], [], []>} : vector<8x8xf32>, vector<8x1024xf32>, vector<8x1024xf32> -> vector<8x1024xf32>
    %143 = arith.addf %136, %142 : vector<8x1024xf32>
    %c0_69 = arith.constant 0 : index
    %c896 = arith.constant 896 : index
    %144 = vector.load %arg7[%c0_69, %c896] : memref<8x2304xf32, #tpu.memory_space<vmem>>, vector<8x1024xf32>
    %145 = vector.extract_strided_slice %5 {offsets = [7, 0, 0], sizes = [1, 8, 8], strides = [1, 1, 1]} : vector<9x8x8xf32> to vector<1x8x8xf32>
    %146 = vector.shape_cast %145 : vector<1x8x8xf32> to vector<8x8xf32>
    %cst_70 = arith.constant dense<0.000000e+00> : vector<8x1024xf32>
    %147 = tpu.matmul %146, %144, %cst_70 {dimension_numbers = #tpu.dot_dimension_numbers<[1], [0], [0], [1], [0, 0, 1, 1], [], []>} : vector<8x8xf32>, vector<8x1024xf32>, vector<8x1024xf32> -> vector<8x1024xf32>
    %148 = arith.addf %143, %147 : vector<8x1024xf32>
    %c0_71 = arith.constant 0 : index
    %c904 = arith.constant 904 : index
    %149 = vector.load %arg7[%c0_71, %c904] : memref<8x2304xf32, #tpu.memory_space<vmem>>, vector<8x1024xf32>
    %cst_72 = arith.constant 0.000000e+00 : f32
    %150 = vector.broadcast %cst_72 : f32 to vector<8x1024xf32>
    %151 = arith.select %31, %149, %150 : vector<8x1024xi1>, vector<8x1024xf32>
    %152 = vector.extract_strided_slice %5 {offsets = [8, 0, 0], sizes = [1, 8, 8], strides = [1, 1, 1]} : vector<9x8x8xf32> to vector<1x8x8xf32>
    %153 = vector.shape_cast %152 : vector<1x8x8xf32> to vector<8x8xf32>
    %cst_73 = arith.constant dense<0.000000e+00> : vector<8x1024xf32>
    %154 = tpu.matmul %153, %151, %cst_73 {dimension_numbers = #tpu.dot_dimension_numbers<[1], [0], [0], [1], [0, 0, 1, 1], [], []>} : vector<8x8xf32>, vector<8x1024xf32>, vector<8x1024xf32> -> vector<8x1024xf32>
    %155 = arith.addf %148, %154 : vector<8x1024xf32>
    %cst_74 = arith.constant 0.000000e+00 : f32
    %156 = vector.broadcast %cst_74 : f32 to vector<8x1024xf32>
    %157 = arith.maximumf %155, %156 : vector<8x1024xf32>
    %158 = arith.addf %99, %157 : vector<8x1024xf32>
    %c0_75 = arith.constant 0 : index
    %c112 = arith.constant 112 : index
    %159 = vector.load %arg7[%c0_75, %c112] : memref<8x2304xf32, #tpu.memory_space<vmem>>, vector<8x1024xf32>
    %cst_76 = arith.constant 0.000000e+00 : f32
    %160 = vector.broadcast %cst_76 : f32 to vector<8x1024xf32>
    %161 = arith.select %33, %159, %160 : vector<8x1024xi1>, vector<8x1024xf32>
    %162 = vector.extract_strided_slice %6 {offsets = [0, 0, 0], sizes = [1, 8, 8], strides = [1, 1, 1]} : vector<9x8x8xf32> to vector<1x8x8xf32>
    %163 = vector.shape_cast %162 : vector<1x8x8xf32> to vector<8x8xf32>
    %cst_77 = arith.constant dense<0.000000e+00> : vector<8x1024xf32>
    %164 = tpu.matmul %163, %161, %cst_77 {dimension_numbers = #tpu.dot_dimension_numbers<[1], [0], [0], [1], [0, 0, 1, 1], [], []>} : vector<8x8xf32>, vector<8x1024xf32>, vector<8x1024xf32> -> vector<8x1024xf32>
    %c0_78 = arith.constant 0 : index
    %c128 = arith.constant 128 : index
    %165 = vector.load %arg7[%c0_78, %c128] : memref<8x2304xf32, #tpu.memory_space<vmem>>, vector<8x1024xf32>
    %166 = vector.extract_strided_slice %6 {offsets = [1, 0, 0], sizes = [1, 8, 8], strides = [1, 1, 1]} : vector<9x8x8xf32> to vector<1x8x8xf32>
    %167 = vector.shape_cast %166 : vector<1x8x8xf32> to vector<8x8xf32>
    %cst_79 = arith.constant dense<0.000000e+00> : vector<8x1024xf32>
    %168 = tpu.matmul %167, %165, %cst_79 {dimension_numbers = #tpu.dot_dimension_numbers<[1], [0], [0], [1], [0, 0, 1, 1], [], []>} : vector<8x8xf32>, vector<8x1024xf32>, vector<8x1024xf32> -> vector<8x1024xf32>
    %169 = arith.addf %164, %168 : vector<8x1024xf32>
    %c0_80 = arith.constant 0 : index
    %c144 = arith.constant 144 : index
    %170 = vector.load %arg7[%c0_80, %c144] : memref<8x2304xf32, #tpu.memory_space<vmem>>, vector<8x1024xf32>
    %cst_81 = arith.constant 0.000000e+00 : f32
    %171 = vector.broadcast %cst_81 : f32 to vector<8x1024xf32>
    %172 = arith.select %35, %170, %171 : vector<8x1024xi1>, vector<8x1024xf32>
    %173 = vector.extract_strided_slice %6 {offsets = [2, 0, 0], sizes = [1, 8, 8], strides = [1, 1, 1]} : vector<9x8x8xf32> to vector<1x8x8xf32>
    %174 = vector.shape_cast %173 : vector<1x8x8xf32> to vector<8x8xf32>
    %cst_82 = arith.constant dense<0.000000e+00> : vector<8x1024xf32>
    %175 = tpu.matmul %174, %172, %cst_82 {dimension_numbers = #tpu.dot_dimension_numbers<[1], [0], [0], [1], [0, 0, 1, 1], [], []>} : vector<8x8xf32>, vector<8x1024xf32>, vector<8x1024xf32> -> vector<8x1024xf32>
    %176 = arith.addf %169, %175 : vector<8x1024xf32>
    %c0_83 = arith.constant 0 : index
    %c624 = arith.constant 624 : index
    %177 = vector.load %arg7[%c0_83, %c624] : memref<8x2304xf32, #tpu.memory_space<vmem>>, vector<8x1024xf32>
    %cst_84 = arith.constant 0.000000e+00 : f32
    %178 = vector.broadcast %cst_84 : f32 to vector<8x1024xf32>
    %179 = arith.select %33, %177, %178 : vector<8x1024xi1>, vector<8x1024xf32>
    %180 = vector.extract_strided_slice %6 {offsets = [3, 0, 0], sizes = [1, 8, 8], strides = [1, 1, 1]} : vector<9x8x8xf32> to vector<1x8x8xf32>
    %181 = vector.shape_cast %180 : vector<1x8x8xf32> to vector<8x8xf32>
    %cst_85 = arith.constant dense<0.000000e+00> : vector<8x1024xf32>
    %182 = tpu.matmul %181, %179, %cst_85 {dimension_numbers = #tpu.dot_dimension_numbers<[1], [0], [0], [1], [0, 0, 1, 1], [], []>} : vector<8x8xf32>, vector<8x1024xf32>, vector<8x1024xf32> -> vector<8x1024xf32>
    %183 = arith.addf %176, %182 : vector<8x1024xf32>
    %c0_86 = arith.constant 0 : index
    %c640_87 = arith.constant 640 : index
    %184 = vector.load %arg7[%c0_86, %c640_87] : memref<8x2304xf32, #tpu.memory_space<vmem>>, vector<8x1024xf32>
    %185 = vector.extract_strided_slice %6 {offsets = [4, 0, 0], sizes = [1, 8, 8], strides = [1, 1, 1]} : vector<9x8x8xf32> to vector<1x8x8xf32>
    %186 = vector.shape_cast %185 : vector<1x8x8xf32> to vector<8x8xf32>
    %cst_88 = arith.constant dense<0.000000e+00> : vector<8x1024xf32>
    %187 = tpu.matmul %186, %184, %cst_88 {dimension_numbers = #tpu.dot_dimension_numbers<[1], [0], [0], [1], [0, 0, 1, 1], [], []>} : vector<8x8xf32>, vector<8x1024xf32>, vector<8x1024xf32> -> vector<8x1024xf32>
    %188 = arith.addf %183, %187 : vector<8x1024xf32>
    %c0_89 = arith.constant 0 : index
    %c656 = arith.constant 656 : index
    %189 = vector.load %arg7[%c0_89, %c656] : memref<8x2304xf32, #tpu.memory_space<vmem>>, vector<8x1024xf32>
    %cst_90 = arith.constant 0.000000e+00 : f32
    %190 = vector.broadcast %cst_90 : f32 to vector<8x1024xf32>
    %191 = arith.select %35, %189, %190 : vector<8x1024xi1>, vector<8x1024xf32>
    %192 = vector.extract_strided_slice %6 {offsets = [5, 0, 0], sizes = [1, 8, 8], strides = [1, 1, 1]} : vector<9x8x8xf32> to vector<1x8x8xf32>
    %193 = vector.shape_cast %192 : vector<1x8x8xf32> to vector<8x8xf32>
    %cst_91 = arith.constant dense<0.000000e+00> : vector<8x1024xf32>
    %194 = tpu.matmul %193, %191, %cst_91 {dimension_numbers = #tpu.dot_dimension_numbers<[1], [0], [0], [1], [0, 0, 1, 1], [], []>} : vector<8x8xf32>, vector<8x1024xf32>, vector<8x1024xf32> -> vector<8x1024xf32>
    %195 = arith.addf %188, %194 : vector<8x1024xf32>
    %c0_92 = arith.constant 0 : index
    %c1136 = arith.constant 1136 : index
    %196 = vector.load %arg7[%c0_92, %c1136] : memref<8x2304xf32, #tpu.memory_space<vmem>>, vector<8x1024xf32>
    %cst_93 = arith.constant 0.000000e+00 : f32
    %197 = vector.broadcast %cst_93 : f32 to vector<8x1024xf32>
    %198 = arith.select %33, %196, %197 : vector<8x1024xi1>, vector<8x1024xf32>
    %199 = vector.extract_strided_slice %6 {offsets = [6, 0, 0], sizes = [1, 8, 8], strides = [1, 1, 1]} : vector<9x8x8xf32> to vector<1x8x8xf32>
    %200 = vector.shape_cast %199 : vector<1x8x8xf32> to vector<8x8xf32>
    %cst_94 = arith.constant dense<0.000000e+00> : vector<8x1024xf32>
    %201 = tpu.matmul %200, %198, %cst_94 {dimension_numbers = #tpu.dot_dimension_numbers<[1], [0], [0], [1], [0, 0, 1, 1], [], []>} : vector<8x8xf32>, vector<8x1024xf32>, vector<8x1024xf32> -> vector<8x1024xf32>
    %202 = arith.addf %195, %201 : vector<8x1024xf32>
    %c0_95 = arith.constant 0 : index
    %c1152 = arith.constant 1152 : index
    %203 = vector.load %arg7[%c0_95, %c1152] : memref<8x2304xf32, #tpu.memory_space<vmem>>, vector<8x1024xf32>
    %204 = vector.extract_strided_slice %6 {offsets = [7, 0, 0], sizes = [1, 8, 8], strides = [1, 1, 1]} : vector<9x8x8xf32> to vector<1x8x8xf32>
    %205 = vector.shape_cast %204 : vector<1x8x8xf32> to vector<8x8xf32>
    %cst_96 = arith.constant dense<0.000000e+00> : vector<8x1024xf32>
    %206 = tpu.matmul %205, %203, %cst_96 {dimension_numbers = #tpu.dot_dimension_numbers<[1], [0], [0], [1], [0, 0, 1, 1], [], []>} : vector<8x8xf32>, vector<8x1024xf32>, vector<8x1024xf32> -> vector<8x1024xf32>
    %207 = arith.addf %202, %206 : vector<8x1024xf32>
    %c0_97 = arith.constant 0 : index
    %c1168 = arith.constant 1168 : index
    %208 = vector.load %arg7[%c0_97, %c1168] : memref<8x2304xf32, #tpu.memory_space<vmem>>, vector<8x1024xf32>
    %cst_98 = arith.constant 0.000000e+00 : f32
    %209 = vector.broadcast %cst_98 : f32 to vector<8x1024xf32>
    %210 = arith.select %35, %208, %209 : vector<8x1024xi1>, vector<8x1024xf32>
    %211 = vector.extract_strided_slice %6 {offsets = [8, 0, 0], sizes = [1, 8, 8], strides = [1, 1, 1]} : vector<9x8x8xf32> to vector<1x8x8xf32>
    %212 = vector.shape_cast %211 : vector<1x8x8xf32> to vector<8x8xf32>
    %cst_99 = arith.constant dense<0.000000e+00> : vector<8x1024xf32>
    %213 = tpu.matmul %212, %210, %cst_99 {dimension_numbers = #tpu.dot_dimension_numbers<[1], [0], [0], [1], [0, 0, 1, 1], [], []>} : vector<8x8xf32>, vector<8x1024xf32>, vector<8x1024xf32> -> vector<8x1024xf32>
    %214 = arith.addf %207, %213 : vector<8x1024xf32>
    %cst_100 = arith.constant 0.000000e+00 : f32
    %215 = vector.broadcast %cst_100 : f32 to vector<8x1024xf32>
    %216 = arith.maximumf %214, %215 : vector<8x1024xf32>
    %217 = arith.addf %158, %216 : vector<8x1024xf32>
    %c0_101 = arith.constant 0 : index
    %c0_102 = arith.constant 0 : index
    %c0_103 = arith.constant 0 : index
    %218 = vector.load %arg6[%c0_101, %c0_102, %c0_103] : memref<1x8x1024xf32, #tpu.memory_space<vmem>>, vector<1x8x1024xf32>
    %219 = vector.shape_cast %218 : vector<1x8x1024xf32> to vector<8x1024xf32>
    %220 = vector.shape_cast %217 : vector<8x1024xf32> to vector<1x8x1024xf32>
    tpu.vector_store %arg6[%c0_101, %c0_102, %c0_103], %220 {strides = array<i32>} : memref<1x8x1024xf32, #tpu.memory_space<vmem>>, vector<1x8x1024xf32>,
    return
  }
  func.func @transform_0(%arg0: i32) -> (i32, i32, i32) {
    %c0_i32 = arith.constant 0 : i32
    %c0_i32_0 = arith.constant 0 : i32
    %c0_i32_1 = arith.constant 0 : i32
    return %arg0, %c0_i32, %c0_i32_0 : i32, i32, i32
  }
  func.func @transform_1(%arg0: i32) -> (i32, i32) {
    %c0_i32 = arith.constant 0 : i32
    %c0_i32_0 = arith.constant 0 : i32
    %c0_i32_1 = arith.constant 0 : i32
    return %c0_i32, %c0_i32_0 : i32, i32
  }
  func.func @transform_2(%arg0: i32) -> (i32, i32, i32) {
    %c0_i32 = arith.constant 0 : i32
    %c0_i32_0 = arith.constant 0 : i32
    %c0_i32_1 = arith.constant 0 : i32
    %c0_i32_2 = arith.constant 0 : i32
    return %c0_i32, %c0_i32_0, %c0_i32_1 : i32, i32, i32
  }
  func.func @transform_3(%arg0: i32) -> (i32, i32, i32) {
    %c0_i32 = arith.constant 0 : i32
    %c0_i32_0 = arith.constant 0 : i32
    %c0_i32_1 = arith.constant 0 : i32
    %c0_i32_2 = arith.constant 0 : i32
    return %c0_i32, %c0_i32_0, %c0_i32_1 : i32, i32, i32
  }
  func.func @transform_4(%arg0: i32) -> (i32, i32, i32) {
    %c0_i32 = arith.constant 0 : i32
    %c0_i32_0 = arith.constant 0 : i32
    %c0_i32_1 = arith.constant 0 : i32
    %c0_i32_2 = arith.constant 0 : i32
    return %c0_i32, %c0_i32_0, %c0_i32_1 : i32, i32, i32
  }
  func.func @transform_5(%arg0: i32) -> (i32, i32, i32) {
    %c0_i32 = arith.constant 0 : i32
    %c0_i32_0 = arith.constant 0 : i32
    %c0_i32_1 = arith.constant 0 : i32
    return %arg0, %c0_i32, %c0_i32_0 : i32, i32, i32
  }
}

</mosaic_0001>

<llo_original>
// kernel: tpu_custom_call.1
$region0: #{tpu_custom_call.1}
  #allocation0 [shape = 'u32[]', space=smem, size = 0x4, offset = 0x4, fixed_abs, tag = 'smem constant byte address 0x4 - core index']
  #allocation1 [shape = 'u32[144,128]{1,0:T(1,128)}', space=vmem, size = 0x12000, scoped, tag = 'internal scratch']
  #allocation2 [shape = 'f32[8,2304]{1,0:T(8,128)}', space=vmem, size = 0x12000, scoped, tag = 'scratch operand']
  %s0 = inlined_call_operand.vmem [shape: f32[2,4,1024], index: 0, kind: input, shape index: {}]
  %s1 = inlined_call_operand.vmem [shape: f32[8,4], index: 1, kind: input, shape index: {}]
  %s2 = inlined_call_operand.vmem [shape: f32[9,8,8], index: 2, kind: input, shape index: {}]
  %s3 = inlined_call_operand.vmem [shape: f32[9,8,8], index: 3, kind: input, shape index: {}]
  %s4 = inlined_call_operand.vmem [shape: f32[9,8,8], index: 4, kind: input, shape index: {}]
  %s5 = inlined_call_operand.hbm [shape: f32[2,8,1024], index: 5, kind: output, shape index: {}]
  %s6 = sld [smem:[#allocation0]]
  $region53: #{tpu_custom_call.1} parent=0
    _
  %s8 = ssub.s32 1, %s6
  %s9 = scalar_select 0, %s8, %s6
  $region1: #{tpu_custom_call.1} parent=0
    #allocation3 [shape = 'u8[65536]{0}', space=vmem, size = 0x10000, scoped, tag = 'output window, operand 0']
    #allocation4 [shape = 's32[2]{0}', space=sflag, size = 0x8, scoped, tag = 'scoped memory for tpu_custom_call.1']
    %10 = vsyncpa [#allocation4], 0
    %s11 = scalar_lea.sflag [#allocation4], 1
    %12 = vsyncpa %s11, 0
    loop: start=0, step=1, limit=4
    $region2: #{tpu_custom_call.1} parent=1 // loop_pre_header
      _
    $region3: #{tpu_custom_call.1} parent=1 // loop_header
      %s14 = sphi 0, %s18
      %p15 = scmp.ge.s32.totalorder %s14, 4
      %s24 = sphi 0, %s26
      %s27 = sphi 0, %s24
      %s28 = sphi 0, %s27
      %s44 = sphi 0, %s28
      %s48 = sphi 0, %s48
      %s50 = sphi 0, %s48
      %s51 = sphi 0, %s50
      %s65 = sphi 0, %s51
      %s69 = sphi 0, %s69
      %s71 = sphi 0, %s69
      %s72 = sphi 0, %s71
      %s86 = sphi 0, %s72
      %s90 = sphi 0, %s90
      %s92 = sphi 0, %s90
      %s93 = sphi 0, %s92
      %s107 = sphi 0, %s93
      %s111 = sphi 0, %s111
      %s113 = sphi 0, %s111
      %s114 = sphi 0, %s113
      %s128 = sphi 0, %s114
      %s134 = sphi 0, %s136
      %s137 = sphi 0, %s134
      %s138 = sphi 0, %s137
      %s154 = sphi 0, %s138
    $region4: #{tpu_custom_call.1} parent=1 // loop_header_branch
      %17 = sbr.rel (%p15) target = $region8
    $region5: #{tpu_custom_call.1} parent=1 // loop_body
      %s19 = ssub.s32 %s14, 1
      %s20 = ssub.s32 %s14, 2
      %s21 = sadd.s32 %s14, 1
      %s22 = ssub.s32 %s14, %s21
      %p23 = scmp.eq.s32.totalorder %s22, 0
      %s25 = sadd.s32 %s24, 1
      %s26 = scalar_select %p23, %s24, %s25
      %p29 = pneg %p23
      %p30 = scmp.eq.s32.totalorder %s14, 1
      %p31 = por %p29, %p30
      %p32 = scmp.ne.s32.totalorder %s24, %s27
      %p33 = scmp.eq.s32.totalorder %s14, 0
      %p34 = por %p32, %p33
      %p35 = scmp.ne.s32.totalorder %s24, %s27
      %p36 = scmp.eq.s32.totalorder %s19, 1
      %p37 = por %p35, %p36
      %p38 = scmp.ne.s32.totalorder %s27, %s28
      %p39 = scmp.eq.s32.totalorder %s19, 0
      %p40 = por %p38, %p39
      %p41 = scmp.ne.s32.totalorder %s27, %s28
      %p42 = scmp.eq.s32.totalorder %s20, 1
      %p43 = por %p41, %p42
      %p45 = scmp.ne.s32.totalorder %s28, %s44
      %p46 = scmp.eq.s32.totalorder %s20, 0
      %p47 = por %p45, %p46
      %s49 = sadd.s32 %s48, 1
      %p52 = scmp.eq.s32.totalorder %s14, 1
      %p53 = scmp.ne.s32.totalorder %s48, %s50
      %p54 = scmp.eq.s32.totalorder %s14, 0
      %p55 = por %p53, %p54
      %p56 = scmp.ne.s32.totalorder %s48, %s50
      %p57 = scmp.eq.s32.totalorder %s19, 1
      %p58 = por %p56, %p57
      %p59 = scmp.ne.s32.totalorder %s50, %s51
      %p60 = scmp.eq.s32.totalorder %s19, 0
      %p61 = por %p59, %p60
      %p62 = scmp.ne.s32.totalorder %s50, %s51
      %p63 = scmp.eq.s32.totalorder %s20, 1
      %p64 = por %p62, %p63
      %p66 = scmp.ne.s32.totalorder %s51, %s65
      %p67 = scmp.eq.s32.totalorder %s20, 0
      %p68 = por %p66, %p67
      %s70 = sadd.s32 %s69, 1
      %p73 = scmp.eq.s32.totalorder %s14, 1
      %p74 = scmp.ne.s32.totalorder %s69, %s71
      %p75 = scmp.eq.s32.totalorder %s14, 0
      %p76 = por %p74, %p75
      %p77 = scmp.ne.s32.totalorder %s69, %s71
      %p78 = scmp.eq.s32.totalorder %s19, 1
      %p79 = por %p77, %p78
      %p80 = scmp.ne.s32.totalorder %s71, %s72
      %p81 = scmp.eq.s32.totalorder %s19, 0
      %p82 = por %p80, %p81
      %p83 = scmp.ne.s32.totalorder %s71, %s72
      %p84 = scmp.eq.s32.totalorder %s20, 1
      %p85 = por %p83, %p84
      %p87 = scmp.ne.s32.totalorder %s72, %s86
      %p88 = scmp.eq.s32.totalorder %s20, 0
      %p89 = por %p87, %p88
      %s91 = sadd.s32 %s90, 1
      %p94 = scmp.eq.s32.totalorder %s14, 1
      %p95 = scmp.ne.s32.totalorder %s90, %s92
      %p96 = scmp.eq.s32.totalorder %s14, 0
      %p97 = por %p95, %p96
      %p98 = scmp.ne.s32.totalorder %s90, %s92
      %p99 = scmp.eq.s32.totalorder %s19, 1
      %p100 = por %p98, %p99
      %p101 = scmp.ne.s32.totalorder %s92, %s93
      %p102 = scmp.eq.s32.totalorder %s19, 0
      %p103 = por %p101, %p102
      %p104 = scmp.ne.s32.totalorder %s92, %s93
      %p105 = scmp.eq.s32.totalorder %s20, 1
      %p106 = por %p104, %p105
      %p108 = scmp.ne.s32.totalorder %s93, %s107
      %p109 = scmp.eq.s32.totalorder %s20, 0
      %p110 = por %p108, %p109
      %s112 = sadd.s32 %s111, 1
      %p115 = scmp.eq.s32.totalorder %s14, 1
      %p116 = scmp.ne.s32.totalorder %s111, %s113
      %p117 = scmp.eq.s32.totalorder %s14, 0
      %p118 = por %p116, %p117
      %p119 = scmp.ne.s32.totalorder %s111, %s113
      %p120 = scmp.eq.s32.totalorder %s19, 1
      %p121 = por %p119, %p120
      %p122 = scmp.ne.s32.totalorder %s113, %s114
      %p123 = scmp.eq.s32.totalorder %s19, 0
      %p124 = por %p122, %p123
      %p125 = scmp.ne.s32.totalorder %s113, %s114
      %p126 = scmp.eq.s32.totalorder %s20, 1
      %p127 = por %p125, %p126
      %p129 = scmp.ne.s32.totalorder %s114, %s128
      %p130 = scmp.eq.s32.totalorder %s20, 0
      %p131 = por %p129, %p130
      %s132 = ssub.s32 %s14, %s21
      %p133 = scmp.eq.s32.totalorder %s132, 0
      %s135 = sadd.s32 %s134, 1
      %s136 = scalar_select %p133, %s134, %s135
      %p139 = pneg %p133
      %p140 = scmp.eq.s32.totalorder %s14, 1
      %p141 = por %p139, %p140
      %p142 = scmp.ne.s32.totalorder %s134, %s137
      %p143 = scmp.eq.s32.totalorder %s14, 0
      %p144 = por %p142, %p143
      %p145 = scmp.ne.s32.totalorder %s134, %s137
      %p146 = scmp.eq.s32.totalorder %s19, 1
      %p147 = por %p145, %p146
      %p148 = scmp.ne.s32.totalorder %s137, %s138
      %p149 = scmp.eq.s32.totalorder %s19, 0
      %p150 = por %p148, %p149
      %p151 = scmp.ne.s32.totalorder %s137, %s138
      %p152 = scmp.eq.s32.totalorder %s20, 1
      %p153 = por %p151, %p152
      %p155 = scmp.ne.s32.totalorder %s138, %s154
      %p156 = scmp.eq.s32.totalorder %s20, 0
      %p157 = por %p155, %p156
      %p158 = scmp.le.s32.totalorder 1, %s14
      %p159 = scmp.lt.s32.totalorder %s14, 3
      %p160 = pnand %p158, %p159
      %p161 = pneg %p160
      // Predicated region
      $region9: #{tpu_custom_call.1} parent=5 // pred_check
        _
      $region10: #{tpu_custom_call.1} parent=5 // pred_check_branch
        %163 = sbr.rel (%p160) target = $region12
      $region11: #{tpu_custom_call.1} parent=5 // pred_region
        %s164 = ssub.s32 %s14, 1
        // Predicated region
        $region13: #{tpu_custom_call.1} parent=11 // pred_check
          %p165 = pneg %p61
        $region14: #{tpu_custom_call.1} parent=11 // pred_check_branch
          %167 = sbr.rel (%p165) target = $region16
        $region15: #{tpu_custom_call.1} parent=11 // pred_region
          _
        $region16: #{tpu_custom_call.1} parent=11 // pred_fallthru
          _
        // Predicated region
        $region17: #{tpu_custom_call.1} parent=11 // pred_check
          %p168 = pneg %p82
        $region18: #{tpu_custom_call.1} parent=11 // pred_check_branch
          %170 = sbr.rel (%p168) target = $region20
        $region19: #{tpu_custom_call.1} parent=11 // pred_region
          _
        $region20: #{tpu_custom_call.1} parent=11 // pred_fallthru
          _
        // Predicated region
        $region21: #{tpu_custom_call.1} parent=11 // pred_check
          %p171 = pneg %p103
        $region22: #{tpu_custom_call.1} parent=11 // pred_check_branch
          %173 = sbr.rel (%p171) target = $region24
        $region23: #{tpu_custom_call.1} parent=11 // pred_region
          _
        $region24: #{tpu_custom_call.1} parent=11 // pred_fallthru
          _
        // Predicated region
        $region25: #{tpu_custom_call.1} parent=11 // pred_check
          %p174 = pneg %p124
        $region26: #{tpu_custom_call.1} parent=11 // pred_check_branch
          %176 = sbr.rel (%p174) target = $region28
        $region27: #{tpu_custom_call.1} parent=11 // pred_region
          _
        $region28: #{tpu_custom_call.1} parent=11 // pred_fallthru
          _
      $region12: #{tpu_custom_call.1} parent=5 // pred_fallthru
        _
      %p177 = scmp.lt.s32.totalorder %s14, 2
      // Predicated region
      $region29: #{tpu_custom_call.1} parent=5 // pred_check
        %p178 = pneg %p177
      $region30: #{tpu_custom_call.1} parent=5 // pred_check_branch
        %180 = sbr.rel (%p178) target = $region32
      $region31: #{tpu_custom_call.1} parent=5 // pred_region
        // Predicated region
        $region33: #{tpu_custom_call.1} parent=31 // pred_check
          %p181 = pneg %p34
        $region34: #{tpu_custom_call.1} parent=31 // pred_check_branch
          %183 = sbr.rel (%p181) target = $region36
        $region35: #{tpu_custom_call.1} parent=31 // pred_region
          %p184 = scmp.lt.s32.totalorder %s14, 1
          %s185 = scalar_select %p184, %s14, 1
          %s186 = smul.addr %s185, 8
          %s187 = smul.addr %s186, 4
          %s188 = scalar_lea.vmem %s0, %s187
        $region36: #{tpu_custom_call.1} parent=31 // pred_fallthru
          _
      $region32: #{tpu_custom_call.1} parent=5 // pred_fallthru
        _
      %p189 = scmp.le.s32.totalorder 1, %s14
      %p190 = scmp.lt.s32.totalorder %s14, 3
      %p191 = pnand %p189, %p190
      %p192 = pneg %p191
      // Predicated region
      $region37: #{tpu_custom_call.1} parent=5 // pred_check
        _
      $region38: #{tpu_custom_call.1} parent=5 // pred_check_branch
        %194 = sbr.rel (%p191) target = $region40
      $region39: #{tpu_custom_call.1} parent=5 // pred_region
        %s195 = ssub.s32 %s14, 1
        %p196 = scmp.lt.s32.totalorder %s19, 1
        %s197 = scalar_select %p196, %s19, 1
        %s198 = smul.addr %s197, 8
        %s199 = smul.addr %s198, 4
        %s200 = scalar_lea.vmem %s0, %s199
        %p201 = pneg %p40
        %p202 = pneg %p37
        %p203 = pneg %p61
        %p204 = pneg %p58
        %p205 = pneg %p82
        %p206 = pneg %p79
        %p207 = pneg %p103
        %p208 = pneg %p100
        %p209 = pneg %p124
        %p210 = pneg %p121
        %p211 = pneg %p150
        %p212 = pneg %p147
        %s213 = sand.u32 %s137, 1
        %s214 = scalar_lea.sflag [#allocation4], %s213
        %s215 = sand.u32 %s137, 1
        %s216 = smul.addr %s215, 64
        %s217 = scalar_lea.vmem [#allocation3], %s216
        %p218 = scmp.lt.s32.totalorder %s19, 1
        %s219 = scalar_select %p218, %s19, 1
        %s220 = smul.addr %s219, 8
        %s221 = smul.addr %s220, 4
        %s222 = scalar_lea.vmem %s0, %s221
        %223 = vst [vmem:[#allocation2] sm:$0xff] 0.0
        %224 = vst [vmem:[#allocation2 + $0x8] sm:$0xff] 0.0
        %225 = vst [vmem:[#allocation2 + $0x10] sm:$0xff] 0.0
        %226 = vst [vmem:[#allocation2 + $0x18] sm:$0xff] 0.0
        %227 = vst [vmem:[#allocation2 + $0x20] sm:$0xff] 0.0
        %228 = vst [vmem:[#allocation2 + $0x68] sm:$0xff] 0.0
        %229 = vst [vmem:[#allocation2 + $0x70] sm:$0xff] 0.0
        %230 = vst [vmem:[#allocation2 + $0x78] sm:$0xff] 0.0
        %231 = vst [vmem:[#allocation2 + $0x80] sm:$0xff] 0.0
        %232 = vst [vmem:[#allocation2 + $0x88] sm:$0xff] 0.0
        %v233 = vld [vmem:[%s1] sm:$0xff]
        %v234 = vld [vmem:[%s2] sm:$0xff]
        %v235 = vld [vmem:[%s2 + $0x8] sm:$0xff]
        %v236 = vld [vmem:[%s2 + $0x10] sm:$0xff]
        %v237 = vld [vmem:[%s2 + $0x18] sm:$0xff]
        %v238 = vld [vmem:[%s2 + $0x20] sm:$0xff]
        %v239 = vld [vmem:[%s2 + $0x28] sm:$0xff]
        %v240 = vld [vmem:[%s2 + $0x30] sm:$0xff]
        %v241 = vld [vmem:[%s2 + $0x38] sm:$0xff]
        %v242 = vld [vmem:[%s2 + $0x40] sm:$0xff]
        %v243 = vld [vmem:[%s3] sm:$0xff]
        %v244 = vld [vmem:[%s3 + $0x8] sm:$0xff]
        %v245 = vld [vmem:[%s3 + $0x10] sm:$0xff]
        %v246 = vld [vmem:[%s3 + $0x18] sm:$0xff]
        %v247 = vld [vmem:[%s3 + $0x20] sm:$0xff]
        %v248 = vld [vmem:[%s3 + $0x28] sm:$0xff]
        %v249 = vld [vmem:[%s3 + $0x30] sm:$0xff]
        %v250 = vld [vmem:[%s3 + $0x38] sm:$0xff]
        %v251 = vld [vmem:[%s3 + $0x40] sm:$0xff]
        %v252 = vld [vmem:[%s4] sm:$0xff]
        %v253 = vld [vmem:[%s4 + $0x8] sm:$0xff]
        %v254 = vld [vmem:[%s4 + $0x10] sm:$0xff]
        %v255 = vld [vmem:[%s4 + $0x18] sm:$0xff]
        %v256 = vld [vmem:[%s4 + $0x20] sm:$0xff]
        %v257 = vld [vmem:[%s4 + $0x28] sm:$0xff]
        %v258 = vld [vmem:[%s4 + $0x30] sm:$0xff]
        %v259 = vld [vmem:[%s4 + $0x38] sm:$0xff]
        %v260 = vld [vmem:[%s4 + $0x40] sm:$0xff]
        %v261 = vlaneseq
        %v262 = vand.u32 %v261, 127
        %v263 = vadd.s32 %v262, 128
        %v264 = vadd.s32 %v262, 256
        %v265 = vadd.s32 %v262, 384
        %v266 = vadd.s32 %v262, 512
        %v267 = vadd.s32 %v262, 640
        %v268 = vadd.s32 %v262, 768
        %v269 = vadd.s32 %v262, 896
        %vm270 = vcmp.lt.s32.totalorder %v262, 0
        %v271 = vsub.s32 0, %v262
        %v272 = vsel %vm270, %v271, %v262
        %v273 = vshrl.u32 %v272, 5
        %v274 = vand.u32 %v272, 31
        %v275 = vsub.s32 0, %v274
        %v276 = vsel %vm270, %v275, %v274
        %vm277 = vcmp.lt.s32.totalorder %v263, 0
        %v278 = vsub.s32 0, %v263
        %v279 = vsel %vm277, %v278, %v263
        %v280 = vshrl.u32 %v279, 5
        %v281 = vand.u32 %v279, 31
        %v282 = vsub.s32 0, %v281
        %v283 = vsel %vm277, %v282, %v281
        %vm284 = vcmp.lt.s32.totalorder %v264, 0
        %v285 = vsub.s32 0, %v264
        %v286 = vsel %vm284, %v285, %v264
        %v287 = vshrl.u32 %v286, 5
        %v288 = vand.u32 %v286, 31
        %v289 = vsub.s32 0, %v288
        %v290 = vsel %vm284, %v289, %v288
        %vm291 = vcmp.lt.s32.totalorder %v265, 0
        %v292 = vsub.s32 0, %v265
        %v293 = vsel %vm291, %v292, %v265
        %v294 = vshrl.u32 %v293, 5
        %v295 = vand.u32 %v293, 31
        %v296 = vsub.s32 0, %v295
        %v297 = vsel %vm291, %v296, %v295
        %vm298 = vcmp.lt.s32.totalorder %v266, 0
        %v299 = vsub.s32 0, %v266
        %v300 = vsel %vm298, %v299, %v266
        %v301 = vshrl.u32 %v300, 5
        %v302 = vand.u32 %v300, 31
        %v303 = vsub.s32 0, %v302
        %v304 = vsel %vm298, %v303, %v302
        %vm305 = vcmp.lt.s32.totalorder %v267, 0
        %v306 = vsub.s32 0, %v267
        %v307 = vsel %vm305, %v306, %v267
        %v308 = vshrl.u32 %v307, 5
        %v309 = vand.u32 %v307, 31
        %v310 = vsub.s32 0, %v309
        %v311 = vsel %vm305, %v310, %v309
        %vm312 = vcmp.lt.s32.totalorder %v268, 0
        %v313 = vsub.s32 0, %v268
        %v314 = vsel %vm312, %v313, %v268
        %v315 = vshrl.u32 %v314, 5
        %v316 = vand.u32 %v314, 31
        %v317 = vsub.s32 0, %v316
        %v318 = vsel %vm312, %v317, %v316
        %vm319 = vcmp.lt.s32.totalorder %v269, 0
        %v320 = vsub.s32 0, %v269
        %v321 = vsel %vm319, %v320, %v269
        %v322 = vshrl.u32 %v321, 5
        %v323 = vand.u32 %v321, 31
        %v324 = vsub.s32 0, %v323
        %v325 = vsel %vm319, %v324, %v323
        %vm326 = vcmp.ne.s32.totalorder %v276, 0
        %vm327 = vcmp.ne.s32.totalorder %v283, 0
        %vm328 = vcmp.ne.s32.totalorder %v290, 0
        %vm329 = vcmp.ne.s32.totalorder %v297, 0
        %vm330 = vcmp.ne.s32.totalorder %v304, 0
        %vm331 = vcmp.ne.s32.totalorder %v311, 0
        %vm332 = vcmp.ne.s32.totalorder %v318, 0
        %vm333 = vcmp.ne.s32.totalorder %v325, 0
        %vm334 = vcmp.lt.s32.totalorder %v276, 0
        %vm335 = vcmp.lt.s32.totalorder %v283, 0
        %vm336 = vcmp.lt.s32.totalorder %v290, 0
        %vm337 = vcmp.lt.s32.totalorder %v297, 0
        %vm338 = vcmp.lt.s32.totalorder %v304, 0
        %vm339 = vcmp.lt.s32.totalorder %v311, 0
        %vm340 = vcmp.lt.s32.totalorder %v318, 0
        %vm341 = vcmp.lt.s32.totalorder %v325, 0
        %vm342 = vmand %vm334, %vm326
        %vm343 = vmand %vm335, %vm327
        %vm344 = vmand %vm336, %vm328
        %vm345 = vmand %vm337, %vm329
        %vm346 = vmand %vm338, %vm330
        %vm347 = vmand %vm339, %vm331
        %vm348 = vmand %vm340, %vm332
        %vm349 = vmand %vm341, %vm333
        %v350 = vadd.s32 %v276, 32
        %v351 = vadd.s32 %v283, 32
        %v352 = vadd.s32 %v290, 32
        %v353 = vadd.s32 %v297, 32
        %v354 = vadd.s32 %v304, 32
        %v355 = vadd.s32 %v311, 32
        %v356 = vadd.s32 %v318, 32
        %v357 = vadd.s32 %v325, 32
        %v358 = vsel %vm342, %v350, %v276
        %v359 = vsel %vm343, %v351, %v283
        %v360 = vsel %vm344, %v352, %v290
        %v361 = vsel %vm345, %v353, %v297
        %v362 = vsel %vm346, %v354, %v304
        %v363 = vsel %vm347, %v355, %v311
        %v364 = vsel %vm348, %v356, %v318
        %v365 = vsel %vm349, %v357, %v325
        %vm366 = vcmp.ge.s32.totalorder %v358, 4
        %vm367 = vcmp.ge.s32.totalorder %v359, 4
        %vm368 = vcmp.ge.s32.totalorder %v360, 4
        %vm369 = vcmp.ge.s32.totalorder %v361, 4
        %vm370 = vcmp.ge.s32.totalorder %v362, 4
        %vm371 = vcmp.ge.s32.totalorder %v363, 4
        %vm372 = vcmp.ge.s32.totalorder %v364, 4
        %vm373 = vcmp.ge.s32.totalorder %v365, 4
        %vm374 = vcmp.lt.s32.totalorder %v358, 28
        %vm375 = vcmp.lt.s32.totalorder %v359, 28
        %vm376 = vcmp.lt.s32.totalorder %v360, 28
        %vm377 = vcmp.lt.s32.totalorder %v361, 28
        %vm378 = vcmp.lt.s32.totalorder %v362, 28
        %vm379 = vcmp.lt.s32.totalorder %v363, 28
        %vm380 = vcmp.lt.s32.totalorder %v364, 28
        %vm381 = vcmp.lt.s32.totalorder %v365, 28
        %vm382 = vcmp.ge.s32.totalorder %v358, 8
        %vm383 = vcmp.ge.s32.totalorder %v359, 8
        %vm384 = vcmp.ge.s32.totalorder %v360, 8
        %vm385 = vcmp.ge.s32.totalorder %v361, 8
        %vm386 = vcmp.ge.s32.totalorder %v362, 8
        %vm387 = vcmp.ge.s32.totalorder %v363, 8
        %vm388 = vcmp.ge.s32.totalorder %v364, 8
        %vm389 = vcmp.ge.s32.totalorder %v365, 8
        %vm390 = vcmp.lt.s32.totalorder %v358, 24
        %vm391 = vcmp.lt.s32.totalorder %v359, 24
        %vm392 = vcmp.lt.s32.totalorder %v360, 24
        %vm393 = vcmp.lt.s32.totalorder %v361, 24
        %vm394 = vcmp.lt.s32.totalorder %v362, 24
        %vm395 = vcmp.lt.s32.totalorder %v363, 24
        %vm396 = vcmp.lt.s32.totalorder %v364, 24
        %vm397 = vcmp.lt.s32.totalorder %v365, 24
        %vm398 = vcmp.ge.s32.totalorder %v358, 16
        %vm399 = vcmp.ge.s32.totalorder %v359, 16
        %vm400 = vcmp.ge.s32.totalorder %v360, 16
        %vm401 = vcmp.ge.s32.totalorder %v361, 16
        %vm402 = vcmp.ge.s32.totalorder %v362, 16
        %vm403 = vcmp.ge.s32.totalorder %v363, 16
        %vm404 = vcmp.ge.s32.totalorder %v364, 16
        %vm405 = vcmp.ge.s32.totalorder %v365, 16
        %vm406 = vcmp.lt.s32.totalorder %v358, 16
        %vm407 = vcmp.lt.s32.totalorder %v359, 16
        %vm408 = vcmp.lt.s32.totalorder %v360, 16
        %vm409 = vcmp.lt.s32.totalorder %v361, 16
        %vm410 = vcmp.lt.s32.totalorder %v362, 16
        %vm411 = vcmp.lt.s32.totalorder %v363, 16
        %vm412 = vcmp.lt.s32.totalorder %v364, 16
        %vm413 = vcmp.lt.s32.totalorder %v365, 16
        %v414 = vld [vmem:[%s222] sm:$0xff]
        %v415 = vld [vmem:[%s222 + $0x8] sm:$0xff]
        %v416 = vld [vmem:[%s222 + $0x10] sm:$0xff]
        %v417 = vld [vmem:[%s222 + $0x18] sm:$0xff]
        %v422 = vcombine.high %v414, %v414
        %v423 = vcombine.high %v415, %v415
        %v424 = vcombine.high %v416, %v416
        %v425 = vcombine.high %v417, %v417
        %vm426 = vcmask 31744
        %v428 = vsel %vm426, %v233, 0
        %vm430 = vcmask 1043456
        %v431 = vsel %vm430, %v414, 0
        %v433 = vsel %vm430, %v422, 0
        %v435 = vsel %vm430, %v415, 0
        %v437 = vsel %vm430, %v423, 0
        %v439 = vsel %vm430, %v416, 0
        %v441 = vsel %vm430, %v424, 0
        %v443 = vsel %vm430, %v417, 0
        %v445 = vsel %vm430, %v425, 0
        %447 = vmatprep.subr.mxu0 %v433
        %448 = vmatpush1.msra.mxu0 %v431
        %449 = vmatprep.subr.mxu0 0.0
        %450 = vmatpush1.msra.mxu0 0.0
        %451 = vmatprep.subr.mxu0 0.0
        %452 = vmatpush1.msra.mxu0 0.0
        %453 = vmatprep.subr.mxu0 0.0
        %454 = vmatpush1.msra.mxu0 0.0
        %455 = vmatprep.subr.mxu0 0.0
        %456 = vmatpush1.msra.mxu0 0.0
        %457 = vmatprep.subr.mxu0 0.0
        %458 = vmatpush1.msra.mxu0 0.0
        %459 = vmatprep.subr.mxu0 0.0
        %460 = vmatpush1.msra.mxu0 0.0
        %461 = vmatprep.subr.mxu0 0.0
        %462 = vmatpush1.msra.mxu0 0.0
        %463 = vmatprep.subr.mxu0 0.0
        %464 = vmatpush1.msra.mxu0 0.0
        %465 = vmatprep.subr.mxu0 0.0
        %466 = vmatpush1.msra.mxu0 0.0
        %467 = vmatprep.subr.mxu0 0.0
        %468 = vmatpush1.msra.mxu0 0.0
        %469 = vmatprep.subr.mxu0 0.0
        %470 = vmatpush1.msra.mxu0 0.0
        %471 = vmatprep.subr.mxu0 0.0
        %472 = vmatpush1.msra.mxu0 0.0
        %473 = vmatprep.subr.mxu0 0.0
        %474 = vmatpush1.msra.mxu0 0.0
        %475 = vmatprep.subr.mxu0 0.0
        %476 = vmatpush1.msra.mxu0 0.0
        %477 = vmatprep.subr.mxu0 0.0
        %478 = vmatpush1.msra.mxu0 0.0
        %479 = vmatprep.subr.mxu0 0.0
        %480 = vmatpush1.msra.mxu0 0.0
        %481 = vmatprep.subr.mxu0 0.0
        %482 = vmatpush1.msra.mxu0 0.0
        %483 = vmatprep.subr.mxu0 0.0
        %484 = vmatpush1.msra.mxu0 0.0
        %485 = vmatprep.subr.mxu0 0.0
        %486 = vmatpush1.msra.mxu0 0.0
        %487 = vmatprep.subr.mxu0 0.0
        %488 = vmatpush1.msra.mxu0 0.0
        %489 = vmatprep.subr.mxu0 0.0
        %490 = vmatpush1.msra.mxu0 0.0
        %491 = vmatprep.subr.mxu0 0.0
        %492 = vmatpush1.msra.mxu0 0.0
        %493 = vmatprep.subr.mxu0 0.0
        %494 = vmatpush1.msra.mxu0 0.0
        %495 = vmatprep.subr.mxu0 0.0
        %496 = vmatpush1.msra.mxu0 0.0
        %497 = vmatprep.subr.mxu0 0.0
        %498 = vmatpush1.msra.mxu0 0.0
        %499 = vmatprep.subr.mxu0 0.0
        %500 = vmatpush1.msra.mxu0 0.0
        %501 = vmatprep.subr.mxu0 0.0
        %502 = vmatpush1.msra.mxu0 0.0
        %503 = vmatprep.subr.mxu0 0.0
        %504 = vmatpush1.msra.mxu0 0.0
        %505 = vmatprep.subr.mxu0 0.0
        %506 = vmatpush1.msra.mxu0 0.0
        %507 = vmatprep.subr.mxu0 0.0
        %508 = vmatpush1.msra.mxu0 0.0
        %509 = vmatprep.subr.mxu0 0.0
        %510 = vmatpush1.msra.mxu0 0.0
        %511 = vmatprep.mubr.f32.mxu0 0.0
        %512 = vmatmul.mubr.f32.gmra.mrb[0].mxu0 %v428
        %v513 = vpop.f32.mrb[0].mxu0
        %v514 = vadd.f32 0.0, %v513
        %v515 = vpop.f32.mrb[0].mxu0
        %v516 = vadd.f32 0.0, %v515
        %517 = vdwg.mxu0
        %518 = vmatprep.subr.mxu0 %v437
        %519 = vmatpush1.msra.mxu0 %v435
        %520 = vmatprep.subr.mxu0 0.0
        %521 = vmatpush1.msra.mxu0 0.0
        %522 = vmatprep.subr.mxu0 0.0
        %523 = vmatpush1.msra.mxu0 0.0
        %524 = vmatprep.subr.mxu0 0.0
        %525 = vmatpush1.msra.mxu0 0.0
        %526 = vmatprep.subr.mxu0 0.0
        %527 = vmatpush1.msra.mxu0 0.0
        %528 = vmatprep.subr.mxu0 0.0
        %529 = vmatpush1.msra.mxu0 0.0
        %530 = vmatprep.subr.mxu0 0.0
        %531 = vmatpush1.msra.mxu0 0.0
        %532 = vmatprep.subr.mxu0 0.0
        %533 = vmatpush1.msra.mxu0 0.0
        %534 = vmatprep.subr.mxu0 0.0
        %535 = vmatpush1.msra.mxu0 0.0
        %536 = vmatprep.subr.mxu0 0.0
        %537 = vmatpush1.msra.mxu0 0.0
        %538 = vmatprep.subr.mxu0 0.0
        %539 = vmatpush1.msra.mxu0 0.0
        %540 = vmatprep.subr.mxu0 0.0
        %541 = vmatpush1.msra.mxu0 0.0
        %542 = vmatprep.subr.mxu0 0.0
        %543 = vmatpush1.msra.mxu0 0.0
        %544 = vmatprep.subr.mxu0 0.0
        %545 = vmatpush1.msra.mxu0 0.0
        %546 = vmatprep.subr.mxu0 0.0
        %547 = vmatpush1.msra.mxu0 0.0
        %548 = vmatprep.subr.mxu0 0.0
        %549 = vmatpush1.msra.mxu0 0.0
        %550 = vmatprep.subr.mxu0 0.0
        %551 = vmatpush1.msra.mxu0 0.0
        %552 = vmatprep.subr.mxu0 0.0
        %553 = vmatpush1.msra.mxu0 0.0
        %554 = vmatprep.subr.mxu0 0.0
        %555 = vmatpush1.msra.mxu0 0.0
        %556 = vmatprep.subr.mxu0 0.0
        %557 = vmatpush1.msra.mxu0 0.0
        %558 = vmatprep.subr.mxu0 0.0
        %559 = vmatpush1.msra.mxu0 0.0
        %560 = vmatprep.subr.mxu0 0.0
        %561 = vmatpush1.msra.mxu0 0.0
        %562 = vmatprep.subr.mxu0 0.0
        %563 = vmatpush1.msra.mxu0 0.0
        %564 = vmatprep.subr.mxu0 0.0
        %565 = vmatpush1.msra.mxu0 0.0
        %566 = vmatprep.subr.mxu0 0.0
        %567 = vmatpush1.msra.mxu0 0.0
        %568 = vmatprep.subr.mxu0 0.0
        %569 = vmatpush1.msra.mxu0 0.0
        %570 = vmatprep.subr.mxu0 0.0
        %571 = vmatpush1.msra.mxu0 0.0
        %572 = vmatprep.subr.mxu0 0.0
        %573 = vmatpush1.msra.mxu0 0.0
        %574 = vmatprep.subr.mxu0 0.0
        %575 = vmatpush1.msra.mxu0 0.0
        %576 = vmatprep.subr.mxu0 0.0
        %577 = vmatpush1.msra.mxu0 0.0
        %578 = vmatprep.subr.mxu0 0.0
        %579 = vmatpush1.msra.mxu0 0.0
        %580 = vmatprep.subr.mxu0 0.0
        %581 = vmatpush1.msra.mxu0 0.0
        %582 = vmatprep.mubr.f32.mxu0 0.0
        %583 = vmatmul.mubr.f32.gmra.mrb[0].mxu0 %v428
        %v584 = vpop.f32.mrb[0].mxu0
        %v585 = vadd.f32 0.0, %v584
        %v586 = vpop.f32.mrb[0].mxu0
        %v587 = vadd.f32 0.0, %v586
        %588 = vdwg.mxu0
        %589 = vmatprep.subr.mxu0 %v441
        %590 = vmatpush1.msra.mxu0 %v439
        %591 = vmatprep.subr.mxu0 0.0
        %592 = vmatpush1.msra.mxu0 0.0
        %593 = vmatprep.subr.mxu0 0.0
        %594 = vmatpush1.msra.mxu0 0.0
        %595 = vmatprep.subr.mxu0 0.0
        %596 = vmatpush1.msra.mxu0 0.0
        %597 = vmatprep.subr.mxu0 0.0
        %598 = vmatpush1.msra.mxu0 0.0
        %599 = vmatprep.subr.mxu0 0.0
        %600 = vmatpush1.msra.mxu0 0.0
        %601 = vmatprep.subr.mxu0 0.0
        %602 = vmatpush1.msra.mxu0 0.0
        %603 = vmatprep.subr.mxu0 0.0
        %604 = vmatpush1.msra.mxu0 0.0
        %605 = vmatprep.subr.mxu0 0.0
        %606 = vmatpush1.msra.mxu0 0.0
        %607 = vmatprep.subr.mxu0 0.0
        %608 = vmatpush1.msra.mxu0 0.0
        %609 = vmatprep.subr.mxu0 0.0
        %610 = vmatpush1.msra.mxu0 0.0
        %611 = vmatprep.subr.mxu0 0.0
        %612 = vmatpush1.msra.mxu0 0.0
        %613 = vmatprep.subr.mxu0 0.0
        %614 = vmatpush1.msra.mxu0 0.0
        %615 = vmatprep.subr.mxu0 0.0
        %616 = vmatpush1.msra.mxu0 0.0
        %617 = vmatprep.subr.mxu0 0.0
        %618 = vmatpush1.msra.mxu0 0.0
        %619 = vmatprep.subr.mxu0 0.0
        %620 = vmatpush1.msra.mxu0 0.0
        %621 = vmatprep.subr.mxu0 0.0
        %622 = vmatpush1.msra.mxu0 0.0
        %623 = vmatprep.subr.mxu0 0.0
        %624 = vmatpush1.msra.mxu0 0.0
        %625 = vmatprep.subr.mxu0 0.0
        %626 = vmatpush1.msra.mxu0 0.0
        %627 = vmatprep.subr.mxu0 0.0
        %628 = vmatpush1.msra.mxu0 0.0
        %629 = vmatprep.subr.mxu0 0.0
        %630 = vmatpush1.msra.mxu0 0.0
        %631 = vmatprep.subr.mxu0 0.0
        %632 = vmatpush1.msra.mxu0 0.0
        %633 = vmatprep.subr.mxu0 0.0
        %634 = vmatpush1.msra.mxu0 0.0
        %635 = vmatprep.subr.mxu0 0.0
        %636 = vmatpush1.msra.mxu0 0.0
        %637 = vmatprep.subr.mxu0 0.0
        %638 = vmatpush1.msra.mxu0 0.0
        %639 = vmatprep.subr.mxu0 0.0
        %640 = vmatpush1.msra.mxu0 0.0
        %641 = vmatprep.subr.mxu0 0.0
        %642 = vmatpush1.msra.mxu0 0.0
        %643 = vmatprep.subr.mxu0 0.0
        %644 = vmatpush1.msra.mxu0 0.0
        %645 = vmatprep.subr.mxu0 0.0
        %646 = vmatpush1.msra.mxu0 0.0
        %647 = vmatprep.subr.mxu0 0.0
        %648 = vmatpush1.msra.mxu0 0.0
        %649 = vmatprep.subr.mxu0 0.0
        %650 = vmatpush1.msra.mxu0 0.0
        %651 = vmatprep.subr.mxu0 0.0
        %652 = vmatpush1.msra.mxu0 0.0
        %653 = vmatprep.mubr.f32.mxu0 0.0
        %654 = vmatmul.mubr.f32.gmra.mrb[0].mxu0 %v428
        %v655 = vpop.f32.mrb[0].mxu0
        %v656 = vadd.f32 0.0, %v655
        %v657 = vpop.f32.mrb[0].mxu0
        %v658 = vadd.f32 0.0, %v657
        %659 = vdwg.mxu0
        %660 = vmatprep.subr.mxu0 %v445
        %661 = vmatpush1.msra.mxu0 %v443
        %662 = vmatprep.subr.mxu0 0.0
        %663 = vmatpush1.msra.mxu0 0.0
        %664 = vmatprep.subr.mxu0 0.0
        %665 = vmatpush1.msra.mxu0 0.0
        %666 = vmatprep.subr.mxu0 0.0
        %667 = vmatpush1.msra.mxu0 0.0
        %668 = vmatprep.subr.mxu0 0.0
        %669 = vmatpush1.msra.mxu0 0.0
        %670 = vmatprep.subr.mxu0 0.0
        %671 = vmatpush1.msra.mxu0 0.0
        %672 = vmatprep.subr.mxu0 0.0
        %673 = vmatpush1.msra.mxu0 0.0
        %674 = vmatprep.subr.mxu0 0.0
        %675 = vmatpush1.msra.mxu0 0.0
        %676 = vmatprep.subr.mxu0 0.0
        %677 = vmatpush1.msra.mxu0 0.0
        %678 = vmatprep.subr.mxu0 0.0
        %679 = vmatpush1.msra.mxu0 0.0
        %680 = vmatprep.subr.mxu0 0.0
        %681 = vmatpush1.msra.mxu0 0.0
        %682 = vmatprep.subr.mxu0 0.0
        %683 = vmatpush1.msra.mxu0 0.0
        %684 = vmatprep.subr.mxu0 0.0
        %685 = vmatpush1.msra.mxu0 0.0
        %686 = vmatprep.subr.mxu0 0.0
        %687 = vmatpush1.msra.mxu0 0.0
        %688 = vmatprep.subr.mxu0 0.0
        %689 = vmatpush1.msra.mxu0 0.0
        %690 = vmatprep.subr.mxu0 0.0
        %691 = vmatpush1.msra.mxu0 0.0
        %692 = vmatprep.subr.mxu0 0.0
        %693 = vmatpush1.msra.mxu0 0.0
        %694 = vmatprep.subr.mxu0 0.0
        %695 = vmatpush1.msra.mxu0 0.0
        %696 = vmatprep.subr.mxu0 0.0
        %697 = vmatpush1.msra.mxu0 0.0
        %698 = vmatprep.subr.mxu0 0.0
        %699 = vmatpush1.msra.mxu0 0.0
        %700 = vmatprep.subr.mxu0 0.0
        %701 = vmatpush1.msra.mxu0 0.0
        %702 = vmatprep.subr.mxu0 0.0
        %703 = vmatpush1.msra.mxu0 0.0
        %704 = vmatprep.subr.mxu0 0.0
        %705 = vmatpush1.msra.mxu0 0.0
        %706 = vmatprep.subr.mxu0 0.0
        %707 = vmatpush1.msra.mxu0 0.0
        %708 = vmatprep.subr.mxu0 0.0
        %709 = vmatpush1.msra.mxu0 0.0
        %710 = vmatprep.subr.mxu0 0.0
        %711 = vmatpush1.msra.mxu0 0.0
        %712 = vmatprep.subr.mxu0 0.0
        %713 = vmatpush1.msra.mxu0 0.0
        %714 = vmatprep.subr.mxu0 0.0
        %715 = vmatpush1.msra.mxu0 0.0
        %716 = vmatprep.subr.mxu0 0.0
        %717 = vmatpush1.msra.mxu0 0.0
        %718 = vmatprep.subr.mxu0 0.0
        %719 = vmatpush1.msra.mxu0 0.0
        %720 = vmatprep.subr.mxu0 0.0
        %721 = vmatpush1.msra.mxu0 0.0
        %722 = vmatprep.subr.mxu0 0.0
        %723 = vmatpush1.msra.mxu0 0.0
        %724 = vmatprep.mubr.f32.mxu0 0.0
        %725 = vmatmul.mubr.f32.gmra.mrb[0].mxu0 %v428
        %v726 = vpop.f32.mrb[0].mxu0
        %v727 = vadd.f32 0.0, %v726
        %v728 = vpop.f32.mrb[0].mxu0
        %v729 = vadd.f32 0.0, %v728
        %730 = vdwg.mxu0
        %v731 = vmax.f32 %v514, 0.0
        %v732 = vmax.f32 %v516, 0.0
        %v733 = vmax.f32 %v585, 0.0
        %v734 = vmax.f32 %v587, 0.0
        %v735 = vmax.f32 %v656, 0.0
        %v736 = vmax.f32 %v658, 0.0
        %v737 = vmax.f32 %v727, 0.0
        %v738 = vmax.f32 %v729, 0.0
        %739 = vst [vmem:[#allocation2 + $0x28] sm:$0xff] %v731
        %740 = vst [vmem:[#allocation2 + $0x30] sm:$0xff] %v732
        %741 = vst [vmem:[#allocation2 + $0x38] sm:$0xff] %v733
        %742 = vst [vmem:[#allocation2 + $0x40] sm:$0xff] %v734
        %743 = vst [vmem:[#allocation2 + $0x48] sm:$0xff] %v735
        %744 = vst [vmem:[#allocation2 + $0x50] sm:$0xff] %v736
        %745 = vst [vmem:[#allocation2 + $0x58] sm:$0xff] %v737
        %746 = vst [vmem:[#allocation2 + $0x60] sm:$0xff] %v738
        %v747 = vld [vmem:[#allocation2 + $0x18] sm:$0xff]
        %v748 = vld [vmem:[#allocation2 + $0x20] sm:$0xff]
        %v749 = vld [vmem:[#allocation2 + $0x28] sm:$0xff]
        %v750 = vld [vmem:[#allocation2 + $0x30] sm:$0xff]
        %v751 = vld [vmem:[#allocation2 + $0x38] sm:$0xff]
        %v752 = vld [vmem:[#allocation2 + $0x40] sm:$0xff]
        %v753 = vld [vmem:[#allocation2 + $0x48] sm:$0xff]
        %v754 = vld [vmem:[#allocation2 + $0x50] sm:$0xff]
        %v755 = vld [vmem:[#allocation2 + $0x58] sm:$0xff]
        %765 = vrot.lane.b32.xlu0 %v747, 4
        %v766 = vpop.permute.xlu0 %765
        %767 = vrot.lane.b32.xlu0 %v748, 4
        %v768 = vpop.permute.xlu0 %767
        %769 = vrot.lane.b32.xlu0 %v749, 4
        %v770 = vpop.permute.xlu0 %769
        %771 = vrot.lane.b32.xlu0 %v750, 4
        %v772 = vpop.permute.xlu0 %771
        %773 = vrot.lane.b32.xlu0 %v751, 4
        %v774 = vpop.permute.xlu0 %773
        %775 = vrot.lane.b32.xlu0 %v752, 4
        %v776 = vpop.permute.xlu0 %775
        %777 = vrot.lane.b32.xlu0 %v753, 4
        %v778 = vpop.permute.xlu0 %777
        %779 = vrot.lane.b32.xlu0 %v754, 4
        %v780 = vpop.permute.xlu0 %779
        %781 = vrot.lane.b32.xlu0 %v755, 4
        %v782 = vpop.permute.xlu0 %781
        %v783 = vsel %vm426, %v766, %v768
        %v784 = vsel %vm426, %v768, %v770
        %v785 = vsel %vm426, %v770, %v772
        %v786 = vsel %vm426, %v772, %v774
        %v787 = vsel %vm426, %v774, %v776
        %v788 = vsel %vm426, %v776, %v778
        %v789 = vsel %vm426, %v778, %v780
        %v790 = vsel %vm426, %v780, %v782
        %v799 = vsel %vm366, %v783, 0.0
        %v800 = vsel %vm367, %v784, 0.0
        %v801 = vsel %vm368, %v785, 0.0
        %v802 = vsel %vm369, %v786, 0.0
        %v803 = vsel %vm370, %v787, 0.0
        %v804 = vsel %vm371, %v788, 0.0
        %v805 = vsel %vm372, %v789, 0.0
        %v806 = vsel %vm373, %v790, 0.0
        %vm807 = vcmask 64512
        %v809 = vsel %vm807, %v235, 0
        %811 = vmatprep.subr.mxu0 %v749
        %812 = vmatpush1.msra.mxu0 %v748
        %813 = vmatprep.subr.mxu0 0.0
        %814 = vmatpush1.msra.mxu0 0.0
        %815 = vmatprep.subr.mxu0 0.0
        %816 = vmatpush1.msra.mxu0 0.0
        %817 = vmatprep.subr.mxu0 0.0
        %818 = vmatpush1.msra.mxu0 0.0
        %819 = vmatprep.subr.mxu0 0.0
        %820 = vmatpush1.msra.mxu0 0.0
        %821 = vmatprep.subr.mxu0 0.0
        %822 = vmatpush1.msra.mxu0 0.0
        %823 = vmatprep.subr.mxu0 0.0
        %824 = vmatpush1.msra.mxu0 0.0
        %825 = vmatprep.subr.mxu0 0.0
        %826 = vmatpush1.msra.mxu0 0.0
        %827 = vmatprep.subr.mxu0 0.0
        %828 = vmatpush1.msra.mxu0 0.0
        %829 = vmatprep.subr.mxu0 0.0
        %830 = vmatpush1.msra.mxu0 0.0
        %831 = vmatprep.subr.mxu0 0.0
        %832 = vmatpush1.msra.mxu0 0.0
        %833 = vmatprep.subr.mxu0 0.0
        %834 = vmatpush1.msra.mxu0 0.0
        %835 = vmatprep.subr.mxu0 0.0
        %836 = vmatpush1.msra.mxu0 0.0
        %837 = vmatprep.subr.mxu0 0.0
        %838 = vmatpush1.msra.mxu0 0.0
        %839 = vmatprep.subr.mxu0 0.0
        %840 = vmatpush1.msra.mxu0 0.0
        %841 = vmatprep.subr.mxu0 0.0
        %842 = vmatpush1.msra.mxu0 0.0
        %843 = vmatprep.subr.mxu0 0.0
        %844 = vmatpush1.msra.mxu0 0.0
        %845 = vmatprep.subr.mxu0 0.0
        %846 = vmatpush1.msra.mxu0 0.0
        %847 = vmatprep.subr.mxu0 0.0
        %848 = vmatpush1.msra.mxu0 0.0
        %849 = vmatprep.subr.mxu0 0.0
        %850 = vmatpush1.msra.mxu0 0.0
        %851 = vmatprep.subr.mxu0 0.0
        %852 = vmatpush1.msra.mxu0 0.0
        %853 = vmatprep.subr.mxu0 0.0
        %854 = vmatpush1.msra.mxu0 0.0
        %855 = vmatprep.subr.mxu0 0.0
        %856 = vmatpush1.msra.mxu0 0.0
        %857 = vmatprep.subr.mxu0 0.0
        %858 = vmatpush1.msra.mxu0 0.0
        %859 = vmatprep.subr.mxu0 0.0
        %860 = vmatpush1.msra.mxu0 0.0
        %861 = vmatprep.subr.mxu0 0.0
        %862 = vmatpush1.msra.mxu0 0.0
        %863 = vmatprep.subr.mxu0 0.0
        %864 = vmatpush1.msra.mxu0 0.0
        %865 = vmatprep.subr.mxu0 0.0
        %866 = vmatpush1.msra.mxu0 0.0
        %867 = vmatprep.subr.mxu0 0.0
        %868 = vmatpush1.msra.mxu0 0.0
        %869 = vmatprep.subr.mxu0 0.0
        %870 = vmatpush1.msra.mxu0 0.0
        %871 = vmatprep.subr.mxu0 0.0
        %872 = vmatpush1.msra.mxu0 0.0
        %873 = vmatprep.subr.mxu0 0.0
        %874 = vmatpush1.msra.mxu0 0.0
        %875 = vmatprep.mubr.f32.mxu0 0.0
        %876 = vmatmul.mubr.f32.gmra.mrb[0].mxu0 %v809
        %v877 = vpop.f32.mrb[0].mxu0
        %v878 = vadd.f32 0.0, %v877
        %v879 = vpop.f32.mrb[0].mxu0
        %v880 = vadd.f32 0.0, %v879
        %881 = vdwg.mxu0
        %882 = vmatprep.subr.mxu0 %v751
        %883 = vmatpush1.msra.mxu0 %v750
        %884 = vmatprep.subr.mxu0 0.0
        %885 = vmatpush1.msra.mxu0 0.0
        %886 = vmatprep.subr.mxu0 0.0
        %887 = vmatpush1.msra.mxu0 0.0
        %888 = vmatprep.subr.mxu0 0.0
        %889 = vmatpush1.msra.mxu0 0.0
        %890 = vmatprep.subr.mxu0 0.0
        %891 = vmatpush1.msra.mxu0 0.0
        %892 = vmatprep.subr.mxu0 0.0
        %893 = vmatpush1.msra.mxu0 0.0
        %894 = vmatprep.subr.mxu0 0.0
        %895 = vmatpush1.msra.mxu0 0.0
        %896 = vmatprep.subr.mxu0 0.0
        %897 = vmatpush1.msra.mxu0 0.0
        %898 = vmatprep.subr.mxu0 0.0
        %899 = vmatpush1.msra.mxu0 0.0
        %900 = vmatprep.subr.mxu0 0.0
        %901 = vmatpush1.msra.mxu0 0.0
        %902 = vmatprep.subr.mxu0 0.0
        %903 = vmatpush1.msra.mxu0 0.0
        %904 = vmatprep.subr.mxu0 0.0
        %905 = vmatpush1.msra.mxu0 0.0
        %906 = vmatprep.subr.mxu0 0.0
        %907 = vmatpush1.msra.mxu0 0.0
        %908 = vmatprep.subr.mxu0 0.0
        %909 = vmatpush1.msra.mxu0 0.0
        %910 = vmatprep.subr.mxu0 0.0
        %911 = vmatpush1.msra.mxu0 0.0
        %912 = vmatprep.subr.mxu0 0.0
        %913 = vmatpush1.msra.mxu0 0.0
        %914 = vmatprep.subr.mxu0 0.0
        %915 = vmatpush1.msra.mxu0 0.0
        %916 = vmatprep.subr.mxu0 0.0
        %917 = vmatpush1.msra.mxu0 0.0
        %918 = vmatprep.subr.mxu0 0.0
        %919 = vmatpush1.msra.mxu0 0.0
        %920 = vmatprep.subr.mxu0 0.0
        %921 = vmatpush1.msra.mxu0 0.0
        %922 = vmatprep.subr.mxu0 0.0
        %923 = vmatpush1.msra.mxu0 0.0
        %924 = vmatprep.subr.mxu0 0.0
        %925 = vmatpush1.msra.mxu0 0.0
        %926 = vmatprep.subr.mxu0 0.0
        %927 = vmatpush1.msra.mxu0 0.0
        %928 = vmatprep.subr.mxu0 0.0
        %929 = vmatpush1.msra.mxu0 0.0
        %930 = vmatprep.subr.mxu0 0.0
        %931 = vmatpush1.msra.mxu0 0.0
        %932 = vmatprep.subr.mxu0 0.0
        %933 = vmatpush1.msra.mxu0 0.0
        %934 = vmatprep.subr.mxu0 0.0
        %935 = vmatpush1.msra.mxu0 0.0
        %936 = vmatprep.subr.mxu0 0.0
        %937 = vmatpush1.msra.mxu0 0.0
        %938 = vmatprep.subr.mxu0 0.0
        %939 = vmatpush1.msra.mxu0 0.0
        %940 = vmatprep.subr.mxu0 0.0
        %941 = vmatpush1.msra.mxu0 0.0
        %942 = vmatprep.subr.mxu0 0.0
        %943 = vmatpush1.msra.mxu0 0.0
        %944 = vmatprep.subr.mxu0 0.0
        %945 = vmatpush1.msra.mxu0 0.0
        %946 = vmatprep.mubr.f32.mxu0 0.0
        %947 = vmatmul.mubr.f32.gmra.mrb[0].mxu0 %v809
        %v948 = vpop.f32.mrb[0].mxu0
        %v949 = vadd.f32 0.0, %v948
        %v950 = vpop.f32.mrb[0].mxu0
        %v951 = vadd.f32 0.0, %v950
        %952 = vdwg.mxu0
        %953 = vmatprep.subr.mxu0 %v753
        %954 = vmatpush1.msra.mxu0 %v752
        %955 = vmatprep.subr.mxu0 0.0
        %956 = vmatpush1.msra.mxu0 0.0
        %957 = vmatprep.subr.mxu0 0.0
        %958 = vmatpush1.msra.mxu0 0.0
        %959 = vmatprep.subr.mxu0 0.0
        %960 = vmatpush1.msra.mxu0 0.0
        %961 = vmatprep.subr.mxu0 0.0
        %962 = vmatpush1.msra.mxu0 0.0
        %963 = vmatprep.subr.mxu0 0.0
        %964 = vmatpush1.msra.mxu0 0.0
        %965 = vmatprep.subr.mxu0 0.0
        %966 = vmatpush1.msra.mxu0 0.0
        %967 = vmatprep.subr.mxu0 0.0
        %968 = vmatpush1.msra.mxu0 0.0
        %969 = vmatprep.subr.mxu0 0.0
        %970 = vmatpush1.msra.mxu0 0.0
        %971 = vmatprep.subr.mxu0 0.0
        %972 = vmatpush1.msra.mxu0 0.0
        %973 = vmatprep.subr.mxu0 0.0
        %974 = vmatpush1.msra.mxu0 0.0
        %975 = vmatprep.subr.mxu0 0.0
        %976 = vmatpush1.msra.mxu0 0.0
        %977 = vmatprep.subr.mxu0 0.0
        %978 = vmatpush1.msra.mxu0 0.0
        %979 = vmatprep.subr.mxu0 0.0
        %980 = vmatpush1.msra.mxu0 0.0
        %981 = vmatprep.subr.mxu0 0.0
        %982 = vmatpush1.msra.mxu0 0.0
        %983 = vmatprep.subr.mxu0 0.0
        %984 = vmatpush1.msra.mxu0 0.0
        %985 = vmatprep.subr.mxu0 0.0
        %986 = vmatpush1.msra.mxu0 0.0
        %987 = vmatprep.subr.mxu0 0.0
        %988 = vmatpush1.msra.mxu0 0.0
        %989 = vmatprep.subr.mxu0 0.0
        %990 = vmatpush1.msra.mxu0 0.0
        %991 = vmatprep.subr.mxu0 0.0
        %992 = vmatpush1.msra.mxu0 0.0
        %993 = vmatprep.subr.mxu0 0.0
        %994 = vmatpush1.msra.mxu0 0.0
        %995 = vmatprep.subr.mxu0 0.0
        %996 = vmatpush1.msra.mxu0 0.0
        %997 = vmatprep.subr.mxu0 0.0
        %998 = vmatpush1.msra.mxu0 0.0
        %999 = vmatprep.subr.mxu0 0.0
        %1000 = vmatpush1.msra.mxu0 0.0
        %1001 = vmatprep.subr.mxu0 0.0
        %1002 = vmatpush1.msra.mxu0 0.0
        %1003 = vmatprep.subr.mxu0 0.0
        %1004 = vmatpush1.msra.mxu0 0.0
        %1005 = vmatprep.subr.mxu0 0.0
        %1006 = vmatpush1.msra.mxu0 0.0
        %1007 = vmatprep.subr.mxu0 0.0
        %1008 = vmatpush1.msra.mxu0 0.0
        %1009 = vmatprep.subr.mxu0 0.0
        %1010 = vmatpush1.msra.mxu0 0.0
        %1011 = vmatprep.subr.mxu0 0.0
        %1012 = vmatpush1.msra.mxu0 0.0
        %1013 = vmatprep.subr.mxu0 0.0
        %1014 = vmatpush1.msra.mxu0 0.0
        %1015 = vmatprep.subr.mxu0 0.0
        %1016 = vmatpush1.msra.mxu0 0.0
        %1017 = vmatprep.mubr.f32.mxu0 0.0
        %1018 = vmatmul.mubr.f32.gmra.mrb[0].mxu0 %v809
        %v1019 = vpop.f32.mrb[0].mxu0
        %v1020 = vadd.f32 0.0, %v1019
        %v1021 = vpop.f32.mrb[0].mxu0
        %v1022 = vadd.f32 0.0, %v1021
        %1023 = vdwg.mxu0
        %1024 = vmatprep.subr.mxu0 %v755
        %1025 = vmatpush1.msra.mxu0 %v754
        %1026 = vmatprep.subr.mxu0 0.0
        %1027 = vmatpush1.msra.mxu0 0.0
        %1028 = vmatprep.subr.mxu0 0.0
        %1029 = vmatpush1.msra.mxu0 0.0
        %1030 = vmatprep.subr.mxu0 0.0
        %1031 = vmatpush1.msra.mxu0 0.0
        %1032 = vmatprep.subr.mxu0 0.0
        %1033 = vmatpush1.msra.mxu0 0.0
        %1034 = vmatprep.subr.mxu0 0.0
        %1035 = vmatpush1.msra.mxu0 0.0
        %1036 = vmatprep.subr.mxu0 0.0
        %1037 = vmatpush1.msra.mxu0 0.0
        %1038 = vmatprep.subr.mxu0 0.0
        %1039 = vmatpush1.msra.mxu0 0.0
        %1040 = vmatprep.subr.mxu0 0.0
        %1041 = vmatpush1.msra.mxu0 0.0
        %1042 = vmatprep.subr.mxu0 0.0
        %1043 = vmatpush1.msra.mxu0 0.0
        %1044 = vmatprep.subr.mxu0 0.0
        %1045 = vmatpush1.msra.mxu0 0.0
        %1046 = vmatprep.subr.mxu0 0.0
        %1047 = vmatpush1.msra.mxu0 0.0
        %1048 = vmatprep.subr.mxu0 0.0
        %1049 = vmatpush1.msra.mxu0 0.0
        %1050 = vmatprep.subr.mxu0 0.0
        %1051 = vmatpush1.msra.mxu0 0.0
        %1052 = vmatprep.subr.mxu0 0.0
        %1053 = vmatpush1.msra.mxu0 0.0
        %1054 = vmatprep.subr.mxu0 0.0
        %1055 = vmatpush1.msra.mxu0 0.0
        %1056 = vmatprep.subr.mxu0 0.0
        %1057 = vmatpush1.msra.mxu0 0.0
        %1058 = vmatprep.subr.mxu0 0.0
        %1059 = vmatpush1.msra.mxu0 0.0
        %1060 = vmatprep.subr.mxu0 0.0
        %1061 = vmatpush1.msra.mxu0 0.0
        %1062 = vmatprep.subr.mxu0 0.0
        %1063 = vmatpush1.msra.mxu0 0.0
        %1064 = vmatprep.subr.mxu0 0.0
        %1065 = vmatpush1.msra.mxu0 0.0
        %1066 = vmatprep.subr.mxu0 0.0
        %1067 = vmatpush1.msra.mxu0 0.0
        %1068 = vmatprep.subr.mxu0 0.0
        %1069 = vmatpush1.msra.mxu0 0.0
        %1070 = vmatprep.subr.mxu0 0.0
        %1071 = vmatpush1.msra.mxu0 0.0
        %1072 = vmatprep.subr.mxu0 0.0
        %1073 = vmatpush1.msra.mxu0 0.0
        %1074 = vmatprep.subr.mxu0 0.0
        %1075 = vmatpush1.msra.mxu0 0.0
        %1076 = vmatprep.subr.mxu0 0.0
        %1077 = vmatpush1.msra.mxu0 0.0
        %1078 = vmatprep.subr.mxu0 0.0
        %1079 = vmatpush1.msra.mxu0 0.0
        %1080 = vmatprep.subr.mxu0 0.0
        %1081 = vmatpush1.msra.mxu0 0.0
        %1082 = vmatprep.subr.mxu0 0.0
        %1083 = vmatpush1.msra.mxu0 0.0
        %1084 = vmatprep.subr.mxu0 0.0
        %1085 = vmatpush1.msra.mxu0 0.0
        %1086 = vmatprep.subr.mxu0 0.0
        %1087 = vmatpush1.msra.mxu0 0.0
        %1088 = vmatprep.mubr.f32.mxu0 0.0
        %1089 = vmatmul.mubr.f32.gmra.mrb[0].mxu0 %v809
        %v1090 = vpop.f32.mrb[0].mxu0
        %v1091 = vadd.f32 0.0, %v1090
        %v1092 = vpop.f32.mrb[0].mxu0
        %v1093 = vadd.f32 0.0, %v1092
        %1094 = vdwg.mxu0
        %v1096 = vsel %vm807, %v234, 0
        %1098 = vmatprep.subr.mxu0 %v800
        %1099 = vmatpush1.msra.mxu0 %v799
        %1100 = vmatprep.subr.mxu0 0.0
        %1101 = vmatpush1.msra.mxu0 0.0
        %1102 = vmatprep.subr.mxu0 0.0
        %1103 = vmatpush1.msra.mxu0 0.0
        %1104 = vmatprep.subr.mxu0 0.0
        %1105 = vmatpush1.msra.mxu0 0.0
        %1106 = vmatprep.subr.mxu0 0.0
        %1107 = vmatpush1.msra.mxu0 0.0
        %1108 = vmatprep.subr.mxu0 0.0
        %1109 = vmatpush1.msra.mxu0 0.0
        %1110 = vmatprep.subr.mxu0 0.0
        %1111 = vmatpush1.msra.mxu0 0.0
        %1112 = vmatprep.subr.mxu0 0.0
        %1113 = vmatpush1.msra.mxu0 0.0
        %1114 = vmatprep.subr.mxu0 0.0
        %1115 = vmatpush1.msra.mxu0 0.0
        %1116 = vmatprep.subr.mxu0 0.0
        %1117 = vmatpush1.msra.mxu0 0.0
        %1118 = vmatprep.subr.mxu0 0.0
        %1119 = vmatpush1.msra.mxu0 0.0
        %1120 = vmatprep.subr.mxu0 0.0
        %1121 = vmatpush1.msra.mxu0 0.0
        %1122 = vmatprep.subr.mxu0 0.0
        %1123 = vmatpush1.msra.mxu0 0.0
        %1124 = vmatprep.subr.mxu0 0.0
        %1125 = vmatpush1.msra.mxu0 0.0
        %1126 = vmatprep.subr.mxu0 0.0
        %1127 = vmatpush1.msra.mxu0 0.0
        %1128 = vmatprep.subr.mxu0 0.0
        %1129 = vmatpush1.msra.mxu0 0.0
        %1130 = vmatprep.subr.mxu0 0.0
        %1131 = vmatpush1.msra.mxu0 0.0
        %1132 = vmatprep.subr.mxu0 0.0
        %1133 = vmatpush1.msra.mxu0 0.0
        %1134 = vmatprep.subr.mxu0 0.0
        %1135 = vmatpush1.msra.mxu0 0.0
        %1136 = vmatprep.subr.mxu0 0.0
        %1137 = vmatpush1.msra.mxu0 0.0
        %1138 = vmatprep.subr.mxu0 0.0
        %1139 = vmatpush1.msra.mxu0 0.0
        %1140 = vmatprep.subr.mxu0 0.0
        %1141 = vmatpush1.msra.mxu0 0.0
        %1142 = vmatprep.subr.mxu0 0.0
        %1143 = vmatpush1.msra.mxu0 0.0
        %1144 = vmatprep.subr.mxu0 0.0
        %1145 = vmatpush1.msra.mxu0 0.0
        %1146 = vmatprep.subr.mxu0 0.0
        %1147 = vmatpush1.msra.mxu0 0.0
        %1148 = vmatprep.subr.mxu0 0.0
        %1149 = vmatpush1.msra.mxu0 0.0
        %1150 = vmatprep.subr.mxu0 0.0
        %1151 = vmatpush1.msra.mxu0 0.0
        %1152 = vmatprep.subr.mxu0 0.0
        %1153 = vmatpush1.msra.mxu0 0.0
        %1154 = vmatprep.subr.mxu0 0.0
        %1155 = vmatpush1.msra.mxu0 0.0
        %1156 = vmatprep.subr.mxu0 0.0
        %1157 = vmatpush1.msra.mxu0 0.0
        %1158 = vmatprep.subr.mxu0 0.0
        %1159 = vmatpush1.msra.mxu0 0.0
        %1160 = vmatprep.subr.mxu0 0.0
        %1161 = vmatpush1.msra.mxu0 0.0
        %1162 = vmatprep.mubr.f32.mxu0 0.0
        %1163 = vmatmul.mubr.f32.gmra.mrb[0].mxu0 %v1096
        %v1164 = vpop.f32.mrb[0].mxu0
        %v1165 = vadd.f32 %v878, %v1164
        %v1166 = vpop.f32.mrb[0].mxu0
        %v1167 = vadd.f32 %v880, %v1166
        %1168 = vdwg.mxu0
        %1169 = vmatprep.subr.mxu0 %v802
        %1170 = vmatpush1.msra.mxu0 %v801
        %1171 = vmatprep.subr.mxu0 0.0
        %1172 = vmatpush1.msra.mxu0 0.0
        %1173 = vmatprep.subr.mxu0 0.0
        %1174 = vmatpush1.msra.mxu0 0.0
        %1175 = vmatprep.subr.mxu0 0.0
        %1176 = vmatpush1.msra.mxu0 0.0
        %1177 = vmatprep.subr.mxu0 0.0
        %1178 = vmatpush1.msra.mxu0 0.0
        %1179 = vmatprep.subr.mxu0 0.0
        %1180 = vmatpush1.msra.mxu0 0.0
        %1181 = vmatprep.subr.mxu0 0.0
        %1182 = vmatpush1.msra.mxu0 0.0
        %1183 = vmatprep.subr.mxu0 0.0
        %1184 = vmatpush1.msra.mxu0 0.0
        %1185 = vmatprep.subr.mxu0 0.0
        %1186 = vmatpush1.msra.mxu0 0.0
        %1187 = vmatprep.subr.mxu0 0.0
        %1188 = vmatpush1.msra.mxu0 0.0
        %1189 = vmatprep.subr.mxu0 0.0
        %1190 = vmatpush1.msra.mxu0 0.0
        %1191 = vmatprep.subr.mxu0 0.0
        %1192 = vmatpush1.msra.mxu0 0.0
        %1193 = vmatprep.subr.mxu0 0.0
        %1194 = vmatpush1.msra.mxu0 0.0
        %1195 = vmatprep.subr.mxu0 0.0
        %1196 = vmatpush1.msra.mxu0 0.0
        %1197 = vmatprep.subr.mxu0 0.0
        %1198 = vmatpush1.msra.mxu0 0.0
        %1199 = vmatprep.subr.mxu0 0.0
        %1200 = vmatpush1.msra.mxu0 0.0
        %1201 = vmatprep.subr.mxu0 0.0
        %1202 = vmatpush1.msra.mxu0 0.0
        %1203 = vmatprep.subr.mxu0 0.0
        %1204 = vmatpush1.msra.mxu0 0.0
        %1205 = vmatprep.subr.mxu0 0.0
        %1206 = vmatpush1.msra.mxu0 0.0
        %1207 = vmatprep.subr.mxu0 0.0
        %1208 = vmatpush1.msra.mxu0 0.0
        %1209 = vmatprep.subr.mxu0 0.0
        %1210 = vmatpush1.msra.mxu0 0.0
        %1211 = vmatprep.subr.mxu0 0.0
        %1212 = vmatpush1.msra.mxu0 0.0
        %1213 = vmatprep.subr.mxu0 0.0
        %1214 = vmatpush1.msra.mxu0 0.0
        %1215 = vmatprep.subr.mxu0 0.0
        %1216 = vmatpush1.msra.mxu0 0.0
        %1217 = vmatprep.subr.mxu0 0.0
        %1218 = vmatpush1.msra.mxu0 0.0
        %1219 = vmatprep.subr.mxu0 0.0
        %1220 = vmatpush1.msra.mxu0 0.0
        %1221 = vmatprep.subr.mxu0 0.0
        %1222 = vmatpush1.msra.mxu0 0.0
        %1223 = vmatprep.subr.mxu0 0.0
        %1224 = vmatpush1.msra.mxu0 0.0
        %1225 = vmatprep.subr.mxu0 0.0
        %1226 = vmatpush1.msra.mxu0 0.0
        %1227 = vmatprep.subr.mxu0 0.0
        %1228 = vmatpush1.msra.mxu0 0.0
        %1229 = vmatprep.subr.mxu0 0.0
        %1230 = vmatpush1.msra.mxu0 0.0
        %1231 = vmatprep.subr.mxu0 0.0
        %1232 = vmatpush1.msra.mxu0 0.0
        %1233 = vmatprep.mubr.f32.mxu0 0.0
        %1234 = vmatmul.mubr.f32.gmra.mrb[0].mxu0 %v1096
        %v1235 = vpop.f32.mrb[0].mxu0
        %v1236 = vadd.f32 %v949, %v1235
        %v1237 = vpop.f32.mrb[0].mxu0
        %v1238 = vadd.f32 %v951, %v1237
        %1239 = vdwg.mxu0
        %1240 = vmatprep.subr.mxu0 %v804
        %1241 = vmatpush1.msra.mxu0 %v803
        %1242 = vmatprep.subr.mxu0 0.0
        %1243 = vmatpush1.msra.mxu0 0.0
        %1244 = vmatprep.subr.mxu0 0.0
        %1245 = vmatpush1.msra.mxu0 0.0
        %1246 = vmatprep.subr.mxu0 0.0
        %1247 = vmatpush1.msra.mxu0 0.0
        %1248 = vmatprep.subr.mxu0 0.0
        %1249 = vmatpush1.msra.mxu0 0.0
        %1250 = vmatprep.subr.mxu0 0.0
        %1251 = vmatpush1.msra.mxu0 0.0
        %1252 = vmatprep.subr.mxu0 0.0
        %1253 = vmatpush1.msra.mxu0 0.0
        %1254 = vmatprep.subr.mxu0 0.0
        %1255 = vmatpush1.msra.mxu0 0.0
        %1256 = vmatprep.subr.mxu0 0.0
        %1257 = vmatpush1.msra.mxu0 0.0
        %1258 = vmatprep.subr.mxu0 0.0
        %1259 = vmatpush1.msra.mxu0 0.0
        %1260 = vmatprep.subr.mxu0 0.0
        %1261 = vmatpush1.msra.mxu0 0.0
        %1262 = vmatprep.subr.mxu0 0.0
        %1263 = vmatpush1.msra.mxu0 0.0
        %1264 = vmatprep.subr.mxu0 0.0
        %1265 = vmatpush1.msra.mxu0 0.0
        %1266 = vmatprep.subr.mxu0 0.0
        %1267 = vmatpush1.msra.mxu0 0.0
        %1268 = vmatprep.subr.mxu0 0.0
        %1269 = vmatpush1.msra.mxu0 0.0
        %1270 = vmatprep.subr.mxu0 0.0
        %1271 = vmatpush1.msra.mxu0 0.0
        %1272 = vmatprep.subr.mxu0 0.0
        %1273 = vmatpush1.msra.mxu0 0.0
        %1274 = vmatprep.subr.mxu0 0.0
        %1275 = vmatpush1.msra.mxu0 0.0
        %1276 = vmatprep.subr.mxu0 0.0
        %1277 = vmatpush1.msra.mxu0 0.0
        %1278 = vmatprep.subr.mxu0 0.0
        %1279 = vmatpush1.msra.mxu0 0.0
        %1280 = vmatprep.subr.mxu0 0.0
        %1281 = vmatpush1.msra.mxu0 0.0
        %1282 = vmatprep.subr.mxu0 0.0
        %1283 = vmatpush1.msra.mxu0 0.0
        %1284 = vmatprep.subr.mxu0 0.0
        %1285 = vmatpush1.msra.mxu0 0.0
        %1286 = vmatprep.subr.mxu0 0.0
        %1287 = vmatpush1.msra.mxu0 0.0
        %1288 = vmatprep.subr.mxu0 0.0
        %1289 = vmatpush1.msra.mxu0 0.0
        %1290 = vmatprep.subr.mxu0 0.0
        %1291 = vmatpush1.msra.mxu0 0.0
        %1292 = vmatprep.subr.mxu0 0.0
        %1293 = vmatpush1.msra.mxu0 0.0
        %1294 = vmatprep.subr.mxu0 0.0
        %1295 = vmatpush1.msra.mxu0 0.0
        %1296 = vmatprep.subr.mxu0 0.0
        %1297 = vmatpush1.msra.mxu0 0.0
        %1298 = vmatprep.subr.mxu0 0.0
        %1299 = vmatpush1.msra.mxu0 0.0
        %1300 = vmatprep.subr.mxu0 0.0
        %1301 = vmatpush1.msra.mxu0 0.0
        %1302 = vmatprep.subr.mxu0 0.0
        %1303 = vmatpush1.msra.mxu0 0.0
        %1304 = vmatprep.mubr.f32.mxu0 0.0
        %1305 = vmatmul.mubr.f32.gmra.mrb[0].mxu0 %v1096
        %v1306 = vpop.f32.mrb[0].mxu0
        %v1307 = vadd.f32 %v1020, %v1306
        %v1308 = vpop.f32.mrb[0].mxu0
        %v1309 = vadd.f32 %v1022, %v1308
        %1310 = vdwg.mxu0
        %1311 = vmatprep.subr.mxu0 %v806
        %1312 = vmatpush1.msra.mxu0 %v805
        %1313 = vmatprep.subr.mxu0 0.0
        %1314 = vmatpush1.msra.mxu0 0.0
        %1315 = vmatprep.subr.mxu0 0.0
        %1316 = vmatpush1.msra.mxu0 0.0
        %1317 = vmatprep.subr.mxu0 0.0
        %1318 = vmatpush1.msra.mxu0 0.0
        %1319 = vmatprep.subr.mxu0 0.0
        %1320 = vmatpush1.msra.mxu0 0.0
        %1321 = vmatprep.subr.mxu0 0.0
        %1322 = vmatpush1.msra.mxu0 0.0
        %1323 = vmatprep.subr.mxu0 0.0
        %1324 = vmatpush1.msra.mxu0 0.0
        %1325 = vmatprep.subr.mxu0 0.0
        %1326 = vmatpush1.msra.mxu0 0.0
        %1327 = vmatprep.subr.mxu0 0.0
        %1328 = vmatpush1.msra.mxu0 0.0
        %1329 = vmatprep.subr.mxu0 0.0
        %1330 = vmatpush1.msra.mxu0 0.0
        %1331 = vmatprep.subr.mxu0 0.0
        %1332 = vmatpush1.msra.mxu0 0.0
        %1333 = vmatprep.subr.mxu0 0.0
        %1334 = vmatpush1.msra.mxu0 0.0
        %1335 = vmatprep.subr.mxu0 0.0
        %1336 = vmatpush1.msra.mxu0 0.0
        %1337 = vmatprep.subr.mxu0 0.0
        %1338 = vmatpush1.msra.mxu0 0.0
        %1339 = vmatprep.subr.mxu0 0.0
        %1340 = vmatpush1.msra.mxu0 0.0
        %1341 = vmatprep.subr.mxu0 0.0
        %1342 = vmatpush1.msra.mxu0 0.0
        %1343 = vmatprep.subr.mxu0 0.0
        %1344 = vmatpush1.msra.mxu0 0.0
        %1345 = vmatprep.subr.mxu0 0.0
        %1346 = vmatpush1.msra.mxu0 0.0
        %1347 = vmatprep.subr.mxu0 0.0
        %1348 = vmatpush1.msra.mxu0 0.0
        %1349 = vmatprep.subr.mxu0 0.0
        %1350 = vmatpush1.msra.mxu0 0.0
        %1351 = vmatprep.subr.mxu0 0.0
        %1352 = vmatpush1.msra.mxu0 0.0
        %1353 = vmatprep.subr.mxu0 0.0
        %1354 = vmatpush1.msra.mxu0 0.0
        %1355 = vmatprep.subr.mxu0 0.0
        %1356 = vmatpush1.msra.mxu0 0.0
        %1357 = vmatprep.subr.mxu0 0.0
        %1358 = vmatpush1.msra.mxu0 0.0
        %1359 = vmatprep.subr.mxu0 0.0
        %1360 = vmatpush1.msra.mxu0 0.0
        %1361 = vmatprep.subr.mxu0 0.0
        %1362 = vmatpush1.msra.mxu0 0.0
        %1363 = vmatprep.subr.mxu0 0.0
        %1364 = vmatpush1.msra.mxu0 0.0
        %1365 = vmatprep.subr.mxu0 0.0
        %1366 = vmatpush1.msra.mxu0 0.0
        %1367 = vmatprep.subr.mxu0 0.0
        %1368 = vmatpush1.msra.mxu0 0.0
        %1369 = vmatprep.subr.mxu0 0.0
        %1370 = vmatpush1.msra.mxu0 0.0
        %1371 = vmatprep.subr.mxu0 0.0
        %1372 = vmatpush1.msra.mxu0 0.0
        %1373 = vmatprep.subr.mxu0 0.0
        %1374 = vmatpush1.msra.mxu0 0.0
        %1375 = vmatprep.mubr.f32.mxu0 0.0
        %1376 = vmatmul.mubr.f32.gmra.mrb[0].mxu0 %v1096
        %v1377 = vpop.f32.mrb[0].mxu0
        %v1378 = vadd.f32 %v1091, %v1377
        %v1379 = vpop.f32.mrb[0].mxu0
        %v1380 = vadd.f32 %v1093, %v1379
        %1381 = vdwg.mxu0
        %v1382 = vld [vmem:[#allocation2 + $0x20] sm:$0xff]
        %v1383 = vld [vmem:[#allocation2 + $0x28] sm:$0xff]
        %v1384 = vld [vmem:[#allocation2 + $0x30] sm:$0xff]
        %v1385 = vld [vmem:[#allocation2 + $0x38] sm:$0xff]
        %v1386 = vld [vmem:[#allocation2 + $0x40] sm:$0xff]
        %v1387 = vld [vmem:[#allocation2 + $0x48] sm:$0xff]
        %v1388 = vld [vmem:[#allocation2 + $0x50] sm:$0xff]
        %v1389 = vld [vmem:[#allocation2 + $0x58] sm:$0xff]
        %v1390 = vld [vmem:[#allocation2 + $0x60] sm:$0xff]
        %1400 = vrot.lane.b32.xlu0 %v1382, 124
        %v1401 = vpop.permute.xlu0 %1400
        %1402 = vrot.lane.b32.xlu0 %v1383, 124
        %v1403 = vpop.permute.xlu0 %1402
        %1404 = vrot.lane.b32.xlu0 %v1384, 124
        %v1405 = vpop.permute.xlu0 %1404
        %1406 = vrot.lane.b32.xlu0 %v1385, 124
        %v1407 = vpop.permute.xlu0 %1406
        %1408 = vrot.lane.b32.xlu0 %v1386, 124
        %v1409 = vpop.permute.xlu0 %1408
        %1410 = vrot.lane.b32.xlu0 %v1387, 124
        %v1411 = vpop.permute.xlu0 %1410
        %1412 = vrot.lane.b32.xlu0 %v1388, 124
        %v1413 = vpop.permute.xlu0 %1412
        %1414 = vrot.lane.b32.xlu0 %v1389, 124
        %v1415 = vpop.permute.xlu0 %1414
        %1416 = vrot.lane.b32.xlu0 %v1390, 124
        %v1417 = vpop.permute.xlu0 %1416
        %vm1418 = vcmask 1014784
        %v1419 = vsel %vm1418, %v1401, %v1403
        %v1420 = vsel %vm1418, %v1403, %v1405
        %v1421 = vsel %vm1418, %v1405, %v1407
        %v1422 = vsel %vm1418, %v1407, %v1409
        %v1423 = vsel %vm1418, %v1409, %v1411
        %v1424 = vsel %vm1418, %v1411, %v1413
        %v1425 = vsel %vm1418, %v1413, %v1415
        %v1426 = vsel %vm1418, %v1415, %v1417
        %v1435 = vsel %vm374, %v1419, 0.0
        %v1436 = vsel %vm375, %v1420, 0.0
        %v1437 = vsel %vm376, %v1421, 0.0
        %v1438 = vsel %vm377, %v1422, 0.0
        %v1439 = vsel %vm378, %v1423, 0.0
        %v1440 = vsel %vm379, %v1424, 0.0
        %v1441 = vsel %vm380, %v1425, 0.0
        %v1442 = vsel %vm381, %v1426, 0.0
        %v1444 = vsel %vm807, %v236, 0
        %1446 = vmatprep.subr.mxu0 %v1436
        %1447 = vmatpush1.msra.mxu0 %v1435
        %1448 = vmatprep.subr.mxu0 0.0
        %1449 = vmatpush1.msra.mxu0 0.0
        %1450 = vmatprep.subr.mxu0 0.0
        %1451 = vmatpush1.msra.mxu0 0.0
        %1452 = vmatprep.subr.mxu0 0.0
        %1453 = vmatpush1.msra.mxu0 0.0
        %1454 = vmatprep.subr.mxu0 0.0
        %1455 = vmatpush1.msra.mxu0 0.0
        %1456 = vmatprep.subr.mxu0 0.0
        %1457 = vmatpush1.msra.mxu0 0.0
        %1458 = vmatprep.subr.mxu0 0.0
        %1459 = vmatpush1.msra.mxu0 0.0
        %1460 = vmatprep.subr.mxu0 0.0
        %1461 = vmatpush1.msra.mxu0 0.0
        %1462 = vmatprep.subr.mxu0 0.0
        %1463 = vmatpush1.msra.mxu0 0.0
        %1464 = vmatprep.subr.mxu0 0.0
        %1465 = vmatpush1.msra.mxu0 0.0
        %1466 = vmatprep.subr.mxu0 0.0
        %1467 = vmatpush1.msra.mxu0 0.0
        %1468 = vmatprep.subr.mxu0 0.0
        %1469 = vmatpush1.msra.mxu0 0.0
        %1470 = vmatprep.subr.mxu0 0.0
        %1471 = vmatpush1.msra.mxu0 0.0
        %1472 = vmatprep.subr.mxu0 0.0
        %1473 = vmatpush1.msra.mxu0 0.0
        %1474 = vmatprep.subr.mxu0 0.0
        %1475 = vmatpush1.msra.mxu0 0.0
        %1476 = vmatprep.subr.mxu0 0.0
        %1477 = vmatpush1.msra.mxu0 0.0
        %1478 = vmatprep.subr.mxu0 0.0
        %1479 = vmatpush1.msra.mxu0 0.0
        %1480 = vmatprep.subr.mxu0 0.0
        %1481 = vmatpush1.msra.mxu0 0.0
        %1482 = vmatprep.subr.mxu0 0.0
        %1483 = vmatpush1.msra.mxu0 0.0
        %1484 = vmatprep.subr.mxu0 0.0
        %1485 = vmatpush1.msra.mxu0 0.0
        %1486 = vmatprep.subr.mxu0 0.0
        %1487 = vmatpush1.msra.mxu0 0.0
        %1488 = vmatprep.subr.mxu0 0.0
        %1489 = vmatpush1.msra.mxu0 0.0
        %1490 = vmatprep.subr.mxu0 0.0
        %1491 = vmatpush1.msra.mxu0 0.0
        %1492 = vmatprep.subr.mxu0 0.0
        %1493 = vmatpush1.msra.mxu0 0.0
        %1494 = vmatprep.subr.mxu0 0.0
        %1495 = vmatpush1.msra.mxu0 0.0
        %1496 = vmatprep.subr.mxu0 0.0
        %1497 = vmatpush1.msra.mxu0 0.0
        %1498 = vmatprep.subr.mxu0 0.0
        %1499 = vmatpush1.msra.mxu0 0.0
        %1500 = vmatprep.subr.mxu0 0.0
        %1501 = vmatpush1.msra.mxu0 0.0
        %1502 = vmatprep.subr.mxu0 0.0
        %1503 = vmatpush1.msra.mxu0 0.0
        %1504 = vmatprep.subr.mxu0 0.0
        %1505 = vmatpush1.msra.mxu0 0.0
        %1506 = vmatprep.subr.mxu0 0.0
        %1507 = vmatpush1.msra.mxu0 0.0
        %1508 = vmatprep.subr.mxu0 0.0
        %1509 = vmatpush1.msra.mxu0 0.0
        %1510 = vmatprep.mubr.f32.mxu0 0.0
        %1511 = vmatmul.mubr.f32.gmra.mrb[0].mxu0 %v1444
        %v1512 = vpop.f32.mrb[0].mxu0
        %v1513 = vadd.f32 0.0, %v1512
        %v1514 = vpop.f32.mrb[0].mxu0
        %v1515 = vadd.f32 0.0, %v1514
        %1516 = vdwg.mxu0
        %1517 = vmatprep.subr.mxu0 %v1438
        %1518 = vmatpush1.msra.mxu0 %v1437
        %1519 = vmatprep.subr.mxu0 0.0
        %1520 = vmatpush1.msra.mxu0 0.0
        %1521 = vmatprep.subr.mxu0 0.0
        %1522 = vmatpush1.msra.mxu0 0.0
        %1523 = vmatprep.subr.mxu0 0.0
        %1524 = vmatpush1.msra.mxu0 0.0
        %1525 = vmatprep.subr.mxu0 0.0
        %1526 = vmatpush1.msra.mxu0 0.0
        %1527 = vmatprep.subr.mxu0 0.0
        %1528 = vmatpush1.msra.mxu0 0.0
        %1529 = vmatprep.subr.mxu0 0.0
        %1530 = vmatpush1.msra.mxu0 0.0
        %1531 = vmatprep.subr.mxu0 0.0
        %1532 = vmatpush1.msra.mxu0 0.0
        %1533 = vmatprep.subr.mxu0 0.0
        %1534 = vmatpush1.msra.mxu0 0.0
        %1535 = vmatprep.subr.mxu0 0.0
        %1536 = vmatpush1.msra.mxu0 0.0
        %1537 = vmatprep.subr.mxu0 0.0
        %1538 = vmatpush1.msra.mxu0 0.0
        %1539 = vmatprep.subr.mxu0 0.0
        %1540 = vmatpush1.msra.mxu0 0.0
        %1541 = vmatprep.subr.mxu0 0.0
        %1542 = vmatpush1.msra.mxu0 0.0
        %1543 = vmatprep.subr.mxu0 0.0
        %1544 = vmatpush1.msra.mxu0 0.0
        %1545 = vmatprep.subr.mxu0 0.0
        %1546 = vmatpush1.msra.mxu0 0.0
        %1547 = vmatprep.subr.mxu0 0.0
        %1548 = vmatpush1.msra.mxu0 0.0
        %1549 = vmatprep.subr.mxu0 0.0
        %1550 = vmatpush1.msra.mxu0 0.0
        %1551 = vmatprep.subr.mxu0 0.0
        %1552 = vmatpush1.msra.mxu0 0.0
        %1553 = vmatprep.subr.mxu0 0.0
        %1554 = vmatpush1.msra.mxu0 0.0
        %1555 = vmatprep.subr.mxu0 0.0
        %1556 = vmatpush1.msra.mxu0 0.0
        %1557 = vmatprep.subr.mxu0 0.0
        %1558 = vmatpush1.msra.mxu0 0.0
        %1559 = vmatprep.subr.mxu0 0.0
        %1560 = vmatpush1.msra.mxu0 0.0
        %1561 = vmatprep.subr.mxu0 0.0
        %1562 = vmatpush1.msra.mxu0 0.0
        %1563 = vmatprep.subr.mxu0 0.0
        %1564 = vmatpush1.msra.mxu0 0.0
        %1565 = vmatprep.subr.mxu0 0.0
        %1566 = vmatpush1.msra.mxu0 0.0
        %1567 = vmatprep.subr.mxu0 0.0
        %1568 = vmatpush1.msra.mxu0 0.0
        %1569 = vmatprep.subr.mxu0 0.0
        %1570 = vmatpush1.msra.mxu0 0.0
        %1571 = vmatprep.subr.mxu0 0.0
        %1572 = vmatpush1.msra.mxu0 0.0
        %1573 = vmatprep.subr.mxu0 0.0
        %1574 = vmatpush1.msra.mxu0 0.0
        %1575 = vmatprep.subr.mxu0 0.0
        %1576 = vmatpush1.msra.mxu0 0.0
        %1577 = vmatprep.subr.mxu0 0.0
        %1578 = vmatpush1.msra.mxu0 0.0
        %1579 = vmatprep.subr.mxu0 0.0
        %1580 = vmatpush1.msra.mxu0 0.0
        %1581 = vmatprep.mubr.f32.mxu0 0.0
        %1582 = vmatmul.mubr.f32.gmra.mrb[0].mxu0 %v1444
        %v1583 = vpop.f32.mrb[0].mxu0
        %v1584 = vadd.f32 0.0, %v1583
        %v1585 = vpop.f32.mrb[0].mxu0
        %v1586 = vadd.f32 0.0, %v1585
        %1587 = vdwg.mxu0
        %1588 = vmatprep.subr.mxu0 %v1440
        %1589 = vmatpush1.msra.mxu0 %v1439
        %1590 = vmatprep.subr.mxu0 0.0
        %1591 = vmatpush1.msra.mxu0 0.0
        %1592 = vmatprep.subr.mxu0 0.0
        %1593 = vmatpush1.msra.mxu0 0.0
        %1594 = vmatprep.subr.mxu0 0.0
        %1595 = vmatpush1.msra.mxu0 0.0
        %1596 = vmatprep.subr.mxu0 0.0
        %1597 = vmatpush1.msra.mxu0 0.0
        %1598 = vmatprep.subr.mxu0 0.0
        %1599 = vmatpush1.msra.mxu0 0.0
        %1600 = vmatprep.subr.mxu0 0.0
        %1601 = vmatpush1.msra.mxu0 0.0
        %1602 = vmatprep.subr.mxu0 0.0
        %1603 = vmatpush1.msra.mxu0 0.0
        %1604 = vmatprep.subr.mxu0 0.0
        %1605 = vmatpush1.msra.mxu0 0.0
        %1606 = vmatprep.subr.mxu0 0.0
        %1607 = vmatpush1.msra.mxu0 0.0
        %1608 = vmatprep.subr.mxu0 0.0
        %1609 = vmatpush1.msra.mxu0 0.0
        %1610 = vmatprep.subr.mxu0 0.0
        %1611 = vmatpush1.msra.mxu0 0.0
        %1612 = vmatprep.subr.mxu0 0.0
        %1613 = vmatpush1.msra.mxu0 0.0
        %1614 = vmatprep.subr.mxu0 0.0
        %1615 = vmatpush1.msra.mxu0 0.0
        %1616 = vmatprep.subr.mxu0 0.0
        %1617 = vmatpush1.msra.mxu0 0.0
        %1618 = vmatprep.subr.mxu0 0.0
        %1619 = vmatpush1.msra.mxu0 0.0
        %1620 = vmatprep.subr.mxu0 0.0
        %1621 = vmatpush1.msra.mxu0 0.0
        %1622 = vmatprep.subr.mxu0 0.0
        %1623 = vmatpush1.msra.mxu0 0.0
        %1624 = vmatprep.subr.mxu0 0.0
        %1625 = vmatpush1.msra.mxu0 0.0
        %1626 = vmatprep.subr.mxu0 0.0
        %1627 = vmatpush1.msra.mxu0 0.0
        %1628 = vmatprep.subr.mxu0 0.0
        %1629 = vmatpush1.msra.mxu0 0.0
        %1630 = vmatprep.subr.mxu0 0.0
        %1631 = vmatpush1.msra.mxu0 0.0
        %1632 = vmatprep.subr.mxu0 0.0
        %1633 = vmatpush1.msra.mxu0 0.0
        %1634 = vmatprep.subr.mxu0 0.0
        %1635 = vmatpush1.msra.mxu0 0.0
        %1636 = vmatprep.subr.mxu0 0.0
        %1637 = vmatpush1.msra.mxu0 0.0
        %1638 = vmatprep.subr.mxu0 0.0
        %1639 = vmatpush1.msra.mxu0 0.0
        %1640 = vmatprep.subr.mxu0 0.0
        %1641 = vmatpush1.msra.mxu0 0.0
        %1642 = vmatprep.subr.mxu0 0.0
        %1643 = vmatpush1.msra.mxu0 0.0
        %1644 = vmatprep.subr.mxu0 0.0
        %1645 = vmatpush1.msra.mxu0 0.0
        %1646 = vmatprep.subr.mxu0 0.0
        %1647 = vmatpush1.msra.mxu0 0.0
        %1648 = vmatprep.subr.mxu0 0.0
        %1649 = vmatpush1.msra.mxu0 0.0
        %1650 = vmatprep.subr.mxu0 0.0
        %1651 = vmatpush1.msra.mxu0 0.0
        %1652 = vmatprep.mubr.f32.mxu0 0.0
        %1653 = vmatmul.mubr.f32.gmra.mrb[0].mxu0 %v1444
        %v1654 = vpop.f32.mrb[0].mxu0
        %v1655 = vadd.f32 0.0, %v1654
        %v1656 = vpop.f32.mrb[0].mxu0
        %v1657 = vadd.f32 0.0, %v1656
        %1658 = vdwg.mxu0
        %1659 = vmatprep.subr.mxu0 %v1442
        %1660 = vmatpush1.msra.mxu0 %v1441
        %1661 = vmatprep.subr.mxu0 0.0
        %1662 = vmatpush1.msra.mxu0 0.0
        %1663 = vmatprep.subr.mxu0 0.0
        %1664 = vmatpush1.msra.mxu0 0.0
        %1665 = vmatprep.subr.mxu0 0.0
        %1666 = vmatpush1.msra.mxu0 0.0
        %1667 = vmatprep.subr.mxu0 0.0
        %1668 = vmatpush1.msra.mxu0 0.0
        %1669 = vmatprep.subr.mxu0 0.0
        %1670 = vmatpush1.msra.mxu0 0.0
        %1671 = vmatprep.subr.mxu0 0.0
        %1672 = vmatpush1.msra.mxu0 0.0
        %1673 = vmatprep.subr.mxu0 0.0
        %1674 = vmatpush1.msra.mxu0 0.0
        %1675 = vmatprep.subr.mxu0 0.0
        %1676 = vmatpush1.msra.mxu0 0.0
        %1677 = vmatprep.subr.mxu0 0.0
        %1678 = vmatpush1.msra.mxu0 0.0
        %1679 = vmatprep.subr.mxu0 0.0
        %1680 = vmatpush1.msra.mxu0 0.0
        %1681 = vmatprep.subr.mxu0 0.0
        %1682 = vmatpush1.msra.mxu0 0.0
        %1683 = vmatprep.subr.mxu0 0.0
        %1684 = vmatpush1.msra.mxu0 0.0
        %1685 = vmatprep.subr.mxu0 0.0
        %1686 = vmatpush1.msra.mxu0 0.0
        %1687 = vmatprep.subr.mxu0 0.0
        %1688 = vmatpush1.msra.mxu0 0.0
        %1689 = vmatprep.subr.mxu0 0.0
        %1690 = vmatpush1.msra.mxu0 0.0
        %1691 = vmatprep.subr.mxu0 0.0
        %1692 = vmatpush1.msra.mxu0 0.0
        %1693 = vmatprep.subr.mxu0 0.0
        %1694 = vmatpush1.msra.mxu0 0.0
        %1695 = vmatprep.subr.mxu0 0.0
        %1696 = vmatpush1.msra.mxu0 0.0
        %1697 = vmatprep.subr.mxu0 0.0
        %1698 = vmatpush1.msra.mxu0 0.0
        %1699 = vmatprep.subr.mxu0 0.0
        %1700 = vmatpush1.msra.mxu0 0.0
        %1701 = vmatprep.subr.mxu0 0.0
        %1702 = vmatpush1.msra.mxu0 0.0
        %1703 = vmatprep.subr.mxu0 0.0
        %1704 = vmatpush1.msra.mxu0 0.0
        %1705 = vmatprep.subr.mxu0 0.0
        %1706 = vmatpush1.msra.mxu0 0.0
        %1707 = vmatprep.subr.mxu0 0.0
        %1708 = vmatpush1.msra.mxu0 0.0
        %1709 = vmatprep.subr.mxu0 0.0
        %1710 = vmatpush1.msra.mxu0 0.0
        %1711 = vmatprep.subr.mxu0 0.0
        %1712 = vmatpush1.msra.mxu0 0.0
        %1713 = vmatprep.subr.mxu0 0.0
        %1714 = vmatpush1.msra.mxu0 0.0
        %1715 = vmatprep.subr.mxu0 0.0
        %1716 = vmatpush1.msra.mxu0 0.0
        %1717 = vmatprep.subr.mxu0 0.0
        %1718 = vmatpush1.msra.mxu0 0.0
        %1719 = vmatprep.subr.mxu0 0.0
        %1720 = vmatpush1.msra.mxu0 0.0
        %1721 = vmatprep.subr.mxu0 0.0
        %1722 = vmatpush1.msra.mxu0 0.0
        %1723 = vmatprep.mubr.f32.mxu0 0.0
        %1724 = vmatmul.mubr.f32.gmra.mrb[0].mxu0 %v1444
        %v1725 = vpop.f32.mrb[0].mxu0
        %v1726 = vadd.f32 0.0, %v1725
        %v1727 = vpop.f32.mrb[0].mxu0
        %v1728 = vadd.f32 0.0, %v1727
        %1729 = vdwg.mxu0
        %v1730 = vadd.f32 %v1165, %v1513
        %v1731 = vadd.f32 %v1167, %v1515
        %v1732 = vadd.f32 %v1236, %v1584
        %v1733 = vadd.f32 %v1238, %v1586
        %v1734 = vadd.f32 %v1307, %v1655
        %v1735 = vadd.f32 %v1309, %v1657
        %v1736 = vadd.f32 %v1378, %v1726
        %v1737 = vadd.f32 %v1380, %v1728
        %1738 = vrot.lane.b32.xlu0 %v1382, 4
        %v1739 = vpop.permute.xlu0 %1738
        %1740 = vrot.lane.b32.xlu0 %v1383, 4
        %v1741 = vpop.permute.xlu0 %1740
        %1742 = vrot.lane.b32.xlu0 %v1384, 4
        %v1743 = vpop.permute.xlu0 %1742
        %1744 = vrot.lane.b32.xlu0 %v1385, 4
        %v1745 = vpop.permute.xlu0 %1744
        %1746 = vrot.lane.b32.xlu0 %v1386, 4
        %v1747 = vpop.permute.xlu0 %1746
        %1748 = vrot.lane.b32.xlu0 %v1387, 4
        %v1749 = vpop.permute.xlu0 %1748
        %1750 = vrot.lane.b32.xlu0 %v1388, 4
        %v1751 = vpop.permute.xlu0 %1750
        %1752 = vrot.lane.b32.xlu0 %v1389, 4
        %v1753 = vpop.permute.xlu0 %1752
        %1754 = vrot.lane.b32.xlu0 %v1390, 4
        %v1755 = vpop.permute.xlu0 %1754
        %v1756 = vsel %vm426, %v1739, %v1741
        %v1757 = vsel %vm426, %v1741, %v1743
        %v1758 = vsel %vm426, %v1743, %v1745
        %v1759 = vsel %vm426, %v1745, %v1747
        %v1760 = vsel %vm426, %v1747, %v1749
        %v1761 = vsel %vm426, %v1749, %v1751
        %v1762 = vsel %vm426, %v1751, %v1753
        %v1763 = vsel %vm426, %v1753, %v1755
        %v1772 = vsel %vm366, %v1756, 0.0
        %v1773 = vsel %vm367, %v1757, 0.0
        %v1774 = vsel %vm368, %v1758, 0.0
        %v1775 = vsel %vm369, %v1759, 0.0
        %v1776 = vsel %vm370, %v1760, 0.0
        %v1777 = vsel %vm371, %v1761, 0.0
        %v1778 = vsel %vm372, %v1762, 0.0
        %v1779 = vsel %vm373, %v1763, 0.0
        %v1781 = vsel %vm807, %v237, 0
        %1783 = vmatprep.subr.mxu0 %v1773
        %1784 = vmatpush1.msra.mxu0 %v1772
        %1785 = vmatprep.subr.mxu0 0.0
        %1786 = vmatpush1.msra.mxu0 0.0
        %1787 = vmatprep.subr.mxu0 0.0
        %1788 = vmatpush1.msra.mxu0 0.0
        %1789 = vmatprep.subr.mxu0 0.0
        %1790 = vmatpush1.msra.mxu0 0.0
        %1791 = vmatprep.subr.mxu0 0.0
        %1792 = vmatpush1.msra.mxu0 0.0
        %1793 = vmatprep.subr.mxu0 0.0
        %1794 = vmatpush1.msra.mxu0 0.0
        %1795 = vmatprep.subr.mxu0 0.0
        %1796 = vmatpush1.msra.mxu0 0.0
        %1797 = vmatprep.subr.mxu0 0.0
        %1798 = vmatpush1.msra.mxu0 0.0
        %1799 = vmatprep.subr.mxu0 0.0
        %1800 = vmatpush1.msra.mxu0 0.0
        %1801 = vmatprep.subr.mxu0 0.0
        %1802 = vmatpush1.msra.mxu0 0.0
        %1803 = vmatprep.subr.mxu0 0.0
        %1804 = vmatpush1.msra.mxu0 0.0
        %1805 = vmatprep.subr.mxu0 0.0
        %1806 = vmatpush1.msra.mxu0 0.0
        %1807 = vmatprep.subr.mxu0 0.0
        %1808 = vmatpush1.msra.mxu0 0.0
        %1809 = vmatprep.subr.mxu0 0.0
        %1810 = vmatpush1.msra.mxu0 0.0
        %1811 = vmatprep.subr.mxu0 0.0
        %1812 = vmatpush1.msra.mxu0 0.0
        %1813 = vmatprep.subr.mxu0 0.0
        %1814 = vmatpush1.msra.mxu0 0.0
        %1815 = vmatprep.subr.mxu0 0.0
        %1816 = vmatpush1.msra.mxu0 0.0
        %1817 = vmatprep.subr.mxu0 0.0
        %1818 = vmatpush1.msra.mxu0 0.0
        %1819 = vmatprep.subr.mxu0 0.0
        %1820 = vmatpush1.msra.mxu0 0.0
        %1821 = vmatprep.subr.mxu0 0.0
        %1822 = vmatpush1.msra.mxu0 0.0
        %1823 = vmatprep.subr.mxu0 0.0
        %1824 = vmatpush1.msra.mxu0 0.0
        %1825 = vmatprep.subr.mxu0 0.0
        %1826 = vmatpush1.msra.mxu0 0.0
        %1827 = vmatprep.subr.mxu0 0.0
        %1828 = vmatpush1.msra.mxu0 0.0
        %1829 = vmatprep.subr.mxu0 0.0
        %1830 = vmatpush1.msra.mxu0 0.0
        %1831 = vmatprep.subr.mxu0 0.0
        %1832 = vmatpush1.msra.mxu0 0.0
        %1833 = vmatprep.subr.mxu0 0.0
        %1834 = vmatpush1.msra.mxu0 0.0
        %1835 = vmatprep.subr.mxu0 0.0
        %1836 = vmatpush1.msra.mxu0 0.0
        %1837 = vmatprep.subr.mxu0 0.0
        %1838 = vmatpush1.msra.mxu0 0.0
        %1839 = vmatprep.subr.mxu0 0.0
        %1840 = vmatpush1.msra.mxu0 0.0
        %1841 = vmatprep.subr.mxu0 0.0
        %1842 = vmatpush1.msra.mxu0 0.0
        %1843 = vmatprep.subr.mxu0 0.0
        %1844 = vmatpush1.msra.mxu0 0.0
        %1845 = vmatprep.subr.mxu0 0.0
        %1846 = vmatpush1.msra.mxu0 0.0
        %1847 = vmatprep.mubr.f32.mxu0 0.0
        %1848 = vmatmul.mubr.f32.gmra.mrb[0].mxu0 %v1781
        %v1849 = vpop.f32.mrb[0].mxu0
        %v1850 = vadd.f32 0.0, %v1849
        %v1851 = vpop.f32.mrb[0].mxu0
        %v1852 = vadd.f32 0.0, %v1851
        %1853 = vdwg.mxu0
        %1854 = vmatprep.subr.mxu0 %v1775
        %1855 = vmatpush1.msra.mxu0 %v1774
        %1856 = vmatprep.subr.mxu0 0.0
        %1857 = vmatpush1.msra.mxu0 0.0
        %1858 = vmatprep.subr.mxu0 0.0
        %1859 = vmatpush1.msra.mxu0 0.0
        %1860 = vmatprep.subr.mxu0 0.0
        %1861 = vmatpush1.msra.mxu0 0.0
        %1862 = vmatprep.subr.mxu0 0.0
        %1863 = vmatpush1.msra.mxu0 0.0
        %1864 = vmatprep.subr.mxu0 0.0
        %1865 = vmatpush1.msra.mxu0 0.0
        %1866 = vmatprep.subr.mxu0 0.0
        %1867 = vmatpush1.msra.mxu0 0.0
        %1868 = vmatprep.subr.mxu0 0.0
        %1869 = vmatpush1.msra.mxu0 0.0
        %1870 = vmatprep.subr.mxu0 0.0
        %1871 = vmatpush1.msra.mxu0 0.0
        %1872 = vmatprep.subr.mxu0 0.0
        %1873 = vmatpush1.msra.mxu0 0.0
        %1874 = vmatprep.subr.mxu0 0.0
        %1875 = vmatpush1.msra.mxu0 0.0
        %1876 = vmatprep.subr.mxu0 0.0
        %1877 = vmatpush1.msra.mxu0 0.0
        %1878 = vmatprep.subr.mxu0 0.0
        %1879 = vmatpush1.msra.mxu0 0.0
        %1880 = vmatprep.subr.mxu0 0.0
        %1881 = vmatpush1.msra.mxu0 0.0
        %1882 = vmatprep.subr.mxu0 0.0
        %1883 = vmatpush1.msra.mxu0 0.0
        %1884 = vmatprep.subr.mxu0 0.0
        %1885 = vmatpush1.msra.mxu0 0.0
        %1886 = vmatprep.subr.mxu0 0.0
        %1887 = vmatpush1.msra.mxu0 0.0
        %1888 = vmatprep.subr.mxu0 0.0
        %1889 = vmatpush1.msra.mxu0 0.0
        %1890 = vmatprep.subr.mxu0 0.0
        %1891 = vmatpush1.msra.mxu0 0.0
        %1892 = vmatprep.subr.mxu0 0.0
        %1893 = vmatpush1.msra.mxu0 0.0
        %1894 = vmatprep.subr.mxu0 0.0
        %1895 = vmatpush1.msra.mxu0 0.0
        %1896 = vmatprep.subr.mxu0 0.0
        %1897 = vmatpush1.msra.mxu0 0.0
        %1898 = vmatprep.subr.mxu0 0.0
        %1899 = vmatpush1.msra.mxu0 0.0
        %1900 = vmatprep.subr.mxu0 0.0
        %1901 = vmatpush1.msra.mxu0 0.0
        %1902 = vmatprep.subr.mxu0 0.0
        %1903 = vmatpush1.msra.mxu0 0.0
        %1904 = vmatprep.subr.mxu0 0.0
        %1905 = vmatpush1.msra.mxu0 0.0
        %1906 = vmatprep.subr.mxu0 0.0
        %1907 = vmatpush1.msra.mxu0 0.0
        %1908 = vmatprep.subr.mxu0 0.0
        %1909 = vmatpush1.msra.mxu0 0.0
        %1910 = vmatprep.subr.mxu0 0.0
        %1911 = vmatpush1.msra.mxu0 0.0
        %1912 = vmatprep.subr.mxu0 0.0
        %1913 = vmatpush1.msra.mxu0 0.0
        %1914 = vmatprep.subr.mxu0 0.0
        %1915 = vmatpush1.msra.mxu0 0.0
        %1916 = vmatprep.subr.mxu0 0.0
        %1917 = vmatpush1.msra.mxu0 0.0
        %1918 = vmatprep.mubr.f32.mxu0 0.0
        %1919 = vmatmul.mubr.f32.gmra.mrb[0].mxu0 %v1781
        %v1920 = vpop.f32.mrb[0].mxu0
        %v1921 = vadd.f32 0.0, %v1920
        %v1922 = vpop.f32.mrb[0].mxu0
        %v1923 = vadd.f32 0.0, %v1922
        %1924 = vdwg.mxu0
        %1925 = vmatprep.subr.mxu0 %v1777
        %1926 = vmatpush1.msra.mxu0 %v1776
        %1927 = vmatprep.subr.mxu0 0.0
        %1928 = vmatpush1.msra.mxu0 0.0
        %1929 = vmatprep.subr.mxu0 0.0
        %1930 = vmatpush1.msra.mxu0 0.0
        %1931 = vmatprep.subr.mxu0 0.0
        %1932 = vmatpush1.msra.mxu0 0.0
        %1933 = vmatprep.subr.mxu0 0.0
        %1934 = vmatpush1.msra.mxu0 0.0
        %1935 = vmatprep.subr.mxu0 0.0
        %1936 = vmatpush1.msra.mxu0 0.0
        %1937 = vmatprep.subr.mxu0 0.0
        %1938 = vmatpush1.msra.mxu0 0.0
        %1939 = vmatprep.subr.mxu0 0.0
        %1940 = vmatpush1.msra.mxu0 0.0
        %1941 = vmatprep.subr.mxu0 0.0
        %1942 = vmatpush1.msra.mxu0 0.0
        %1943 = vmatprep.subr.mxu0 0.0
        %1944 = vmatpush1.msra.mxu0 0.0
        %1945 = vmatprep.subr.mxu0 0.0
        %1946 = vmatpush1.msra.mxu0 0.0
        %1947 = vmatprep.subr.mxu0 0.0
        %1948 = vmatpush1.msra.mxu0 0.0
        %1949 = vmatprep.subr.mxu0 0.0
        %1950 = vmatpush1.msra.mxu0 0.0
        %1951 = vmatprep.subr.mxu0 0.0
        %1952 = vmatpush1.msra.mxu0 0.0
        %1953 = vmatprep.subr.mxu0 0.0
        %1954 = vmatpush1.msra.mxu0 0.0
        %1955 = vmatprep.subr.mxu0 0.0
        %1956 = vmatpush1.msra.mxu0 0.0
        %1957 = vmatprep.subr.mxu0 0.0
        %1958 = vmatpush1.msra.mxu0 0.0
        %1959 = vmatprep.subr.mxu0 0.0
        %1960 = vmatpush1.msra.mxu0 0.0
        %1961 = vmatprep.subr.mxu0 0.0
        %1962 = vmatpush1.msra.mxu0 0.0
        %1963 = vmatprep.subr.mxu0 0.0
        %1964 = vmatpush1.msra.mxu0 0.0
        %1965 = vmatprep.subr.mxu0 0.0
        %1966 = vmatpush1.msra.mxu0 0.0
        %1967 = vmatprep.subr.mxu0 0.0
        %1968 = vmatpush1.msra.mxu0 0.0
        %1969 = vmatprep.subr.mxu0 0.0
        %1970 = vmatpush1.msra.mxu0 0.0
        %1971 = vmatprep.subr.mxu0 0.0
        %1972 = vmatpush1.msra.mxu0 0.0
        %1973 = vmatprep.subr.mxu0 0.0
        %1974 = vmatpush1.msra.mxu0 0.0
        %1975 = vmatprep.subr.mxu0 0.0
        %1976 = vmatpush1.msra.mxu0 0.0
        %1977 = vmatprep.subr.mxu0 0.0
        %1978 = vmatpush1.msra.mxu0 0.0
        %1979 = vmatprep.subr.mxu0 0.0
        %1980 = vmatpush1.msra.mxu0 0.0
        %1981 = vmatprep.subr.mxu0 0.0
        %1982 = vmatpush1.msra.mxu0 0.0
        %1983 = vmatprep.subr.mxu0 0.0
        %1984 = vmatpush1.msra.mxu0 0.0
        %1985 = vmatprep.subr.mxu0 0.0
        %1986 = vmatpush1.msra.mxu0 0.0
        %1987 = vmatprep.subr.mxu0 0.0
        %1988 = vmatpush1.msra.mxu0 0.0
        %1989 = vmatprep.mubr.f32.mxu0 0.0
        %1990 = vmatmul.mubr.f32.gmra.mrb[0].mxu0 %v1781
        %v1991 = vpop.f32.mrb[0].mxu0
        %v1992 = vadd.f32 0.0, %v1991
        %v1993 = vpop.f32.mrb[0].mxu0
        %v1994 = vadd.f32 0.0, %v1993
        %1995 = vdwg.mxu0
        %1996 = vmatprep.subr.mxu0 %v1779
        %1997 = vmatpush1.msra.mxu0 %v1778
        %1998 = vmatprep.subr.mxu0 0.0
        %1999 = vmatpush1.msra.mxu0 0.0
        %2000 = vmatprep.subr.mxu0 0.0
        %2001 = vmatpush1.msra.mxu0 0.0
        %2002 = vmatprep.subr.mxu0 0.0
        %2003 = vmatpush1.msra.mxu0 0.0
        %2004 = vmatprep.subr.mxu0 0.0
        %2005 = vmatpush1.msra.mxu0 0.0
        %2006 = vmatprep.subr.mxu0 0.0
        %2007 = vmatpush1.msra.mxu0 0.0
        %2008 = vmatprep.subr.mxu0 0.0
        %2009 = vmatpush1.msra.mxu0 0.0
        %2010 = vmatprep.subr.mxu0 0.0
        %2011 = vmatpush1.msra.mxu0 0.0
        %2012 = vmatprep.subr.mxu0 0.0
        %2013 = vmatpush1.msra.mxu0 0.0
        %2014 = vmatprep.subr.mxu0 0.0
        %2015 = vmatpush1.msra.mxu0 0.0
        %2016 = vmatprep.subr.mxu0 0.0
        %2017 = vmatpush1.msra.mxu0 0.0
        %2018 = vmatprep.subr.mxu0 0.0
        %2019 = vmatpush1.msra.mxu0 0.0
        %2020 = vmatprep.subr.mxu0 0.0
        %2021 = vmatpush1.msra.mxu0 0.0
        %2022 = vmatprep.subr.mxu0 0.0
        %2023 = vmatpush1.msra.mxu0 0.0
        %2024 = vmatprep.subr.mxu0 0.0
        %2025 = vmatpush1.msra.mxu0 0.0
        %2026 = vmatprep.subr.mxu0 0.0
        %2027 = vmatpush1.msra.mxu0 0.0
        %2028 = vmatprep.subr.mxu0 0.0
        %2029 = vmatpush1.msra.mxu0 0.0
        %2030 = vmatprep.subr.mxu0 0.0
        %2031 = vmatpush1.msra.mxu0 0.0
        %2032 = vmatprep.subr.mxu0 0.0
        %2033 = vmatpush1.msra.mxu0 0.0
        %2034 = vmatprep.subr.mxu0 0.0
        %2035 = vmatpush1.msra.mxu0 0.0
        %2036 = vmatprep.subr.mxu0 0.0
        %2037 = vmatpush1.msra.mxu0 0.0
        %2038 = vmatprep.subr.mxu0 0.0
        %2039 = vmatpush1.msra.mxu0 0.0
        %2040 = vmatprep.subr.mxu0 0.0
        %2041 = vmatpush1.msra.mxu0 0.0
        %2042 = vmatprep.subr.mxu0 0.0
        %2043 = vmatpush1.msra.mxu0 0.0
        %2044 = vmatprep.subr.mxu0 0.0
        %2045 = vmatpush1.msra.mxu0 0.0
        %2046 = vmatprep.subr.mxu0 0.0
        %2047 = vmatpush1.msra.mxu0 0.0
        %2048 = vmatprep.subr.mxu0 0.0
        %2049 = vmatpush1.msra.mxu0 0.0
        %2050 = vmatprep.subr.mxu0 0.0
        %2051 = vmatpush1.msra.mxu0 0.0
        %2052 = vmatprep.subr.mxu0 0.0
        %2053 = vmatpush1.msra.mxu0 0.0
        %2054 = vmatprep.subr.mxu0 0.0
        %2055 = vmatpush1.msra.mxu0 0.0
        %2056 = vmatprep.subr.mxu0 0.0
        %2057 = vmatpush1.msra.mxu0 0.0
        %2058 = vmatprep.subr.mxu0 0.0
        %2059 = vmatpush1.msra.mxu0 0.0
        %2060 = vmatprep.mubr.f32.mxu0 0.0
        %2061 = vmatmul.mubr.f32.gmra.mrb[0].mxu0 %v1781
        %v2062 = vpop.f32.mrb[0].mxu0
        %v2063 = vadd.f32 0.0, %v2062
        %v2064 = vpop.f32.mrb[0].mxu0
        %v2065 = vadd.f32 0.0, %v2064
        %2066 = vdwg.mxu0
        %v2067 = vadd.f32 %v1730, %v1850
        %v2068 = vadd.f32 %v1731, %v1852
        %v2069 = vadd.f32 %v1732, %v1921
        %v2070 = vadd.f32 %v1733, %v1923
        %v2071 = vadd.f32 %v1734, %v1992
        %v2072 = vadd.f32 %v1735, %v1994
        %v2073 = vadd.f32 %v1736, %v2063
        %v2074 = vadd.f32 %v1737, %v2065
        %v2076 = vsel %vm807, %v238, 0
        %2078 = vmatprep.subr.mxu0 %v1384
        %2079 = vmatpush1.msra.mxu0 %v1383
        %2080 = vmatprep.subr.mxu0 0.0
        %2081 = vmatpush1.msra.mxu0 0.0
        %2082 = vmatprep.subr.mxu0 0.0
        %2083 = vmatpush1.msra.mxu0 0.0
        %2084 = vmatprep.subr.mxu0 0.0
        %2085 = vmatpush1.msra.mxu0 0.0
        %2086 = vmatprep.subr.mxu0 0.0
        %2087 = vmatpush1.msra.mxu0 0.0
        %2088 = vmatprep.subr.mxu0 0.0
        %2089 = vmatpush1.msra.mxu0 0.0
        %2090 = vmatprep.subr.mxu0 0.0
        %2091 = vmatpush1.msra.mxu0 0.0
        %2092 = vmatprep.subr.mxu0 0.0
        %2093 = vmatpush1.msra.mxu0 0.0
        %2094 = vmatprep.subr.mxu0 0.0
        %2095 = vmatpush1.msra.mxu0 0.0
        %2096 = vmatprep.subr.mxu0 0.0
        %2097 = vmatpush1.msra.mxu0 0.0
        %2098 = vmatprep.subr.mxu0 0.0
        %2099 = vmatpush1.msra.mxu0 0.0
        %2100 = vmatprep.subr.mxu0 0.0
        %2101 = vmatpush1.msra.mxu0 0.0
        %2102 = vmatprep.subr.mxu0 0.0
        %2103 = vmatpush1.msra.mxu0 0.0
        %2104 = vmatprep.subr.mxu0 0.0
        %2105 = vmatpush1.msra.mxu0 0.0
        %2106 = vmatprep.subr.mxu0 0.0
        %2107 = vmatpush1.msra.mxu0 0.0
        %2108 = vmatprep.subr.mxu0 0.0
        %2109 = vmatpush1.msra.mxu0 0.0
        %2110 = vmatprep.subr.mxu0 0.0
        %2111 = vmatpush1.msra.mxu0 0.0
        %2112 = vmatprep.subr.mxu0 0.0
        %2113 = vmatpush1.msra.mxu0 0.0
        %2114 = vmatprep.subr.mxu0 0.0
        %2115 = vmatpush1.msra.mxu0 0.0
        %2116 = vmatprep.subr.mxu0 0.0
        %2117 = vmatpush1.msra.mxu0 0.0
        %2118 = vmatprep.subr.mxu0 0.0
        %2119 = vmatpush1.msra.mxu0 0.0
        %2120 = vmatprep.subr.mxu0 0.0
        %2121 = vmatpush1.msra.mxu0 0.0
        %2122 = vmatprep.subr.mxu0 0.0
        %2123 = vmatpush1.msra.mxu0 0.0
        %2124 = vmatprep.subr.mxu0 0.0
        %2125 = vmatpush1.msra.mxu0 0.0
        %2126 = vmatprep.subr.mxu0 0.0
        %2127 = vmatpush1.msra.mxu0 0.0
        %2128 = vmatprep.subr.mxu0 0.0
        %2129 = vmatpush1.msra.mxu0 0.0
        %2130 = vmatprep.subr.mxu0 0.0
        %2131 = vmatpush1.msra.mxu0 0.0
        %2132 = vmatprep.subr.mxu0 0.0
        %2133 = vmatpush1.msra.mxu0 0.0
        %2134 = vmatprep.subr.mxu0 0.0
        %2135 = vmatpush1.msra.mxu0 0.0
        %2136 = vmatprep.subr.mxu0 0.0
        %2137 = vmatpush1.msra.mxu0 0.0
        %2138 = vmatprep.subr.mxu0 0.0
        %2139 = vmatpush1.msra.mxu0 0.0
        %2140 = vmatprep.subr.mxu0 0.0
        %2141 = vmatpush1.msra.mxu0 0.0
        %2142 = vmatprep.mubr.f32.mxu0 0.0
        %2143 = vmatmul.mubr.f32.gmra.mrb[0].mxu0 %v2076
        %v2144 = vpop.f32.mrb[0].mxu0
        %v2145 = vadd.f32 0.0, %v2144
        %v2146 = vpop.f32.mrb[0].mxu0
        %v2147 = vadd.f32 0.0, %v2146
        %2148 = vdwg.mxu0
        %2149 = vmatprep.subr.mxu0 %v1386
        %2150 = vmatpush1.msra.mxu0 %v1385
        %2151 = vmatprep.subr.mxu0 0.0
        %2152 = vmatpush1.msra.mxu0 0.0
        %2153 = vmatprep.subr.mxu0 0.0
        %2154 = vmatpush1.msra.mxu0 0.0
        %2155 = vmatprep.subr.mxu0 0.0
        %2156 = vmatpush1.msra.mxu0 0.0
        %2157 = vmatprep.subr.mxu0 0.0
        %2158 = vmatpush1.msra.mxu0 0.0
        %2159 = vmatprep.subr.mxu0 0.0
        %2160 = vmatpush1.msra.mxu0 0.0
        %2161 = vmatprep.subr.mxu0 0.0
        %2162 = vmatpush1.msra.mxu0 0.0
        %2163 = vmatprep.subr.mxu0 0.0
        %2164 = vmatpush1.msra.mxu0 0.0
        %2165 = vmatprep.subr.mxu0 0.0
        %2166 = vmatpush1.msra.mxu0 0.0
        %2167 = vmatprep.subr.mxu0 0.0
        %2168 = vmatpush1.msra.mxu0 0.0
        %2169 = vmatprep.subr.mxu0 0.0
        %2170 = vmatpush1.msra.mxu0 0.0
        %2171 = vmatprep.subr.mxu0 0.0
        %2172 = vmatpush1.msra.mxu0 0.0
        %2173 = vmatprep.subr.mxu0 0.0
        %2174 = vmatpush1.msra.mxu0 0.0
        %2175 = vmatprep.subr.mxu0 0.0
        %2176 = vmatpush1.msra.mxu0 0.0
        %2177 = vmatprep.subr.mxu0 0.0
        %2178 = vmatpush1.msra.mxu0 0.0
        %2179 = vmatprep.subr.mxu0 0.0
        %2180 = vmatpush1.msra.mxu0 0.0
        %2181 = vmatprep.subr.mxu0 0.0
        %2182 = vmatpush1.msra.mxu0 0.0
        %2183 = vmatprep.subr.mxu0 0.0
        %2184 = vmatpush1.msra.mxu0 0.0
        %2185 = vmatprep.subr.mxu0 0.0
        %2186 = vmatpush1.msra.mxu0 0.0
        %2187 = vmatprep.subr.mxu0 0.0
        %2188 = vmatpush1.msra.mxu0 0.0
        %2189 = vmatprep.subr.mxu0 0.0
        %2190 = vmatpush1.msra.mxu0 0.0
        %2191 = vmatprep.subr.mxu0 0.0
        %2192 = vmatpush1.msra.mxu0 0.0
        %2193 = vmatprep.subr.mxu0 0.0
        %2194 = vmatpush1.msra.mxu0 0.0
        %2195 = vmatprep.subr.mxu0 0.0
        %2196 = vmatpush1.msra.mxu0 0.0
        %2197 = vmatprep.subr.mxu0 0.0
        %2198 = vmatpush1.msra.mxu0 0.0
        %2199 = vmatprep.subr.mxu0 0.0
        %2200 = vmatpush1.msra.mxu0 0.0
        %2201 = vmatprep.subr.mxu0 0.0
        %2202 = vmatpush1.msra.mxu0 0.0
        %2203 = vmatprep.subr.mxu0 0.0
        %2204 = vmatpush1.msra.mxu0 0.0
        %2205 = vmatprep.subr.mxu0 0.0
        %2206 = vmatpush1.msra.mxu0 0.0
        %2207 = vmatprep.subr.mxu0 0.0
        %2208 = vmatpush1.msra.mxu0 0.0
        %2209 = vmatprep.subr.mxu0 0.0
        %2210 = vmatpush1.msra.mxu0 0.0
        %2211 = vmatprep.subr.mxu0 0.0
        %2212 = vmatpush1.msra.mxu0 0.0
        %2213 = vmatprep.mubr.f32.mxu0 0.0
        %2214 = vmatmul.mubr.f32.gmra.mrb[0].mxu0 %v2076
        %v2215 = vpop.f32.mrb[0].mxu0
        %v2216 = vadd.f32 0.0, %v2215
        %v2217 = vpop.f32.mrb[0].mxu0
        %v2218 = vadd.f32 0.0, %v2217
        %2219 = vdwg.mxu0
        %2220 = vmatprep.subr.mxu0 %v1388
        %2221 = vmatpush1.msra.mxu0 %v1387
        %2222 = vmatprep.subr.mxu0 0.0
        %2223 = vmatpush1.msra.mxu0 0.0
        %2224 = vmatprep.subr.mxu0 0.0
        %2225 = vmatpush1.msra.mxu0 0.0
        %2226 = vmatprep.subr.mxu0 0.0
        %2227 = vmatpush1.msra.mxu0 0.0
        %2228 = vmatprep.subr.mxu0 0.0
        %2229 = vmatpush1.msra.mxu0 0.0
        %2230 = vmatprep.subr.mxu0 0.0
        %2231 = vmatpush1.msra.mxu0 0.0
        %2232 = vmatprep.subr.mxu0 0.0
        %2233 = vmatpush1.msra.mxu0 0.0
        %2234 = vmatprep.subr.mxu0 0.0
        %2235 = vmatpush1.msra.mxu0 0.0
        %2236 = vmatprep.subr.mxu0 0.0
        %2237 = vmatpush1.msra.mxu0 0.0
        %2238 = vmatprep.subr.mxu0 0.0
        %2239 = vmatpush1.msra.mxu0 0.0
        %2240 = vmatprep.subr.mxu0 0.0
        %2241 = vmatpush1.msra.mxu0 0.0
        %2242 = vmatprep.subr.mxu0 0.0
        %2243 = vmatpush1.msra.mxu0 0.0
        %2244 = vmatprep.subr.mxu0 0.0
        %2245 = vmatpush1.msra.mxu0 0.0
        %2246 = vmatprep.subr.mxu0 0.0
        %2247 = vmatpush1.msra.mxu0 0.0
        %2248 = vmatprep.subr.mxu0 0.0
        %2249 = vmatpush1.msra.mxu0 0.0
        %2250 = vmatprep.subr.mxu0 0.0
        %2251 = vmatpush1.msra.mxu0 0.0
        %2252 = vmatprep.subr.mxu0 0.0
        %2253 = vmatpush1.msra.mxu0 0.0
        %2254 = vmatprep.subr.mxu0 0.0
        %2255 = vmatpush1.msra.mxu0 0.0
        %2256 = vmatprep.subr.mxu0 0.0
        %2257 = vmatpush1.msra.mxu0 0.0
        %2258 = vmatprep.subr.mxu0 0.0
        %2259 = vmatpush1.msra.mxu0 0.0
        %2260 = vmatprep.subr.mxu0 0.0
        %2261 = vmatpush1.msra.mxu0 0.0
        %2262 = vmatprep.subr.mxu0 0.0
        %2263 = vmatpush1.msra.mxu0 0.0
        %2264 = vmatprep.subr.mxu0 0.0
        %2265 = vmatpush1.msra.mxu0 0.0
        %2266 = vmatprep.subr.mxu0 0.0
        %2267 = vmatpush1.msra.mxu0 0.0
        %2268 = vmatprep.subr.mxu0 0.0
        %2269 = vmatpush1.msra.mxu0 0.0
        %2270 = vmatprep.subr.mxu0 0.0
        %2271 = vmatpush1.msra.mxu0 0.0
        %2272 = vmatprep.subr.mxu0 0.0
        %2273 = vmatpush1.msra.mxu0 0.0
        %2274 = vmatprep.subr.mxu0 0.0
        %2275 = vmatpush1.msra.mxu0 0.0
        %2276 = vmatprep.subr.mxu0 0.0
        %2277 = vmatpush1.msra.mxu0 0.0
        %2278 = vmatprep.subr.mxu0 0.0
        %2279 = vmatpush1.msra.mxu0 0.0
        %2280 = vmatprep.subr.mxu0 0.0
        %2281 = vmatpush1.msra.mxu0 0.0
        %2282 = vmatprep.subr.mxu0 0.0
        %2283 = vmatpush1.msra.mxu0 0.0
        %2284 = vmatprep.mubr.f32.mxu0 0.0
        %2285 = vmatmul.mubr.f32.gmra.mrb[0].mxu0 %v2076
        %v2286 = vpop.f32.mrb[0].mxu0
        %v2287 = vadd.f32 0.0, %v2286
        %v2288 = vpop.f32.mrb[0].mxu0
        %v2289 = vadd.f32 0.0, %v2288
        %2290 = vdwg.mxu0
        %2291 = vmatprep.subr.mxu0 %v1390
        %2292 = vmatpush1.msra.mxu0 %v1389
        %2293 = vmatprep.subr.mxu0 0.0
        %2294 = vmatpush1.msra.mxu0 0.0
        %2295 = vmatprep.subr.mxu0 0.0
        %2296 = vmatpush1.msra.mxu0 0.0
        %2297 = vmatprep.subr.mxu0 0.0
        %2298 = vmatpush1.msra.mxu0 0.0
        %2299 = vmatprep.subr.mxu0 0.0
        %2300 = vmatpush1.msra.mxu0 0.0
        %2301 = vmatprep.subr.mxu0 0.0
        %2302 = vmatpush1.msra.mxu0 0.0
        %2303 = vmatprep.subr.mxu0 0.0
        %2304 = vmatpush1.msra.mxu0 0.0
        %2305 = vmatprep.subr.mxu0 0.0
        %2306 = vmatpush1.msra.mxu0 0.0
        %2307 = vmatprep.subr.mxu0 0.0
        %2308 = vmatpush1.msra.mxu0 0.0
        %2309 = vmatprep.subr.mxu0 0.0
        %2310 = vmatpush1.msra.mxu0 0.0
        %2311 = vmatprep.subr.mxu0 0.0
        %2312 = vmatpush1.msra.mxu0 0.0
        %2313 = vmatprep.subr.mxu0 0.0
        %2314 = vmatpush1.msra.mxu0 0.0
        %2315 = vmatprep.subr.mxu0 0.0
        %2316 = vmatpush1.msra.mxu0 0.0
        %2317 = vmatprep.subr.mxu0 0.0
        %2318 = vmatpush1.msra.mxu0 0.0
        %2319 = vmatprep.subr.mxu0 0.0
        %2320 = vmatpush1.msra.mxu0 0.0
        %2321 = vmatprep.subr.mxu0 0.0
        %2322 = vmatpush1.msra.mxu0 0.0
        %2323 = vmatprep.subr.mxu0 0.0
        %2324 = vmatpush1.msra.mxu0 0.0
        %2325 = vmatprep.subr.mxu0 0.0
        %2326 = vmatpush1.msra.mxu0 0.0
        %2327 = vmatprep.subr.mxu0 0.0
        %2328 = vmatpush1.msra.mxu0 0.0
        %2329 = vmatprep.subr.mxu0 0.0
        %2330 = vmatpush1.msra.mxu0 0.0
        %2331 = vmatprep.subr.mxu0 0.0
        %2332 = vmatpush1.msra.mxu0 0.0
        %2333 = vmatprep.subr.mxu0 0.0
        %2334 = vmatpush1.msra.mxu0 0.0
        %2335 = vmatprep.subr.mxu0 0.0
        %2336 = vmatpush1.msra.mxu0 0.0
        %2337 = vmatprep.subr.mxu0 0.0
        %2338 = vmatpush1.msra.mxu0 0.0
        %2339 = vmatprep.subr.mxu0 0.0
        %2340 = vmatpush1.msra.mxu0 0.0
        %2341 = vmatprep.subr.mxu0 0.0
        %2342 = vmatpush1.msra.mxu0 0.0
        %2343 = vmatprep.subr.mxu0 0.0
        %2344 = vmatpush1.msra.mxu0 0.0
        %2345 = vmatprep.subr.mxu0 0.0
        %2346 = vmatpush1.msra.mxu0 0.0
        %2347 = vmatprep.subr.mxu0 0.0
        %2348 = vmatpush1.msra.mxu0 0.0
        %2349 = vmatprep.subr.mxu0 0.0
        %2350 = vmatpush1.msra.mxu0 0.0
        %2351 = vmatprep.subr.mxu0 0.0
        %2352 = vmatpush1.msra.mxu0 0.0
        %2353 = vmatprep.subr.mxu0 0.0
        %2354 = vmatpush1.msra.mxu0 0.0
        %2355 = vmatprep.mubr.f32.mxu0 0.0
        %2356 = vmatmul.mubr.f32.gmra.mrb[0].mxu0 %v2076
        %v2357 = vpop.f32.mrb[0].mxu0
        %v2358 = vadd.f32 0.0, %v2357
        %v2359 = vpop.f32.mrb[0].mxu0
        %v2360 = vadd.f32 0.0, %v2359
        %2361 = vdwg.mxu0
        %v2362 = vadd.f32 %v2067, %v2145
        %v2363 = vadd.f32 %v2068, %v2147
        %v2364 = vadd.f32 %v2069, %v2216
        %v2365 = vadd.f32 %v2070, %v2218
        %v2366 = vadd.f32 %v2071, %v2287
        %v2367 = vadd.f32 %v2072, %v2289
        %v2368 = vadd.f32 %v2073, %v2358
        %v2369 = vadd.f32 %v2074, %v2360
        %v2370 = vld [vmem:[#allocation2 + $0x28] sm:$0xff]
        %v2371 = vld [vmem:[#allocation2 + $0x30] sm:$0xff]
        %v2372 = vld [vmem:[#allocation2 + $0x38] sm:$0xff]
        %v2373 = vld [vmem:[#allocation2 + $0x40] sm:$0xff]
        %v2374 = vld [vmem:[#allocation2 + $0x48] sm:$0xff]
        %v2375 = vld [vmem:[#allocation2 + $0x50] sm:$0xff]
        %v2376 = vld [vmem:[#allocation2 + $0x58] sm:$0xff]
        %v2377 = vld [vmem:[#allocation2 + $0x60] sm:$0xff]
        %v2378 = vld [vmem:[#allocation2 + $0x68] sm:$0xff]
        %2388 = vrot.lane.b32.xlu0 %v2370, 124
        %v2389 = vpop.permute.xlu0 %2388
        %2390 = vrot.lane.b32.xlu0 %v2371, 124
        %v2391 = vpop.permute.xlu0 %2390
        %2392 = vrot.lane.b32.xlu0 %v2372, 124
        %v2393 = vpop.permute.xlu0 %2392
        %2394 = vrot.lane.b32.xlu0 %v2373, 124
        %v2395 = vpop.permute.xlu0 %2394
        %2396 = vrot.lane.b32.xlu0 %v2374, 124
        %v2397 = vpop.permute.xlu0 %2396
        %2398 = vrot.lane.b32.xlu0 %v2375, 124
        %v2399 = vpop.permute.xlu0 %2398
        %2400 = vrot.lane.b32.xlu0 %v2376, 124
        %v2401 = vpop.permute.xlu0 %2400
        %2402 = vrot.lane.b32.xlu0 %v2377, 124
        %v2403 = vpop.permute.xlu0 %2402
        %2404 = vrot.lane.b32.xlu0 %v2378, 124
        %v2405 = vpop.permute.xlu0 %2404
        %v2406 = vsel %vm1418, %v2389, %v2391
        %v2407 = vsel %vm1418, %v2391, %v2393
        %v2408 = vsel %vm1418, %v2393, %v2395
        %v2409 = vsel %vm1418, %v2395, %v2397
        %v2410 = vsel %vm1418, %v2397, %v2399
        %v2411 = vsel %vm1418, %v2399, %v2401
        %v2412 = vsel %vm1418, %v2401, %v2403
        %v2413 = vsel %vm1418, %v2403, %v2405
        %v2422 = vsel %vm374, %v2406, 0.0
        %v2423 = vsel %vm375, %v2407, 0.0
        %v2424 = vsel %vm376, %v2408, 0.0
        %v2425 = vsel %vm377, %v2409, 0.0
        %v2426 = vsel %vm378, %v2410, 0.0
        %v2427 = vsel %vm379, %v2411, 0.0
        %v2428 = vsel %vm380, %v2412, 0.0
        %v2429 = vsel %vm381, %v2413, 0.0
        %v2431 = vsel %vm807, %v239, 0
        %2433 = vmatprep.subr.mxu0 %v2423
        %2434 = vmatpush1.msra.mxu0 %v2422
        %2435 = vmatprep.subr.mxu0 0.0
        %2436 = vmatpush1.msra.mxu0 0.0
        %2437 = vmatprep.subr.mxu0 0.0
        %2438 = vmatpush1.msra.mxu0 0.0
        %2439 = vmatprep.subr.mxu0 0.0
        %2440 = vmatpush1.msra.mxu0 0.0
        %2441 = vmatprep.subr.mxu0 0.0
        %2442 = vmatpush1.msra.mxu0 0.0
        %2443 = vmatprep.subr.mxu0 0.0
        %2444 = vmatpush1.msra.mxu0 0.0
        %2445 = vmatprep.subr.mxu0 0.0
        %2446 = vmatpush1.msra.mxu0 0.0
        %2447 = vmatprep.subr.mxu0 0.0
        %2448 = vmatpush1.msra.mxu0 0.0
        %2449 = vmatprep.subr.mxu0 0.0
        %2450 = vmatpush1.msra.mxu0 0.0
        %2451 = vmatprep.subr.mxu0 0.0
        %2452 = vmatpush1.msra.mxu0 0.0
        %2453 = vmatprep.subr.mxu0 0.0
        %2454 = vmatpush1.msra.mxu0 0.0
        %2455 = vmatprep.subr.mxu0 0.0
        %2456 = vmatpush1.msra.mxu0 0.0
        %2457 = vmatprep.subr.mxu0 0.0
        %2458 = vmatpush1.msra.mxu0 0.0
        %2459 = vmatprep.subr.mxu0 0.0
        %2460 = vmatpush1.msra.mxu0 0.0
        %2461 = vmatprep.subr.mxu0 0.0
        %2462 = vmatpush1.msra.mxu0 0.0
        %2463 = vmatprep.subr.mxu0 0.0
        %2464 = vmatpush1.msra.mxu0 0.0
        %2465 = vmatprep.subr.mxu0 0.0
        %2466 = vmatpush1.msra.mxu0 0.0
        %2467 = vmatprep.subr.mxu0 0.0
        %2468 = vmatpush1.msra.mxu0 0.0
        %2469 = vmatprep.subr.mxu0 0.0
        %2470 = vmatpush1.msra.mxu0 0.0
        %2471 = vmatprep.subr.mxu0 0.0
        %2472 = vmatpush1.msra.mxu0 0.0
        %2473 = vmatprep.subr.mxu0 0.0
        %2474 = vmatpush1.msra.mxu0 0.0
        %2475 = vmatprep.subr.mxu0 0.0
        %2476 = vmatpush1.msra.mxu0 0.0
        %2477 = vmatprep.subr.mxu0 0.0
        %2478 = vmatpush1.msra.mxu0 0.0
        %2479 = vmatprep.subr.mxu0 0.0
        %2480 = vmatpush1.msra.mxu0 0.0
        %2481 = vmatprep.subr.mxu0 0.0
        %2482 = vmatpush1.msra.mxu0 0.0
        %2483 = vmatprep.subr.mxu0 0.0
        %2484 = vmatpush1.msra.mxu0 0.0
        %2485 = vmatprep.subr.mxu0 0.0
        %2486 = vmatpush1.msra.mxu0 0.0
        %2487 = vmatprep.subr.mxu0 0.0
        %2488 = vmatpush1.msra.mxu0 0.0
        %2489 = vmatprep.subr.mxu0 0.0
        %2490 = vmatpush1.msra.mxu0 0.0
        %2491 = vmatprep.subr.mxu0 0.0
        %2492 = vmatpush1.msra.mxu0 0.0
        %2493 = vmatprep.subr.mxu0 0.0
        %2494 = vmatpush1.msra.mxu0 0.0
        %2495 = vmatprep.subr.mxu0 0.0
        %2496 = vmatpush1.msra.mxu0 0.0
        %2497 = vmatprep.mubr.f32.mxu0 0.0
        %2498 = vmatmul.mubr.f32.gmra.mrb[0].mxu0 %v2431
        %v2499 = vpop.f32.mrb[0].mxu0
        %v2500 = vadd.f32 0.0, %v2499
        %v2501 = vpop.f32.mrb[0].mxu0
        %v2502 = vadd.f32 0.0, %v2501
        %2503 = vdwg.mxu0
        %2504 = vmatprep.subr.mxu0 %v2425
        %2505 = vmatpush1.msra.mxu0 %v2424
        %2506 = vmatprep.subr.mxu0 0.0
        %2507 = vmatpush1.msra.mxu0 0.0
        %2508 = vmatprep.subr.mxu0 0.0
        %2509 = vmatpush1.msra.mxu0 0.0
        %2510 = vmatprep.subr.mxu0 0.0
        %2511 = vmatpush1.msra.mxu0 0.0
        %2512 = vmatprep.subr.mxu0 0.0
        %2513 = vmatpush1.msra.mxu0 0.0
        %2514 = vmatprep.subr.mxu0 0.0
        %2515 = vmatpush1.msra.mxu0 0.0
        %2516 = vmatprep.subr.mxu0 0.0
        %2517 = vmatpush1.msra.mxu0 0.0
        %2518 = vmatprep.subr.mxu0 0.0
        %2519 = vmatpush1.msra.mxu0 0.0
        %2520 = vmatprep.subr.mxu0 0.0
        %2521 = vmatpush1.msra.mxu0 0.0
        %2522 = vmatprep.subr.mxu0 0.0
        %2523 = vmatpush1.msra.mxu0 0.0
        %2524 = vmatprep.subr.mxu0 0.0
        %2525 = vmatpush1.msra.mxu0 0.0
        %2526 = vmatprep.subr.mxu0 0.0
        %2527 = vmatpush1.msra.mxu0 0.0
        %2528 = vmatprep.subr.mxu0 0.0
        %2529 = vmatpush1.msra.mxu0 0.0
        %2530 = vmatprep.subr.mxu0 0.0
        %2531 = vmatpush1.msra.mxu0 0.0
        %2532 = vmatprep.subr.mxu0 0.0
        %2533 = vmatpush1.msra.mxu0 0.0
        %2534 = vmatprep.subr.mxu0 0.0
        %2535 = vmatpush1.msra.mxu0 0.0
        %2536 = vmatprep.subr.mxu0 0.0
        %2537 = vmatpush1.msra.mxu0 0.0
        %2538 = vmatprep.subr.mxu0 0.0
        %2539 = vmatpush1.msra.mxu0 0.0
        %2540 = vmatprep.subr.mxu0 0.0
        %2541 = vmatpush1.msra.mxu0 0.0
        %2542 = vmatprep.subr.mxu0 0.0
        %2543 = vmatpush1.msra.mxu0 0.0
        %2544 = vmatprep.subr.mxu0 0.0
        %2545 = vmatpush1.msra.mxu0 0.0
        %2546 = vmatprep.subr.mxu0 0.0
        %2547 = vmatpush1.msra.mxu0 0.0
        %2548 = vmatprep.subr.mxu0 0.0
        %2549 = vmatpush1.msra.mxu0 0.0
        %2550 = vmatprep.subr.mxu0 0.0
        %2551 = vmatpush1.msra.mxu0 0.0
        %2552 = vmatprep.subr.mxu0 0.0
        %2553 = vmatpush1.msra.mxu0 0.0
        %2554 = vmatprep.subr.mxu0 0.0
        %2555 = vmatpush1.msra.mxu0 0.0
        %2556 = vmatprep.subr.mxu0 0.0
        %2557 = vmatpush1.msra.mxu0 0.0
        %2558 = vmatprep.subr.mxu0 0.0
        %2559 = vmatpush1.msra.mxu0 0.0
        %2560 = vmatprep.subr.mxu0 0.0
        %2561 = vmatpush1.msra.mxu0 0.0
        %2562 = vmatprep.subr.mxu0 0.0
        %2563 = vmatpush1.msra.mxu0 0.0
        %2564 = vmatprep.subr.mxu0 0.0
        %2565 = vmatpush1.msra.mxu0 0.0
        %2566 = vmatprep.subr.mxu0 0.0
        %2567 = vmatpush1.msra.mxu0 0.0
        %2568 = vmatprep.mubr.f32.mxu0 0.0
        %2569 = vmatmul.mubr.f32.gmra.mrb[0].mxu0 %v2431
        %v2570 = vpop.f32.mrb[0].mxu0
        %v2571 = vadd.f32 0.0, %v2570
        %v2572 = vpop.f32.mrb[0].mxu0
        %v2573 = vadd.f32 0.0, %v2572
        %2574 = vdwg.mxu0
        %2575 = vmatprep.subr.mxu0 %v2427
        %2576 = vmatpush1.msra.mxu0 %v2426
        %2577 = vmatprep.subr.mxu0 0.0
        %2578 = vmatpush1.msra.mxu0 0.0
        %2579 = vmatprep.subr.mxu0 0.0
        %2580 = vmatpush1.msra.mxu0 0.0
        %2581 = vmatprep.subr.mxu0 0.0
        %2582 = vmatpush1.msra.mxu0 0.0
        %2583 = vmatprep.subr.mxu0 0.0
        %2584 = vmatpush1.msra.mxu0 0.0
        %2585 = vmatprep.subr.mxu0 0.0
        %2586 = vmatpush1.msra.mxu0 0.0
        %2587 = vmatprep.subr.mxu0 0.0
        %2588 = vmatpush1.msra.mxu0 0.0
        %2589 = vmatprep.subr.mxu0 0.0
        %2590 = vmatpush1.msra.mxu0 0.0
        %2591 = vmatprep.subr.mxu0 0.0
        %2592 = vmatpush1.msra.mxu0 0.0
        %2593 = vmatprep.subr.mxu0 0.0
        %2594 = vmatpush1.msra.mxu0 0.0
        %2595 = vmatprep.subr.mxu0 0.0
        %2596 = vmatpush1.msra.mxu0 0.0
        %2597 = vmatprep.subr.mxu0 0.0
        %2598 = vmatpush1.msra.mxu0 0.0
        %2599 = vmatprep.subr.mxu0 0.0
        %2600 = vmatpush1.msra.mxu0 0.0
        %2601 = vmatprep.subr.mxu0 0.0
        %2602 = vmatpush1.msra.mxu0 0.0
        %2603 = vmatprep.subr.mxu0 0.0
        %2604 = vmatpush1.msra.mxu0 0.0
        %2605 = vmatprep.subr.mxu0 0.0
        %2606 = vmatpush1.msra.mxu0 0.0
        %2607 = vmatprep.subr.mxu0 0.0
        %2608 = vmatpush1.msra.mxu0 0.0
        %2609 = vmatprep.subr.mxu0 0.0
        %2610 = vmatpush1.msra.mxu0 0.0
        %2611 = vmatprep.subr.mxu0 0.0
        %2612 = vmatpush1.msra.mxu0 0.0
        %2613 = vmatprep.subr.mxu0 0.0
        %2614 = vmatpush1.msra.mxu0 0.0
        %2615 = vmatprep.subr.mxu0 0.0
        %2616 = vmatpush1.msra.mxu0 0.0
        %2617 = vmatprep.subr.mxu0 0.0
        %2618 = vmatpush1.msra.mxu0 0.0
        %2619 = vmatprep.subr.mxu0 0.0
        %2620 = vmatpush1.msra.mxu0 0.0
        %2621 = vmatprep.subr.mxu0 0.0
        %2622 = vmatpush1.msra.mxu0 0.0
        %2623 = vmatprep.subr.mxu0 0.0
        %2624 = vmatpush1.msra.mxu0 0.0
        %2625 = vmatprep.subr.mxu0 0.0
        %2626 = vmatpush1.msra.mxu0 0.0
        %2627 = vmatprep.subr.mxu0 0.0
        %2628 = vmatpush1.msra.mxu0 0.0
        %2629 = vmatprep.subr.mxu0 0.0
        %2630 = vmatpush1.msra.mxu0 0.0
        %2631 = vmatprep.subr.mxu0 0.0
        %2632 = vmatpush1.msra.mxu0 0.0
        %2633 = vmatprep.subr.mxu0 0.0
        %2634 = vmatpush1.msra.mxu0 0.0
        %2635 = vmatprep.subr.mxu0 0.0
        %2636 = vmatpush1.msra.mxu0 0.0
        %2637 = vmatprep.subr.mxu0 0.0
        %2638 = vmatpush1.msra.mxu0 0.0
        %2639 = vmatprep.mubr.f32.mxu0 0.0
        %2640 = vmatmul.mubr.f32.gmra.mrb[0].mxu0 %v2431
        %v2641 = vpop.f32.mrb[0].mxu0
        %v2642 = vadd.f32 0.0, %v2641
        %v2643 = vpop.f32.mrb[0].mxu0
        %v2644 = vadd.f32 0.0, %v2643
        %2645 = vdwg.mxu0
        %2646 = vmatprep.subr.mxu0 %v2429
        %2647 = vmatpush1.msra.mxu0 %v2428
        %2648 = vmatprep.subr.mxu0 0.0
        %2649 = vmatpush1.msra.mxu0 0.0
        %2650 = vmatprep.subr.mxu0 0.0
        %2651 = vmatpush1.msra.mxu0 0.0
        %2652 = vmatprep.subr.mxu0 0.0
        %2653 = vmatpush1.msra.mxu0 0.0
        %2654 = vmatprep.subr.mxu0 0.0
        %2655 = vmatpush1.msra.mxu0 0.0
        %2656 = vmatprep.subr.mxu0 0.0
        %2657 = vmatpush1.msra.mxu0 0.0
        %2658 = vmatprep.subr.mxu0 0.0
        %2659 = vmatpush1.msra.mxu0 0.0
        %2660 = vmatprep.subr.mxu0 0.0
        %2661 = vmatpush1.msra.mxu0 0.0
        %2662 = vmatprep.subr.mxu0 0.0
        %2663 = vmatpush1.msra.mxu0 0.0
        %2664 = vmatprep.subr.mxu0 0.0
        %2665 = vmatpush1.msra.mxu0 0.0
        %2666 = vmatprep.subr.mxu0 0.0
        %2667 = vmatpush1.msra.mxu0 0.0
        %2668 = vmatprep.subr.mxu0 0.0
        %2669 = vmatpush1.msra.mxu0 0.0
        %2670 = vmatprep.subr.mxu0 0.0
        %2671 = vmatpush1.msra.mxu0 0.0
        %2672 = vmatprep.subr.mxu0 0.0
        %2673 = vmatpush1.msra.mxu0 0.0
        %2674 = vmatprep.subr.mxu0 0.0
        %2675 = vmatpush1.msra.mxu0 0.0
        %2676 = vmatprep.subr.mxu0 0.0
        %2677 = vmatpush1.msra.mxu0 0.0
        %2678 = vmatprep.subr.mxu0 0.0
        %2679 = vmatpush1.msra.mxu0 0.0
        %2680 = vmatprep.subr.mxu0 0.0
        %2681 = vmatpush1.msra.mxu0 0.0
        %2682 = vmatprep.subr.mxu0 0.0
        %2683 = vmatpush1.msra.mxu0 0.0
        %2684 = vmatprep.subr.mxu0 0.0
        %2685 = vmatpush1.msra.mxu0 0.0
        %2686 = vmatprep.subr.mxu0 0.0
        %2687 = vmatpush1.msra.mxu0 0.0
        %2688 = vmatprep.subr.mxu0 0.0
        %2689 = vmatpush1.msra.mxu0 0.0
        %2690 = vmatprep.subr.mxu0 0.0
        %2691 = vmatpush1.msra.mxu0 0.0
        %2692 = vmatprep.subr.mxu0 0.0
        %2693 = vmatpush1.msra.mxu0 0.0
        %2694 = vmatprep.subr.mxu0 0.0
        %2695 = vmatpush1.msra.mxu0 0.0
        %2696 = vmatprep.subr.mxu0 0.0
        %2697 = vmatpush1.msra.mxu0 0.0
        %2698 = vmatprep.subr.mxu0 0.0
        %2699 = vmatpush1.msra.mxu0 0.0
        %2700 = vmatprep.subr.mxu0 0.0
        %2701 = vmatpush1.msra.mxu0 0.0
        %2702 = vmatprep.subr.mxu0 0.0
        %2703 = vmatpush1.msra.mxu0 0.0
        %2704 = vmatprep.subr.mxu0 0.0
        %2705 = vmatpush1.msra.mxu0 0.0
        %2706 = vmatprep.subr.mxu0 0.0
        %2707 = vmatpush1.msra.mxu0 0.0
        %2708 = vmatprep.subr.mxu0 0.0
        %2709 = vmatpush1.msra.mxu0 0.0
        %2710 = vmatprep.mubr.f32.mxu0 0.0
        %2711 = vmatmul.mubr.f32.gmra.mrb[0].mxu0 %v2431
        %v2712 = vpop.f32.mrb[0].mxu0
        %v2713 = vadd.f32 0.0, %v2712
        %v2714 = vpop.f32.mrb[0].mxu0
        %v2715 = vadd.f32 0.0, %v2714
        %2716 = vdwg.mxu0
        %v2717 = vadd.f32 %v2362, %v2500
        %v2718 = vadd.f32 %v2363, %v2502
        %v2719 = vadd.f32 %v2364, %v2571
        %v2720 = vadd.f32 %v2365, %v2573
        %v2721 = vadd.f32 %v2366, %v2642
        %v2722 = vadd.f32 %v2367, %v2644
        %v2723 = vadd.f32 %v2368, %v2713
        %v2724 = vadd.f32 %v2369, %v2715
        %2725 = vrot.lane.b32.xlu0 %v2370, 4
        %v2726 = vpop.permute.xlu0 %2725
        %2727 = vrot.lane.b32.xlu0 %v2371, 4
        %v2728 = vpop.permute.xlu0 %2727
        %2729 = vrot.lane.b32.xlu0 %v2372, 4
        %v2730 = vpop.permute.xlu0 %2729
        %2731 = vrot.lane.b32.xlu0 %v2373, 4
        %v2732 = vpop.permute.xlu0 %2731
        %2733 = vrot.lane.b32.xlu0 %v2374, 4
        %v2734 = vpop.permute.xlu0 %2733
        %2735 = vrot.lane.b32.xlu0 %v2375, 4
        %v2736 = vpop.permute.xlu0 %2735
        %2737 = vrot.lane.b32.xlu0 %v2376, 4
        %v2738 = vpop.permute.xlu0 %2737
        %2739 = vrot.lane.b32.xlu0 %v2377, 4
        %v2740 = vpop.permute.xlu0 %2739
        %2741 = vrot.lane.b32.xlu0 %v2378, 4
        %v2742 = vpop.permute.xlu0 %2741
        %v2743 = vsel %vm426, %v2726, %v2728
        %v2744 = vsel %vm426, %v2728, %v2730
        %v2745 = vsel %vm426, %v2730, %v2732
        %v2746 = vsel %vm426, %v2732, %v2734
        %v2747 = vsel %vm426, %v2734, %v2736
        %v2748 = vsel %vm426, %v2736, %v2738
        %v2749 = vsel %vm426, %v2738, %v2740
        %v2750 = vsel %vm426, %v2740, %v2742
        %v2759 = vsel %vm366, %v2743, 0.0
        %v2760 = vsel %vm367, %v2744, 0.0
        %v2761 = vsel %vm368, %v2745, 0.0
        %v2762 = vsel %vm369, %v2746, 0.0
        %v2763 = vsel %vm370, %v2747, 0.0
        %v2764 = vsel %vm371, %v2748, 0.0
        %v2765 = vsel %vm372, %v2749, 0.0
        %v2766 = vsel %vm373, %v2750, 0.0
        %v2768 = vsel %vm807, %v240, 0
        %2770 = vmatprep.subr.mxu0 %v2760
        %2771 = vmatpush1.msra.mxu0 %v2759
        %2772 = vmatprep.subr.mxu0 0.0
        %2773 = vmatpush1.msra.mxu0 0.0
        %2774 = vmatprep.subr.mxu0 0.0
        %2775 = vmatpush1.msra.mxu0 0.0
        %2776 = vmatprep.subr.mxu0 0.0
        %2777 = vmatpush1.msra.mxu0 0.0
        %2778 = vmatprep.subr.mxu0 0.0
        %2779 = vmatpush1.msra.mxu0 0.0
        %2780 = vmatprep.subr.mxu0 0.0
        %2781 = vmatpush1.msra.mxu0 0.0
        %2782 = vmatprep.subr.mxu0 0.0
        %2783 = vmatpush1.msra.mxu0 0.0
        %2784 = vmatprep.subr.mxu0 0.0
        %2785 = vmatpush1.msra.mxu0 0.0
        %2786 = vmatprep.subr.mxu0 0.0
        %2787 = vmatpush1.msra.mxu0 0.0
        %2788 = vmatprep.subr.mxu0 0.0
        %2789 = vmatpush1.msra.mxu0 0.0
        %2790 = vmatprep.subr.mxu0 0.0
        %2791 = vmatpush1.msra.mxu0 0.0
        %2792 = vmatprep.subr.mxu0 0.0
        %2793 = vmatpush1.msra.mxu0 0.0
        %2794 = vmatprep.subr.mxu0 0.0
        %2795 = vmatpush1.msra.mxu0 0.0
        %2796 = vmatprep.subr.mxu0 0.0
        %2797 = vmatpush1.msra.mxu0 0.0
        %2798 = vmatprep.subr.mxu0 0.0
        %2799 = vmatpush1.msra.mxu0 0.0
        %2800 = vmatprep.subr.mxu0 0.0
        %2801 = vmatpush1.msra.mxu0 0.0
        %2802 = vmatprep.subr.mxu0 0.0
        %2803 = vmatpush1.msra.mxu0 0.0
        %2804 = vmatprep.subr.mxu0 0.0
        %2805 = vmatpush1.msra.mxu0 0.0
        %2806 = vmatprep.subr.mxu0 0.0
        %2807 = vmatpush1.msra.mxu0 0.0
        %2808 = vmatprep.subr.mxu0 0.0
        %2809 = vmatpush1.msra.mxu0 0.0
        %2810 = vmatprep.subr.mxu0 0.0
        %2811 = vmatpush1.msra.mxu0 0.0
        %2812 = vmatprep.subr.mxu0 0.0
        %2813 = vmatpush1.msra.mxu0 0.0
        %2814 = vmatprep.subr.mxu0 0.0
        %2815 = vmatpush1.msra.mxu0 0.0
        %2816 = vmatprep.subr.mxu0 0.0
        %2817 = vmatpush1.msra.mxu0 0.0
        %2818 = vmatprep.subr.mxu0 0.0
        %2819 = vmatpush1.msra.mxu0 0.0
        %2820 = vmatprep.subr.mxu0 0.0
        %2821 = vmatpush1.msra.mxu0 0.0
        %2822 = vmatprep.subr.mxu0 0.0
        %2823 = vmatpush1.msra.mxu0 0.0
        %2824 = vmatprep.subr.mxu0 0.0
        %2825 = vmatpush1.msra.mxu0 0.0
        %2826 = vmatprep.subr.mxu0 0.0
        %2827 = vmatpush1.msra.mxu0 0.0
        %2828 = vmatprep.subr.mxu0 0.0
        %2829 = vmatpush1.msra.mxu0 0.0
        %2830 = vmatprep.subr.mxu0 0.0
        %2831 = vmatpush1.msra.mxu0 0.0
        %2832 = vmatprep.subr.mxu0 0.0
        %2833 = vmatpush1.msra.mxu0 0.0
        %2834 = vmatprep.mubr.f32.mxu0 0.0
        %2835 = vmatmul.mubr.f32.gmra.mrb[0].mxu0 %v2768
        %v2836 = vpop.f32.mrb[0].mxu0
        %v2837 = vadd.f32 0.0, %v2836
        %v2838 = vpop.f32.mrb[0].mxu0
        %v2839 = vadd.f32 0.0, %v2838
        %2840 = vdwg.mxu0
        %2841 = vmatprep.subr.mxu0 %v2762
        %2842 = vmatpush1.msra.mxu0 %v2761
        %2843 = vmatprep.subr.mxu0 0.0
        %2844 = vmatpush1.msra.mxu0 0.0
        %2845 = vmatprep.subr.mxu0 0.0
        %2846 = vmatpush1.msra.mxu0 0.0
        %2847 = vmatprep.subr.mxu0 0.0
        %2848 = vmatpush1.msra.mxu0 0.0
        %2849 = vmatprep.subr.mxu0 0.0
        %2850 = vmatpush1.msra.mxu0 0.0
        %2851 = vmatprep.subr.mxu0 0.0
        %2852 = vmatpush1.msra.mxu0 0.0
        %2853 = vmatprep.subr.mxu0 0.0
        %2854 = vmatpush1.msra.mxu0 0.0
        %2855 = vmatprep.subr.mxu0 0.0
        %2856 = vmatpush1.msra.mxu0 0.0
        %2857 = vmatprep.subr.mxu0 0.0
        %2858 = vmatpush1.msra.mxu0 0.0
        %2859 = vmatprep.subr.mxu0 0.0
        %2860 = vmatpush1.msra.mxu0 0.0
        %2861 = vmatprep.subr.mxu0 0.0
        %2862 = vmatpush1.msra.mxu0 0.0
        %2863 = vmatprep.subr.mxu0 0.0
        %2864 = vmatpush1.msra.mxu0 0.0
        %2865 = vmatprep.subr.mxu0 0.0
        %2866 = vmatpush1.msra.mxu0 0.0
        %2867 = vmatprep.subr.mxu0 0.0
        %2868 = vmatpush1.msra.mxu0 0.0
        %2869 = vmatprep.subr.mxu0 0.0
        %2870 = vmatpush1.msra.mxu0 0.0
        %2871 = vmatprep.subr.mxu0 0.0
        %2872 = vmatpush1.msra.mxu0 0.0
        %2873 = vmatprep.subr.mxu0 0.0
        %2874 = vmatpush1.msra.mxu0 0.0
        %2875 = vmatprep.subr.mxu0 0.0
        %2876 = vmatpush1.msra.mxu0 0.0
        %2877 = vmatprep.subr.mxu0 0.0
        %2878 = vmatpush1.msra.mxu0 0.0
        %2879 = vmatprep.subr.mxu0 0.0
        %2880 = vmatpush1.msra.mxu0 0.0
        %2881 = vmatprep.subr.mxu0 0.0
        %2882 = vmatpush1.msra.mxu0 0.0
        %2883 = vmatprep.subr.mxu0 0.0
        %2884 = vmatpush1.msra.mxu0 0.0
        %2885 = vmatprep.subr.mxu0 0.0
        %2886 = vmatpush1.msra.mxu0 0.0
        %2887 = vmatprep.subr.mxu0 0.0
        %2888 = vmatpush1.msra.mxu0 0.0
        %2889 = vmatprep.subr.mxu0 0.0
        %2890 = vmatpush1.msra.mxu0 0.0
        %2891 = vmatprep.subr.mxu0 0.0
        %2892 = vmatpush1.msra.mxu0 0.0
        %2893 = vmatprep.subr.mxu0 0.0
        %2894 = vmatpush1.msra.mxu0 0.0
        %2895 = vmatprep.subr.mxu0 0.0
        %2896 = vmatpush1.msra.mxu0 0.0
        %2897 = vmatprep.subr.mxu0 0.0
        %2898 = vmatpush1.msra.mxu0 0.0
        %2899 = vmatprep.subr.mxu0 0.0
        %2900 = vmatpush1.msra.mxu0 0.0
        %2901 = vmatprep.subr.mxu0 0.0
        %2902 = vmatpush1.msra.mxu0 0.0
        %2903 = vmatprep.subr.mxu0 0.0
        %2904 = vmatpush1.msra.mxu0 0.0
        %2905 = vmatprep.mubr.f32.mxu0 0.0
        %2906 = vmatmul.mubr.f32.gmra.mrb[0].mxu0 %v2768
        %v2907 = vpop.f32.mrb[0].mxu0
        %v2908 = vadd.f32 0.0, %v2907
        %v2909 = vpop.f32.mrb[0].mxu0
        %v2910 = vadd.f32 0.0, %v2909
        %2911 = vdwg.mxu0
        %2912 = vmatprep.subr.mxu0 %v2764
        %2913 = vmatpush1.msra.mxu0 %v2763
        %2914 = vmatprep.subr.mxu0 0.0
        %2915 = vmatpush1.msra.mxu0 0.0
        %2916 = vmatprep.subr.mxu0 0.0
        %2917 = vmatpush1.msra.mxu0 0.0
        %2918 = vmatprep.subr.mxu0 0.0
        %2919 = vmatpush1.msra.mxu0 0.0
        %2920 = vmatprep.subr.mxu0 0.0
        %2921 = vmatpush1.msra.mxu0 0.0
        %2922 = vmatprep.subr.mxu0 0.0
        %2923 = vmatpush1.msra.mxu0 0.0
        %2924 = vmatprep.subr.mxu0 0.0
        %2925 = vmatpush1.msra.mxu0 0.0
        %2926 = vmatprep.subr.mxu0 0.0
        %2927 = vmatpush1.msra.mxu0 0.0
        %2928 = vmatprep.subr.mxu0 0.0
        %2929 = vmatpush1.msra.mxu0 0.0
        %2930 = vmatprep.subr.mxu0 0.0
        %2931 = vmatpush1.msra.mxu0 0.0
        %2932 = vmatprep.subr.mxu0 0.0
        %2933 = vmatpush1.msra.mxu0 0.0
        %2934 = vmatprep.subr.mxu0 0.0
        %2935 = vmatpush1.msra.mxu0 0.0
        %2936 = vmatprep.subr.mxu0 0.0
        %2937 = vmatpush1.msra.mxu0 0.0
        %2938 = vmatprep.subr.mxu0 0.0
        %2939 = vmatpush1.msra.mxu0 0.0
        %2940 = vmatprep.subr.mxu0 0.0
        %2941 = vmatpush1.msra.mxu0 0.0
        %2942 = vmatprep.subr.mxu0 0.0
        %2943 = vmatpush1.msra.mxu0 0.0
        %2944 = vmatprep.subr.mxu0 0.0
        %2945 = vmatpush1.msra.mxu0 0.0
        %2946 = vmatprep.subr.mxu0 0.0
        %2947 = vmatpush1.msra.mxu0 0.0
        %2948 = vmatprep.subr.mxu0 0.0
        %2949 = vmatpush1.msra.mxu0 0.0
        %2950 = vmatprep.subr.mxu0 0.0
        %2951 = vmatpush1.msra.mxu0 0.0
        %2952 = vmatprep.subr.mxu0 0.0
        %2953 = vmatpush1.msra.mxu0 0.0
        %2954 = vmatprep.subr.mxu0 0.0
        %2955 = vmatpush1.msra.mxu0 0.0
        %2956 = vmatprep.subr.mxu0 0.0
        %2957 = vmatpush1.msra.mxu0 0.0
        %2958 = vmatprep.subr.mxu0 0.0
        %2959 = vmatpush1.msra.mxu0 0.0
        %2960 = vmatprep.subr.mxu0 0.0
        %2961 = vmatpush1.msra.mxu0 0.0
        %2962 = vmatprep.subr.mxu0 0.0
        %2963 = vmatpush1.msra.mxu0 0.0
        %2964 = vmatprep.subr.mxu0 0.0
        %2965 = vmatpush1.msra.mxu0 0.0
        %2966 = vmatprep.subr.mxu0 0.0
        %2967 = vmatpush1.msra.mxu0 0.0
        %2968 = vmatprep.subr.mxu0 0.0
        %2969 = vmatpush1.msra.mxu0 0.0
        %2970 = vmatprep.subr.mxu0 0.0
        %2971 = vmatpush1.msra.mxu0 0.0
        %2972 = vmatprep.subr.mxu0 0.0
        %2973 = vmatpush1.msra.mxu0 0.0
        %2974 = vmatprep.subr.mxu0 0.0
        %2975 = vmatpush1.msra.mxu0 0.0
        %2976 = vmatprep.mubr.f32.mxu0 0.0
        %2977 = vmatmul.mubr.f32.gmra.mrb[0].mxu0 %v2768
        %v2978 = vpop.f32.mrb[0].mxu0
        %v2979 = vadd.f32 0.0, %v2978
        %v2980 = vpop.f32.mrb[0].mxu0
        %v2981 = vadd.f32 0.0, %v2980
        %2982 = vdwg.mxu0
        %2983 = vmatprep.subr.mxu0 %v2766
        %2984 = vmatpush1.msra.mxu0 %v2765
        %2985 = vmatprep.subr.mxu0 0.0
        %2986 = vmatpush1.msra.mxu0 0.0
        %2987 = vmatprep.subr.mxu0 0.0
        %2988 = vmatpush1.msra.mxu0 0.0
        %2989 = vmatprep.subr.mxu0 0.0
        %2990 = vmatpush1.msra.mxu0 0.0
        %2991 = vmatprep.subr.mxu0 0.0
        %2992 = vmatpush1.msra.mxu0 0.0
        %2993 = vmatprep.subr.mxu0 0.0
        %2994 = vmatpush1.msra.mxu0 0.0
        %2995 = vmatprep.subr.mxu0 0.0
        %2996 = vmatpush1.msra.mxu0 0.0
        %2997 = vmatprep.subr.mxu0 0.0
        %2998 = vmatpush1.msra.mxu0 0.0
        %2999 = vmatprep.subr.mxu0 0.0
        %3000 = vmatpush1.msra.mxu0 0.0
        %3001 = vmatprep.subr.mxu0 0.0
        %3002 = vmatpush1.msra.mxu0 0.0
        %3003 = vmatprep.subr.mxu0 0.0
        %3004 = vmatpush1.msra.mxu0 0.0
        %3005 = vmatprep.subr.mxu0 0.0
        %3006 = vmatpush1.msra.mxu0 0.0
        %3007 = vmatprep.subr.mxu0 0.0
        %3008 = vmatpush1.msra.mxu0 0.0
        %3009 = vmatprep.subr.mxu0 0.0
        %3010 = vmatpush1.msra.mxu0 0.0
        %3011 = vmatprep.subr.mxu0 0.0
        %3012 = vmatpush1.msra.mxu0 0.0
        %3013 = vmatprep.subr.mxu0 0.0
        %3014 = vmatpush1.msra.mxu0 0.0
        %3015 = vmatprep.subr.mxu0 0.0
        %3016 = vmatpush1.msra.mxu0 0.0
        %3017 = vmatprep.subr.mxu0 0.0
        %3018 = vmatpush1.msra.mxu0 0.0
        %3019 = vmatprep.subr.mxu0 0.0
        %3020 = vmatpush1.msra.mxu0 0.0
        %3021 = vmatprep.subr.mxu0 0.0
        %3022 = vmatpush1.msra.mxu0 0.0
        %3023 = vmatprep.subr.mxu0 0.0
        %3024 = vmatpush1.msra.mxu0 0.0
        %3025 = vmatprep.subr.mxu0 0.0
        %3026 = vmatpush1.msra.mxu0 0.0
        %3027 = vmatprep.subr.mxu0 0.0
        %3028 = vmatpush1.msra.mxu0 0.0
        %3029 = vmatprep.subr.mxu0 0.0
        %3030 = vmatpush1.msra.mxu0 0.0
        %3031 = vmatprep.subr.mxu0 0.0
        %3032 = vmatpush1.msra.mxu0 0.0
        %3033 = vmatprep.subr.mxu0 0.0
        %3034 = vmatpush1.msra.mxu0 0.0
        %3035 = vmatprep.subr.mxu0 0.0
        %3036 = vmatpush1.msra.mxu0 0.0
        %3037 = vmatprep.subr.mxu0 0.0
        %3038 = vmatpush1.msra.mxu0 0.0
        %3039 = vmatprep.subr.mxu0 0.0
        %3040 = vmatpush1.msra.mxu0 0.0
        %3041 = vmatprep.subr.mxu0 0.0
        %3042 = vmatpush1.msra.mxu0 0.0
        %3043 = vmatprep.subr.mxu0 0.0
        %3044 = vmatpush1.msra.mxu0 0.0
        %3045 = vmatprep.subr.mxu0 0.0
        %3046 = vmatpush1.msra.mxu0 0.0
        %3047 = vmatprep.mubr.f32.mxu0 0.0
        %3048 = vmatmul.mubr.f32.gmra.mrb[0].mxu0 %v2768
        %v3049 = vpop.f32.mrb[0].mxu0
        %v3050 = vadd.f32 0.0, %v3049
        %v3051 = vpop.f32.mrb[0].mxu0
        %v3052 = vadd.f32 0.0, %v3051
        %3053 = vdwg.mxu0
        %v3054 = vadd.f32 %v2717, %v2837
        %v3055 = vadd.f32 %v2718, %v2839
        %v3056 = vadd.f32 %v2719, %v2908
        %v3057 = vadd.f32 %v2720, %v2910
        %v3058 = vadd.f32 %v2721, %v2979
        %v3059 = vadd.f32 %v2722, %v2981
        %v3060 = vadd.f32 %v2723, %v3050
        %v3061 = vadd.f32 %v2724, %v3052
        %v3063 = vsel %vm807, %v241, 0
        %3065 = vmatprep.subr.mxu0 %v2372
        %3066 = vmatpush1.msra.mxu0 %v2371
        %3067 = vmatprep.subr.mxu0 0.0
        %3068 = vmatpush1.msra.mxu0 0.0
        %3069 = vmatprep.subr.mxu0 0.0
        %3070 = vmatpush1.msra.mxu0 0.0
        %3071 = vmatprep.subr.mxu0 0.0
        %3072 = vmatpush1.msra.mxu0 0.0
        %3073 = vmatprep.subr.mxu0 0.0
        %3074 = vmatpush1.msra.mxu0 0.0
        %3075 = vmatprep.subr.mxu0 0.0
        %3076 = vmatpush1.msra.mxu0 0.0
        %3077 = vmatprep.subr.mxu0 0.0
        %3078 = vmatpush1.msra.mxu0 0.0
        %3079 = vmatprep.subr.mxu0 0.0
        %3080 = vmatpush1.msra.mxu0 0.0
        %3081 = vmatprep.subr.mxu0 0.0
        %3082 = vmatpush1.msra.mxu0 0.0
        %3083 = vmatprep.subr.mxu0 0.0
        %3084 = vmatpush1.msra.mxu0 0.0
        %3085 = vmatprep.subr.mxu0 0.0
        %3086 = vmatpush1.msra.mxu0 0.0
        %3087 = vmatprep.subr.mxu0 0.0
        %3088 = vmatpush1.msra.mxu0 0.0
        %3089 = vmatprep.subr.mxu0 0.0
        %3090 = vmatpush1.msra.mxu0 0.0
        %3091 = vmatprep.subr.mxu0 0.0
        %3092 = vmatpush1.msra.mxu0 0.0
        %3093 = vmatprep.subr.mxu0 0.0
        %3094 = vmatpush1.msra.mxu0 0.0
        %3095 = vmatprep.subr.mxu0 0.0
        %3096 = vmatpush1.msra.mxu0 0.0
        %3097 = vmatprep.subr.mxu0 0.0
        %3098 = vmatpush1.msra.mxu0 0.0
        %3099 = vmatprep.subr.mxu0 0.0
        %3100 = vmatpush1.msra.mxu0 0.0
        %3101 = vmatprep.subr.mxu0 0.0
        %3102 = vmatpush1.msra.mxu0 0.0
        %3103 = vmatprep.subr.mxu0 0.0
        %3104 = vmatpush1.msra.mxu0 0.0
        %3105 = vmatprep.subr.mxu0 0.0
        %3106 = vmatpush1.msra.mxu0 0.0
        %3107 = vmatprep.subr.mxu0 0.0
        %3108 = vmatpush1.msra.mxu0 0.0
        %3109 = vmatprep.subr.mxu0 0.0
        %3110 = vmatpush1.msra.mxu0 0.0
        %3111 = vmatprep.subr.mxu0 0.0
        %3112 = vmatpush1.msra.mxu0 0.0
        %3113 = vmatprep.subr.mxu0 0.0
        %3114 = vmatpush1.msra.mxu0 0.0
        %3115 = vmatprep.subr.mxu0 0.0
        %3116 = vmatpush1.msra.mxu0 0.0
        %3117 = vmatprep.subr.mxu0 0.0
        %3118 = vmatpush1.msra.mxu0 0.0
        %3119 = vmatprep.subr.mxu0 0.0
        %3120 = vmatpush1.msra.mxu0 0.0
        %3121 = vmatprep.subr.mxu0 0.0
        %3122 = vmatpush1.msra.mxu0 0.0
        %3123 = vmatprep.subr.mxu0 0.0
        %3124 = vmatpush1.msra.mxu0 0.0
        %3125 = vmatprep.subr.mxu0 0.0
        %3126 = vmatpush1.msra.mxu0 0.0
        %3127 = vmatprep.subr.mxu0 0.0
        %3128 = vmatpush1.msra.mxu0 0.0
        %3129 = vmatprep.mubr.f32.mxu0 0.0
        %3130 = vmatmul.mubr.f32.gmra.mrb[0].mxu0 %v3063
        %v3131 = vpop.f32.mrb[0].mxu0
        %v3132 = vadd.f32 0.0, %v3131
        %v3133 = vpop.f32.mrb[0].mxu0
        %v3134 = vadd.f32 0.0, %v3133
        %3135 = vdwg.mxu0
        %3136 = vmatprep.subr.mxu0 %v2374
        %3137 = vmatpush1.msra.mxu0 %v2373
        %3138 = vmatprep.subr.mxu0 0.0
        %3139 = vmatpush1.msra.mxu0 0.0
        %3140 = vmatprep.subr.mxu0 0.0
        %3141 = vmatpush1.msra.mxu0 0.0
        %3142 = vmatprep.subr.mxu0 0.0
        %3143 = vmatpush1.msra.mxu0 0.0
        %3144 = vmatprep.subr.mxu0 0.0
        %3145 = vmatpush1.msra.mxu0 0.0
        %3146 = vmatprep.subr.mxu0 0.0
        %3147 = vmatpush1.msra.mxu0 0.0
        %3148 = vmatprep.subr.mxu0 0.0
        %3149 = vmatpush1.msra.mxu0 0.0
        %3150 = vmatprep.subr.mxu0 0.0
        %3151 = vmatpush1.msra.mxu0 0.0
        %3152 = vmatprep.subr.mxu0 0.0
        %3153 = vmatpush1.msra.mxu0 0.0
        %3154 = vmatprep.subr.mxu0 0.0
        %3155 = vmatpush1.msra.mxu0 0.0
        %3156 = vmatprep.subr.mxu0 0.0
        %3157 = vmatpush1.msra.mxu0 0.0
        %3158 = vmatprep.subr.mxu0 0.0
        %3159 = vmatpush1.msra.mxu0 0.0
        %3160 = vmatprep.subr.mxu0 0.0
        %3161 = vmatpush1.msra.mxu0 0.0
        %3162 = vmatprep.subr.mxu0 0.0
        %3163 = vmatpush1.msra.mxu0 0.0
        %3164 = vmatprep.subr.mxu0 0.0
        %3165 = vmatpush1.msra.mxu0 0.0
        %3166 = vmatprep.subr.mxu0 0.0
        %3167 = vmatpush1.msra.mxu0 0.0
        %3168 = vmatprep.subr.mxu0 0.0
        %3169 = vmatpush1.msra.mxu0 0.0
        %3170 = vmatprep.subr.mxu0 0.0
        %3171 = vmatpush1.msra.mxu0 0.0
        %3172 = vmatprep.subr.mxu0 0.0
        %3173 = vmatpush1.msra.mxu0 0.0
        %3174 = vmatprep.subr.mxu0 0.0
        %3175 = vmatpush1.msra.mxu0 0.0
        %3176 = vmatprep.subr.mxu0 0.0
        %3177 = vmatpush1.msra.mxu0 0.0
        %3178 = vmatprep.subr.mxu0 0.0
        %3179 = vmatpush1.msra.mxu0 0.0
        %3180 = vmatprep.subr.mxu0 0.0
        %3181 = vmatpush1.msra.mxu0 0.0
        %3182 = vmatprep.subr.mxu0 0.0
        %3183 = vmatpush1.msra.mxu0 0.0
        %3184 = vmatprep.subr.mxu0 0.0
        %3185 = vmatpush1.msra.mxu0 0.0
        %3186 = vmatprep.subr.mxu0 0.0
        %3187 = vmatpush1.msra.mxu0 0.0
        %3188 = vmatprep.subr.mxu0 0.0
        %3189 = vmatpush1.msra.mxu0 0.0
        %3190 = vmatprep.subr.mxu0 0.0
        %3191 = vmatpush1.msra.mxu0 0.0
        %3192 = vmatprep.subr.mxu0 0.0
        %3193 = vmatpush1.msra.mxu0 0.0
        %3194 = vmatprep.subr.mxu0 0.0
        %3195 = vmatpush1.msra.mxu0 0.0
        %3196 = vmatprep.subr.mxu0 0.0
        %3197 = vmatpush1.msra.mxu0 0.0
        %3198 = vmatprep.subr.mxu0 0.0
        %3199 = vmatpush1.msra.mxu0 0.0
        %3200 = vmatprep.mubr.f32.mxu0 0.0
        %3201 = vmatmul.mubr.f32.gmra.mrb[0].mxu0 %v3063
        %v3202 = vpop.f32.mrb[0].mxu0
        %v3203 = vadd.f32 0.0, %v3202
        %v3204 = vpop.f32.mrb[0].mxu0
        %v3205 = vadd.f32 0.0, %v3204
        %3206 = vdwg.mxu0
        %3207 = vmatprep.subr.mxu0 %v2376
        %3208 = vmatpush1.msra.mxu0 %v2375
        %3209 = vmatprep.subr.mxu0 0.0
        %3210 = vmatpush1.msra.mxu0 0.0
        %3211 = vmatprep.subr.mxu0 0.0
        %3212 = vmatpush1.msra.mxu0 0.0
        %3213 = vmatprep.subr.mxu0 0.0
        %3214 = vmatpush1.msra.mxu0 0.0
        %3215 = vmatprep.subr.mxu0 0.0
        %3216 = vmatpush1.msra.mxu0 0.0
        %3217 = vmatprep.subr.mxu0 0.0
        %3218 = vmatpush1.msra.mxu0 0.0
        %3219 = vmatprep.subr.mxu0 0.0
        %3220 = vmatpush1.msra.mxu0 0.0
        %3221 = vmatprep.subr.mxu0 0.0
        %3222 = vmatpush1.msra.mxu0 0.0
        %3223 = vmatprep.subr.mxu0 0.0
        %3224 = vmatpush1.msra.mxu0 0.0
        %3225 = vmatprep.subr.mxu0 0.0
        %3226 = vmatpush1.msra.mxu0 0.0
        %3227 = vmatprep.subr.mxu0 0.0
        %3228 = vmatpush1.msra.mxu0 0.0
        %3229 = vmatprep.subr.mxu0 0.0
        %3230 = vmatpush1.msra.mxu0 0.0
        %3231 = vmatprep.subr.mxu0 0.0
        %3232 = vmatpush1.msra.mxu0 0.0
        %3233 = vmatprep.subr.mxu0 0.0
        %3234 = vmatpush1.msra.mxu0 0.0
        %3235 = vmatprep.subr.mxu0 0.0
        %3236 = vmatpush1.msra.mxu0 0.0
        %3237 = vmatprep.subr.mxu0 0.0
        %3238 = vmatpush1.msra.mxu0 0.0
        %3239 = vmatprep.subr.mxu0 0.0
        %3240 = vmatpush1.msra.mxu0 0.0
        %3241 = vmatprep.subr.mxu0 0.0
        %3242 = vmatpush1.msra.mxu0 0.0
        %3243 = vmatprep.subr.mxu0 0.0
        %3244 = vmatpush1.msra.mxu0 0.0
        %3245 = vmatprep.subr.mxu0 0.0
        %3246 = vmatpush1.msra.mxu0 0.0
        %3247 = vmatprep.subr.mxu0 0.0
        %3248 = vmatpush1.msra.mxu0 0.0
        %3249 = vmatprep.subr.mxu0 0.0
        %3250 = vmatpush1.msra.mxu0 0.0
        %3251 = vmatprep.subr.mxu0 0.0
        %3252 = vmatpush1.msra.mxu0 0.0
        %3253 = vmatprep.subr.mxu0 0.0
        %3254 = vmatpush1.msra.mxu0 0.0
        %3255 = vmatprep.subr.mxu0 0.0
        %3256 = vmatpush1.msra.mxu0 0.0
        %3257 = vmatprep.subr.mxu0 0.0
        %3258 = vmatpush1.msra.mxu0 0.0
        %3259 = vmatprep.subr.mxu0 0.0
        %3260 = vmatpush1.msra.mxu0 0.0
        %3261 = vmatprep.subr.mxu0 0.0
        %3262 = vmatpush1.msra.mxu0 0.0
        %3263 = vmatprep.subr.mxu0 0.0
        %3264 = vmatpush1.msra.mxu0 0.0
        %3265 = vmatprep.subr.mxu0 0.0
        %3266 = vmatpush1.msra.mxu0 0.0
        %3267 = vmatprep.subr.mxu0 0.0
        %3268 = vmatpush1.msra.mxu0 0.0
        %3269 = vmatprep.subr.mxu0 0.0
        %3270 = vmatpush1.msra.mxu0 0.0
        %3271 = vmatprep.mubr.f32.mxu0 0.0
        %3272 = vmatmul.mubr.f32.gmra.mrb[0].mxu0 %v3063
        %v3273 = vpop.f32.mrb[0].mxu0
        %v3274 = vadd.f32 0.0, %v3273
        %v3275 = vpop.f32.mrb[0].mxu0
        %v3276 = vadd.f32 0.0, %v3275
        %3277 = vdwg.mxu0
        %3278 = vmatprep.subr.mxu0 %v2378
        %3279 = vmatpush1.msra.mxu0 %v2377
        %3280 = vmatprep.subr.mxu0 0.0
        %3281 = vmatpush1.msra.mxu0 0.0
        %3282 = vmatprep.subr.mxu0 0.0
        %3283 = vmatpush1.msra.mxu0 0.0
        %3284 = vmatprep.subr.mxu0 0.0
        %3285 = vmatpush1.msra.mxu0 0.0
        %3286 = vmatprep.subr.mxu0 0.0
        %3287 = vmatpush1.msra.mxu0 0.0
        %3288 = vmatprep.subr.mxu0 0.0
        %3289 = vmatpush1.msra.mxu0 0.0
        %3290 = vmatprep.subr.mxu0 0.0
        %3291 = vmatpush1.msra.mxu0 0.0
        %3292 = vmatprep.subr.mxu0 0.0
        %3293 = vmatpush1.msra.mxu0 0.0
        %3294 = vmatprep.subr.mxu0 0.0
        %3295 = vmatpush1.msra.mxu0 0.0
        %3296 = vmatprep.subr.mxu0 0.0
        %3297 = vmatpush1.msra.mxu0 0.0
        %3298 = vmatprep.subr.mxu0 0.0
        %3299 = vmatpush1.msra.mxu0 0.0
        %3300 = vmatprep.subr.mxu0 0.0
        %3301 = vmatpush1.msra.mxu0 0.0
        %3302 = vmatprep.subr.mxu0 0.0
        %3303 = vmatpush1.msra.mxu0 0.0
        %3304 = vmatprep.subr.mxu0 0.0
        %3305 = vmatpush1.msra.mxu0 0.0
        %3306 = vmatprep.subr.mxu0 0.0
        %3307 = vmatpush1.msra.mxu0 0.0
        %3308 = vmatprep.subr.mxu0 0.0
        %3309 = vmatpush1.msra.mxu0 0.0
        %3310 = vmatprep.subr.mxu0 0.0
        %3311 = vmatpush1.msra.mxu0 0.0
        %3312 = vmatprep.subr.mxu0 0.0
        %3313 = vmatpush1.msra.mxu0 0.0
        %3314 = vmatprep.subr.mxu0 0.0
        %3315 = vmatpush1.msra.mxu0 0.0
        %3316 = vmatprep.subr.mxu0 0.0
        %3317 = vmatpush1.msra.mxu0 0.0
        %3318 = vmatprep.subr.mxu0 0.0
        %3319 = vmatpush1.msra.mxu0 0.0
        %3320 = vmatprep.subr.mxu0 0.0
        %3321 = vmatpush1.msra.mxu0 0.0
        %3322 = vmatprep.subr.mxu0 0.0
        %3323 = vmatpush1.msra.mxu0 0.0
        %3324 = vmatprep.subr.mxu0 0.0
        %3325 = vmatpush1.msra.mxu0 0.0
        %3326 = vmatprep.subr.mxu0 0.0
        %3327 = vmatpush1.msra.mxu0 0.0
        %3328 = vmatprep.subr.mxu0 0.0
        %3329 = vmatpush1.msra.mxu0 0.0
        %3330 = vmatprep.subr.mxu0 0.0
        %3331 = vmatpush1.msra.mxu0 0.0
        %3332 = vmatprep.subr.mxu0 0.0
        %3333 = vmatpush1.msra.mxu0 0.0
        %3334 = vmatprep.subr.mxu0 0.0
        %3335 = vmatpush1.msra.mxu0 0.0
        %3336 = vmatprep.subr.mxu0 0.0
        %3337 = vmatpush1.msra.mxu0 0.0
        %3338 = vmatprep.subr.mxu0 0.0
        %3339 = vmatpush1.msra.mxu0 0.0
        %3340 = vmatprep.subr.mxu0 0.0
        %3341 = vmatpush1.msra.mxu0 0.0
        %3342 = vmatprep.mubr.f32.mxu0 0.0
        %3343 = vmatmul.mubr.f32.gmra.mrb[0].mxu0 %v3063
        %v3344 = vpop.f32.mrb[0].mxu0
        %v3345 = vadd.f32 0.0, %v3344
        %v3346 = vpop.f32.mrb[0].mxu0
        %v3347 = vadd.f32 0.0, %v3346
        %3348 = vdwg.mxu0
        %v3349 = vadd.f32 %v3054, %v3132
        %v3350 = vadd.f32 %v3055, %v3134
        %v3351 = vadd.f32 %v3056, %v3203
        %v3352 = vadd.f32 %v3057, %v3205
        %v3353 = vadd.f32 %v3058, %v3274
        %v3354 = vadd.f32 %v3059, %v3276
        %v3355 = vadd.f32 %v3060, %v3345
        %v3356 = vadd.f32 %v3061, %v3347
        %v3357 = vld [vmem:[#allocation2 + $0x30] sm:$0xff]
        %v3358 = vld [vmem:[#allocation2 + $0x38] sm:$0xff]
        %v3359 = vld [vmem:[#allocation2 + $0x40] sm:$0xff]
        %v3360 = vld [vmem:[#allocation2 + $0x48] sm:$0xff]
        %v3361 = vld [vmem:[#allocation2 + $0x50] sm:$0xff]
        %v3362 = vld [vmem:[#allocation2 + $0x58] sm:$0xff]
        %v3363 = vld [vmem:[#allocation2 + $0x60] sm:$0xff]
        %v3364 = vld [vmem:[#allocation2 + $0x68] sm:$0xff]
        %v3365 = vld [vmem:[#allocation2 + $0x70] sm:$0xff]
        %3375 = vrot.lane.b32.xlu0 %v3357, 124
        %v3376 = vpop.permute.xlu0 %3375
        %3377 = vrot.lane.b32.xlu0 %v3358, 124
        %v3378 = vpop.permute.xlu0 %3377
        %3379 = vrot.lane.b32.xlu0 %v3359, 124
        %v3380 = vpop.permute.xlu0 %3379
        %3381 = vrot.lane.b32.xlu0 %v3360, 124
        %v3382 = vpop.permute.xlu0 %3381
        %3383 = vrot.lane.b32.xlu0 %v3361, 124
        %v3384 = vpop.permute.xlu0 %3383
        %3385 = vrot.lane.b32.xlu0 %v3362, 124
        %v3386 = vpop.permute.xlu0 %3385
        %3387 = vrot.lane.b32.xlu0 %v3363, 124
        %v3388 = vpop.permute.xlu0 %3387
        %3389 = vrot.lane.b32.xlu0 %v3364, 124
        %v3390 = vpop.permute.xlu0 %3389
        %3391 = vrot.lane.b32.xlu0 %v3365, 124
        %v3392 = vpop.permute.xlu0 %3391
        %v3393 = vsel %vm1418, %v3376, %v3378
        %v3394 = vsel %vm1418, %v3378, %v3380
        %v3395 = vsel %vm1418, %v3380, %v3382
        %v3396 = vsel %vm1418, %v3382, %v3384
        %v3397 = vsel %vm1418, %v3384, %v3386
        %v3398 = vsel %vm1418, %v3386, %v3388
        %v3399 = vsel %vm1418, %v3388, %v3390
        %v3400 = vsel %vm1418, %v3390, %v3392
        %v3409 = vsel %vm374, %v3393, 0.0
        %v3410 = vsel %vm375, %v3394, 0.0
        %v3411 = vsel %vm376, %v3395, 0.0
        %v3412 = vsel %vm377, %v3396, 0.0
        %v3413 = vsel %vm378, %v3397, 0.0
        %v3414 = vsel %vm379, %v3398, 0.0
        %v3415 = vsel %vm380, %v3399, 0.0
        %v3416 = vsel %vm381, %v3400, 0.0
        %v3418 = vsel %vm807, %v242, 0
        %3420 = vmatprep.subr.mxu0 %v3410
        %3421 = vmatpush1.msra.mxu0 %v3409
        %3422 = vmatprep.subr.mxu0 0.0
        %3423 = vmatpush1.msra.mxu0 0.0
        %3424 = vmatprep.subr.mxu0 0.0
        %3425 = vmatpush1.msra.mxu0 0.0
        %3426 = vmatprep.subr.mxu0 0.0
        %3427 = vmatpush1.msra.mxu0 0.0
        %3428 = vmatprep.subr.mxu0 0.0
        %3429 = vmatpush1.msra.mxu0 0.0
        %3430 = vmatprep.subr.mxu0 0.0
        %3431 = vmatpush1.msra.mxu0 0.0
        %3432 = vmatprep.subr.mxu0 0.0
        %3433 = vmatpush1.msra.mxu0 0.0
        %3434 = vmatprep.subr.mxu0 0.0
        %3435 = vmatpush1.msra.mxu0 0.0
        %3436 = vmatprep.subr.mxu0 0.0
        %3437 = vmatpush1.msra.mxu0 0.0
        %3438 = vmatprep.subr.mxu0 0.0
        %3439 = vmatpush1.msra.mxu0 0.0
        %3440 = vmatprep.subr.mxu0 0.0
        %3441 = vmatpush1.msra.mxu0 0.0
        %3442 = vmatprep.subr.mxu0 0.0
        %3443 = vmatpush1.msra.mxu0 0.0
        %3444 = vmatprep.subr.mxu0 0.0
        %3445 = vmatpush1.msra.mxu0 0.0
        %3446 = vmatprep.subr.mxu0 0.0
        %3447 = vmatpush1.msra.mxu0 0.0
        %3448 = vmatprep.subr.mxu0 0.0
        %3449 = vmatpush1.msra.mxu0 0.0
        %3450 = vmatprep.subr.mxu0 0.0
        %3451 = vmatpush1.msra.mxu0 0.0
        %3452 = vmatprep.subr.mxu0 0.0
        %3453 = vmatpush1.msra.mxu0 0.0
        %3454 = vmatprep.subr.mxu0 0.0
        %3455 = vmatpush1.msra.mxu0 0.0
        %3456 = vmatprep.subr.mxu0 0.0
        %3457 = vmatpush1.msra.mxu0 0.0
        %3458 = vmatprep.subr.mxu0 0.0
        %3459 = vmatpush1.msra.mxu0 0.0
        %3460 = vmatprep.subr.mxu0 0.0
        %3461 = vmatpush1.msra.mxu0 0.0
        %3462 = vmatprep.subr.mxu0 0.0
        %3463 = vmatpush1.msra.mxu0 0.0
        %3464 = vmatprep.subr.mxu0 0.0
        %3465 = vmatpush1.msra.mxu0 0.0
        %3466 = vmatprep.subr.mxu0 0.0
        %3467 = vmatpush1.msra.mxu0 0.0
        %3468 = vmatprep.subr.mxu0 0.0
        %3469 = vmatpush1.msra.mxu0 0.0
        %3470 = vmatprep.subr.mxu0 0.0
        %3471 = vmatpush1.msra.mxu0 0.0
        %3472 = vmatprep.subr.mxu0 0.0
        %3473 = vmatpush1.msra.mxu0 0.0
        %3474 = vmatprep.subr.mxu0 0.0
        %3475 = vmatpush1.msra.mxu0 0.0
        %3476 = vmatprep.subr.mxu0 0.0
        %3477 = vmatpush1.msra.mxu0 0.0
        %3478 = vmatprep.subr.mxu0 0.0
        %3479 = vmatpush1.msra.mxu0 0.0
        %3480 = vmatprep.subr.mxu0 0.0
        %3481 = vmatpush1.msra.mxu0 0.0
        %3482 = vmatprep.subr.mxu0 0.0
        %3483 = vmatpush1.msra.mxu0 0.0
        %3484 = vmatprep.mubr.f32.mxu0 0.0
        %3485 = vmatmul.mubr.f32.gmra.mrb[0].mxu0 %v3418
        %v3486 = vpop.f32.mrb[0].mxu0
        %v3487 = vadd.f32 0.0, %v3486
        %v3488 = vpop.f32.mrb[0].mxu0
        %v3489 = vadd.f32 0.0, %v3488
        %3490 = vdwg.mxu0
        %3491 = vmatprep.subr.mxu0 %v3412
        %3492 = vmatpush1.msra.mxu0 %v3411
        %3493 = vmatprep.subr.mxu0 0.0
        %3494 = vmatpush1.msra.mxu0 0.0
        %3495 = vmatprep.subr.mxu0 0.0
        %3496 = vmatpush1.msra.mxu0 0.0
        %3497 = vmatprep.subr.mxu0 0.0
        %3498 = vmatpush1.msra.mxu0 0.0
        %3499 = vmatprep.subr.mxu0 0.0
        %3500 = vmatpush1.msra.mxu0 0.0
        %3501 = vmatprep.subr.mxu0 0.0
        %3502 = vmatpush1.msra.mxu0 0.0
        %3503 = vmatprep.subr.mxu0 0.0
        %3504 = vmatpush1.msra.mxu0 0.0
        %3505 = vmatprep.subr.mxu0 0.0
        %3506 = vmatpush1.msra.mxu0 0.0
        %3507 = vmatprep.subr.mxu0 0.0
        %3508 = vmatpush1.msra.mxu0 0.0
        %3509 = vmatprep.subr.mxu0 0.0
        %3510 = vmatpush1.msra.mxu0 0.0
        %3511 = vmatprep.subr.mxu0 0.0
        %3512 = vmatpush1.msra.mxu0 0.0
        %3513 = vmatprep.subr.mxu0 0.0
        %3514 = vmatpush1.msra.mxu0 0.0
        %3515 = vmatprep.subr.mxu0 0.0
        %3516 = vmatpush1.msra.mxu0 0.0
        %3517 = vmatprep.subr.mxu0 0.0
        %3518 = vmatpush1.msra.mxu0 0.0
        %3519 = vmatprep.subr.mxu0 0.0
        %3520 = vmatpush1.msra.mxu0 0.0
        %3521 = vmatprep.subr.mxu0 0.0
        %3522 = vmatpush1.msra.mxu0 0.0
        %3523 = vmatprep.subr.mxu0 0.0
        %3524 = vmatpush1.msra.mxu0 0.0
        %3525 = vmatprep.subr.mxu0 0.0
        %3526 = vmatpush1.msra.mxu0 0.0
        %3527 = vmatprep.subr.mxu0 0.0
        %3528 = vmatpush1.msra.mxu0 0.0
        %3529 = vmatprep.subr.mxu0 0.0
        %3530 = vmatpush1.msra.mxu0 0.0
        %3531 = vmatprep.subr.mxu0 0.0
        %3532 = vmatpush1.msra.mxu0 0.0
        %3533 = vmatprep.subr.mxu0 0.0
        %3534 = vmatpush1.msra.mxu0 0.0
        %3535 = vmatprep.subr.mxu0 0.0
        %3536 = vmatpush1.msra.mxu0 0.0
        %3537 = vmatprep.subr.mxu0 0.0
        %3538 = vmatpush1.msra.mxu0 0.0
        %3539 = vmatprep.subr.mxu0 0.0
        %3540 = vmatpush1.msra.mxu0 0.0
        %3541 = vmatprep.subr.mxu0 0.0
        %3542 = vmatpush1.msra.mxu0 0.0
        %3543 = vmatprep.subr.mxu0 0.0
        %3544 = vmatpush1.msra.mxu0 0.0
        %3545 = vmatprep.subr.mxu0 0.0
        %3546 = vmatpush1.msra.mxu0 0.0
        %3547 = vmatprep.subr.mxu0 0.0
        %3548 = vmatpush1.msra.mxu0 0.0
        %3549 = vmatprep.subr.mxu0 0.0
        %3550 = vmatpush1.msra.mxu0 0.0
        %3551 = vmatprep.subr.mxu0 0.0
        %3552 = vmatpush1.msra.mxu0 0.0
        %3553 = vmatprep.subr.mxu0 0.0
        %3554 = vmatpush1.msra.mxu0 0.0
        %3555 = vmatprep.mubr.f32.mxu0 0.0
        %3556 = vmatmul.mubr.f32.gmra.mrb[0].mxu0 %v3418
        %v3557 = vpop.f32.mrb[0].mxu0
        %v3558 = vadd.f32 0.0, %v3557
        %v3559 = vpop.f32.mrb[0].mxu0
        %v3560 = vadd.f32 0.0, %v3559
        %3561 = vdwg.mxu0
        %3562 = vmatprep.subr.mxu0 %v3414
        %3563 = vmatpush1.msra.mxu0 %v3413
        %3564 = vmatprep.subr.mxu0 0.0
        %3565 = vmatpush1.msra.mxu0 0.0
        %3566 = vmatprep.subr.mxu0 0.0
        %3567 = vmatpush1.msra.mxu0 0.0
        %3568 = vmatprep.subr.mxu0 0.0
        %3569 = vmatpush1.msra.mxu0 0.0
        %3570 = vmatprep.subr.mxu0 0.0
        %3571 = vmatpush1.msra.mxu0 0.0
        %3572 = vmatprep.subr.mxu0 0.0
        %3573 = vmatpush1.msra.mxu0 0.0
        %3574 = vmatprep.subr.mxu0 0.0
        %3575 = vmatpush1.msra.mxu0 0.0
        %3576 = vmatprep.subr.mxu0 0.0
        %3577 = vmatpush1.msra.mxu0 0.0
        %3578 = vmatprep.subr.mxu0 0.0
        %3579 = vmatpush1.msra.mxu0 0.0
        %3580 = vmatprep.subr.mxu0 0.0
        %3581 = vmatpush1.msra.mxu0 0.0
        %3582 = vmatprep.subr.mxu0 0.0
        %3583 = vmatpush1.msra.mxu0 0.0
        %3584 = vmatprep.subr.mxu0 0.0
        %3585 = vmatpush1.msra.mxu0 0.0
        %3586 = vmatprep.subr.mxu0 0.0
        %3587 = vmatpush1.msra.mxu0 0.0
        %3588 = vmatprep.subr.mxu0 0.0
        %3589 = vmatpush1.msra.mxu0 0.0
        %3590 = vmatprep.subr.mxu0 0.0
        %3591 = vmatpush1.msra.mxu0 0.0
        %3592 = vmatprep.subr.mxu0 0.0
        %3593 = vmatpush1.msra.mxu0 0.0
        %3594 = vmatprep.subr.mxu0 0.0
        %3595 = vmatpush1.msra.mxu0 0.0
        %3596 = vmatprep.subr.mxu0 0.0
        %3597 = vmatpush1.msra.mxu0 0.0
        %3598 = vmatprep.subr.mxu0 0.0
        %3599 = vmatpush1.msra.mxu0 0.0
        %3600 = vmatprep.subr.mxu0 0.0
        %3601 = vmatpush1.msra.mxu0 0.0
        %3602 = vmatprep.subr.mxu0 0.0
        %3603 = vmatpush1.msra.mxu0 0.0
        %3604 = vmatprep.subr.mxu0 0.0
        %3605 = vmatpush1.msra.mxu0 0.0
        %3606 = vmatprep.subr.mxu0 0.0
        %3607 = vmatpush1.msra.mxu0 0.0
        %3608 = vmatprep.subr.mxu0 0.0
        %3609 = vmatpush1.msra.mxu0 0.0
        %3610 = vmatprep.subr.mxu0 0.0
        %3611 = vmatpush1.msra.mxu0 0.0
        %3612 = vmatprep.subr.mxu0 0.0
        %3613 = vmatpush1.msra.mxu0 0.0
        %3614 = vmatprep.subr.mxu0 0.0
        %3615 = vmatpush1.msra.mxu0 0.0
        %3616 = vmatprep.subr.mxu0 0.0
        %3617 = vmatpush1.msra.mxu0 0.0
        %3618 = vmatprep.subr.mxu0 0.0
        %3619 = vmatpush1.msra.mxu0 0.0
        %3620 = vmatprep.subr.mxu0 0.0
        %3621 = vmatpush1.msra.mxu0 0.0
        %3622 = vmatprep.subr.mxu0 0.0
        %3623 = vmatpush1.msra.mxu0 0.0
        %3624 = vmatprep.subr.mxu0 0.0
        %3625 = vmatpush1.msra.mxu0 0.0
        %3626 = vmatprep.mubr.f32.mxu0 0.0
        %3627 = vmatmul.mubr.f32.gmra.mrb[0].mxu0 %v3418
        %v3628 = vpop.f32.mrb[0].mxu0
        %v3629 = vadd.f32 0.0, %v3628
        %v3630 = vpop.f32.mrb[0].mxu0
        %v3631 = vadd.f32 0.0, %v3630
        %3632 = vdwg.mxu0
        %3633 = vmatprep.subr.mxu0 %v3416
        %3634 = vmatpush1.msra.mxu0 %v3415
        %3635 = vmatprep.subr.mxu0 0.0
        %3636 = vmatpush1.msra.mxu0 0.0
        %3637 = vmatprep.subr.mxu0 0.0
        %3638 = vmatpush1.msra.mxu0 0.0
        %3639 = vmatprep.subr.mxu0 0.0
        %3640 = vmatpush1.msra.mxu0 0.0
        %3641 = vmatprep.subr.mxu0 0.0
        %3642 = vmatpush1.msra.mxu0 0.0
        %3643 = vmatprep.subr.mxu0 0.0
        %3644 = vmatpush1.msra.mxu0 0.0
        %3645 = vmatprep.subr.mxu0 0.0
        %3646 = vmatpush1.msra.mxu0 0.0
        %3647 = vmatprep.subr.mxu0 0.0
        %3648 = vmatpush1.msra.mxu0 0.0
        %3649 = vmatprep.subr.mxu0 0.0
        %3650 = vmatpush1.msra.mxu0 0.0
        %3651 = vmatprep.subr.mxu0 0.0
        %3652 = vmatpush1.msra.mxu0 0.0
        %3653 = vmatprep.subr.mxu0 0.0
        %3654 = vmatpush1.msra.mxu0 0.0
        %3655 = vmatprep.subr.mxu0 0.0
        %3656 = vmatpush1.msra.mxu0 0.0
        %3657 = vmatprep.subr.mxu0 0.0
        %3658 = vmatpush1.msra.mxu0 0.0
        %3659 = vmatprep.subr.mxu0 0.0
        %3660 = vmatpush1.msra.mxu0 0.0
        %3661 = vmatprep.subr.mxu0 0.0
        %3662 = vmatpush1.msra.mxu0 0.0
        %3663 = vmatprep.subr.mxu0 0.0
        %3664 = vmatpush1.msra.mxu0 0.0
        %3665 = vmatprep.subr.mxu0 0.0
        %3666 = vmatpush1.msra.mxu0 0.0
        %3667 = vmatprep.subr.mxu0 0.0
        %3668 = vmatpush1.msra.mxu0 0.0
        %3669 = vmatprep.subr.mxu0 0.0
        %3670 = vmatpush1.msra.mxu0 0.0
        %3671 = vmatprep.subr.mxu0 0.0
        %3672 = vmatpush1.msra.mxu0 0.0
        %3673 = vmatprep.subr.mxu0 0.0
        %3674 = vmatpush1.msra.mxu0 0.0
        %3675 = vmatprep.subr.mxu0 0.0
        %3676 = vmatpush1.msra.mxu0 0.0
        %3677 = vmatprep.subr.mxu0 0.0
        %3678 = vmatpush1.msra.mxu0 0.0
        %3679 = vmatprep.subr.mxu0 0.0
        %3680 = vmatpush1.msra.mxu0 0.0
        %3681 = vmatprep.subr.mxu0 0.0
        %3682 = vmatpush1.msra.mxu0 0.0
        %3683 = vmatprep.subr.mxu0 0.0
        %3684 = vmatpush1.msra.mxu0 0.0
        %3685 = vmatprep.subr.mxu0 0.0
        %3686 = vmatpush1.msra.mxu0 0.0
        %3687 = vmatprep.subr.mxu0 0.0
        %3688 = vmatpush1.msra.mxu0 0.0
        %3689 = vmatprep.subr.mxu0 0.0
        %3690 = vmatpush1.msra.mxu0 0.0
        %3691 = vmatprep.subr.mxu0 0.0
        %3692 = vmatpush1.msra.mxu0 0.0
        %3693 = vmatprep.subr.mxu0 0.0
        %3694 = vmatpush1.msra.mxu0 0.0
        %3695 = vmatprep.subr.mxu0 0.0
        %3696 = vmatpush1.msra.mxu0 0.0
        %3697 = vmatprep.mubr.f32.mxu0 0.0
        %3698 = vmatmul.mubr.f32.gmra.mrb[0].mxu0 %v3418
        %v3699 = vpop.f32.mrb[0].mxu0
        %v3700 = vadd.f32 0.0, %v3699
        %v3701 = vpop.f32.mrb[0].mxu0
        %v3702 = vadd.f32 0.0, %v3701
        %3703 = vdwg.mxu0
        %v3704 = vadd.f32 %v3349, %v3487
        %v3705 = vadd.f32 %v3350, %v3489
        %v3706 = vadd.f32 %v3351, %v3558
        %v3707 = vadd.f32 %v3352, %v3560
        %v3708 = vadd.f32 %v3353, %v3629
        %v3709 = vadd.f32 %v3354, %v3631
        %v3710 = vadd.f32 %v3355, %v3700
        %v3711 = vadd.f32 %v3356, %v3702
        %v3712 = vmax.f32 %v3704, 0.0
        %v3713 = vmax.f32 %v3705, 0.0
        %v3714 = vmax.f32 %v3706, 0.0
        %v3715 = vmax.f32 %v3707, 0.0
        %v3716 = vmax.f32 %v3708, 0.0
        %v3717 = vmax.f32 %v3709, 0.0
        %v3718 = vmax.f32 %v3710, 0.0
        %v3719 = vmax.f32 %v3711, 0.0
        %v3720 = vld [vmem:[#allocation2 + $0x10] sm:$0xff]
        %v3721 = vld [vmem:[#allocation2 + $0x18] sm:$0xff]
        %v3722 = vld [vmem:[#allocation2 + $0x20] sm:$0xff]
        %v3723 = vld [vmem:[#allocation2 + $0x28] sm:$0xff]
        %v3724 = vld [vmem:[#allocation2 + $0x30] sm:$0xff]
        %v3725 = vld [vmem:[#allocation2 + $0x38] sm:$0xff]
        %v3726 = vld [vmem:[#allocation2 + $0x40] sm:$0xff]
        %v3727 = vld [vmem:[#allocation2 + $0x48] sm:$0xff]
        %v3728 = vld [vmem:[#allocation2 + $0x50] sm:$0xff]
        %3738 = vrot.lane.b32.xlu0 %v3720, 8
        %v3739 = vpop.permute.xlu0 %3738
        %3740 = vrot.lane.b32.xlu0 %v3721, 8
        %v3741 = vpop.permute.xlu0 %3740
        %3742 = vrot.lane.b32.xlu0 %v3722, 8
        %v3743 = vpop.permute.xlu0 %3742
        %3744 = vrot.lane.b32.xlu0 %v3723, 8
        %v3745 = vpop.permute.xlu0 %3744
        %3746 = vrot.lane.b32.xlu0 %v3724, 8
        %v3747 = vpop.permute.xlu0 %3746
        %3748 = vrot.lane.b32.xlu0 %v3725, 8
        %v3749 = vpop.permute.xlu0 %3748
        %3750 = vrot.lane.b32.xlu0 %v3726, 8
        %v3751 = vpop.permute.xlu0 %3750
        %3752 = vrot.lane.b32.xlu0 %v3727, 8
        %v3753 = vpop.permute.xlu0 %3752
        %3754 = vrot.lane.b32.xlu0 %v3728, 8
        %v3755 = vpop.permute.xlu0 %3754
        %v3756 = vsel %vm807, %v3739, %v3741
        %v3757 = vsel %vm807, %v3741, %v3743
        %v3758 = vsel %vm807, %v3743, %v3745
        %v3759 = vsel %vm807, %v3745, %v3747
        %v3760 = vsel %vm807, %v3747, %v3749
        %v3761 = vsel %vm807, %v3749, %v3751
        %v3762 = vsel %vm807, %v3751, %v3753
        %v3763 = vsel %vm807, %v3753, %v3755
        %v3772 = vsel %vm382, %v3756, 0.0
        %v3773 = vsel %vm383, %v3757, 0.0
        %v3774 = vsel %vm384, %v3758, 0.0
        %v3775 = vsel %vm385, %v3759, 0.0
        %v3776 = vsel %vm386, %v3760, 0.0
        %v3777 = vsel %vm387, %v3761, 0.0
        %v3778 = vsel %vm388, %v3762, 0.0
        %v3779 = vsel %vm389, %v3763, 0.0
        %v3781 = vsel %vm807, %v244, 0
        %3783 = vmatprep.subr.mxu0 %v3722
        %3784 = vmatpush1.msra.mxu0 %v3721
        %3785 = vmatprep.subr.mxu0 0.0
        %3786 = vmatpush1.msra.mxu0 0.0
        %3787 = vmatprep.subr.mxu0 0.0
        %3788 = vmatpush1.msra.mxu0 0.0
        %3789 = vmatprep.subr.mxu0 0.0
        %3790 = vmatpush1.msra.mxu0 0.0
        %3791 = vmatprep.subr.mxu0 0.0
        %3792 = vmatpush1.msra.mxu0 0.0
        %3793 = vmatprep.subr.mxu0 0.0
        %3794 = vmatpush1.msra.mxu0 0.0
        %3795 = vmatprep.subr.mxu0 0.0
        %3796 = vmatpush1.msra.mxu0 0.0
        %3797 = vmatprep.subr.mxu0 0.0
        %3798 = vmatpush1.msra.mxu0 0.0
        %3799 = vmatprep.subr.mxu0 0.0
        %3800 = vmatpush1.msra.mxu0 0.0
        %3801 = vmatprep.subr.mxu0 0.0
        %3802 = vmatpush1.msra.mxu0 0.0
        %3803 = vmatprep.subr.mxu0 0.0
        %3804 = vmatpush1.msra.mxu0 0.0
        %3805 = vmatprep.subr.mxu0 0.0
        %3806 = vmatpush1.msra.mxu0 0.0
        %3807 = vmatprep.subr.mxu0 0.0
        %3808 = vmatpush1.msra.mxu0 0.0
        %3809 = vmatprep.subr.mxu0 0.0
        %3810 = vmatpush1.msra.mxu0 0.0
        %3811 = vmatprep.subr.mxu0 0.0
        %3812 = vmatpush1.msra.mxu0 0.0
        %3813 = vmatprep.subr.mxu0 0.0
        %3814 = vmatpush1.msra.mxu0 0.0
        %3815 = vmatprep.subr.mxu0 0.0
        %3816 = vmatpush1.msra.mxu0 0.0
        %3817 = vmatprep.subr.mxu0 0.0
        %3818 = vmatpush1.msra.mxu0 0.0
        %3819 = vmatprep.subr.mxu0 0.0
        %3820 = vmatpush1.msra.mxu0 0.0
        %3821 = vmatprep.subr.mxu0 0.0
        %3822 = vmatpush1.msra.mxu0 0.0
        %3823 = vmatprep.subr.mxu0 0.0
        %3824 = vmatpush1.msra.mxu0 0.0
        %3825 = vmatprep.subr.mxu0 0.0
        %3826 = vmatpush1.msra.mxu0 0.0
        %3827 = vmatprep.subr.mxu0 0.0
        %3828 = vmatpush1.msra.mxu0 0.0
        %3829 = vmatprep.subr.mxu0 0.0
        %3830 = vmatpush1.msra.mxu0 0.0
        %3831 = vmatprep.subr.mxu0 0.0
        %3832 = vmatpush1.msra.mxu0 0.0
        %3833 = vmatprep.subr.mxu0 0.0
        %3834 = vmatpush1.msra.mxu0 0.0
        %3835 = vmatprep.subr.mxu0 0.0
        %3836 = vmatpush1.msra.mxu0 0.0
        %3837 = vmatprep.subr.mxu0 0.0
        %3838 = vmatpush1.msra.mxu0 0.0
        %3839 = vmatprep.subr.mxu0 0.0
        %3840 = vmatpush1.msra.mxu0 0.0
        %3841 = vmatprep.subr.mxu0 0.0
        %3842 = vmatpush1.msra.mxu0 0.0
        %3843 = vmatprep.subr.mxu0 0.0
        %3844 = vmatpush1.msra.mxu0 0.0
        %3845 = vmatprep.subr.mxu0 0.0
        %3846 = vmatpush1.msra.mxu0 0.0
        %3847 = vmatprep.mubr.f32.mxu0 0.0
        %3848 = vmatmul.mubr.f32.gmra.mrb[0].mxu0 %v3781
        %v3849 = vpop.f32.mrb[0].mxu0
        %v3850 = vadd.f32 0.0, %v3849
        %v3851 = vpop.f32.mrb[0].mxu0
        %v3852 = vadd.f32 0.0, %v3851
        %3853 = vdwg.mxu0
        %3854 = vmatprep.subr.mxu0 %v3724
        %3855 = vmatpush1.msra.mxu0 %v3723
        %3856 = vmatprep.subr.mxu0 0.0
        %3857 = vmatpush1.msra.mxu0 0.0
        %3858 = vmatprep.subr.mxu0 0.0
        %3859 = vmatpush1.msra.mxu0 0.0
        %3860 = vmatprep.subr.mxu0 0.0
        %3861 = vmatpush1.msra.mxu0 0.0
        %3862 = vmatprep.subr.mxu0 0.0
        %3863 = vmatpush1.msra.mxu0 0.0
        %3864 = vmatprep.subr.mxu0 0.0
        %3865 = vmatpush1.msra.mxu0 0.0
        %3866 = vmatprep.subr.mxu0 0.0
        %3867 = vmatpush1.msra.mxu0 0.0
        %3868 = vmatprep.subr.mxu0 0.0
        %3869 = vmatpush1.msra.mxu0 0.0
        %3870 = vmatprep.subr.mxu0 0.0
        %3871 = vmatpush1.msra.mxu0 0.0
        %3872 = vmatprep.subr.mxu0 0.0
        %3873 = vmatpush1.msra.mxu0 0.0
        %3874 = vmatprep.subr.mxu0 0.0
        %3875 = vmatpush1.msra.mxu0 0.0
        %3876 = vmatprep.subr.mxu0 0.0
        %3877 = vmatpush1.msra.mxu0 0.0
        %3878 = vmatprep.subr.mxu0 0.0
        %3879 = vmatpush1.msra.mxu0 0.0
        %3880 = vmatprep.subr.mxu0 0.0
        %3881 = vmatpush1.msra.mxu0 0.0
        %3882 = vmatprep.subr.mxu0 0.0
        %3883 = vmatpush1.msra.mxu0 0.0
        %3884 = vmatprep.subr.mxu0 0.0
        %3885 = vmatpush1.msra.mxu0 0.0
        %3886 = vmatprep.subr.mxu0 0.0
        %3887 = vmatpush1.msra.mxu0 0.0
        %3888 = vmatprep.subr.mxu0 0.0
        %3889 = vmatpush1.msra.mxu0 0.0
        %3890 = vmatprep.subr.mxu0 0.0
        %3891 = vmatpush1.msra.mxu0 0.0
        %3892 = vmatprep.subr.mxu0 0.0
        %3893 = vmatpush1.msra.mxu0 0.0
        %3894 = vmatprep.subr.mxu0 0.0
        %3895 = vmatpush1.msra.mxu0 0.0
        %3896 = vmatprep.subr.mxu0 0.0
        %3897 = vmatpush1.msra.mxu0 0.0
        %3898 = vmatprep.subr.mxu0 0.0
        %3899 = vmatpush1.msra.mxu0 0.0
        %3900 = vmatprep.subr.mxu0 0.0
        %3901 = vmatpush1.msra.mxu0 0.0
        %3902 = vmatprep.subr.mxu0 0.0
        %3903 = vmatpush1.msra.mxu0 0.0
        %3904 = vmatprep.subr.mxu0 0.0
        %3905 = vmatpush1.msra.mxu0 0.0
        %3906 = vmatprep.subr.mxu0 0.0
        %3907 = vmatpush1.msra.mxu0 0.0
        %3908 = vmatprep.subr.mxu0 0.0
        %3909 = vmatpush1.msra.mxu0 0.0
        %3910 = vmatprep.subr.mxu0 0.0
        %3911 = vmatpush1.msra.mxu0 0.0
        %3912 = vmatprep.subr.mxu0 0.0
        %3913 = vmatpush1.msra.mxu0 0.0
        %3914 = vmatprep.subr.mxu0 0.0
        %3915 = vmatpush1.msra.mxu0 0.0
        %3916 = vmatprep.subr.mxu0 0.0
        %3917 = vmatpush1.msra.mxu0 0.0
        %3918 = vmatprep.mubr.f32.mxu0 0.0
        %3919 = vmatmul.mubr.f32.gmra.mrb[0].mxu0 %v3781
        %v3920 = vpop.f32.mrb[0].mxu0
        %v3921 = vadd.f32 0.0, %v3920
        %v3922 = vpop.f32.mrb[0].mxu0
        %v3923 = vadd.f32 0.0, %v3922
        %3924 = vdwg.mxu0
        %3925 = vmatprep.subr.mxu0 %v3726
        %3926 = vmatpush1.msra.mxu0 %v3725
        %3927 = vmatprep.subr.mxu0 0.0
        %3928 = vmatpush1.msra.mxu0 0.0
        %3929 = vmatprep.subr.mxu0 0.0
        %3930 = vmatpush1.msra.mxu0 0.0
        %3931 = vmatprep.subr.mxu0 0.0
        %3932 = vmatpush1.msra.mxu0 0.0
        %3933 = vmatprep.subr.mxu0 0.0
        %3934 = vmatpush1.msra.mxu0 0.0
        %3935 = vmatprep.subr.mxu0 0.0
        %3936 = vmatpush1.msra.mxu0 0.0
        %3937 = vmatprep.subr.mxu0 0.0
        %3938 = vmatpush1.msra.mxu0 0.0
        %3939 = vmatprep.subr.mxu0 0.0
        %3940 = vmatpush1.msra.mxu0 0.0
        %3941 = vmatprep.subr.mxu0 0.0
        %3942 = vmatpush1.msra.mxu0 0.0
        %3943 = vmatprep.subr.mxu0 0.0
        %3944 = vmatpush1.msra.mxu0 0.0
        %3945 = vmatprep.subr.mxu0 0.0
        %3946 = vmatpush1.msra.mxu0 0.0
        %3947 = vmatprep.subr.mxu0 0.0
        %3948 = vmatpush1.msra.mxu0 0.0
        %3949 = vmatprep.subr.mxu0 0.0
        %3950 = vmatpush1.msra.mxu0 0.0
        %3951 = vmatprep.subr.mxu0 0.0
        %3952 = vmatpush1.msra.mxu0 0.0
        %3953 = vmatprep.subr.mxu0 0.0
        %3954 = vmatpush1.msra.mxu0 0.0
        %3955 = vmatprep.subr.mxu0 0.0
        %3956 = vmatpush1.msra.mxu0 0.0
        %3957 = vmatprep.subr.mxu0 0.0
        %3958 = vmatpush1.msra.mxu0 0.0
        %3959 = vmatprep.subr.mxu0 0.0
        %3960 = vmatpush1.msra.mxu0 0.0
        %3961 = vmatprep.subr.mxu0 0.0
        %3962 = vmatpush1.msra.mxu0 0.0
        %3963 = vmatprep.subr.mxu0 0.0
        %3964 = vmatpush1.msra.mxu0 0.0
        %3965 = vmatprep.subr.mxu0 0.0
        %3966 = vmatpush1.msra.mxu0 0.0
        %3967 = vmatprep.subr.mxu0 0.0
        %3968 = vmatpush1.msra.mxu0 0.0
        %3969 = vmatprep.subr.mxu0 0.0
        %3970 = vmatpush1.msra.mxu0 0.0
        %3971 = vmatprep.subr.mxu0 0.0
        %3972 = vmatpush1.msra.mxu0 0.0
        %3973 = vmatprep.subr.mxu0 0.0
        %3974 = vmatpush1.msra.mxu0 0.0
        %3975 = vmatprep.subr.mxu0 0.0
        %3976 = vmatpush1.msra.mxu0 0.0
        %3977 = vmatprep.subr.mxu0 0.0
        %3978 = vmatpush1.msra.mxu0 0.0
        %3979 = vmatprep.subr.mxu0 0.0
        %3980 = vmatpush1.msra.mxu0 0.0
        %3981 = vmatprep.subr.mxu0 0.0
        %3982 = vmatpush1.msra.mxu0 0.0
        %3983 = vmatprep.subr.mxu0 0.0
        %3984 = vmatpush1.msra.mxu0 0.0
        %3985 = vmatprep.subr.mxu0 0.0
        %3986 = vmatpush1.msra.mxu0 0.0
        %3987 = vmatprep.subr.mxu0 0.0
        %3988 = vmatpush1.msra.mxu0 0.0
        %3989 = vmatprep.mubr.f32.mxu0 0.0
        %3990 = vmatmul.mubr.f32.gmra.mrb[0].mxu0 %v3781
        %v3991 = vpop.f32.mrb[0].mxu0
        %v3992 = vadd.f32 0.0, %v3991
        %v3993 = vpop.f32.mrb[0].mxu0
        %v3994 = vadd.f32 0.0, %v3993
        %3995 = vdwg.mxu0
        %3996 = vmatprep.subr.mxu0 %v3728
        %3997 = vmatpush1.msra.mxu0 %v3727
        %3998 = vmatprep.subr.mxu0 0.0
        %3999 = vmatpush1.msra.mxu0 0.0
        %4000 = vmatprep.subr.mxu0 0.0
        %4001 = vmatpush1.msra.mxu0 0.0
        %4002 = vmatprep.subr.mxu0 0.0
        %4003 = vmatpush1.msra.mxu0 0.0
        %4004 = vmatprep.subr.mxu0 0.0
        %4005 = vmatpush1.msra.mxu0 0.0
        %4006 = vmatprep.subr.mxu0 0.0
        %4007 = vmatpush1.msra.mxu0 0.0
        %4008 = vmatprep.subr.mxu0 0.0
        %4009 = vmatpush1.msra.mxu0 0.0
        %4010 = vmatprep.subr.mxu0 0.0
        %4011 = vmatpush1.msra.mxu0 0.0
        %4012 = vmatprep.subr.mxu0 0.0
        %4013 = vmatpush1.msra.mxu0 0.0
        %4014 = vmatprep.subr.mxu0 0.0
        %4015 = vmatpush1.msra.mxu0 0.0
        %4016 = vmatprep.subr.mxu0 0.0
        %4017 = vmatpush1.msra.mxu0 0.0
        %4018 = vmatprep.subr.mxu0 0.0
        %4019 = vmatpush1.msra.mxu0 0.0
        %4020 = vmatprep.subr.mxu0 0.0
        %4021 = vmatpush1.msra.mxu0 0.0
        %4022 = vmatprep.subr.mxu0 0.0
        %4023 = vmatpush1.msra.mxu0 0.0
        %4024 = vmatprep.subr.mxu0 0.0
        %4025 = vmatpush1.msra.mxu0 0.0
        %4026 = vmatprep.subr.mxu0 0.0
        %4027 = vmatpush1.msra.mxu0 0.0
        %4028 = vmatprep.subr.mxu0 0.0
        %4029 = vmatpush1.msra.mxu0 0.0
        %4030 = vmatprep.subr.mxu0 0.0
        %4031 = vmatpush1.msra.mxu0 0.0
        %4032 = vmatprep.subr.mxu0 0.0
        %4033 = vmatpush1.msra.mxu0 0.0
        %4034 = vmatprep.subr.mxu0 0.0
        %4035 = vmatpush1.msra.mxu0 0.0
        %4036 = vmatprep.subr.mxu0 0.0
        %4037 = vmatpush1.msra.mxu0 0.0
        %4038 = vmatprep.subr.mxu0 0.0
        %4039 = vmatpush1.msra.mxu0 0.0
        %4040 = vmatprep.subr.mxu0 0.0
        %4041 = vmatpush1.msra.mxu0 0.0
        %4042 = vmatprep.subr.mxu0 0.0
        %4043 = vmatpush1.msra.mxu0 0.0
        %4044 = vmatprep.subr.mxu0 0.0
        %4045 = vmatpush1.msra.mxu0 0.0
        %4046 = vmatprep.subr.mxu0 0.0
        %4047 = vmatpush1.msra.mxu0 0.0
        %4048 = vmatprep.subr.mxu0 0.0
        %4049 = vmatpush1.msra.mxu0 0.0
        %4050 = vmatprep.subr.mxu0 0.0
        %4051 = vmatpush1.msra.mxu0 0.0
        %4052 = vmatprep.subr.mxu0 0.0
        %4053 = vmatpush1.msra.mxu0 0.0
        %4054 = vmatprep.subr.mxu0 0.0
        %4055 = vmatpush1.msra.mxu0 0.0
        %4056 = vmatprep.subr.mxu0 0.0
        %4057 = vmatpush1.msra.mxu0 0.0
        %4058 = vmatprep.subr.mxu0 0.0
        %4059 = vmatpush1.msra.mxu0 0.0
        %4060 = vmatprep.mubr.f32.mxu0 0.0
        %4061 = vmatmul.mubr.f32.gmra.mrb[0].mxu0 %v3781
        %v4062 = vpop.f32.mrb[0].mxu0
        %v4063 = vadd.f32 0.0, %v4062
        %v4064 = vpop.f32.mrb[0].mxu0
        %v4065 = vadd.f32 0.0, %v4064
        %4066 = vdwg.mxu0
        %v4068 = vsel %vm807, %v243, 0
        %4070 = vmatprep.subr.mxu0 %v3773
        %4071 = vmatpush1.msra.mxu0 %v3772
        %4072 = vmatprep.subr.mxu0 0.0
        %4073 = vmatpush1.msra.mxu0 0.0
        %4074 = vmatprep.subr.mxu0 0.0
        %4075 = vmatpush1.msra.mxu0 0.0
        %4076 = vmatprep.subr.mxu0 0.0
        %4077 = vmatpush1.msra.mxu0 0.0
        %4078 = vmatprep.subr.mxu0 0.0
        %4079 = vmatpush1.msra.mxu0 0.0
        %4080 = vmatprep.subr.mxu0 0.0
        %4081 = vmatpush1.msra.mxu0 0.0
        %4082 = vmatprep.subr.mxu0 0.0
        %4083 = vmatpush1.msra.mxu0 0.0
        %4084 = vmatprep.subr.mxu0 0.0
        %4085 = vmatpush1.msra.mxu0 0.0
        %4086 = vmatprep.subr.mxu0 0.0
        %4087 = vmatpush1.msra.mxu0 0.0
        %4088 = vmatprep.subr.mxu0 0.0
        %4089 = vmatpush1.msra.mxu0 0.0
        %4090 = vmatprep.subr.mxu0 0.0
        %4091 = vmatpush1.msra.mxu0 0.0
        %4092 = vmatprep.subr.mxu0 0.0
        %4093 = vmatpush1.msra.mxu0 0.0
        %4094 = vmatprep.subr.mxu0 0.0
        %4095 = vmatpush1.msra.mxu0 0.0
        %4096 = vmatprep.subr.mxu0 0.0
        %4097 = vmatpush1.msra.mxu0 0.0
        %4098 = vmatprep.subr.mxu0 0.0
        %4099 = vmatpush1.msra.mxu0 0.0
        %4100 = vmatprep.subr.mxu0 0.0
        %4101 = vmatpush1.msra.mxu0 0.0
        %4102 = vmatprep.subr.mxu0 0.0
        %4103 = vmatpush1.msra.mxu0 0.0
        %4104 = vmatprep.subr.mxu0 0.0
        %4105 = vmatpush1.msra.mxu0 0.0
        %4106 = vmatprep.subr.mxu0 0.0
        %4107 = vmatpush1.msra.mxu0 0.0
        %4108 = vmatprep.subr.mxu0 0.0
        %4109 = vmatpush1.msra.mxu0 0.0
        %4110 = vmatprep.subr.mxu0 0.0
        %4111 = vmatpush1.msra.mxu0 0.0
        %4112 = vmatprep.subr.mxu0 0.0
        %4113 = vmatpush1.msra.mxu0 0.0
        %4114 = vmatprep.subr.mxu0 0.0
        %4115 = vmatpush1.msra.mxu0 0.0
        %4116 = vmatprep.subr.mxu0 0.0
        %4117 = vmatpush1.msra.mxu0 0.0
        %4118 = vmatprep.subr.mxu0 0.0
        %4119 = vmatpush1.msra.mxu0 0.0
        %4120 = vmatprep.subr.mxu0 0.0
        %4121 = vmatpush1.msra.mxu0 0.0
        %4122 = vmatprep.subr.mxu0 0.0
        %4123 = vmatpush1.msra.mxu0 0.0
        %4124 = vmatprep.subr.mxu0 0.0
        %4125 = vmatpush1.msra.mxu0 0.0
        %4126 = vmatprep.subr.mxu0 0.0
        %4127 = vmatpush1.msra.mxu0 0.0
        %4128 = vmatprep.subr.mxu0 0.0
        %4129 = vmatpush1.msra.mxu0 0.0
        %4130 = vmatprep.subr.mxu0 0.0
        %4131 = vmatpush1.msra.mxu0 0.0
        %4132 = vmatprep.subr.mxu0 0.0
        %4133 = vmatpush1.msra.mxu0 0.0
        %4134 = vmatprep.mubr.f32.mxu0 0.0
        %4135 = vmatmul.mubr.f32.gmra.mrb[0].mxu0 %v4068
        %v4136 = vpop.f32.mrb[0].mxu0
        %v4137 = vadd.f32 %v3850, %v4136
        %v4138 = vpop.f32.mrb[0].mxu0
        %v4139 = vadd.f32 %v3852, %v4138
        %4140 = vdwg.mxu0
        %4141 = vmatprep.subr.mxu0 %v3775
        %4142 = vmatpush1.msra.mxu0 %v3774
        %4143 = vmatprep.subr.mxu0 0.0
        %4144 = vmatpush1.msra.mxu0 0.0
        %4145 = vmatprep.subr.mxu0 0.0
        %4146 = vmatpush1.msra.mxu0 0.0
        %4147 = vmatprep.subr.mxu0 0.0
        %4148 = vmatpush1.msra.mxu0 0.0
        %4149 = vmatprep.subr.mxu0 0.0
        %4150 = vmatpush1.msra.mxu0 0.0
        %4151 = vmatprep.subr.mxu0 0.0
        %4152 = vmatpush1.msra.mxu0 0.0
        %4153 = vmatprep.subr.mxu0 0.0
        %4154 = vmatpush1.msra.mxu0 0.0
        %4155 = vmatprep.subr.mxu0 0.0
        %4156 = vmatpush1.msra.mxu0 0.0
        %4157 = vmatprep.subr.mxu0 0.0
        %4158 = vmatpush1.msra.mxu0 0.0
        %4159 = vmatprep.subr.mxu0 0.0
        %4160 = vmatpush1.msra.mxu0 0.0
        %4161 = vmatprep.subr.mxu0 0.0
        %4162 = vmatpush1.msra.mxu0 0.0
        %4163 = vmatprep.subr.mxu0 0.0
        %4164 = vmatpush1.msra.mxu0 0.0
        %4165 = vmatprep.subr.mxu0 0.0
        %4166 = vmatpush1.msra.mxu0 0.0
        %4167 = vmatprep.subr.mxu0 0.0
        %4168 = vmatpush1.msra.mxu0 0.0
        %4169 = vmatprep.subr.mxu0 0.0
        %4170 = vmatpush1.msra.mxu0 0.0
        %4171 = vmatprep.subr.mxu0 0.0
        %4172 = vmatpush1.msra.mxu0 0.0
        %4173 = vmatprep.subr.mxu0 0.0
        %4174 = vmatpush1.msra.mxu0 0.0
        %4175 = vmatprep.subr.mxu0 0.0
        %4176 = vmatpush1.msra.mxu0 0.0
        %4177 = vmatprep.subr.mxu0 0.0
        %4178 = vmatpush1.msra.mxu0 0.0
        %4179 = vmatprep.subr.mxu0 0.0
        %4180 = vmatpush1.msra.mxu0 0.0
        %4181 = vmatprep.subr.mxu0 0.0
        %4182 = vmatpush1.msra.mxu0 0.0
        %4183 = vmatprep.subr.mxu0 0.0
        %4184 = vmatpush1.msra.mxu0 0.0
        %4185 = vmatprep.subr.mxu0 0.0
        %4186 = vmatpush1.msra.mxu0 0.0
        %4187 = vmatprep.subr.mxu0 0.0
        %4188 = vmatpush1.msra.mxu0 0.0
        %4189 = vmatprep.subr.mxu0 0.0
        %4190 = vmatpush1.msra.mxu0 0.0
        %4191 = vmatprep.subr.mxu0 0.0
        %4192 = vmatpush1.msra.mxu0 0.0
        %4193 = vmatprep.subr.mxu0 0.0
        %4194 = vmatpush1.msra.mxu0 0.0
        %4195 = vmatprep.subr.mxu0 0.0
        %4196 = vmatpush1.msra.mxu0 0.0
        %4197 = vmatprep.subr.mxu0 0.0
        %4198 = vmatpush1.msra.mxu0 0.0
        %4199 = vmatprep.subr.mxu0 0.0
        %4200 = vmatpush1.msra.mxu0 0.0
        %4201 = vmatprep.subr.mxu0 0.0
        %4202 = vmatpush1.msra.mxu0 0.0
        %4203 = vmatprep.subr.mxu0 0.0
        %4204 = vmatpush1.msra.mxu0 0.0
        %4205 = vmatprep.mubr.f32.mxu0 0.0
        %4206 = vmatmul.mubr.f32.gmra.mrb[0].mxu0 %v4068
        %v4207 = vpop.f32.mrb[0].mxu0
        %v4208 = vadd.f32 %v3921, %v4207
        %v4209 = vpop.f32.mrb[0].mxu0
        %v4210 = vadd.f32 %v3923, %v4209
        %4211 = vdwg.mxu0
        %4212 = vmatprep.subr.mxu0 %v3777
        %4213 = vmatpush1.msra.mxu0 %v3776
        %4214 = vmatprep.subr.mxu0 0.0
        %4215 = vmatpush1.msra.mxu0 0.0
        %4216 = vmatprep.subr.mxu0 0.0
        %4217 = vmatpush1.msra.mxu0 0.0
        %4218 = vmatprep.subr.mxu0 0.0
        %4219 = vmatpush1.msra.mxu0 0.0
        %4220 = vmatprep.subr.mxu0 0.0
        %4221 = vmatpush1.msra.mxu0 0.0
        %4222 = vmatprep.subr.mxu0 0.0
        %4223 = vmatpush1.msra.mxu0 0.0
        %4224 = vmatprep.subr.mxu0 0.0
        %4225 = vmatpush1.msra.mxu0 0.0
        %4226 = vmatprep.subr.mxu0 0.0
        %4227 = vmatpush1.msra.mxu0 0.0
        %4228 = vmatprep.subr.mxu0 0.0
        %4229 = vmatpush1.msra.mxu0 0.0
        %4230 = vmatprep.subr.mxu0 0.0
        %4231 = vmatpush1.msra.mxu0 0.0
        %4232 = vmatprep.subr.mxu0 0.0
        %4233 = vmatpush1.msra.mxu0 0.0
        %4234 = vmatprep.subr.mxu0 0.0
        %4235 = vmatpush1.msra.mxu0 0.0
        %4236 = vmatprep.subr.mxu0 0.0
        %4237 = vmatpush1.msra.mxu0 0.0
        %4238 = vmatprep.subr.mxu0 0.0
        %4239 = vmatpush1.msra.mxu0 0.0
        %4240 = vmatprep.subr.mxu0 0.0
        %4241 = vmatpush1.msra.mxu0 0.0
        %4242 = vmatprep.subr.mxu0 0.0
        %4243 = vmatpush1.msra.mxu0 0.0
        %4244 = vmatprep.subr.mxu0 0.0
        %4245 = vmatpush1.msra.mxu0 0.0
        %4246 = vmatprep.subr.mxu0 0.0
        %4247 = vmatpush1.msra.mxu0 0.0
        %4248 = vmatprep.subr.mxu0 0.0
        %4249 = vmatpush1.msra.mxu0 0.0
        %4250 = vmatprep.subr.mxu0 0.0
        %4251 = vmatpush1.msra.mxu0 0.0
        %4252 = vmatprep.subr.mxu0 0.0
        %4253 = vmatpush1.msra.mxu0 0.0
        %4254 = vmatprep.subr.mxu0 0.0
        %4255 = vmatpush1.msra.mxu0 0.0
        %4256 = vmatprep.subr.mxu0 0.0
        %4257 = vmatpush1.msra.mxu0 0.0
        %4258 = vmatprep.subr.mxu0 0.0
        %4259 = vmatpush1.msra.mxu0 0.0
        %4260 = vmatprep.subr.mxu0 0.0
        %4261 = vmatpush1.msra.mxu0 0.0
        %4262 = vmatprep.subr.mxu0 0.0
        %4263 = vmatpush1.msra.mxu0 0.0
        %4264 = vmatprep.subr.mxu0 0.0
        %4265 = vmatpush1.msra.mxu0 0.0
        %4266 = vmatprep.subr.mxu0 0.0
        %4267 = vmatpush1.msra.mxu0 0.0
        %4268 = vmatprep.subr.mxu0 0.0
        %4269 = vmatpush1.msra.mxu0 0.0
        %4270 = vmatprep.subr.mxu0 0.0
        %4271 = vmatpush1.msra.mxu0 0.0
        %4272 = vmatprep.subr.mxu0 0.0
        %4273 = vmatpush1.msra.mxu0 0.0
        %4274 = vmatprep.subr.mxu0 0.0
        %4275 = vmatpush1.msra.mxu0 0.0
        %4276 = vmatprep.mubr.f32.mxu0 0.0
        %4277 = vmatmul.mubr.f32.gmra.mrb[0].mxu0 %v4068
        %v4278 = vpop.f32.mrb[0].mxu0
        %v4279 = vadd.f32 %v3992, %v4278
        %v4280 = vpop.f32.mrb[0].mxu0
        %v4281 = vadd.f32 %v3994, %v4280
        %4282 = vdwg.mxu0
        %4283 = vmatprep.subr.mxu0 %v3779
        %4284 = vmatpush1.msra.mxu0 %v3778
        %4285 = vmatprep.subr.mxu0 0.0
        %4286 = vmatpush1.msra.mxu0 0.0
        %4287 = vmatprep.subr.mxu0 0.0
        %4288 = vmatpush1.msra.mxu0 0.0
        %4289 = vmatprep.subr.mxu0 0.0
        %4290 = vmatpush1.msra.mxu0 0.0
        %4291 = vmatprep.subr.mxu0 0.0
        %4292 = vmatpush1.msra.mxu0 0.0
        %4293 = vmatprep.subr.mxu0 0.0
        %4294 = vmatpush1.msra.mxu0 0.0
        %4295 = vmatprep.subr.mxu0 0.0
        %4296 = vmatpush1.msra.mxu0 0.0
        %4297 = vmatprep.subr.mxu0 0.0
        %4298 = vmatpush1.msra.mxu0 0.0
        %4299 = vmatprep.subr.mxu0 0.0
        %4300 = vmatpush1.msra.mxu0 0.0
        %4301 = vmatprep.subr.mxu0 0.0
        %4302 = vmatpush1.msra.mxu0 0.0
        %4303 = vmatprep.subr.mxu0 0.0
        %4304 = vmatpush1.msra.mxu0 0.0
        %4305 = vmatprep.subr.mxu0 0.0
        %4306 = vmatpush1.msra.mxu0 0.0
        %4307 = vmatprep.subr.mxu0 0.0
        %4308 = vmatpush1.msra.mxu0 0.0
        %4309 = vmatprep.subr.mxu0 0.0
        %4310 = vmatpush1.msra.mxu0 0.0
        %4311 = vmatprep.subr.mxu0 0.0
        %4312 = vmatpush1.msra.mxu0 0.0
        %4313 = vmatprep.subr.mxu0 0.0
        %4314 = vmatpush1.msra.mxu0 0.0
        %4315 = vmatprep.subr.mxu0 0.0
        %4316 = vmatpush1.msra.mxu0 0.0
        %4317 = vmatprep.subr.mxu0 0.0
        %4318 = vmatpush1.msra.mxu0 0.0
        %4319 = vmatprep.subr.mxu0 0.0
        %4320 = vmatpush1.msra.mxu0 0.0
        %4321 = vmatprep.subr.mxu0 0.0
        %4322 = vmatpush1.msra.mxu0 0.0
        %4323 = vmatprep.subr.mxu0 0.0
        %4324 = vmatpush1.msra.mxu0 0.0
        %4325 = vmatprep.subr.mxu0 0.0
        %4326 = vmatpush1.msra.mxu0 0.0
        %4327 = vmatprep.subr.mxu0 0.0
        %4328 = vmatpush1.msra.mxu0 0.0
        %4329 = vmatprep.subr.mxu0 0.0
        %4330 = vmatpush1.msra.mxu0 0.0
        %4331 = vmatprep.subr.mxu0 0.0
        %4332 = vmatpush1.msra.mxu0 0.0
        %4333 = vmatprep.subr.mxu0 0.0
        %4334 = vmatpush1.msra.mxu0 0.0
        %4335 = vmatprep.subr.mxu0 0.0
        %4336 = vmatpush1.msra.mxu0 0.0
        %4337 = vmatprep.subr.mxu0 0.0
        %4338 = vmatpush1.msra.mxu0 0.0
        %4339 = vmatprep.subr.mxu0 0.0
        %4340 = vmatpush1.msra.mxu0 0.0
        %4341 = vmatprep.subr.mxu0 0.0
        %4342 = vmatpush1.msra.mxu0 0.0
        %4343 = vmatprep.subr.mxu0 0.0
        %4344 = vmatpush1.msra.mxu0 0.0
        %4345 = vmatprep.subr.mxu0 0.0
        %4346 = vmatpush1.msra.mxu0 0.0
        %4347 = vmatprep.mubr.f32.mxu0 0.0
        %4348 = vmatmul.mubr.f32.gmra.mrb[0].mxu0 %v4068
        %v4349 = vpop.f32.mrb[0].mxu0
        %v4350 = vadd.f32 %v4063, %v4349
        %v4351 = vpop.f32.mrb[0].mxu0
        %v4352 = vadd.f32 %v4065, %v4351
        %4353 = vdwg.mxu0
        %4354 = vrot.lane.b32.xlu0 %v747, 120
        %v4355 = vpop.permute.xlu0 %4354
        %4356 = vrot.lane.b32.xlu0 %v748, 120
        %v4357 = vpop.permute.xlu0 %4356
        %4358 = vrot.lane.b32.xlu0 %v749, 120
        %v4359 = vpop.permute.xlu0 %4358
        %4360 = vrot.lane.b32.xlu0 %v750, 120
        %v4361 = vpop.permute.xlu0 %4360
        %4362 = vrot.lane.b32.xlu0 %v751, 120
        %v4363 = vpop.permute.xlu0 %4362
        %4364 = vrot.lane.b32.xlu0 %v752, 120
        %v4365 = vpop.permute.xlu0 %4364
        %4366 = vrot.lane.b32.xlu0 %v753, 120
        %v4367 = vpop.permute.xlu0 %4366
        %4368 = vrot.lane.b32.xlu0 %v754, 120
        %v4369 = vpop.permute.xlu0 %4368
        %4370 = vrot.lane.b32.xlu0 %v755, 120
        %v4371 = vpop.permute.xlu0 %4370
        %vm4372 = vcmask 982016
        %v4373 = vsel %vm4372, %v4355, %v4357
        %v4374 = vsel %vm4372, %v4357, %v4359
        %v4375 = vsel %vm4372, %v4359, %v4361
        %v4376 = vsel %vm4372, %v4361, %v4363
        %v4377 = vsel %vm4372, %v4363, %v4365
        %v4378 = vsel %vm4372, %v4365, %v4367
        %v4379 = vsel %vm4372, %v4367, %v4369
        %v4380 = vsel %vm4372, %v4369, %v4371
        %v4389 = vsel %vm390, %v4373, 0.0
        %v4390 = vsel %vm391, %v4374, 0.0
        %v4391 = vsel %vm392, %v4375, 0.0
        %v4392 = vsel %vm393, %v4376, 0.0
        %v4393 = vsel %vm394, %v4377, 0.0
        %v4394 = vsel %vm395, %v4378, 0.0
        %v4395 = vsel %vm396, %v4379, 0.0
        %v4396 = vsel %vm397, %v4380, 0.0
        %v4398 = vsel %vm807, %v245, 0
        %4400 = vmatprep.subr.mxu0 %v4390
        %4401 = vmatpush1.msra.mxu0 %v4389
        %4402 = vmatprep.subr.mxu0 0.0
        %4403 = vmatpush1.msra.mxu0 0.0
        %4404 = vmatprep.subr.mxu0 0.0
        %4405 = vmatpush1.msra.mxu0 0.0
        %4406 = vmatprep.subr.mxu0 0.0
        %4407 = vmatpush1.msra.mxu0 0.0
        %4408 = vmatprep.subr.mxu0 0.0
        %4409 = vmatpush1.msra.mxu0 0.0
        %4410 = vmatprep.subr.mxu0 0.0
        %4411 = vmatpush1.msra.mxu0 0.0
        %4412 = vmatprep.subr.mxu0 0.0
        %4413 = vmatpush1.msra.mxu0 0.0
        %4414 = vmatprep.subr.mxu0 0.0
        %4415 = vmatpush1.msra.mxu0 0.0
        %4416 = vmatprep.subr.mxu0 0.0
        %4417 = vmatpush1.msra.mxu0 0.0
        %4418 = vmatprep.subr.mxu0 0.0
        %4419 = vmatpush1.msra.mxu0 0.0
        %4420 = vmatprep.subr.mxu0 0.0
        %4421 = vmatpush1.msra.mxu0 0.0
        %4422 = vmatprep.subr.mxu0 0.0
        %4423 = vmatpush1.msra.mxu0 0.0
        %4424 = vmatprep.subr.mxu0 0.0
        %4425 = vmatpush1.msra.mxu0 0.0
        %4426 = vmatprep.subr.mxu0 0.0
        %4427 = vmatpush1.msra.mxu0 0.0
        %4428 = vmatprep.subr.mxu0 0.0
        %4429 = vmatpush1.msra.mxu0 0.0
        %4430 = vmatprep.subr.mxu0 0.0
        %4431 = vmatpush1.msra.mxu0 0.0
        %4432 = vmatprep.subr.mxu0 0.0
        %4433 = vmatpush1.msra.mxu0 0.0
        %4434 = vmatprep.subr.mxu0 0.0
        %4435 = vmatpush1.msra.mxu0 0.0
        %4436 = vmatprep.subr.mxu0 0.0
        %4437 = vmatpush1.msra.mxu0 0.0
        %4438 = vmatprep.subr.mxu0 0.0
        %4439 = vmatpush1.msra.mxu0 0.0
        %4440 = vmatprep.subr.mxu0 0.0
        %4441 = vmatpush1.msra.mxu0 0.0
        %4442 = vmatprep.subr.mxu0 0.0
        %4443 = vmatpush1.msra.mxu0 0.0
        %4444 = vmatprep.subr.mxu0 0.0
        %4445 = vmatpush1.msra.mxu0 0.0
        %4446 = vmatprep.subr.mxu0 0.0
        %4447 = vmatpush1.msra.mxu0 0.0
        %4448 = vmatprep.subr.mxu0 0.0
        %4449 = vmatpush1.msra.mxu0 0.0
        %4450 = vmatprep.subr.mxu0 0.0
        %4451 = vmatpush1.msra.mxu0 0.0
        %4452 = vmatprep.subr.mxu0 0.0
        %4453 = vmatpush1.msra.mxu0 0.0
        %4454 = vmatprep.subr.mxu0 0.0
        %4455 = vmatpush1.msra.mxu0 0.0
        %4456 = vmatprep.subr.mxu0 0.0
        %4457 = vmatpush1.msra.mxu0 0.0
        %4458 = vmatprep.subr.mxu0 0.0
        %4459 = vmatpush1.msra.mxu0 0.0
        %4460 = vmatprep.subr.mxu0 0.0
        %4461 = vmatpush1.msra.mxu0 0.0
        %4462 = vmatprep.subr.mxu0 0.0
        %4463 = vmatpush1.msra.mxu0 0.0
        %4464 = vmatprep.mubr.f32.mxu0 0.0
        %4465 = vmatmul.mubr.f32.gmra.mrb[0].mxu0 %v4398
        %v4466 = vpop.f32.mrb[0].mxu0
        %v4467 = vadd.f32 0.0, %v4466
        %v4468 = vpop.f32.mrb[0].mxu0
        %v4469 = vadd.f32 0.0, %v4468
        %4470 = vdwg.mxu0
        %4471 = vmatprep.subr.mxu0 %v4392
        %4472 = vmatpush1.msra.mxu0 %v4391
        %4473 = vmatprep.subr.mxu0 0.0
        %4474 = vmatpush1.msra.mxu0 0.0
        %4475 = vmatprep.subr.mxu0 0.0
        %4476 = vmatpush1.msra.mxu0 0.0
        %4477 = vmatprep.subr.mxu0 0.0
        %4478 = vmatpush1.msra.mxu0 0.0
        %4479 = vmatprep.subr.mxu0 0.0
        %4480 = vmatpush1.msra.mxu0 0.0
        %4481 = vmatprep.subr.mxu0 0.0
        %4482 = vmatpush1.msra.mxu0 0.0
        %4483 = vmatprep.subr.mxu0 0.0
        %4484 = vmatpush1.msra.mxu0 0.0
        %4485 = vmatprep.subr.mxu0 0.0
        %4486 = vmatpush1.msra.mxu0 0.0
        %4487 = vmatprep.subr.mxu0 0.0
        %4488 = vmatpush1.msra.mxu0 0.0
        %4489 = vmatprep.subr.mxu0 0.0
        %4490 = vmatpush1.msra.mxu0 0.0
        %4491 = vmatprep.subr.mxu0 0.0
        %4492 = vmatpush1.msra.mxu0 0.0
        %4493 = vmatprep.subr.mxu0 0.0
        %4494 = vmatpush1.msra.mxu0 0.0
        %4495 = vmatprep.subr.mxu0 0.0
        %4496 = vmatpush1.msra.mxu0 0.0
        %4497 = vmatprep.subr.mxu0 0.0
        %4498 = vmatpush1.msra.mxu0 0.0
        %4499 = vmatprep.subr.mxu0 0.0
        %4500 = vmatpush1.msra.mxu0 0.0
        %4501 = vmatprep.subr.mxu0 0.0
        %4502 = vmatpush1.msra.mxu0 0.0
        %4503 = vmatprep.subr.mxu0 0.0
        %4504 = vmatpush1.msra.mxu0 0.0
        %4505 = vmatprep.subr.mxu0 0.0
        %4506 = vmatpush1.msra.mxu0 0.0
        %4507 = vmatprep.subr.mxu0 0.0
        %4508 = vmatpush1.msra.mxu0 0.0
        %4509 = vmatprep.subr.mxu0 0.0
        %4510 = vmatpush1.msra.mxu0 0.0
        %4511 = vmatprep.subr.mxu0 0.0
        %4512 = vmatpush1.msra.mxu0 0.0
        %4513 = vmatprep.subr.mxu0 0.0
        %4514 = vmatpush1.msra.mxu0 0.0
        %4515 = vmatprep.subr.mxu0 0.0
        %4516 = vmatpush1.msra.mxu0 0.0
        %4517 = vmatprep.subr.mxu0 0.0
        %4518 = vmatpush1.msra.mxu0 0.0
        %4519 = vmatprep.subr.mxu0 0.0
        %4520 = vmatpush1.msra.mxu0 0.0
        %4521 = vmatprep.subr.mxu0 0.0
        %4522 = vmatpush1.msra.mxu0 0.0
        %4523 = vmatprep.subr.mxu0 0.0
        %4524 = vmatpush1.msra.mxu0 0.0
        %4525 = vmatprep.subr.mxu0 0.0
        %4526 = vmatpush1.msra.mxu0 0.0
        %4527 = vmatprep.subr.mxu0 0.0
        %4528 = vmatpush1.msra.mxu0 0.0
        %4529 = vmatprep.subr.mxu0 0.0
        %4530 = vmatpush1.msra.mxu0 0.0
        %4531 = vmatprep.subr.mxu0 0.0
        %4532 = vmatpush1.msra.mxu0 0.0
        %4533 = vmatprep.subr.mxu0 0.0
        %4534 = vmatpush1.msra.mxu0 0.0
        %4535 = vmatprep.mubr.f32.mxu0 0.0
        %4536 = vmatmul.mubr.f32.gmra.mrb[0].mxu0 %v4398
        %v4537 = vpop.f32.mrb[0].mxu0
        %v4538 = vadd.f32 0.0, %v4537
        %v4539 = vpop.f32.mrb[0].mxu0
        %v4540 = vadd.f32 0.0, %v4539
        %4541 = vdwg.mxu0
        %4542 = vmatprep.subr.mxu0 %v4394
        %4543 = vmatpush1.msra.mxu0 %v4393
        %4544 = vmatprep.subr.mxu0 0.0
        %4545 = vmatpush1.msra.mxu0 0.0
        %4546 = vmatprep.subr.mxu0 0.0
        %4547 = vmatpush1.msra.mxu0 0.0
        %4548 = vmatprep.subr.mxu0 0.0
        %4549 = vmatpush1.msra.mxu0 0.0
        %4550 = vmatprep.subr.mxu0 0.0
        %4551 = vmatpush1.msra.mxu0 0.0
        %4552 = vmatprep.subr.mxu0 0.0
        %4553 = vmatpush1.msra.mxu0 0.0
        %4554 = vmatprep.subr.mxu0 0.0
        %4555 = vmatpush1.msra.mxu0 0.0
        %4556 = vmatprep.subr.mxu0 0.0
        %4557 = vmatpush1.msra.mxu0 0.0
        %4558 = vmatprep.subr.mxu0 0.0
        %4559 = vmatpush1.msra.mxu0 0.0
        %4560 = vmatprep.subr.mxu0 0.0
        %4561 = vmatpush1.msra.mxu0 0.0
        %4562 = vmatprep.subr.mxu0 0.0
        %4563 = vmatpush1.msra.mxu0 0.0
        %4564 = vmatprep.subr.mxu0 0.0
        %4565 = vmatpush1.msra.mxu0 0.0
        %4566 = vmatprep.subr.mxu0 0.0
        %4567 = vmatpush1.msra.mxu0 0.0
        %4568 = vmatprep.subr.mxu0 0.0
        %4569 = vmatpush1.msra.mxu0 0.0
        %4570 = vmatprep.subr.mxu0 0.0
        %4571 = vmatpush1.msra.mxu0 0.0
        %4572 = vmatprep.subr.mxu0 0.0
        %4573 = vmatpush1.msra.mxu0 0.0
        %4574 = vmatprep.subr.mxu0 0.0
        %4575 = vmatpush1.msra.mxu0 0.0
        %4576 = vmatprep.subr.mxu0 0.0
        %4577 = vmatpush1.msra.mxu0 0.0
        %4578 = vmatprep.subr.mxu0 0.0
        %4579 = vmatpush1.msra.mxu0 0.0
        %4580 = vmatprep.subr.mxu0 0.0
        %4581 = vmatpush1.msra.mxu0 0.0
        %4582 = vmatprep.subr.mxu0 0.0
        %4583 = vmatpush1.msra.mxu0 0.0
        %4584 = vmatprep.subr.mxu0 0.0
        %4585 = vmatpush1.msra.mxu0 0.0
        %4586 = vmatprep.subr.mxu0 0.0
        %4587 = vmatpush1.msra.mxu0 0.0
        %4588 = vmatprep.subr.mxu0 0.0
        %4589 = vmatpush1.msra.mxu0 0.0
        %4590 = vmatprep.subr.mxu0 0.0
        %4591 = vmatpush1.msra.mxu0 0.0
        %4592 = vmatprep.subr.mxu0 0.0
        %4593 = vmatpush1.msra.mxu0 0.0
        %4594 = vmatprep.subr.mxu0 0.0
        %4595 = vmatpush1.msra.mxu0 0.0
        %4596 = vmatprep.subr.mxu0 0.0
        %4597 = vmatpush1.msra.mxu0 0.0
        %4598 = vmatprep.subr.mxu0 0.0
        %4599 = vmatpush1.msra.mxu0 0.0
        %4600 = vmatprep.subr.mxu0 0.0
        %4601 = vmatpush1.msra.mxu0 0.0
        %4602 = vmatprep.subr.mxu0 0.0
        %4603 = vmatpush1.msra.mxu0 0.0
        %4604 = vmatprep.subr.mxu0 0.0
        %4605 = vmatpush1.msra.mxu0 0.0
        %4606 = vmatprep.mubr.f32.mxu0 0.0
        %4607 = vmatmul.mubr.f32.gmra.mrb[0].mxu0 %v4398
        %v4608 = vpop.f32.mrb[0].mxu0
        %v4609 = vadd.f32 0.0, %v4608
        %v4610 = vpop.f32.mrb[0].mxu0
        %v4611 = vadd.f32 0.0, %v4610
        %4612 = vdwg.mxu0
        %4613 = vmatprep.subr.mxu0 %v4396
        %4614 = vmatpush1.msra.mxu0 %v4395
        %4615 = vmatprep.subr.mxu0 0.0
        %4616 = vmatpush1.msra.mxu0 0.0
        %4617 = vmatprep.subr.mxu0 0.0
        %4618 = vmatpush1.msra.mxu0 0.0
        %4619 = vmatprep.subr.mxu0 0.0
        %4620 = vmatpush1.msra.mxu0 0.0
        %4621 = vmatprep.subr.mxu0 0.0
        %4622 = vmatpush1.msra.mxu0 0.0
        %4623 = vmatprep.subr.mxu0 0.0
        %4624 = vmatpush1.msra.mxu0 0.0
        %4625 = vmatprep.subr.mxu0 0.0
        %4626 = vmatpush1.msra.mxu0 0.0
        %4627 = vmatprep.subr.mxu0 0.0
        %4628 = vmatpush1.msra.mxu0 0.0
        %4629 = vmatprep.subr.mxu0 0.0
        %4630 = vmatpush1.msra.mxu0 0.0
        %4631 = vmatprep.subr.mxu0 0.0
        %4632 = vmatpush1.msra.mxu0 0.0
        %4633 = vmatprep.subr.mxu0 0.0
        %4634 = vmatpush1.msra.mxu0 0.0
        %4635 = vmatprep.subr.mxu0 0.0
        %4636 = vmatpush1.msra.mxu0 0.0
        %4637 = vmatprep.subr.mxu0 0.0
        %4638 = vmatpush1.msra.mxu0 0.0
        %4639 = vmatprep.subr.mxu0 0.0
        %4640 = vmatpush1.msra.mxu0 0.0
        %4641 = vmatprep.subr.mxu0 0.0
        %4642 = vmatpush1.msra.mxu0 0.0
        %4643 = vmatprep.subr.mxu0 0.0
        %4644 = vmatpush1.msra.mxu0 0.0
        %4645 = vmatprep.subr.mxu0 0.0
        %4646 = vmatpush1.msra.mxu0 0.0
        %4647 = vmatprep.subr.mxu0 0.0
        %4648 = vmatpush1.msra.mxu0 0.0
        %4649 = vmatprep.subr.mxu0 0.0
        %4650 = vmatpush1.msra.mxu0 0.0
        %4651 = vmatprep.subr.mxu0 0.0
        %4652 = vmatpush1.msra.mxu0 0.0
        %4653 = vmatprep.subr.mxu0 0.0
        %4654 = vmatpush1.msra.mxu0 0.0
        %4655 = vmatprep.subr.mxu0 0.0
        %4656 = vmatpush1.msra.mxu0 0.0
        %4657 = vmatprep.subr.mxu0 0.0
        %4658 = vmatpush1.msra.mxu0 0.0
        %4659 = vmatprep.subr.mxu0 0.0
        %4660 = vmatpush1.msra.mxu0 0.0
        %4661 = vmatprep.subr.mxu0 0.0
        %4662 = vmatpush1.msra.mxu0 0.0
        %4663 = vmatprep.subr.mxu0 0.0
        %4664 = vmatpush1.msra.mxu0 0.0
        %4665 = vmatprep.subr.mxu0 0.0
        %4666 = vmatpush1.msra.mxu0 0.0
        %4667 = vmatprep.subr.mxu0 0.0
        %4668 = vmatpush1.msra.mxu0 0.0
        %4669 = vmatprep.subr.mxu0 0.0
        %4670 = vmatpush1.msra.mxu0 0.0
        %4671 = vmatprep.subr.mxu0 0.0
        %4672 = vmatpush1.msra.mxu0 0.0
        %4673 = vmatprep.subr.mxu0 0.0
        %4674 = vmatpush1.msra.mxu0 0.0
        %4675 = vmatprep.subr.mxu0 0.0
        %4676 = vmatpush1.msra.mxu0 0.0
        %4677 = vmatprep.mubr.f32.mxu0 0.0
        %4678 = vmatmul.mubr.f32.gmra.mrb[0].mxu0 %v4398
        %v4679 = vpop.f32.mrb[0].mxu0
        %v4680 = vadd.f32 0.0, %v4679
        %v4681 = vpop.f32.mrb[0].mxu0
        %v4682 = vadd.f32 0.0, %v4681
        %4683 = vdwg.mxu0
        %v4684 = vadd.f32 %v4137, %v4467
        %v4685 = vadd.f32 %v4139, %v4469
        %v4686 = vadd.f32 %v4208, %v4538
        %v4687 = vadd.f32 %v4210, %v4540
        %v4688 = vadd.f32 %v4279, %v4609
        %v4689 = vadd.f32 %v4281, %v4611
        %v4690 = vadd.f32 %v4350, %v4680
        %v4691 = vadd.f32 %v4352, %v4682
        %4692 = vrot.lane.b32.xlu0 %v1382, 8
        %v4693 = vpop.permute.xlu0 %4692
        %4694 = vrot.lane.b32.xlu0 %v1383, 8
        %v4695 = vpop.permute.xlu0 %4694
        %4696 = vrot.lane.b32.xlu0 %v1384, 8
        %v4697 = vpop.permute.xlu0 %4696
        %4698 = vrot.lane.b32.xlu0 %v1385, 8
        %v4699 = vpop.permute.xlu0 %4698
        %4700 = vrot.lane.b32.xlu0 %v1386, 8
        %v4701 = vpop.permute.xlu0 %4700
        %4702 = vrot.lane.b32.xlu0 %v1387, 8
        %v4703 = vpop.permute.xlu0 %4702
        %4704 = vrot.lane.b32.xlu0 %v1388, 8
        %v4705 = vpop.permute.xlu0 %4704
        %4706 = vrot.lane.b32.xlu0 %v1389, 8
        %v4707 = vpop.permute.xlu0 %4706
        %4708 = vrot.lane.b32.xlu0 %v1390, 8
        %v4709 = vpop.permute.xlu0 %4708
        %v4710 = vsel %vm807, %v4693, %v4695
        %v4711 = vsel %vm807, %v4695, %v4697
        %v4712 = vsel %vm807, %v4697, %v4699
        %v4713 = vsel %vm807, %v4699, %v4701
        %v4714 = vsel %vm807, %v4701, %v4703
        %v4715 = vsel %vm807, %v4703, %v4705
        %v4716 = vsel %vm807, %v4705, %v4707
        %v4717 = vsel %vm807, %v4707, %v4709
        %v4726 = vsel %vm382, %v4710, 0.0
        %v4727 = vsel %vm383, %v4711, 0.0
        %v4728 = vsel %vm384, %v4712, 0.0
        %v4729 = vsel %vm385, %v4713, 0.0
        %v4730 = vsel %vm386, %v4714, 0.0
        %v4731 = vsel %vm387, %v4715, 0.0
        %v4732 = vsel %vm388, %v4716, 0.0
        %v4733 = vsel %vm389, %v4717, 0.0
        %v4735 = vsel %vm807, %v246, 0
        %4737 = vmatprep.subr.mxu0 %v4727
        %4738 = vmatpush1.msra.mxu0 %v4726
        %4739 = vmatprep.subr.mxu0 0.0
        %4740 = vmatpush1.msra.mxu0 0.0
        %4741 = vmatprep.subr.mxu0 0.0
        %4742 = vmatpush1.msra.mxu0 0.0
        %4743 = vmatprep.subr.mxu0 0.0
        %4744 = vmatpush1.msra.mxu0 0.0
        %4745 = vmatprep.subr.mxu0 0.0
        %4746 = vmatpush1.msra.mxu0 0.0
        %4747 = vmatprep.subr.mxu0 0.0
        %4748 = vmatpush1.msra.mxu0 0.0
        %4749 = vmatprep.subr.mxu0 0.0
        %4750 = vmatpush1.msra.mxu0 0.0
        %4751 = vmatprep.subr.mxu0 0.0
        %4752 = vmatpush1.msra.mxu0 0.0
        %4753 = vmatprep.subr.mxu0 0.0
        %4754 = vmatpush1.msra.mxu0 0.0
        %4755 = vmatprep.subr.mxu0 0.0
        %4756 = vmatpush1.msra.mxu0 0.0
        %4757 = vmatprep.subr.mxu0 0.0
        %4758 = vmatpush1.msra.mxu0 0.0
        %4759 = vmatprep.subr.mxu0 0.0
        %4760 = vmatpush1.msra.mxu0 0.0
        %4761 = vmatprep.subr.mxu0 0.0
        %4762 = vmatpush1.msra.mxu0 0.0
        %4763 = vmatprep.subr.mxu0 0.0
        %4764 = vmatpush1.msra.mxu0 0.0
        %4765 = vmatprep.subr.mxu0 0.0
        %4766 = vmatpush1.msra.mxu0 0.0
        %4767 = vmatprep.subr.mxu0 0.0
        %4768 = vmatpush1.msra.mxu0 0.0
        %4769 = vmatprep.subr.mxu0 0.0
        %4770 = vmatpush1.msra.mxu0 0.0
        %4771 = vmatprep.subr.mxu0 0.0
        %4772 = vmatpush1.msra.mxu0 0.0
        %4773 = vmatprep.subr.mxu0 0.0
        %4774 = vmatpush1.msra.mxu0 0.0
        %4775 = vmatprep.subr.mxu0 0.0
        %4776 = vmatpush1.msra.mxu0 0.0
        %4777 = vmatprep.subr.mxu0 0.0
        %4778 = vmatpush1.msra.mxu0 0.0
        %4779 = vmatprep.subr.mxu0 0.0
        %4780 = vmatpush1.msra.mxu0 0.0
        %4781 = vmatprep.subr.mxu0 0.0
        %4782 = vmatpush1.msra.mxu0 0.0
        %4783 = vmatprep.subr.mxu0 0.0
        %4784 = vmatpush1.msra.mxu0 0.0
        %4785 = vmatprep.subr.mxu0 0.0
        %4786 = vmatpush1.msra.mxu0 0.0
        %4787 = vmatprep.subr.mxu0 0.0
        %4788 = vmatpush1.msra.mxu0 0.0
        %4789 = vmatprep.subr.mxu0 0.0
        %4790 = vmatpush1.msra.mxu0 0.0
        %4791 = vmatprep.subr.mxu0 0.0
        %4792 = vmatpush1.msra.mxu0 0.0
        %4793 = vmatprep.subr.mxu0 0.0
        %4794 = vmatpush1.msra.mxu0 0.0
        %4795 = vmatprep.subr.mxu0 0.0
        %4796 = vmatpush1.msra.mxu0 0.0
        %4797 = vmatprep.subr.mxu0 0.0
        %4798 = vmatpush1.msra.mxu0 0.0
        %4799 = vmatprep.subr.mxu0 0.0
        %4800 = vmatpush1.msra.mxu0 0.0
        %4801 = vmatprep.mubr.f32.mxu0 0.0
        %4802 = vmatmul.mubr.f32.gmra.mrb[0].mxu0 %v4735
        %v4803 = vpop.f32.mrb[0].mxu0
        %v4804 = vadd.f32 0.0, %v4803
        %v4805 = vpop.f32.mrb[0].mxu0
        %v4806 = vadd.f32 0.0, %v4805
        %4807 = vdwg.mxu0
        %4808 = vmatprep.subr.mxu0 %v4729
        %4809 = vmatpush1.msra.mxu0 %v4728
        %4810 = vmatprep.subr.mxu0 0.0
        %4811 = vmatpush1.msra.mxu0 0.0
        %4812 = vmatprep.subr.mxu0 0.0
        %4813 = vmatpush1.msra.mxu0 0.0
        %4814 = vmatprep.subr.mxu0 0.0
        %4815 = vmatpush1.msra.mxu0 0.0
        %4816 = vmatprep.subr.mxu0 0.0
        %4817 = vmatpush1.msra.mxu0 0.0
        %4818 = vmatprep.subr.mxu0 0.0
        %4819 = vmatpush1.msra.mxu0 0.0
        %4820 = vmatprep.subr.mxu0 0.0
        %4821 = vmatpush1.msra.mxu0 0.0
        %4822 = vmatprep.subr.mxu0 0.0
        %4823 = vmatpush1.msra.mxu0 0.0
        %4824 = vmatprep.subr.mxu0 0.0
        %4825 = vmatpush1.msra.mxu0 0.0
        %4826 = vmatprep.subr.mxu0 0.0
        %4827 = vmatpush1.msra.mxu0 0.0
        %4828 = vmatprep.subr.mxu0 0.0
        %4829 = vmatpush1.msra.mxu0 0.0
        %4830 = vmatprep.subr.mxu0 0.0
        %4831 = vmatpush1.msra.mxu0 0.0
        %4832 = vmatprep.subr.mxu0 0.0
        %4833 = vmatpush1.msra.mxu0 0.0
        %4834 = vmatprep.subr.mxu0 0.0
        %4835 = vmatpush1.msra.mxu0 0.0
        %4836 = vmatprep.subr.mxu0 0.0
        %4837 = vmatpush1.msra.mxu0 0.0
        %4838 = vmatprep.subr.mxu0 0.0
        %4839 = vmatpush1.msra.mxu0 0.0
        %4840 = vmatprep.subr.mxu0 0.0
        %4841 = vmatpush1.msra.mxu0 0.0
        %4842 = vmatprep.subr.mxu0 0.0
        %4843 = vmatpush1.msra.mxu0 0.0
        %4844 = vmatprep.subr.mxu0 0.0
        %4845 = vmatpush1.msra.mxu0 0.0
        %4846 = vmatprep.subr.mxu0 0.0
        %4847 = vmatpush1.msra.mxu0 0.0
        %4848 = vmatprep.subr.mxu0 0.0
        %4849 = vmatpush1.msra.mxu0 0.0
        %4850 = vmatprep.subr.mxu0 0.0
        %4851 = vmatpush1.msra.mxu0 0.0
        %4852 = vmatprep.subr.mxu0 0.0
        %4853 = vmatpush1.msra.mxu0 0.0
        %4854 = vmatprep.subr.mxu0 0.0
        %4855 = vmatpush1.msra.mxu0 0.0
        %4856 = vmatprep.subr.mxu0 0.0
        %4857 = vmatpush1.msra.mxu0 0.0
        %4858 = vmatprep.subr.mxu0 0.0
        %4859 = vmatpush1.msra.mxu0 0.0
        %4860 = vmatprep.subr.mxu0 0.0
        %4861 = vmatpush1.msra.mxu0 0.0
        %4862 = vmatprep.subr.mxu0 0.0
        %4863 = vmatpush1.msra.mxu0 0.0
        %4864 = vmatprep.subr.mxu0 0.0
        %4865 = vmatpush1.msra.mxu0 0.0
        %4866 = vmatprep.subr.mxu0 0.0
        %4867 = vmatpush1.msra.mxu0 0.0
        %4868 = vmatprep.subr.mxu0 0.0
        %4869 = vmatpush1.msra.mxu0 0.0
        %4870 = vmatprep.subr.mxu0 0.0
        %4871 = vmatpush1.msra.mxu0 0.0
        %4872 = vmatprep.mubr.f32.mxu0 0.0
        %4873 = vmatmul.mubr.f32.gmra.mrb[0].mxu0 %v4735
        %v4874 = vpop.f32.mrb[0].mxu0
        %v4875 = vadd.f32 0.0, %v4874
        %v4876 = vpop.f32.mrb[0].mxu0
        %v4877 = vadd.f32 0.0, %v4876
        %4878 = vdwg.mxu0
        %4879 = vmatprep.subr.mxu0 %v4731
        %4880 = vmatpush1.msra.mxu0 %v4730
        %4881 = vmatprep.subr.mxu0 0.0
        %4882 = vmatpush1.msra.mxu0 0.0
        %4883 = vmatprep.subr.mxu0 0.0
        %4884 = vmatpush1.msra.mxu0 0.0
        %4885 = vmatprep.subr.mxu0 0.0
        %4886 = vmatpush1.msra.mxu0 0.0
        %4887 = vmatprep.subr.mxu0 0.0
        %4888 = vmatpush1.msra.mxu0 0.0
        %4889 = vmatprep.subr.mxu0 0.0
        %4890 = vmatpush1.msra.mxu0 0.0
        %4891 = vmatprep.subr.mxu0 0.0
        %4892 = vmatpush1.msra.mxu0 0.0
        %4893 = vmatprep.subr.mxu0 0.0
        %4894 = vmatpush1.msra.mxu0 0.0
        %4895 = vmatprep.subr.mxu0 0.0
        %4896 = vmatpush1.msra.mxu0 0.0
        %4897 = vmatprep.subr.mxu0 0.0
        %4898 = vmatpush1.msra.mxu0 0.0
        %4899 = vmatprep.subr.mxu0 0.0
        %4900 = vmatpush1.msra.mxu0 0.0
        %4901 = vmatprep.subr.mxu0 0.0
        %4902 = vmatpush1.msra.mxu0 0.0
        %4903 = vmatprep.subr.mxu0 0.0
        %4904 = vmatpush1.msra.mxu0 0.0
        %4905 = vmatprep.subr.mxu0 0.0
        %4906 = vmatpush1.msra.mxu0 0.0
        %4907 = vmatprep.subr.mxu0 0.0
        %4908 = vmatpush1.msra.mxu0 0.0
        %4909 = vmatprep.subr.mxu0 0.0
        %4910 = vmatpush1.msra.mxu0 0.0
        %4911 = vmatprep.subr.mxu0 0.0
        %4912 = vmatpush1.msra.mxu0 0.0
        %4913 = vmatprep.subr.mxu0 0.0
        %4914 = vmatpush1.msra.mxu0 0.0
        %4915 = vmatprep.subr.mxu0 0.0
        %4916 = vmatpush1.msra.mxu0 0.0
        %4917 = vmatprep.subr.mxu0 0.0
        %4918 = vmatpush1.msra.mxu0 0.0
        %4919 = vmatprep.subr.mxu0 0.0
        %4920 = vmatpush1.msra.mxu0 0.0
        %4921 = vmatprep.subr.mxu0 0.0
        %4922 = vmatpush1.msra.mxu0 0.0
        %4923 = vmatprep.subr.mxu0 0.0
        %4924 = vmatpush1.msra.mxu0 0.0
        %4925 = vmatprep.subr.mxu0 0.0
        %4926 = vmatpush1.msra.mxu0 0.0
        %4927 = vmatprep.subr.mxu0 0.0
        %4928 = vmatpush1.msra.mxu0 0.0
        %4929 = vmatprep.subr.mxu0 0.0
        %4930 = vmatpush1.msra.mxu0 0.0
        %4931 = vmatprep.subr.mxu0 0.0
        %4932 = vmatpush1.msra.mxu0 0.0
        %4933 = vmatprep.subr.mxu0 0.0
        %4934 = vmatpush1.msra.mxu0 0.0
        %4935 = vmatprep.subr.mxu0 0.0
        %4936 = vmatpush1.msra.mxu0 0.0
        %4937 = vmatprep.subr.mxu0 0.0
        %4938 = vmatpush1.msra.mxu0 0.0
        %4939 = vmatprep.subr.mxu0 0.0
        %4940 = vmatpush1.msra.mxu0 0.0
        %4941 = vmatprep.subr.mxu0 0.0
        %4942 = vmatpush1.msra.mxu0 0.0
        %4943 = vmatprep.mubr.f32.mxu0 0.0
        %4944 = vmatmul.mubr.f32.gmra.mrb[0].mxu0 %v4735
        %v4945 = vpop.f32.mrb[0].mxu0
        %v4946 = vadd.f32 0.0, %v4945
        %v4947 = vpop.f32.mrb[0].mxu0
        %v4948 = vadd.f32 0.0, %v4947
        %4949 = vdwg.mxu0
        %4950 = vmatprep.subr.mxu0 %v4733
        %4951 = vmatpush1.msra.mxu0 %v4732
        %4952 = vmatprep.subr.mxu0 0.0
        %4953 = vmatpush1.msra.mxu0 0.0
        %4954 = vmatprep.subr.mxu0 0.0
        %4955 = vmatpush1.msra.mxu0 0.0
        %4956 = vmatprep.subr.mxu0 0.0
        %4957 = vmatpush1.msra.mxu0 0.0
        %4958 = vmatprep.subr.mxu0 0.0
        %4959 = vmatpush1.msra.mxu0 0.0
        %4960 = vmatprep.subr.mxu0 0.0
        %4961 = vmatpush1.msra.mxu0 0.0
        %4962 = vmatprep.subr.mxu0 0.0
        %4963 = vmatpush1.msra.mxu0 0.0
        %4964 = vmatprep.subr.mxu0 0.0
        %4965 = vmatpush1.msra.mxu0 0.0
        %4966 = vmatprep.subr.mxu0 0.0
        %4967 = vmatpush1.msra.mxu0 0.0
        %4968 = vmatprep.subr.mxu0 0.0
        %4969 = vmatpush1.msra.mxu0 0.0
        %4970 = vmatprep.subr.mxu0 0.0
        %4971 = vmatpush1.msra.mxu0 0.0
        %4972 = vmatprep.subr.mxu0 0.0
        %4973 = vmatpush1.msra.mxu0 0.0
        %4974 = vmatprep.subr.mxu0 0.0
        %4975 = vmatpush1.msra.mxu0 0.0
        %4976 = vmatprep.subr.mxu0 0.0
        %4977 = vmatpush1.msra.mxu0 0.0
        %4978 = vmatprep.subr.mxu0 0.0
        %4979 = vmatpush1.msra.mxu0 0.0
        %4980 = vmatprep.subr.mxu0 0.0
        %4981 = vmatpush1.msra.mxu0 0.0
        %4982 = vmatprep.subr.mxu0 0.0
        %4983 = vmatpush1.msra.mxu0 0.0
        %4984 = vmatprep.subr.mxu0 0.0
        %4985 = vmatpush1.msra.mxu0 0.0
        %4986 = vmatprep.subr.mxu0 0.0
        %4987 = vmatpush1.msra.mxu0 0.0
        %4988 = vmatprep.subr.mxu0 0.0
        %4989 = vmatpush1.msra.mxu0 0.0
        %4990 = vmatprep.subr.mxu0 0.0
        %4991 = vmatpush1.msra.mxu0 0.0
        %4992 = vmatprep.subr.mxu0 0.0
        %4993 = vmatpush1.msra.mxu0 0.0
        %4994 = vmatprep.subr.mxu0 0.0
        %4995 = vmatpush1.msra.mxu0 0.0
        %4996 = vmatprep.subr.mxu0 0.0
        %4997 = vmatpush1.msra.mxu0 0.0
        %4998 = vmatprep.subr.mxu0 0.0
        %4999 = vmatpush1.msra.mxu0 0.0
        %5000 = vmatprep.subr.mxu0 0.0
        %5001 = vmatpush1.msra.mxu0 0.0
        %5002 = vmatprep.subr.mxu0 0.0
        %5003 = vmatpush1.msra.mxu0 0.0
        %5004 = vmatprep.subr.mxu0 0.0
        %5005 = vmatpush1.msra.mxu0 0.0
        %5006 = vmatprep.subr.mxu0 0.0
        %5007 = vmatpush1.msra.mxu0 0.0
        %5008 = vmatprep.subr.mxu0 0.0
        %5009 = vmatpush1.msra.mxu0 0.0
        %5010 = vmatprep.subr.mxu0 0.0
        %5011 = vmatpush1.msra.mxu0 0.0
        %5012 = vmatprep.subr.mxu0 0.0
        %5013 = vmatpush1.msra.mxu0 0.0
        %5014 = vmatprep.mubr.f32.mxu0 0.0
        %5015 = vmatmul.mubr.f32.gmra.mrb[0].mxu0 %v4735
        %v5016 = vpop.f32.mrb[0].mxu0
        %v5017 = vadd.f32 0.0, %v5016
        %v5018 = vpop.f32.mrb[0].mxu0
        %v5019 = vadd.f32 0.0, %v5018
        %5020 = vdwg.mxu0
        %v5021 = vadd.f32 %v4684, %v4804
        %v5022 = vadd.f32 %v4685, %v4806
        %v5023 = vadd.f32 %v4686, %v4875
        %v5024 = vadd.f32 %v4687, %v4877
        %v5025 = vadd.f32 %v4688, %v4946
        %v5026 = vadd.f32 %v4689, %v4948
        %v5027 = vadd.f32 %v4690, %v5017
        %v5028 = vadd.f32 %v4691, %v5019
        %v5030 = vsel %vm807, %v247, 0
        %5032 = vmatprep.subr.mxu0 %v1384
        %5033 = vmatpush1.msra.mxu0 %v1383
        %5034 = vmatprep.subr.mxu0 0.0
        %5035 = vmatpush1.msra.mxu0 0.0
        %5036 = vmatprep.subr.mxu0 0.0
        %5037 = vmatpush1.msra.mxu0 0.0
        %5038 = vmatprep.subr.mxu0 0.0
        %5039 = vmatpush1.msra.mxu0 0.0
        %5040 = vmatprep.subr.mxu0 0.0
        %5041 = vmatpush1.msra.mxu0 0.0
        %5042 = vmatprep.subr.mxu0 0.0
        %5043 = vmatpush1.msra.mxu0 0.0
        %5044 = vmatprep.subr.mxu0 0.0
        %5045 = vmatpush1.msra.mxu0 0.0
        %5046 = vmatprep.subr.mxu0 0.0
        %5047 = vmatpush1.msra.mxu0 0.0
        %5048 = vmatprep.subr.mxu0 0.0
        %5049 = vmatpush1.msra.mxu0 0.0
        %5050 = vmatprep.subr.mxu0 0.0
        %5051 = vmatpush1.msra.mxu0 0.0
        %5052 = vmatprep.subr.mxu0 0.0
        %5053 = vmatpush1.msra.mxu0 0.0
        %5054 = vmatprep.subr.mxu0 0.0
        %5055 = vmatpush1.msra.mxu0 0.0
        %5056 = vmatprep.subr.mxu0 0.0
        %5057 = vmatpush1.msra.mxu0 0.0
        %5058 = vmatprep.subr.mxu0 0.0
        %5059 = vmatpush1.msra.mxu0 0.0
        %5060 = vmatprep.subr.mxu0 0.0
        %5061 = vmatpush1.msra.mxu0 0.0
        %5062 = vmatprep.subr.mxu0 0.0
        %5063 = vmatpush1.msra.mxu0 0.0
        %5064 = vmatprep.subr.mxu0 0.0
        %5065 = vmatpush1.msra.mxu0 0.0
        %5066 = vmatprep.subr.mxu0 0.0
        %5067 = vmatpush1.msra.mxu0 0.0
        %5068 = vmatprep.subr.mxu0 0.0
        %5069 = vmatpush1.msra.mxu0 0.0
        %5070 = vmatprep.subr.mxu0 0.0
        %5071 = vmatpush1.msra.mxu0 0.0
        %5072 = vmatprep.subr.mxu0 0.0
        %5073 = vmatpush1.msra.mxu0 0.0
        %5074 = vmatprep.subr.mxu0 0.0
        %5075 = vmatpush1.msra.mxu0 0.0
        %5076 = vmatprep.subr.mxu0 0.0
        %5077 = vmatpush1.msra.mxu0 0.0
        %5078 = vmatprep.subr.mxu0 0.0
        %5079 = vmatpush1.msra.mxu0 0.0
        %5080 = vmatprep.subr.mxu0 0.0
        %5081 = vmatpush1.msra.mxu0 0.0
        %5082 = vmatprep.subr.mxu0 0.0
        %5083 = vmatpush1.msra.mxu0 0.0
        %5084 = vmatprep.subr.mxu0 0.0
        %5085 = vmatpush1.msra.mxu0 0.0
        %5086 = vmatprep.subr.mxu0 0.0
        %5087 = vmatpush1.msra.mxu0 0.0
        %5088 = vmatprep.subr.mxu0 0.0
        %5089 = vmatpush1.msra.mxu0 0.0
        %5090 = vmatprep.subr.mxu0 0.0
        %5091 = vmatpush1.msra.mxu0 0.0
        %5092 = vmatprep.subr.mxu0 0.0
        %5093 = vmatpush1.msra.mxu0 0.0
        %5094 = vmatprep.subr.mxu0 0.0
        %5095 = vmatpush1.msra.mxu0 0.0
        %5096 = vmatprep.mubr.f32.mxu0 0.0
        %5097 = vmatmul.mubr.f32.gmra.mrb[0].mxu0 %v5030
        %v5098 = vpop.f32.mrb[0].mxu0
        %v5099 = vadd.f32 0.0, %v5098
        %v5100 = vpop.f32.mrb[0].mxu0
        %v5101 = vadd.f32 0.0, %v5100
        %5102 = vdwg.mxu0
        %5103 = vmatprep.subr.mxu0 %v1386
        %5104 = vmatpush1.msra.mxu0 %v1385
        %5105 = vmatprep.subr.mxu0 0.0
        %5106 = vmatpush1.msra.mxu0 0.0
        %5107 = vmatprep.subr.mxu0 0.0
        %5108 = vmatpush1.msra.mxu0 0.0
        %5109 = vmatprep.subr.mxu0 0.0
        %5110 = vmatpush1.msra.mxu0 0.0
        %5111 = vmatprep.subr.mxu0 0.0
        %5112 = vmatpush1.msra.mxu0 0.0
        %5113 = vmatprep.subr.mxu0 0.0
        %5114 = vmatpush1.msra.mxu0 0.0
        %5115 = vmatprep.subr.mxu0 0.0
        %5116 = vmatpush1.msra.mxu0 0.0
        %5117 = vmatprep.subr.mxu0 0.0
        %5118 = vmatpush1.msra.mxu0 0.0
        %5119 = vmatprep.subr.mxu0 0.0
        %5120 = vmatpush1.msra.mxu0 0.0
        %5121 = vmatprep.subr.mxu0 0.0
        %5122 = vmatpush1.msra.mxu0 0.0
        %5123 = vmatprep.subr.mxu0 0.0
        %5124 = vmatpush1.msra.mxu0 0.0
        %5125 = vmatprep.subr.mxu0 0.0
        %5126 = vmatpush1.msra.mxu0 0.0
        %5127 = vmatprep.subr.mxu0 0.0
        %5128 = vmatpush1.msra.mxu0 0.0
        %5129 = vmatprep.subr.mxu0 0.0
        %5130 = vmatpush1.msra.mxu0 0.0
        %5131 = vmatprep.subr.mxu0 0.0
        %5132 = vmatpush1.msra.mxu0 0.0
        %5133 = vmatprep.subr.mxu0 0.0
        %5134 = vmatpush1.msra.mxu0 0.0
        %5135 = vmatprep.subr.mxu0 0.0
        %5136 = vmatpush1.msra.mxu0 0.0
        %5137 = vmatprep.subr.mxu0 0.0
        %5138 = vmatpush1.msra.mxu0 0.0
        %5139 = vmatprep.subr.mxu0 0.0
        %5140 = vmatpush1.msra.mxu0 0.0
        %5141 = vmatprep.subr.mxu0 0.0
        %5142 = vmatpush1.msra.mxu0 0.0
        %5143 = vmatprep.subr.mxu0 0.0
        %5144 = vmatpush1.msra.mxu0 0.0
        %5145 = vmatprep.subr.mxu0 0.0
        %5146 = vmatpush1.msra.mxu0 0.0
        %5147 = vmatprep.subr.mxu0 0.0
        %5148 = vmatpush1.msra.mxu0 0.0
        %5149 = vmatprep.subr.mxu0 0.0
        %5150 = vmatpush1.msra.mxu0 0.0
        %5151 = vmatprep.subr.mxu0 0.0
        %5152 = vmatpush1.msra.mxu0 0.0
        %5153 = vmatprep.subr.mxu0 0.0
        %5154 = vmatpush1.msra.mxu0 0.0
        %5155 = vmatprep.subr.mxu0 0.0
        %5156 = vmatpush1.msra.mxu0 0.0
        %5157 = vmatprep.subr.mxu0 0.0
        %5158 = vmatpush1.msra.mxu0 0.0
        %5159 = vmatprep.subr.mxu0 0.0
        %5160 = vmatpush1.msra.mxu0 0.0
        %5161 = vmatprep.subr.mxu0 0.0
        %5162 = vmatpush1.msra.mxu0 0.0
        %5163 = vmatprep.subr.mxu0 0.0
        %5164 = vmatpush1.msra.mxu0 0.0
        %5165 = vmatprep.subr.mxu0 0.0
        %5166 = vmatpush1.msra.mxu0 0.0
        %5167 = vmatprep.mubr.f32.mxu0 0.0
        %5168 = vmatmul.mubr.f32.gmra.mrb[0].mxu0 %v5030
        %v5169 = vpop.f32.mrb[0].mxu0
        %v5170 = vadd.f32 0.0, %v5169
        %v5171 = vpop.f32.mrb[0].mxu0
        %v5172 = vadd.f32 0.0, %v5171
        %5173 = vdwg.mxu0
        %5174 = vmatprep.subr.mxu0 %v1388
        %5175 = vmatpush1.msra.mxu0 %v1387
        %5176 = vmatprep.subr.mxu0 0.0
        %5177 = vmatpush1.msra.mxu0 0.0
        %5178 = vmatprep.subr.mxu0 0.0
        %5179 = vmatpush1.msra.mxu0 0.0
        %5180 = vmatprep.subr.mxu0 0.0
        %5181 = vmatpush1.msra.mxu0 0.0
        %5182 = vmatprep.subr.mxu0 0.0
        %5183 = vmatpush1.msra.mxu0 0.0
        %5184 = vmatprep.subr.mxu0 0.0
        %5185 = vmatpush1.msra.mxu0 0.0
        %5186 = vmatprep.subr.mxu0 0.0
        %5187 = vmatpush1.msra.mxu0 0.0
        %5188 = vmatprep.subr.mxu0 0.0
        %5189 = vmatpush1.msra.mxu0 0.0
        %5190 = vmatprep.subr.mxu0 0.0
        %5191 = vmatpush1.msra.mxu0 0.0
        %5192 = vmatprep.subr.mxu0 0.0
        %5193 = vmatpush1.msra.mxu0 0.0
        %5194 = vmatprep.subr.mxu0 0.0
        %5195 = vmatpush1.msra.mxu0 0.0
        %5196 = vmatprep.subr.mxu0 0.0
        %5197 = vmatpush1.msra.mxu0 0.0
        %5198 = vmatprep.subr.mxu0 0.0
        %5199 = vmatpush1.msra.mxu0 0.0
        %5200 = vmatprep.subr.mxu0 0.0
        %5201 = vmatpush1.msra.mxu0 0.0
        %5202 = vmatprep.subr.mxu0 0.0
        %5203 = vmatpush1.msra.mxu0 0.0
        %5204 = vmatprep.subr.mxu0 0.0
        %5205 = vmatpush1.msra.mxu0 0.0
        %5206 = vmatprep.subr.mxu0 0.0
        %5207 = vmatpush1.msra.mxu0 0.0
        %5208 = vmatprep.subr.mxu0 0.0
        %5209 = vmatpush1.msra.mxu0 0.0
        %5210 = vmatprep.subr.mxu0 0.0
        %5211 = vmatpush1.msra.mxu0 0.0
        %5212 = vmatprep.subr.mxu0 0.0
        %5213 = vmatpush1.msra.mxu0 0.0
        %5214 = vmatprep.subr.mxu0 0.0
        %5215 = vmatpush1.msra.mxu0 0.0
        %5216 = vmatprep.subr.mxu0 0.0
        %5217 = vmatpush1.msra.mxu0 0.0
        %5218 = vmatprep.subr.mxu0 0.0
        %5219 = vmatpush1.msra.mxu0 0.0
        %5220 = vmatprep.subr.mxu0 0.0
        %5221 = vmatpush1.msra.mxu0 0.0
        %5222 = vmatprep.subr.mxu0 0.0
        %5223 = vmatpush1.msra.mxu0 0.0
        %5224 = vmatprep.subr.mxu0 0.0
        %5225 = vmatpush1.msra.mxu0 0.0
        %5226 = vmatprep.subr.mxu0 0.0
        %5227 = vmatpush1.msra.mxu0 0.0
        %5228 = vmatprep.subr.mxu0 0.0
        %5229 = vmatpush1.msra.mxu0 0.0
        %5230 = vmatprep.subr.mxu0 0.0
        %5231 = vmatpush1.msra.mxu0 0.0
        %5232 = vmatprep.subr.mxu0 0.0
        %5233 = vmatpush1.msra.mxu0 0.0
        %5234 = vmatprep.subr.mxu0 0.0
        %5235 = vmatpush1.msra.mxu0 0.0
        %5236 = vmatprep.subr.mxu0 0.0
        %5237 = vmatpush1.msra.mxu0 0.0
        %5238 = vmatprep.mubr.f32.mxu0 0.0
        %5239 = vmatmul.mubr.f32.gmra.mrb[0].mxu0 %v5030
        %v5240 = vpop.f32.mrb[0].mxu0
        %v5241 = vadd.f32 0.0, %v5240
        %v5242 = vpop.f32.mrb[0].mxu0
        %v5243 = vadd.f32 0.0, %v5242
        %5244 = vdwg.mxu0
        %5245 = vmatprep.subr.mxu0 %v1390
        %5246 = vmatpush1.msra.mxu0 %v1389
        %5247 = vmatprep.subr.mxu0 0.0
        %5248 = vmatpush1.msra.mxu0 0.0
        %5249 = vmatprep.subr.mxu0 0.0
        %5250 = vmatpush1.msra.mxu0 0.0
        %5251 = vmatprep.subr.mxu0 0.0
        %5252 = vmatpush1.msra.mxu0 0.0
        %5253 = vmatprep.subr.mxu0 0.0
        %5254 = vmatpush1.msra.mxu0 0.0
        %5255 = vmatprep.subr.mxu0 0.0
        %5256 = vmatpush1.msra.mxu0 0.0
        %5257 = vmatprep.subr.mxu0 0.0
        %5258 = vmatpush1.msra.mxu0 0.0
        %5259 = vmatprep.subr.mxu0 0.0
        %5260 = vmatpush1.msra.mxu0 0.0
        %5261 = vmatprep.subr.mxu0 0.0
        %5262 = vmatpush1.msra.mxu0 0.0
        %5263 = vmatprep.subr.mxu0 0.0
        %5264 = vmatpush1.msra.mxu0 0.0
        %5265 = vmatprep.subr.mxu0 0.0
        %5266 = vmatpush1.msra.mxu0 0.0
        %5267 = vmatprep.subr.mxu0 0.0
        %5268 = vmatpush1.msra.mxu0 0.0
        %5269 = vmatprep.subr.mxu0 0.0
        %5270 = vmatpush1.msra.mxu0 0.0
        %5271 = vmatprep.subr.mxu0 0.0
        %5272 = vmatpush1.msra.mxu0 0.0
        %5273 = vmatprep.subr.mxu0 0.0
        %5274 = vmatpush1.msra.mxu0 0.0
        %5275 = vmatprep.subr.mxu0 0.0
        %5276 = vmatpush1.msra.mxu0 0.0
        %5277 = vmatprep.subr.mxu0 0.0
        %5278 = vmatpush1.msra.mxu0 0.0
        %5279 = vmatprep.subr.mxu0 0.0
        %5280 = vmatpush1.msra.mxu0 0.0
        %5281 = vmatprep.subr.mxu0 0.0
        %5282 = vmatpush1.msra.mxu0 0.0
        %5283 = vmatprep.subr.mxu0 0.0
        %5284 = vmatpush1.msra.mxu0 0.0
        %5285 = vmatprep.subr.mxu0 0.0
        %5286 = vmatpush1.msra.mxu0 0.0
        %5287 = vmatprep.subr.mxu0 0.0
        %5288 = vmatpush1.msra.mxu0 0.0
        %5289 = vmatprep.subr.mxu0 0.0
        %5290 = vmatpush1.msra.mxu0 0.0
        %5291 = vmatprep.subr.mxu0 0.0
        %5292 = vmatpush1.msra.mxu0 0.0
        %5293 = vmatprep.subr.mxu0 0.0
        %5294 = vmatpush1.msra.mxu0 0.0
        %5295 = vmatprep.subr.mxu0 0.0
        %5296 = vmatpush1.msra.mxu0 0.0
        %5297 = vmatprep.subr.mxu0 0.0
        %5298 = vmatpush1.msra.mxu0 0.0
        %5299 = vmatprep.subr.mxu0 0.0
        %5300 = vmatpush1.msra.mxu0 0.0
        %5301 = vmatprep.subr.mxu0 0.0
        %5302 = vmatpush1.msra.mxu0 0.0
        %5303 = vmatprep.subr.mxu0 0.0
        %5304 = vmatpush1.msra.mxu0 0.0
        %5305 = vmatprep.subr.mxu0 0.0
        %5306 = vmatpush1.msra.mxu0 0.0
        %5307 = vmatprep.subr.mxu0 0.0
        %5308 = vmatpush1.msra.mxu0 0.0
        %5309 = vmatprep.mubr.f32.mxu0 0.0
        %5310 = vmatmul.mubr.f32.gmra.mrb[0].mxu0 %v5030
        %v5311 = vpop.f32.mrb[0].mxu0
        %v5312 = vadd.f32 0.0, %v5311
        %v5313 = vpop.f32.mrb[0].mxu0
        %v5314 = vadd.f32 0.0, %v5313
        %5315 = vdwg.mxu0
        %v5316 = vadd.f32 %v5021, %v5099
        %v5317 = vadd.f32 %v5022, %v5101
        %v5318 = vadd.f32 %v5023, %v5170
        %v5319 = vadd.f32 %v5024, %v5172
        %v5320 = vadd.f32 %v5025, %v5241
        %v5321 = vadd.f32 %v5026, %v5243
        %v5322 = vadd.f32 %v5027, %v5312
        %v5323 = vadd.f32 %v5028, %v5314
        %5324 = vrot.lane.b32.xlu0 %v2370, 120
        %v5325 = vpop.permute.xlu0 %5324
        %5326 = vrot.lane.b32.xlu0 %v2371, 120
        %v5327 = vpop.permute.xlu0 %5326
        %5328 = vrot.lane.b32.xlu0 %v2372, 120
        %v5329 = vpop.permute.xlu0 %5328
        %5330 = vrot.lane.b32.xlu0 %v2373, 120
        %v5331 = vpop.permute.xlu0 %5330
        %5332 = vrot.lane.b32.xlu0 %v2374, 120
        %v5333 = vpop.permute.xlu0 %5332
        %5334 = vrot.lane.b32.xlu0 %v2375, 120
        %v5335 = vpop.permute.xlu0 %5334
        %5336 = vrot.lane.b32.xlu0 %v2376, 120
        %v5337 = vpop.permute.xlu0 %5336
        %5338 = vrot.lane.b32.xlu0 %v2377, 120
        %v5339 = vpop.permute.xlu0 %5338
        %5340 = vrot.lane.b32.xlu0 %v2378, 120
        %v5341 = vpop.permute.xlu0 %5340
        %v5342 = vsel %vm4372, %v5325, %v5327
        %v5343 = vsel %vm4372, %v5327, %v5329
        %v5344 = vsel %vm4372, %v5329, %v5331
        %v5345 = vsel %vm4372, %v5331, %v5333
        %v5346 = vsel %vm4372, %v5333, %v5335
        %v5347 = vsel %vm4372, %v5335, %v5337
        %v5348 = vsel %vm4372, %v5337, %v5339
        %v5349 = vsel %vm4372, %v5339, %v5341
        %v5358 = vsel %vm390, %v5342, 0.0
        %v5359 = vsel %vm391, %v5343, 0.0
        %v5360 = vsel %vm392, %v5344, 0.0
        %v5361 = vsel %vm393, %v5345, 0.0
        %v5362 = vsel %vm394, %v5346, 0.0
        %v5363 = vsel %vm395, %v5347, 0.0
        %v5364 = vsel %vm396, %v5348, 0.0
        %v5365 = vsel %vm397, %v5349, 0.0
        %v5367 = vsel %vm807, %v248, 0
        %5369 = vmatprep.subr.mxu0 %v5359
        %5370 = vmatpush1.msra.mxu0 %v5358
        %5371 = vmatprep.subr.mxu0 0.0
        %5372 = vmatpush1.msra.mxu0 0.0
        %5373 = vmatprep.subr.mxu0 0.0
        %5374 = vmatpush1.msra.mxu0 0.0
        %5375 = vmatprep.subr.mxu0 0.0
        %5376 = vmatpush1.msra.mxu0 0.0
        %5377 = vmatprep.subr.mxu0 0.0
        %5378 = vmatpush1.msra.mxu0 0.0
        %5379 = vmatprep.subr.mxu0 0.0
        %5380 = vmatpush1.msra.mxu0 0.0
        %5381 = vmatprep.subr.mxu0 0.0
        %5382 = vmatpush1.msra.mxu0 0.0
        %5383 = vmatprep.subr.mxu0 0.0
        %5384 = vmatpush1.msra.mxu0 0.0
        %5385 = vmatprep.subr.mxu0 0.0
        %5386 = vmatpush1.msra.mxu0 0.0
        %5387 = vmatprep.subr.mxu0 0.0
        %5388 = vmatpush1.msra.mxu0 0.0
        %5389 = vmatprep.subr.mxu0 0.0
        %5390 = vmatpush1.msra.mxu0 0.0
        %5391 = vmatprep.subr.mxu0 0.0
        %5392 = vmatpush1.msra.mxu0 0.0
        %5393 = vmatprep.subr.mxu0 0.0
        %5394 = vmatpush1.msra.mxu0 0.0
        %5395 = vmatprep.subr.mxu0 0.0
        %5396 = vmatpush1.msra.mxu0 0.0
        %5397 = vmatprep.subr.mxu0 0.0
        %5398 = vmatpush1.msra.mxu0 0.0
        %5399 = vmatprep.subr.mxu0 0.0
        %5400 = vmatpush1.msra.mxu0 0.0
        %5401 = vmatprep.subr.mxu0 0.0
        %5402 = vmatpush1.msra.mxu0 0.0
        %5403 = vmatprep.subr.mxu0 0.0
        %5404 = vmatpush1.msra.mxu0 0.0
        %5405 = vmatprep.subr.mxu0 0.0
        %5406 = vmatpush1.msra.mxu0 0.0
        %5407 = vmatprep.subr.mxu0 0.0
        %5408 = vmatpush1.msra.mxu0 0.0
        %5409 = vmatprep.subr.mxu0 0.0
        %5410 = vmatpush1.msra.mxu0 0.0
        %5411 = vmatprep.subr.mxu0 0.0
        %5412 = vmatpush1.msra.mxu0 0.0
        %5413 = vmatprep.subr.mxu0 0.0
        %5414 = vmatpush1.msra.mxu0 0.0
        %5415 = vmatprep.subr.mxu0 0.0
        %5416 = vmatpush1.msra.mxu0 0.0
        %5417 = vmatprep.subr.mxu0 0.0
        %5418 = vmatpush1.msra.mxu0 0.0
        %5419 = vmatprep.subr.mxu0 0.0
        %5420 = vmatpush1.msra.mxu0 0.0
        %5421 = vmatprep.subr.mxu0 0.0
        %5422 = vmatpush1.msra.mxu0 0.0
        %5423 = vmatprep.subr.mxu0 0.0
        %5424 = vmatpush1.msra.mxu0 0.0
        %5425 = vmatprep.subr.mxu0 0.0
        %5426 = vmatpush1.msra.mxu0 0.0
        %5427 = vmatprep.subr.mxu0 0.0
        %5428 = vmatpush1.msra.mxu0 0.0
        %5429 = vmatprep.subr.mxu0 0.0
        %5430 = vmatpush1.msra.mxu0 0.0
        %5431 = vmatprep.subr.mxu0 0.0
        %5432 = vmatpush1.msra.mxu0 0.0
        %5433 = vmatprep.mubr.f32.mxu0 0.0
        %5434 = vmatmul.mubr.f32.gmra.mrb[0].mxu0 %v5367
        %v5435 = vpop.f32.mrb[0].mxu0
        %v5436 = vadd.f32 0.0, %v5435
        %v5437 = vpop.f32.mrb[0].mxu0
        %v5438 = vadd.f32 0.0, %v5437
        %5439 = vdwg.mxu0
        %5440 = vmatprep.subr.mxu0 %v5361
        %5441 = vmatpush1.msra.mxu0 %v5360
        %5442 = vmatprep.subr.mxu0 0.0
        %5443 = vmatpush1.msra.mxu0 0.0
        %5444 = vmatprep.subr.mxu0 0.0
        %5445 = vmatpush1.msra.mxu0 0.0
        %5446 = vmatprep.subr.mxu0 0.0
        %5447 = vmatpush1.msra.mxu0 0.0
        %5448 = vmatprep.subr.mxu0 0.0
        %5449 = vmatpush1.msra.mxu0 0.0
        %5450 = vmatprep.subr.mxu0 0.0
        %5451 = vmatpush1.msra.mxu0 0.0
        %5452 = vmatprep.subr.mxu0 0.0
        %5453 = vmatpush1.msra.mxu0 0.0
        %5454 = vmatprep.subr.mxu0 0.0
        %5455 = vmatpush1.msra.mxu0 0.0
        %5456 = vmatprep.subr.mxu0 0.0
        %5457 = vmatpush1.msra.mxu0 0.0
        %5458 = vmatprep.subr.mxu0 0.0
        %5459 = vmatpush1.msra.mxu0 0.0
        %5460 = vmatprep.subr.mxu0 0.0
        %5461 = vmatpush1.msra.mxu0 0.0
        %5462 = vmatprep.subr.mxu0 0.0
        %5463 = vmatpush1.msra.mxu0 0.0
        %5464 = vmatprep.subr.mxu0 0.0
        %5465 = vmatpush1.msra.mxu0 0.0
        %5466 = vmatprep.subr.mxu0 0.0
        %5467 = vmatpush1.msra.mxu0 0.0
        %5468 = vmatprep.subr.mxu0 0.0
        %5469 = vmatpush1.msra.mxu0 0.0
        %5470 = vmatprep.subr.mxu0 0.0
        %5471 = vmatpush1.msra.mxu0 0.0
        %5472 = vmatprep.subr.mxu0 0.0
        %5473 = vmatpush1.msra.mxu0 0.0
        %5474 = vmatprep.subr.mxu0 0.0
        %5475 = vmatpush1.msra.mxu0 0.0
        %5476 = vmatprep.subr.mxu0 0.0
        %5477 = vmatpush1.msra.mxu0 0.0
        %5478 = vmatprep.subr.mxu0 0.0
        %5479 = vmatpush1.msra.mxu0 0.0
        %5480 = vmatprep.subr.mxu0 0.0
        %5481 = vmatpush1.msra.mxu0 0.0
        %5482 = vmatprep.subr.mxu0 0.0
        %5483 = vmatpush1.msra.mxu0 0.0
        %5484 = vmatprep.subr.mxu0 0.0
        %5485 = vmatpush1.msra.mxu0 0.0
        %5486 = vmatprep.subr.mxu0 0.0
        %5487 = vmatpush1.msra.mxu0 0.0
        %5488 = vmatprep.subr.mxu0 0.0
        %5489 = vmatpush1.msra.mxu0 0.0
        %5490 = vmatprep.subr.mxu0 0.0
        %5491 = vmatpush1.msra.mxu0 0.0
        %5492 = vmatprep.subr.mxu0 0.0
        %5493 = vmatpush1.msra.mxu0 0.0
        %5494 = vmatprep.subr.mxu0 0.0
        %5495 = vmatpush1.msra.mxu0 0.0
        %5496 = vmatprep.subr.mxu0 0.0
        %5497 = vmatpush1.msra.mxu0 0.0
        %5498 = vmatprep.subr.mxu0 0.0
        %5499 = vmatpush1.msra.mxu0 0.0
        %5500 = vmatprep.subr.mxu0 0.0
        %5501 = vmatpush1.msra.mxu0 0.0
        %5502 = vmatprep.subr.mxu0 0.0
        %5503 = vmatpush1.msra.mxu0 0.0
        %5504 = vmatprep.mubr.f32.mxu0 0.0
        %5505 = vmatmul.mubr.f32.gmra.mrb[0].mxu0 %v5367
        %v5506 = vpop.f32.mrb[0].mxu0
        %v5507 = vadd.f32 0.0, %v5506
        %v5508 = vpop.f32.mrb[0].mxu0
        %v5509 = vadd.f32 0.0, %v5508
        %5510 = vdwg.mxu0
        %5511 = vmatprep.subr.mxu0 %v5363
        %5512 = vmatpush1.msra.mxu0 %v5362
        %5513 = vmatprep.subr.mxu0 0.0
        %5514 = vmatpush1.msra.mxu0 0.0
        %5515 = vmatprep.subr.mxu0 0.0
        %5516 = vmatpush1.msra.mxu0 0.0
        %5517 = vmatprep.subr.mxu0 0.0
        %5518 = vmatpush1.msra.mxu0 0.0
        %5519 = vmatprep.subr.mxu0 0.0
        %5520 = vmatpush1.msra.mxu0 0.0
        %5521 = vmatprep.subr.mxu0 0.0
        %5522 = vmatpush1.msra.mxu0 0.0
        %5523 = vmatprep.subr.mxu0 0.0
        %5524 = vmatpush1.msra.mxu0 0.0
        %5525 = vmatprep.subr.mxu0 0.0
        %5526 = vmatpush1.msra.mxu0 0.0
        %5527 = vmatprep.subr.mxu0 0.0
        %5528 = vmatpush1.msra.mxu0 0.0
        %5529 = vmatprep.subr.mxu0 0.0
        %5530 = vmatpush1.msra.mxu0 0.0
        %5531 = vmatprep.subr.mxu0 0.0
        %5532 = vmatpush1.msra.mxu0 0.0
        %5533 = vmatprep.subr.mxu0 0.0
        %5534 = vmatpush1.msra.mxu0 0.0
        %5535 = vmatprep.subr.mxu0 0.0
        %5536 = vmatpush1.msra.mxu0 0.0
        %5537 = vmatprep.subr.mxu0 0.0
        %5538 = vmatpush1.msra.mxu0 0.0
        %5539 = vmatprep.subr.mxu0 0.0
        %5540 = vmatpush1.msra.mxu0 0.0
        %5541 = vmatprep.subr.mxu0 0.0
        %5542 = vmatpush1.msra.mxu0 0.0
        %5543 = vmatprep.subr.mxu0 0.0
        %5544 = vmatpush1.msra.mxu0 0.0
        %5545 = vmatprep.subr.mxu0 0.0
        %5546 = vmatpush1.msra.mxu0 0.0
        %5547 = vmatprep.subr.mxu0 0.0
        %5548 = vmatpush1.msra.mxu0 0.0
        %5549 = vmatprep.subr.mxu0 0.0
        %5550 = vmatpush1.msra.mxu0 0.0
        %5551 = vmatprep.subr.mxu0 0.0
        %5552 = vmatpush1.msra.mxu0 0.0
        %5553 = vmatprep.subr.mxu0 0.0
        %5554 = vmatpush1.msra.mxu0 0.0
        %5555 = vmatprep.subr.mxu0 0.0
        %5556 = vmatpush1.msra.mxu0 0.0
        %5557 = vmatprep.subr.mxu0 0.0
        %5558 = vmatpush1.msra.mxu0 0.0
        %5559 = vmatprep.subr.mxu0 0.0
        %5560 = vmatpush1.msra.mxu0 0.0
        %5561 = vmatprep.subr.mxu0 0.0
        %5562 = vmatpush1.msra.mxu0 0.0
        %5563 = vmatprep.subr.mxu0 0.0
        %5564 = vmatpush1.msra.mxu0 0.0
        %5565 = vmatprep.subr.mxu0 0.0
        %5566 = vmatpush1.msra.mxu0 0.0
        %5567 = vmatprep.subr.mxu0 0.0
        %5568 = vmatpush1.msra.mxu0 0.0
        %5569 = vmatprep.subr.mxu0 0.0
        %5570 = vmatpush1.msra.mxu0 0.0
        %5571 = vmatprep.subr.mxu0 0.0
        %5572 = vmatpush1.msra.mxu0 0.0
        %5573 = vmatprep.subr.mxu0 0.0
        %5574 = vmatpush1.msra.mxu0 0.0
        %5575 = vmatprep.mubr.f32.mxu0 0.0
        %5576 = vmatmul.mubr.f32.gmra.mrb[0].mxu0 %v5367
        %v5577 = vpop.f32.mrb[0].mxu0
        %v5578 = vadd.f32 0.0, %v5577
        %v5579 = vpop.f32.mrb[0].mxu0
        %v5580 = vadd.f32 0.0, %v5579
        %5581 = vdwg.mxu0
        %5582 = vmatprep.subr.mxu0 %v5365
        %5583 = vmatpush1.msra.mxu0 %v5364
        %5584 = vmatprep.subr.mxu0 0.0
        %5585 = vmatpush1.msra.mxu0 0.0
        %5586 = vmatprep.subr.mxu0 0.0
        %5587 = vmatpush1.msra.mxu0 0.0
        %5588 = vmatprep.subr.mxu0 0.0
        %5589 = vmatpush1.msra.mxu0 0.0
        %5590 = vmatprep.subr.mxu0 0.0
        %5591 = vmatpush1.msra.mxu0 0.0
        %5592 = vmatprep.subr.mxu0 0.0
        %5593 = vmatpush1.msra.mxu0 0.0
        %5594 = vmatprep.subr.mxu0 0.0
        %5595 = vmatpush1.msra.mxu0 0.0
        %5596 = vmatprep.subr.mxu0 0.0
        %5597 = vmatpush1.msra.mxu0 0.0
        %5598 = vmatprep.subr.mxu0 0.0
        %5599 = vmatpush1.msra.mxu0 0.0
        %5600 = vmatprep.subr.mxu0 0.0
        %5601 = vmatpush1.msra.mxu0 0.0
        %5602 = vmatprep.subr.mxu0 0.0
        %5603 = vmatpush1.msra.mxu0 0.0
        %5604 = vmatprep.subr.mxu0 0.0
        %5605 = vmatpush1.msra.mxu0 0.0
        %5606 = vmatprep.subr.mxu0 0.0
        %5607 = vmatpush1.msra.mxu0 0.0
        %5608 = vmatprep.subr.mxu0 0.0
        %5609 = vmatpush1.msra.mxu0 0.0
        %5610 = vmatprep.subr.mxu0 0.0
        %5611 = vmatpush1.msra.mxu0 0.0
        %5612 = vmatprep.subr.mxu0 0.0
        %5613 = vmatpush1.msra.mxu0 0.0
        %5614 = vmatprep.subr.mxu0 0.0
        %5615 = vmatpush1.msra.mxu0 0.0
        %5616 = vmatprep.subr.mxu0 0.0
        %5617 = vmatpush1.msra.mxu0 0.0
        %5618 = vmatprep.subr.mxu0 0.0
        %5619 = vmatpush1.msra.mxu0 0.0
        %5620 = vmatprep.subr.mxu0 0.0
        %5621 = vmatpush1.msra.mxu0 0.0
        %5622 = vmatprep.subr.mxu0 0.0
        %5623 = vmatpush1.msra.mxu0 0.0
        %5624 = vmatprep.subr.mxu0 0.0
        %5625 = vmatpush1.msra.mxu0 0.0
        %5626 = vmatprep.subr.mxu0 0.0
        %5627 = vmatpush1.msra.mxu0 0.0
        %5628 = vmatprep.subr.mxu0 0.0
        %5629 = vmatpush1.msra.mxu0 0.0
        %5630 = vmatprep.subr.mxu0 0.0
        %5631 = vmatpush1.msra.mxu0 0.0
        %5632 = vmatprep.subr.mxu0 0.0
        %5633 = vmatpush1.msra.mxu0 0.0
        %5634 = vmatprep.subr.mxu0 0.0
        %5635 = vmatpush1.msra.mxu0 0.0
        %5636 = vmatprep.subr.mxu0 0.0
        %5637 = vmatpush1.msra.mxu0 0.0
        %5638 = vmatprep.subr.mxu0 0.0
        %5639 = vmatpush1.msra.mxu0 0.0
        %5640 = vmatprep.subr.mxu0 0.0
        %5641 = vmatpush1.msra.mxu0 0.0
        %5642 = vmatprep.subr.mxu0 0.0
        %5643 = vmatpush1.msra.mxu0 0.0
        %5644 = vmatprep.subr.mxu0 0.0
        %5645 = vmatpush1.msra.mxu0 0.0
        %5646 = vmatprep.mubr.f32.mxu0 0.0
        %5647 = vmatmul.mubr.f32.gmra.mrb[0].mxu0 %v5367
        %v5648 = vpop.f32.mrb[0].mxu0
        %v5649 = vadd.f32 0.0, %v5648
        %v5650 = vpop.f32.mrb[0].mxu0
        %v5651 = vadd.f32 0.0, %v5650
        %5652 = vdwg.mxu0
        %v5653 = vadd.f32 %v5316, %v5436
        %v5654 = vadd.f32 %v5317, %v5438
        %v5655 = vadd.f32 %v5318, %v5507
        %v5656 = vadd.f32 %v5319, %v5509
        %v5657 = vadd.f32 %v5320, %v5578
        %v5658 = vadd.f32 %v5321, %v5580
        %v5659 = vadd.f32 %v5322, %v5649
        %v5660 = vadd.f32 %v5323, %v5651
        %5661 = vrot.lane.b32.xlu0 %v3357, 8
        %v5662 = vpop.permute.xlu0 %5661
        %5663 = vrot.lane.b32.xlu0 %v3358, 8
        %v5664 = vpop.permute.xlu0 %5663
        %5665 = vrot.lane.b32.xlu0 %v3359, 8
        %v5666 = vpop.permute.xlu0 %5665
        %5667 = vrot.lane.b32.xlu0 %v3360, 8
        %v5668 = vpop.permute.xlu0 %5667
        %5669 = vrot.lane.b32.xlu0 %v3361, 8
        %v5670 = vpop.permute.xlu0 %5669
        %5671 = vrot.lane.b32.xlu0 %v3362, 8
        %v5672 = vpop.permute.xlu0 %5671
        %5673 = vrot.lane.b32.xlu0 %v3363, 8
        %v5674 = vpop.permute.xlu0 %5673
        %5675 = vrot.lane.b32.xlu0 %v3364, 8
        %v5676 = vpop.permute.xlu0 %5675
        %5677 = vrot.lane.b32.xlu0 %v3365, 8
        %v5678 = vpop.permute.xlu0 %5677
        %v5679 = vsel %vm807, %v5662, %v5664
        %v5680 = vsel %vm807, %v5664, %v5666
        %v5681 = vsel %vm807, %v5666, %v5668
        %v5682 = vsel %vm807, %v5668, %v5670
        %v5683 = vsel %vm807, %v5670, %v5672
        %v5684 = vsel %vm807, %v5672, %v5674
        %v5685 = vsel %vm807, %v5674, %v5676
        %v5686 = vsel %vm807, %v5676, %v5678
        %v5695 = vsel %vm382, %v5679, 0.0
        %v5696 = vsel %vm383, %v5680, 0.0
        %v5697 = vsel %vm384, %v5681, 0.0
        %v5698 = vsel %vm385, %v5682, 0.0
        %v5699 = vsel %vm386, %v5683, 0.0
        %v5700 = vsel %vm387, %v5684, 0.0
        %v5701 = vsel %vm388, %v5685, 0.0
        %v5702 = vsel %vm389, %v5686, 0.0
        %v5704 = vsel %vm807, %v249, 0
        %5706 = vmatprep.subr.mxu0 %v5696
        %5707 = vmatpush1.msra.mxu0 %v5695
        %5708 = vmatprep.subr.mxu0 0.0
        %5709 = vmatpush1.msra.mxu0 0.0
        %5710 = vmatprep.subr.mxu0 0.0
        %5711 = vmatpush1.msra.mxu0 0.0
        %5712 = vmatprep.subr.mxu0 0.0
        %5713 = vmatpush1.msra.mxu0 0.0
        %5714 = vmatprep.subr.mxu0 0.0
        %5715 = vmatpush1.msra.mxu0 0.0
        %5716 = vmatprep.subr.mxu0 0.0
        %5717 = vmatpush1.msra.mxu0 0.0
        %5718 = vmatprep.subr.mxu0 0.0
        %5719 = vmatpush1.msra.mxu0 0.0
        %5720 = vmatprep.subr.mxu0 0.0
        %5721 = vmatpush1.msra.mxu0 0.0
        %5722 = vmatprep.subr.mxu0 0.0
        %5723 = vmatpush1.msra.mxu0 0.0
        %5724 = vmatprep.subr.mxu0 0.0
        %5725 = vmatpush1.msra.mxu0 0.0
        %5726 = vmatprep.subr.mxu0 0.0
        %5727 = vmatpush1.msra.mxu0 0.0
        %5728 = vmatprep.subr.mxu0 0.0
        %5729 = vmatpush1.msra.mxu0 0.0
        %5730 = vmatprep.subr.mxu0 0.0
        %5731 = vmatpush1.msra.mxu0 0.0
        %5732 = vmatprep.subr.mxu0 0.0
        %5733 = vmatpush1.msra.mxu0 0.0
        %5734 = vmatprep.subr.mxu0 0.0
        %5735 = vmatpush1.msra.mxu0 0.0
        %5736 = vmatprep.subr.mxu0 0.0
        %5737 = vmatpush1.msra.mxu0 0.0
        %5738 = vmatprep.subr.mxu0 0.0
        %5739 = vmatpush1.msra.mxu0 0.0
        %5740 = vmatprep.subr.mxu0 0.0
        %5741 = vmatpush1.msra.mxu0 0.0
        %5742 = vmatprep.subr.mxu0 0.0
        %5743 = vmatpush1.msra.mxu0 0.0
        %5744 = vmatprep.subr.mxu0 0.0
        %5745 = vmatpush1.msra.mxu0 0.0
        %5746 = vmatprep.subr.mxu0 0.0
        %5747 = vmatpush1.msra.mxu0 0.0
        %5748 = vmatprep.subr.mxu0 0.0
        %5749 = vmatpush1.msra.mxu0 0.0
        %5750 = vmatprep.subr.mxu0 0.0
        %5751 = vmatpush1.msra.mxu0 0.0
        %5752 = vmatprep.subr.mxu0 0.0
        %5753 = vmatpush1.msra.mxu0 0.0
        %5754 = vmatprep.subr.mxu0 0.0
        %5755 = vmatpush1.msra.mxu0 0.0
        %5756 = vmatprep.subr.mxu0 0.0
        %5757 = vmatpush1.msra.mxu0 0.0
        %5758 = vmatprep.subr.mxu0 0.0
        %5759 = vmatpush1.msra.mxu0 0.0
        %5760 = vmatprep.subr.mxu0 0.0
        %5761 = vmatpush1.msra.mxu0 0.0
        %5762 = vmatprep.subr.mxu0 0.0
        %5763 = vmatpush1.msra.mxu0 0.0
        %5764 = vmatprep.subr.mxu0 0.0
        %5765 = vmatpush1.msra.mxu0 0.0
        %5766 = vmatprep.subr.mxu0 0.0
        %5767 = vmatpush1.msra.mxu0 0.0
        %5768 = vmatprep.subr.mxu0 0.0
        %5769 = vmatpush1.msra.mxu0 0.0
        %5770 = vmatprep.mubr.f32.mxu0 0.0
        %5771 = vmatmul.mubr.f32.gmra.mrb[0].mxu0 %v5704
        %v5772 = vpop.f32.mrb[0].mxu0
        %v5773 = vadd.f32 0.0, %v5772
        %v5774 = vpop.f32.mrb[0].mxu0
        %v5775 = vadd.f32 0.0, %v5774
        %5776 = vdwg.mxu0
        %5777 = vmatprep.subr.mxu0 %v5698
        %5778 = vmatpush1.msra.mxu0 %v5697
        %5779 = vmatprep.subr.mxu0 0.0
        %5780 = vmatpush1.msra.mxu0 0.0
        %5781 = vmatprep.subr.mxu0 0.0
        %5782 = vmatpush1.msra.mxu0 0.0
        %5783 = vmatprep.subr.mxu0 0.0
        %5784 = vmatpush1.msra.mxu0 0.0
        %5785 = vmatprep.subr.mxu0 0.0
        %5786 = vmatpush1.msra.mxu0 0.0
        %5787 = vmatprep.subr.mxu0 0.0
        %5788 = vmatpush1.msra.mxu0 0.0
        %5789 = vmatprep.subr.mxu0 0.0
        %5790 = vmatpush1.msra.mxu0 0.0
        %5791 = vmatprep.subr.mxu0 0.0
        %5792 = vmatpush1.msra.mxu0 0.0
        %5793 = vmatprep.subr.mxu0 0.0
        %5794 = vmatpush1.msra.mxu0 0.0
        %5795 = vmatprep.subr.mxu0 0.0
        %5796 = vmatpush1.msra.mxu0 0.0
        %5797 = vmatprep.subr.mxu0 0.0
        %5798 = vmatpush1.msra.mxu0 0.0
        %5799 = vmatprep.subr.mxu0 0.0
        %5800 = vmatpush1.msra.mxu0 0.0
        %5801 = vmatprep.subr.mxu0 0.0
        %5802 = vmatpush1.msra.mxu0 0.0
        %5803 = vmatprep.subr.mxu0 0.0
        %5804 = vmatpush1.msra.mxu0 0.0
        %5805 = vmatprep.subr.mxu0 0.0
        %5806 = vmatpush1.msra.mxu0 0.0
        %5807 = vmatprep.subr.mxu0 0.0
        %5808 = vmatpush1.msra.mxu0 0.0
        %5809 = vmatprep.subr.mxu0 0.0
        %5810 = vmatpush1.msra.mxu0 0.0
        %5811 = vmatprep.subr.mxu0 0.0
        %5812 = vmatpush1.msra.mxu0 0.0
        %5813 = vmatprep.subr.mxu0 0.0
        %5814 = vmatpush1.msra.mxu0 0.0
        %5815 = vmatprep.subr.mxu0 0.0
        %5816 = vmatpush1.msra.mxu0 0.0
        %5817 = vmatprep.subr.mxu0 0.0
        %5818 = vmatpush1.msra.mxu0 0.0
        %5819 = vmatprep.subr.mxu0 0.0
        %5820 = vmatpush1.msra.mxu0 0.0
        %5821 = vmatprep.subr.mxu0 0.0
        %5822 = vmatpush1.msra.mxu0 0.0
        %5823 = vmatprep.subr.mxu0 0.0
        %5824 = vmatpush1.msra.mxu0 0.0
        %5825 = vmatprep.subr.mxu0 0.0
        %5826 = vmatpush1.msra.mxu0 0.0
        %5827 = vmatprep.subr.mxu0 0.0
        %5828 = vmatpush1.msra.mxu0 0.0
        %5829 = vmatprep.subr.mxu0 0.0
        %5830 = vmatpush1.msra.mxu0 0.0
        %5831 = vmatprep.subr.mxu0 0.0
        %5832 = vmatpush1.msra.mxu0 0.0
        %5833 = vmatprep.subr.mxu0 0.0
        %5834 = vmatpush1.msra.mxu0 0.0
        %5835 = vmatprep.subr.mxu0 0.0
        %5836 = vmatpush1.msra.mxu0 0.0
        %5837 = vmatprep.subr.mxu0 0.0
        %5838 = vmatpush1.msra.mxu0 0.0
        %5839 = vmatprep.subr.mxu0 0.0
        %5840 = vmatpush1.msra.mxu0 0.0
        %5841 = vmatprep.mubr.f32.mxu0 0.0
        %5842 = vmatmul.mubr.f32.gmra.mrb[0].mxu0 %v5704
        %v5843 = vpop.f32.mrb[0].mxu0
        %v5844 = vadd.f32 0.0, %v5843
        %v5845 = vpop.f32.mrb[0].mxu0
        %v5846 = vadd.f32 0.0, %v5845
        %5847 = vdwg.mxu0
        %5848 = vmatprep.subr.mxu0 %v5700
        %5849 = vmatpush1.msra.mxu0 %v5699
        %5850 = vmatprep.subr.mxu0 0.0
        %5851 = vmatpush1.msra.mxu0 0.0
        %5852 = vmatprep.subr.mxu0 0.0
        %5853 = vmatpush1.msra.mxu0 0.0
        %5854 = vmatprep.subr.mxu0 0.0
        %5855 = vmatpush1.msra.mxu0 0.0
        %5856 = vmatprep.subr.mxu0 0.0
        %5857 = vmatpush1.msra.mxu0 0.0
        %5858 = vmatprep.subr.mxu0 0.0
        %5859 = vmatpush1.msra.mxu0 0.0
        %5860 = vmatprep.subr.mxu0 0.0
        %5861 = vmatpush1.msra.mxu0 0.0
        %5862 = vmatprep.subr.mxu0 0.0
        %5863 = vmatpush1.msra.mxu0 0.0
        %5864 = vmatprep.subr.mxu0 0.0
        %5865 = vmatpush1.msra.mxu0 0.0
        %5866 = vmatprep.subr.mxu0 0.0
        %5867 = vmatpush1.msra.mxu0 0.0
        %5868 = vmatprep.subr.mxu0 0.0
        %5869 = vmatpush1.msra.mxu0 0.0
        %5870 = vmatprep.subr.mxu0 0.0
        %5871 = vmatpush1.msra.mxu0 0.0
        %5872 = vmatprep.subr.mxu0 0.0
        %5873 = vmatpush1.msra.mxu0 0.0
        %5874 = vmatprep.subr.mxu0 0.0
        %5875 = vmatpush1.msra.mxu0 0.0
        %5876 = vmatprep.subr.mxu0 0.0
        %5877 = vmatpush1.msra.mxu0 0.0
        %5878 = vmatprep.subr.mxu0 0.0
        %5879 = vmatpush1.msra.mxu0 0.0
        %5880 = vmatprep.subr.mxu0 0.0
        %5881 = vmatpush1.msra.mxu0 0.0
        %5882 = vmatprep.subr.mxu0 0.0
        %5883 = vmatpush1.msra.mxu0 0.0
        %5884 = vmatprep.subr.mxu0 0.0
        %5885 = vmatpush1.msra.mxu0 0.0
        %5886 = vmatprep.subr.mxu0 0.0
        %5887 = vmatpush1.msra.mxu0 0.0
        %5888 = vmatprep.subr.mxu0 0.0
        %5889 = vmatpush1.msra.mxu0 0.0
        %5890 = vmatprep.subr.mxu0 0.0
        %5891 = vmatpush1.msra.mxu0 0.0
        %5892 = vmatprep.subr.mxu0 0.0
        %5893 = vmatpush1.msra.mxu0 0.0
        %5894 = vmatprep.subr.mxu0 0.0
        %5895 = vmatpush1.msra.mxu0 0.0
        %5896 = vmatprep.subr.mxu0 0.0
        %5897 = vmatpush1.msra.mxu0 0.0
        %5898 = vmatprep.subr.mxu0 0.0
        %5899 = vmatpush1.msra.mxu0 0.0
        %5900 = vmatprep.subr.mxu0 0.0
        %5901 = vmatpush1.msra.mxu0 0.0
        %5902 = vmatprep.subr.mxu0 0.0
        %5903 = vmatpush1.msra.mxu0 0.0
        %5904 = vmatprep.subr.mxu0 0.0
        %5905 = vmatpush1.msra.mxu0 0.0
        %5906 = vmatprep.subr.mxu0 0.0
        %5907 = vmatpush1.msra.mxu0 0.0
        %5908 = vmatprep.subr.mxu0 0.0
        %5909 = vmatpush1.msra.mxu0 0.0
        %5910 = vmatprep.subr.mxu0 0.0
        %5911 = vmatpush1.msra.mxu0 0.0
        %5912 = vmatprep.mubr.f32.mxu0 0.0
        %5913 = vmatmul.mubr.f32.gmra.mrb[0].mxu0 %v5704
        %v5914 = vpop.f32.mrb[0].mxu0
        %v5915 = vadd.f32 0.0, %v5914
        %v5916 = vpop.f32.mrb[0].mxu0
        %v5917 = vadd.f32 0.0, %v5916
        %5918 = vdwg.mxu0
        %5919 = vmatprep.subr.mxu0 %v5702
        %5920 = vmatpush1.msra.mxu0 %v5701
        %5921 = vmatprep.subr.mxu0 0.0
        %5922 = vmatpush1.msra.mxu0 0.0
        %5923 = vmatprep.subr.mxu0 0.0
        %5924 = vmatpush1.msra.mxu0 0.0
        %5925 = vmatprep.subr.mxu0 0.0
        %5926 = vmatpush1.msra.mxu0 0.0
        %5927 = vmatprep.subr.mxu0 0.0
        %5928 = vmatpush1.msra.mxu0 0.0
        %5929 = vmatprep.subr.mxu0 0.0
        %5930 = vmatpush1.msra.mxu0 0.0
        %5931 = vmatprep.subr.mxu0 0.0
        %5932 = vmatpush1.msra.mxu0 0.0
        %5933 = vmatprep.subr.mxu0 0.0
        %5934 = vmatpush1.msra.mxu0 0.0
        %5935 = vmatprep.subr.mxu0 0.0
        %5936 = vmatpush1.msra.mxu0 0.0
        %5937 = vmatprep.subr.mxu0 0.0
        %5938 = vmatpush1.msra.mxu0 0.0
        %5939 = vmatprep.subr.mxu0 0.0
        %5940 = vmatpush1.msra.mxu0 0.0
        %5941 = vmatprep.subr.mxu0 0.0
        %5942 = vmatpush1.msra.mxu0 0.0
        %5943 = vmatprep.subr.mxu0 0.0
        %5944 = vmatpush1.msra.mxu0 0.0
        %5945 = vmatprep.subr.mxu0 0.0
        %5946 = vmatpush1.msra.mxu0 0.0
        %5947 = vmatprep.subr.mxu0 0.0
        %5948 = vmatpush1.msra.mxu0 0.0
        %5949 = vmatprep.subr.mxu0 0.0
        %5950 = vmatpush1.msra.mxu0 0.0
        %5951 = vmatprep.subr.mxu0 0.0
        %5952 = vmatpush1.msra.mxu0 0.0
        %5953 = vmatprep.subr.mxu0 0.0
        %5954 = vmatpush1.msra.mxu0 0.0
        %5955 = vmatprep.subr.mxu0 0.0
        %5956 = vmatpush1.msra.mxu0 0.0
        %5957 = vmatprep.subr.mxu0 0.0
        %5958 = vmatpush1.msra.mxu0 0.0
        %5959 = vmatprep.subr.mxu0 0.0
        %5960 = vmatpush1.msra.mxu0 0.0
        %5961 = vmatprep.subr.mxu0 0.0
        %5962 = vmatpush1.msra.mxu0 0.0
        %5963 = vmatprep.subr.mxu0 0.0
        %5964 = vmatpush1.msra.mxu0 0.0
        %5965 = vmatprep.subr.mxu0 0.0
        %5966 = vmatpush1.msra.mxu0 0.0
        %5967 = vmatprep.subr.mxu0 0.0
        %5968 = vmatpush1.msra.mxu0 0.0
        %5969 = vmatprep.subr.mxu0 0.0
        %5970 = vmatpush1.msra.mxu0 0.0
        %5971 = vmatprep.subr.mxu0 0.0
        %5972 = vmatpush1.msra.mxu0 0.0
        %5973 = vmatprep.subr.mxu0 0.0
        %5974 = vmatpush1.msra.mxu0 0.0
        %5975 = vmatprep.subr.mxu0 0.0
        %5976 = vmatpush1.msra.mxu0 0.0
        %5977 = vmatprep.subr.mxu0 0.0
        %5978 = vmatpush1.msra.mxu0 0.0
        %5979 = vmatprep.subr.mxu0 0.0
        %5980 = vmatpush1.msra.mxu0 0.0
        %5981 = vmatprep.subr.mxu0 0.0
        %5982 = vmatpush1.msra.mxu0 0.0
        %5983 = vmatprep.mubr.f32.mxu0 0.0
        %5984 = vmatmul.mubr.f32.gmra.mrb[0].mxu0 %v5704
        %v5985 = vpop.f32.mrb[0].mxu0
        %v5986 = vadd.f32 0.0, %v5985
        %v5987 = vpop.f32.mrb[0].mxu0
        %v5988 = vadd.f32 0.0, %v5987
        %5989 = vdwg.mxu0
        %v5990 = vadd.f32 %v5653, %v5773
        %v5991 = vadd.f32 %v5654, %v5775
        %v5992 = vadd.f32 %v5655, %v5844
        %v5993 = vadd.f32 %v5656, %v5846
        %v5994 = vadd.f32 %v5657, %v5915
        %v5995 = vadd.f32 %v5658, %v5917
        %v5996 = vadd.f32 %v5659, %v5986
        %v5997 = vadd.f32 %v5660, %v5988
        %v5999 = vsel %vm807, %v250, 0
        %6001 = vmatprep.subr.mxu0 %v3359
        %6002 = vmatpush1.msra.mxu0 %v3358
        %6003 = vmatprep.subr.mxu0 0.0
        %6004 = vmatpush1.msra.mxu0 0.0
        %6005 = vmatprep.subr.mxu0 0.0
        %6006 = vmatpush1.msra.mxu0 0.0
        %6007 = vmatprep.subr.mxu0 0.0
        %6008 = vmatpush1.msra.mxu0 0.0
        %6009 = vmatprep.subr.mxu0 0.0
        %6010 = vmatpush1.msra.mxu0 0.0
        %6011 = vmatprep.subr.mxu0 0.0
        %6012 = vmatpush1.msra.mxu0 0.0
        %6013 = vmatprep.subr.mxu0 0.0
        %6014 = vmatpush1.msra.mxu0 0.0
        %6015 = vmatprep.subr.mxu0 0.0
        %6016 = vmatpush1.msra.mxu0 0.0
        %6017 = vmatprep.subr.mxu0 0.0
        %6018 = vmatpush1.msra.mxu0 0.0
        %6019 = vmatprep.subr.mxu0 0.0
        %6020 = vmatpush1.msra.mxu0 0.0
        %6021 = vmatprep.subr.mxu0 0.0
        %6022 = vmatpush1.msra.mxu0 0.0
        %6023 = vmatprep.subr.mxu0 0.0
        %6024 = vmatpush1.msra.mxu0 0.0
        %6025 = vmatprep.subr.mxu0 0.0
        %6026 = vmatpush1.msra.mxu0 0.0
        %6027 = vmatprep.subr.mxu0 0.0
        %6028 = vmatpush1.msra.mxu0 0.0
        %6029 = vmatprep.subr.mxu0 0.0
        %6030 = vmatpush1.msra.mxu0 0.0
        %6031 = vmatprep.subr.mxu0 0.0
        %6032 = vmatpush1.msra.mxu0 0.0
        %6033 = vmatprep.subr.mxu0 0.0
        %6034 = vmatpush1.msra.mxu0 0.0
        %6035 = vmatprep.subr.mxu0 0.0
        %6036 = vmatpush1.msra.mxu0 0.0
        %6037 = vmatprep.subr.mxu0 0.0
        %6038 = vmatpush1.msra.mxu0 0.0
        %6039 = vmatprep.subr.mxu0 0.0
        %6040 = vmatpush1.msra.mxu0 0.0
        %6041 = vmatprep.subr.mxu0 0.0
        %6042 = vmatpush1.msra.mxu0 0.0
        %6043 = vmatprep.subr.mxu0 0.0
        %6044 = vmatpush1.msra.mxu0 0.0
        %6045 = vmatprep.subr.mxu0 0.0
        %6046 = vmatpush1.msra.mxu0 0.0
        %6047 = vmatprep.subr.mxu0 0.0
        %6048 = vmatpush1.msra.mxu0 0.0
        %6049 = vmatprep.subr.mxu0 0.0
        %6050 = vmatpush1.msra.mxu0 0.0
        %6051 = vmatprep.subr.mxu0 0.0
        %6052 = vmatpush1.msra.mxu0 0.0
        %6053 = vmatprep.subr.mxu0 0.0
        %6054 = vmatpush1.msra.mxu0 0.0
        %6055 = vmatprep.subr.mxu0 0.0
        %6056 = vmatpush1.msra.mxu0 0.0
        %6057 = vmatprep.subr.mxu0 0.0
        %6058 = vmatpush1.msra.mxu0 0.0
        %6059 = vmatprep.subr.mxu0 0.0
        %6060 = vmatpush1.msra.mxu0 0.0
        %6061 = vmatprep.subr.mxu0 0.0
        %6062 = vmatpush1.msra.mxu0 0.0
        %6063 = vmatprep.subr.mxu0 0.0
        %6064 = vmatpush1.msra.mxu0 0.0
        %6065 = vmatprep.mubr.f32.mxu0 0.0
        %6066 = vmatmul.mubr.f32.gmra.mrb[0].mxu0 %v5999
        %v6067 = vpop.f32.mrb[0].mxu0
        %v6068 = vadd.f32 0.0, %v6067
        %v6069 = vpop.f32.mrb[0].mxu0
        %v6070 = vadd.f32 0.0, %v6069
        %6071 = vdwg.mxu0
        %6072 = vmatprep.subr.mxu0 %v3361
        %6073 = vmatpush1.msra.mxu0 %v3360
        %6074 = vmatprep.subr.mxu0 0.0
        %6075 = vmatpush1.msra.mxu0 0.0
        %6076 = vmatprep.subr.mxu0 0.0
        %6077 = vmatpush1.msra.mxu0 0.0
        %6078 = vmatprep.subr.mxu0 0.0
        %6079 = vmatpush1.msra.mxu0 0.0
        %6080 = vmatprep.subr.mxu0 0.0
        %6081 = vmatpush1.msra.mxu0 0.0
        %6082 = vmatprep.subr.mxu0 0.0
        %6083 = vmatpush1.msra.mxu0 0.0
        %6084 = vmatprep.subr.mxu0 0.0
        %6085 = vmatpush1.msra.mxu0 0.0
        %6086 = vmatprep.subr.mxu0 0.0
        %6087 = vmatpush1.msra.mxu0 0.0
        %6088 = vmatprep.subr.mxu0 0.0
        %6089 = vmatpush1.msra.mxu0 0.0
        %6090 = vmatprep.subr.mxu0 0.0
        %6091 = vmatpush1.msra.mxu0 0.0
        %6092 = vmatprep.subr.mxu0 0.0
        %6093 = vmatpush1.msra.mxu0 0.0
        %6094 = vmatprep.subr.mxu0 0.0
        %6095 = vmatpush1.msra.mxu0 0.0
        %6096 = vmatprep.subr.mxu0 0.0
        %6097 = vmatpush1.msra.mxu0 0.0
        %6098 = vmatprep.subr.mxu0 0.0
        %6099 = vmatpush1.msra.mxu0 0.0
        %6100 = vmatprep.subr.mxu0 0.0
        %6101 = vmatpush1.msra.mxu0 0.0
        %6102 = vmatprep.subr.mxu0 0.0
        %6103 = vmatpush1.msra.mxu0 0.0
        %6104 = vmatprep.subr.mxu0 0.0
        %6105 = vmatpush1.msra.mxu0 0.0
        %6106 = vmatprep.subr.mxu0 0.0
        %6107 = vmatpush1.msra.mxu0 0.0
        %6108 = vmatprep.subr.mxu0 0.0
        %6109 = vmatpush1.msra.mxu0 0.0
        %6110 = vmatprep.subr.mxu0 0.0
        %6111 = vmatpush1.msra.mxu0 0.0
        %6112 = vmatprep.subr.mxu0 0.0
        %6113 = vmatpush1.msra.mxu0 0.0
        %6114 = vmatprep.subr.mxu0 0.0
        %6115 = vmatpush1.msra.mxu0 0.0
        %6116 = vmatprep.subr.mxu0 0.0
        %6117 = vmatpush1.msra.mxu0 0.0
        %6118 = vmatprep.subr.mxu0 0.0
        %6119 = vmatpush1.msra.mxu0 0.0
        %6120 = vmatprep.subr.mxu0 0.0
        %6121 = vmatpush1.msra.mxu0 0.0
        %6122 = vmatprep.subr.mxu0 0.0
        %6123 = vmatpush1.msra.mxu0 0.0
        %6124 = vmatprep.subr.mxu0 0.0
        %6125 = vmatpush1.msra.mxu0 0.0
        %6126 = vmatprep.subr.mxu0 0.0
        %6127 = vmatpush1.msra.mxu0 0.0
        %6128 = vmatprep.subr.mxu0 0.0
        %6129 = vmatpush1.msra.mxu0 0.0
        %6130 = vmatprep.subr.mxu0 0.0
        %6131 = vmatpush1.msra.mxu0 0.0
        %6132 = vmatprep.subr.mxu0 0.0
        %6133 = vmatpush1.msra.mxu0 0.0
        %6134 = vmatprep.subr.mxu0 0.0
        %6135 = vmatpush1.msra.mxu0 0.0
        %6136 = vmatprep.mubr.f32.mxu0 0.0
        %6137 = vmatmul.mubr.f32.gmra.mrb[0].mxu0 %v5999
        %v6138 = vpop.f32.mrb[0].mxu0
        %v6139 = vadd.f32 0.0, %v6138
        %v6140 = vpop.f32.mrb[0].mxu0
        %v6141 = vadd.f32 0.0, %v6140
        %6142 = vdwg.mxu0
        %6143 = vmatprep.subr.mxu0 %v3363
        %6144 = vmatpush1.msra.mxu0 %v3362
        %6145 = vmatprep.subr.mxu0 0.0
        %6146 = vmatpush1.msra.mxu0 0.0
        %6147 = vmatprep.subr.mxu0 0.0
        %6148 = vmatpush1.msra.mxu0 0.0
        %6149 = vmatprep.subr.mxu0 0.0
        %6150 = vmatpush1.msra.mxu0 0.0
        %6151 = vmatprep.subr.mxu0 0.0
        %6152 = vmatpush1.msra.mxu0 0.0
        %6153 = vmatprep.subr.mxu0 0.0
        %6154 = vmatpush1.msra.mxu0 0.0
        %6155 = vmatprep.subr.mxu0 0.0
        %6156 = vmatpush1.msra.mxu0 0.0
        %6157 = vmatprep.subr.mxu0 0.0
        %6158 = vmatpush1.msra.mxu0 0.0
        %6159 = vmatprep.subr.mxu0 0.0
        %6160 = vmatpush1.msra.mxu0 0.0
        %6161 = vmatprep.subr.mxu0 0.0
        %6162 = vmatpush1.msra.mxu0 0.0
        %6163 = vmatprep.subr.mxu0 0.0
        %6164 = vmatpush1.msra.mxu0 0.0
        %6165 = vmatprep.subr.mxu0 0.0
        %6166 = vmatpush1.msra.mxu0 0.0
        %6167 = vmatprep.subr.mxu0 0.0
        %6168 = vmatpush1.msra.mxu0 0.0
        %6169 = vmatprep.subr.mxu0 0.0
        %6170 = vmatpush1.msra.mxu0 0.0
        %6171 = vmatprep.subr.mxu0 0.0
        %6172 = vmatpush1.msra.mxu0 0.0
        %6173 = vmatprep.subr.mxu0 0.0
        %6174 = vmatpush1.msra.mxu0 0.0
        %6175 = vmatprep.subr.mxu0 0.0
        %6176 = vmatpush1.msra.mxu0 0.0
        %6177 = vmatprep.subr.mxu0 0.0
        %6178 = vmatpush1.msra.mxu0 0.0
        %6179 = vmatprep.subr.mxu0 0.0
        %6180 = vmatpush1.msra.mxu0 0.0
        %6181 = vmatprep.subr.mxu0 0.0
        %6182 = vmatpush1.msra.mxu0 0.0
        %6183 = vmatprep.subr.mxu0 0.0
        %6184 = vmatpush1.msra.mxu0 0.0
        %6185 = vmatprep.subr.mxu0 0.0
        %6186 = vmatpush1.msra.mxu0 0.0
        %6187 = vmatprep.subr.mxu0 0.0
        %6188 = vmatpush1.msra.mxu0 0.0
        %6189 = vmatprep.subr.mxu0 0.0
        %6190 = vmatpush1.msra.mxu0 0.0
        %6191 = vmatprep.subr.mxu0 0.0
        %6192 = vmatpush1.msra.mxu0 0.0
        %6193 = vmatprep.subr.mxu0 0.0
        %6194 = vmatpush1.msra.mxu0 0.0
        %6195 = vmatprep.subr.mxu0 0.0
        %6196 = vmatpush1.msra.mxu0 0.0
        %6197 = vmatprep.subr.mxu0 0.0
        %6198 = vmatpush1.msra.mxu0 0.0
        %6199 = vmatprep.subr.mxu0 0.0
        %6200 = vmatpush1.msra.mxu0 0.0
        %6201 = vmatprep.subr.mxu0 0.0
        %6202 = vmatpush1.msra.mxu0 0.0
        %6203 = vmatprep.subr.mxu0 0.0
        %6204 = vmatpush1.msra.mxu0 0.0
        %6205 = vmatprep.subr.mxu0 0.0
        %6206 = vmatpush1.msra.mxu0 0.0
        %6207 = vmatprep.mubr.f32.mxu0 0.0
        %6208 = vmatmul.mubr.f32.gmra.mrb[0].mxu0 %v5999
        %v6209 = vpop.f32.mrb[0].mxu0
        %v6210 = vadd.f32 0.0, %v6209
        %v6211 = vpop.f32.mrb[0].mxu0
        %v6212 = vadd.f32 0.0, %v6211
        %6213 = vdwg.mxu0
        %6214 = vmatprep.subr.mxu0 %v3365
        %6215 = vmatpush1.msra.mxu0 %v3364
        %6216 = vmatprep.subr.mxu0 0.0
        %6217 = vmatpush1.msra.mxu0 0.0
        %6218 = vmatprep.subr.mxu0 0.0
        %6219 = vmatpush1.msra.mxu0 0.0
        %6220 = vmatprep.subr.mxu0 0.0
        %6221 = vmatpush1.msra.mxu0 0.0
        %6222 = vmatprep.subr.mxu0 0.0
        %6223 = vmatpush1.msra.mxu0 0.0
        %6224 = vmatprep.subr.mxu0 0.0
        %6225 = vmatpush1.msra.mxu0 0.0
        %6226 = vmatprep.subr.mxu0 0.0
        %6227 = vmatpush1.msra.mxu0 0.0
        %6228 = vmatprep.subr.mxu0 0.0
        %6229 = vmatpush1.msra.mxu0 0.0
        %6230 = vmatprep.subr.mxu0 0.0
        %6231 = vmatpush1.msra.mxu0 0.0
        %6232 = vmatprep.subr.mxu0 0.0
        %6233 = vmatpush1.msra.mxu0 0.0
        %6234 = vmatprep.subr.mxu0 0.0
        %6235 = vmatpush1.msra.mxu0 0.0
        %6236 = vmatprep.subr.mxu0 0.0
        %6237 = vmatpush1.msra.mxu0 0.0
        %6238 = vmatprep.subr.mxu0 0.0
        %6239 = vmatpush1.msra.mxu0 0.0
        %6240 = vmatprep.subr.mxu0 0.0
        %6241 = vmatpush1.msra.mxu0 0.0
        %6242 = vmatprep.subr.mxu0 0.0
        %6243 = vmatpush1.msra.mxu0 0.0
        %6244 = vmatprep.subr.mxu0 0.0
        %6245 = vmatpush1.msra.mxu0 0.0
        %6246 = vmatprep.subr.mxu0 0.0
        %6247 = vmatpush1.msra.mxu0 0.0
        %6248 = vmatprep.subr.mxu0 0.0
        %6249 = vmatpush1.msra.mxu0 0.0
        %6250 = vmatprep.subr.mxu0 0.0
        %6251 = vmatpush1.msra.mxu0 0.0
        %6252 = vmatprep.subr.mxu0 0.0
        %6253 = vmatpush1.msra.mxu0 0.0
        %6254 = vmatprep.subr.mxu0 0.0
        %6255 = vmatpush1.msra.mxu0 0.0
        %6256 = vmatprep.subr.mxu0 0.0
        %6257 = vmatpush1.msra.mxu0 0.0
        %6258 = vmatprep.subr.mxu0 0.0
        %6259 = vmatpush1.msra.mxu0 0.0
        %6260 = vmatprep.subr.mxu0 0.0
        %6261 = vmatpush1.msra.mxu0 0.0
        %6262 = vmatprep.subr.mxu0 0.0
        %6263 = vmatpush1.msra.mxu0 0.0
        %6264 = vmatprep.subr.mxu0 0.0
        %6265 = vmatpush1.msra.mxu0 0.0
        %6266 = vmatprep.subr.mxu0 0.0
        %6267 = vmatpush1.msra.mxu0 0.0
        %6268 = vmatprep.subr.mxu0 0.0
        %6269 = vmatpush1.msra.mxu0 0.0
        %6270 = vmatprep.subr.mxu0 0.0
        %6271 = vmatpush1.msra.mxu0 0.0
        %6272 = vmatprep.subr.mxu0 0.0
        %6273 = vmatpush1.msra.mxu0 0.0
        %6274 = vmatprep.subr.mxu0 0.0
        %6275 = vmatpush1.msra.mxu0 0.0
        %6276 = vmatprep.subr.mxu0 0.0
        %6277 = vmatpush1.msra.mxu0 0.0
        %6278 = vmatprep.mubr.f32.mxu0 0.0
        %6279 = vmatmul.mubr.f32.gmra.mrb[0].mxu0 %v5999
        %v6280 = vpop.f32.mrb[0].mxu0
        %v6281 = vadd.f32 0.0, %v6280
        %v6282 = vpop.f32.mrb[0].mxu0
        %v6283 = vadd.f32 0.0, %v6282
        %6284 = vdwg.mxu0
        %v6285 = vadd.f32 %v5990, %v6068
        %v6286 = vadd.f32 %v5991, %v6070
        %v6287 = vadd.f32 %v5992, %v6139
        %v6288 = vadd.f32 %v5993, %v6141
        %v6289 = vadd.f32 %v5994, %v6210
        %v6290 = vadd.f32 %v5995, %v6212
        %v6291 = vadd.f32 %v5996, %v6281
        %v6292 = vadd.f32 %v5997, %v6283
        %v6293 = vld [vmem:[#allocation2 + $0x38] sm:$0xff]
        %v6294 = vld [vmem:[#allocation2 + $0x40] sm:$0xff]
        %v6295 = vld [vmem:[#allocation2 + $0x48] sm:$0xff]
        %v6296 = vld [vmem:[#allocation2 + $0x50] sm:$0xff]
        %v6297 = vld [vmem:[#allocation2 + $0x58] sm:$0xff]
        %v6298 = vld [vmem:[#allocation2 + $0x60] sm:$0xff]
        %v6299 = vld [vmem:[#allocation2 + $0x68] sm:$0xff]
        %v6300 = vld [vmem:[#allocation2 + $0x70] sm:$0xff]
        %v6301 = vld [vmem:[#allocation2 + $0x78] sm:$0xff]
        %6311 = vrot.lane.b32.xlu0 %v6293, 120
        %v6312 = vpop.permute.xlu0 %6311
        %6313 = vrot.lane.b32.xlu0 %v6294, 120
        %v6314 = vpop.permute.xlu0 %6313
        %6315 = vrot.lane.b32.xlu0 %v6295, 120
        %v6316 = vpop.permute.xlu0 %6315
        %6317 = vrot.lane.b32.xlu0 %v6296, 120
        %v6318 = vpop.permute.xlu0 %6317
        %6319 = vrot.lane.b32.xlu0 %v6297, 120
        %v6320 = vpop.permute.xlu0 %6319
        %6321 = vrot.lane.b32.xlu0 %v6298, 120
        %v6322 = vpop.permute.xlu0 %6321
        %6323 = vrot.lane.b32.xlu0 %v6299, 120
        %v6324 = vpop.permute.xlu0 %6323
        %6325 = vrot.lane.b32.xlu0 %v6300, 120
        %v6326 = vpop.permute.xlu0 %6325
        %6327 = vrot.lane.b32.xlu0 %v6301, 120
        %v6328 = vpop.permute.xlu0 %6327
        %v6329 = vsel %vm4372, %v6312, %v6314
        %v6330 = vsel %vm4372, %v6314, %v6316
        %v6331 = vsel %vm4372, %v6316, %v6318
        %v6332 = vsel %vm4372, %v6318, %v6320
        %v6333 = vsel %vm4372, %v6320, %v6322
        %v6334 = vsel %vm4372, %v6322, %v6324
        %v6335 = vsel %vm4372, %v6324, %v6326
        %v6336 = vsel %vm4372, %v6326, %v6328
        %v6345 = vsel %vm390, %v6329, 0.0
        %v6346 = vsel %vm391, %v6330, 0.0
        %v6347 = vsel %vm392, %v6331, 0.0
        %v6348 = vsel %vm393, %v6332, 0.0
        %v6349 = vsel %vm394, %v6333, 0.0
        %v6350 = vsel %vm395, %v6334, 0.0
        %v6351 = vsel %vm396, %v6335, 0.0
        %v6352 = vsel %vm397, %v6336, 0.0
        %v6354 = vsel %vm807, %v251, 0
        %6356 = vmatprep.subr.mxu0 %v6346
        %6357 = vmatpush1.msra.mxu0 %v6345
        %6358 = vmatprep.subr.mxu0 0.0
        %6359 = vmatpush1.msra.mxu0 0.0
        %6360 = vmatprep.subr.mxu0 0.0
        %6361 = vmatpush1.msra.mxu0 0.0
        %6362 = vmatprep.subr.mxu0 0.0
        %6363 = vmatpush1.msra.mxu0 0.0
        %6364 = vmatprep.subr.mxu0 0.0
        %6365 = vmatpush1.msra.mxu0 0.0
        %6366 = vmatprep.subr.mxu0 0.0
        %6367 = vmatpush1.msra.mxu0 0.0
        %6368 = vmatprep.subr.mxu0 0.0
        %6369 = vmatpush1.msra.mxu0 0.0
        %6370 = vmatprep.subr.mxu0 0.0
        %6371 = vmatpush1.msra.mxu0 0.0
        %6372 = vmatprep.subr.mxu0 0.0
        %6373 = vmatpush1.msra.mxu0 0.0
        %6374 = vmatprep.subr.mxu0 0.0
        %6375 = vmatpush1.msra.mxu0 0.0
        %6376 = vmatprep.subr.mxu0 0.0
        %6377 = vmatpush1.msra.mxu0 0.0
        %6378 = vmatprep.subr.mxu0 0.0
        %6379 = vmatpush1.msra.mxu0 0.0
        %6380 = vmatprep.subr.mxu0 0.0
        %6381 = vmatpush1.msra.mxu0 0.0
        %6382 = vmatprep.subr.mxu0 0.0
        %6383 = vmatpush1.msra.mxu0 0.0
        %6384 = vmatprep.subr.mxu0 0.0
        %6385 = vmatpush1.msra.mxu0 0.0
        %6386 = vmatprep.subr.mxu0 0.0
        %6387 = vmatpush1.msra.mxu0 0.0
        %6388 = vmatprep.subr.mxu0 0.0
        %6389 = vmatpush1.msra.mxu0 0.0
        %6390 = vmatprep.subr.mxu0 0.0
        %6391 = vmatpush1.msra.mxu0 0.0
        %6392 = vmatprep.subr.mxu0 0.0
        %6393 = vmatpush1.msra.mxu0 0.0
        %6394 = vmatprep.subr.mxu0 0.0
        %6395 = vmatpush1.msra.mxu0 0.0
        %6396 = vmatprep.subr.mxu0 0.0
        %6397 = vmatpush1.msra.mxu0 0.0
        %6398 = vmatprep.subr.mxu0 0.0
        %6399 = vmatpush1.msra.mxu0 0.0
        %6400 = vmatprep.subr.mxu0 0.0
        %6401 = vmatpush1.msra.mxu0 0.0
        %6402 = vmatprep.subr.mxu0 0.0
        %6403 = vmatpush1.msra.mxu0 0.0
        %6404 = vmatprep.subr.mxu0 0.0
        %6405 = vmatpush1.msra.mxu0 0.0
        %6406 = vmatprep.subr.mxu0 0.0
        %6407 = vmatpush1.msra.mxu0 0.0
        %6408 = vmatprep.subr.mxu0 0.0
        %6409 = vmatpush1.msra.mxu0 0.0
        %6410 = vmatprep.subr.mxu0 0.0
        %6411 = vmatpush1.msra.mxu0 0.0
        %6412 = vmatprep.subr.mxu0 0.0
        %6413 = vmatpush1.msra.mxu0 0.0
        %6414 = vmatprep.subr.mxu0 0.0
        %6415 = vmatpush1.msra.mxu0 0.0
        %6416 = vmatprep.subr.mxu0 0.0
        %6417 = vmatpush1.msra.mxu0 0.0
        %6418 = vmatprep.subr.mxu0 0.0
        %6419 = vmatpush1.msra.mxu0 0.0
        %6420 = vmatprep.mubr.f32.mxu0 0.0
        %6421 = vmatmul.mubr.f32.gmra.mrb[0].mxu0 %v6354
        %v6422 = vpop.f32.mrb[0].mxu0
        %v6423 = vadd.f32 0.0, %v6422
        %v6424 = vpop.f32.mrb[0].mxu0
        %v6425 = vadd.f32 0.0, %v6424
        %6426 = vdwg.mxu0
        %6427 = vmatprep.subr.mxu0 %v6348
        %6428 = vmatpush1.msra.mxu0 %v6347
        %6429 = vmatprep.subr.mxu0 0.0
        %6430 = vmatpush1.msra.mxu0 0.0
        %6431 = vmatprep.subr.mxu0 0.0
        %6432 = vmatpush1.msra.mxu0 0.0
        %6433 = vmatprep.subr.mxu0 0.0
        %6434 = vmatpush1.msra.mxu0 0.0
        %6435 = vmatprep.subr.mxu0 0.0
        %6436 = vmatpush1.msra.mxu0 0.0
        %6437 = vmatprep.subr.mxu0 0.0
        %6438 = vmatpush1.msra.mxu0 0.0
        %6439 = vmatprep.subr.mxu0 0.0
        %6440 = vmatpush1.msra.mxu0 0.0
        %6441 = vmatprep.subr.mxu0 0.0
        %6442 = vmatpush1.msra.mxu0 0.0
        %6443 = vmatprep.subr.mxu0 0.0
        %6444 = vmatpush1.msra.mxu0 0.0
        %6445 = vmatprep.subr.mxu0 0.0
        %6446 = vmatpush1.msra.mxu0 0.0
        %6447 = vmatprep.subr.mxu0 0.0
        %6448 = vmatpush1.msra.mxu0 0.0
        %6449 = vmatprep.subr.mxu0 0.0
        %6450 = vmatpush1.msra.mxu0 0.0
        %6451 = vmatprep.subr.mxu0 0.0
        %6452 = vmatpush1.msra.mxu0 0.0
        %6453 = vmatprep.subr.mxu0 0.0
        %6454 = vmatpush1.msra.mxu0 0.0
        %6455 = vmatprep.subr.mxu0 0.0
        %6456 = vmatpush1.msra.mxu0 0.0
        %6457 = vmatprep.subr.mxu0 0.0
        %6458 = vmatpush1.msra.mxu0 0.0
        %6459 = vmatprep.subr.mxu0 0.0
        %6460 = vmatpush1.msra.mxu0 0.0
        %6461 = vmatprep.subr.mxu0 0.0
        %6462 = vmatpush1.msra.mxu0 0.0
        %6463 = vmatprep.subr.mxu0 0.0
        %6464 = vmatpush1.msra.mxu0 0.0
        %6465 = vmatprep.subr.mxu0 0.0
        %6466 = vmatpush1.msra.mxu0 0.0
        %6467 = vmatprep.subr.mxu0 0.0
        %6468 = vmatpush1.msra.mxu0 0.0
        %6469 = vmatprep.subr.mxu0 0.0
        %6470 = vmatpush1.msra.mxu0 0.0
        %6471 = vmatprep.subr.mxu0 0.0
        %6472 = vmatpush1.msra.mxu0 0.0
        %6473 = vmatprep.subr.mxu0 0.0
        %6474 = vmatpush1.msra.mxu0 0.0
        %6475 = vmatprep.subr.mxu0 0.0
        %6476 = vmatpush1.msra.mxu0 0.0
        %6477 = vmatprep.subr.mxu0 0.0
        %6478 = vmatpush1.msra.mxu0 0.0
        %6479 = vmatprep.subr.mxu0 0.0
        %6480 = vmatpush1.msra.mxu0 0.0
        %6481 = vmatprep.subr.mxu0 0.0
        %6482 = vmatpush1.msra.mxu0 0.0
        %6483 = vmatprep.subr.mxu0 0.0
        %6484 = vmatpush1.msra.mxu0 0.0
        %6485 = vmatprep.subr.mxu0 0.0
        %6486 = vmatpush1.msra.mxu0 0.0
        %6487 = vmatprep.subr.mxu0 0.0
        %6488 = vmatpush1.msra.mxu0 0.0
        %6489 = vmatprep.subr.mxu0 0.0
        %6490 = vmatpush1.msra.mxu0 0.0
        %6491 = vmatprep.mubr.f32.mxu0 0.0
        %6492 = vmatmul.mubr.f32.gmra.mrb[0].mxu0 %v6354
        %v6493 = vpop.f32.mrb[0].mxu0
        %v6494 = vadd.f32 0.0, %v6493
        %v6495 = vpop.f32.mrb[0].mxu0
        %v6496 = vadd.f32 0.0, %v6495
        %6497 = vdwg.mxu0
        %6498 = vmatprep.subr.mxu0 %v6350
        %6499 = vmatpush1.msra.mxu0 %v6349
        %6500 = vmatprep.subr.mxu0 0.0
        %6501 = vmatpush1.msra.mxu0 0.0
        %6502 = vmatprep.subr.mxu0 0.0
        %6503 = vmatpush1.msra.mxu0 0.0
        %6504 = vmatprep.subr.mxu0 0.0
        %6505 = vmatpush1.msra.mxu0 0.0
        %6506 = vmatprep.subr.mxu0 0.0
        %6507 = vmatpush1.msra.mxu0 0.0
        %6508 = vmatprep.subr.mxu0 0.0
        %6509 = vmatpush1.msra.mxu0 0.0
        %6510 = vmatprep.subr.mxu0 0.0
        %6511 = vmatpush1.msra.mxu0 0.0
        %6512 = vmatprep.subr.mxu0 0.0
        %6513 = vmatpush1.msra.mxu0 0.0
        %6514 = vmatprep.subr.mxu0 0.0
        %6515 = vmatpush1.msra.mxu0 0.0
        %6516 = vmatprep.subr.mxu0 0.0
        %6517 = vmatpush1.msra.mxu0 0.0
        %6518 = vmatprep.subr.mxu0 0.0
        %6519 = vmatpush1.msra.mxu0 0.0
        %6520 = vmatprep.subr.mxu0 0.0
        %6521 = vmatpush1.msra.mxu0 0.0
        %6522 = vmatprep.subr.mxu0 0.0
        %6523 = vmatpush1.msra.mxu0 0.0
        %6524 = vmatprep.subr.mxu0 0.0
        %6525 = vmatpush1.msra.mxu0 0.0
        %6526 = vmatprep.subr.mxu0 0.0
        %6527 = vmatpush1.msra.mxu0 0.0
        %6528 = vmatprep.subr.mxu0 0.0
        %6529 = vmatpush1.msra.mxu0 0.0
        %6530 = vmatprep.subr.mxu0 0.0
        %6531 = vmatpush1.msra.mxu0 0.0
        %6532 = vmatprep.subr.mxu0 0.0
        %6533 = vmatpush1.msra.mxu0 0.0
        %6534 = vmatprep.subr.mxu0 0.0
        %6535 = vmatpush1.msra.mxu0 0.0
        %6536 = vmatprep.subr.mxu0 0.0
        %6537 = vmatpush1.msra.mxu0 0.0
        %6538 = vmatprep.subr.mxu0 0.0
        %6539 = vmatpush1.msra.mxu0 0.0
        %6540 = vmatprep.subr.mxu0 0.0
        %6541 = vmatpush1.msra.mxu0 0.0
        %6542 = vmatprep.subr.mxu0 0.0
        %6543 = vmatpush1.msra.mxu0 0.0
        %6544 = vmatprep.subr.mxu0 0.0
        %6545 = vmatpush1.msra.mxu0 0.0
        %6546 = vmatprep.subr.mxu0 0.0
        %6547 = vmatpush1.msra.mxu0 0.0
        %6548 = vmatprep.subr.mxu0 0.0
        %6549 = vmatpush1.msra.mxu0 0.0
        %6550 = vmatprep.subr.mxu0 0.0
        %6551 = vmatpush1.msra.mxu0 0.0
        %6552 = vmatprep.subr.mxu0 0.0
        %6553 = vmatpush1.msra.mxu0 0.0
        %6554 = vmatprep.subr.mxu0 0.0
        %6555 = vmatpush1.msra.mxu0 0.0
        %6556 = vmatprep.subr.mxu0 0.0
        %6557 = vmatpush1.msra.mxu0 0.0
        %6558 = vmatprep.subr.mxu0 0.0
        %6559 = vmatpush1.msra.mxu0 0.0
        %6560 = vmatprep.subr.mxu0 0.0
        %6561 = vmatpush1.msra.mxu0 0.0
        %6562 = vmatprep.mubr.f32.mxu0 0.0
        %6563 = vmatmul.mubr.f32.gmra.mrb[0].mxu0 %v6354
        %v6564 = vpop.f32.mrb[0].mxu0
        %v6565 = vadd.f32 0.0, %v6564
        %v6566 = vpop.f32.mrb[0].mxu0
        %v6567 = vadd.f32 0.0, %v6566
        %6568 = vdwg.mxu0
        %6569 = vmatprep.subr.mxu0 %v6352
        %6570 = vmatpush1.msra.mxu0 %v6351
        %6571 = vmatprep.subr.mxu0 0.0
        %6572 = vmatpush1.msra.mxu0 0.0
        %6573 = vmatprep.subr.mxu0 0.0
        %6574 = vmatpush1.msra.mxu0 0.0
        %6575 = vmatprep.subr.mxu0 0.0
        %6576 = vmatpush1.msra.mxu0 0.0
        %6577 = vmatprep.subr.mxu0 0.0
        %6578 = vmatpush1.msra.mxu0 0.0
        %6579 = vmatprep.subr.mxu0 0.0
        %6580 = vmatpush1.msra.mxu0 0.0
        %6581 = vmatprep.subr.mxu0 0.0
        %6582 = vmatpush1.msra.mxu0 0.0
        %6583 = vmatprep.subr.mxu0 0.0
        %6584 = vmatpush1.msra.mxu0 0.0
        %6585 = vmatprep.subr.mxu0 0.0
        %6586 = vmatpush1.msra.mxu0 0.0
        %6587 = vmatprep.subr.mxu0 0.0
        %6588 = vmatpush1.msra.mxu0 0.0
        %6589 = vmatprep.subr.mxu0 0.0
        %6590 = vmatpush1.msra.mxu0 0.0
        %6591 = vmatprep.subr.mxu0 0.0
        %6592 = vmatpush1.msra.mxu0 0.0
        %6593 = vmatprep.subr.mxu0 0.0
        %6594 = vmatpush1.msra.mxu0 0.0
        %6595 = vmatprep.subr.mxu0 0.0
        %6596 = vmatpush1.msra.mxu0 0.0
        %6597 = vmatprep.subr.mxu0 0.0
        %6598 = vmatpush1.msra.mxu0 0.0
        %6599 = vmatprep.subr.mxu0 0.0
        %6600 = vmatpush1.msra.mxu0 0.0
        %6601 = vmatprep.subr.mxu0 0.0
        %6602 = vmatpush1.msra.mxu0 0.0
        %6603 = vmatprep.subr.mxu0 0.0
        %6604 = vmatpush1.msra.mxu0 0.0
        %6605 = vmatprep.subr.mxu0 0.0
        %6606 = vmatpush1.msra.mxu0 0.0
        %6607 = vmatprep.subr.mxu0 0.0
        %6608 = vmatpush1.msra.mxu0 0.0
        %6609 = vmatprep.subr.mxu0 0.0
        %6610 = vmatpush1.msra.mxu0 0.0
        %6611 = vmatprep.subr.mxu0 0.0
        %6612 = vmatpush1.msra.mxu0 0.0
        %6613 = vmatprep.subr.mxu0 0.0
        %6614 = vmatpush1.msra.mxu0 0.0
        %6615 = vmatprep.subr.mxu0 0.0
        %6616 = vmatpush1.msra.mxu0 0.0
        %6617 = vmatprep.subr.mxu0 0.0
        %6618 = vmatpush1.msra.mxu0 0.0
        %6619 = vmatprep.subr.mxu0 0.0
        %6620 = vmatpush1.msra.mxu0 0.0
        %6621 = vmatprep.subr.mxu0 0.0
        %6622 = vmatpush1.msra.mxu0 0.0
        %6623 = vmatprep.subr.mxu0 0.0
        %6624 = vmatpush1.msra.mxu0 0.0
        %6625 = vmatprep.subr.mxu0 0.0
        %6626 = vmatpush1.msra.mxu0 0.0
        %6627 = vmatprep.subr.mxu0 0.0
        %6628 = vmatpush1.msra.mxu0 0.0
        %6629 = vmatprep.subr.mxu0 0.0
        %6630 = vmatpush1.msra.mxu0 0.0
        %6631 = vmatprep.subr.mxu0 0.0
        %6632 = vmatpush1.msra.mxu0 0.0
        %6633 = vmatprep.mubr.f32.mxu0 0.0
        %6634 = vmatmul.mubr.f32.gmra.mrb[0].mxu0 %v6354
        %v6635 = vpop.f32.mrb[0].mxu0
        %v6636 = vadd.f32 0.0, %v6635
        %v6637 = vpop.f32.mrb[0].mxu0
        %v6638 = vadd.f32 0.0, %v6637
        %6639 = vdwg.mxu0
        %v6640 = vadd.f32 %v6285, %v6423
        %v6641 = vadd.f32 %v6286, %v6425
        %v6642 = vadd.f32 %v6287, %v6494
        %v6643 = vadd.f32 %v6288, %v6496
        %v6644 = vadd.f32 %v6289, %v6565
        %v6645 = vadd.f32 %v6290, %v6567
        %v6646 = vadd.f32 %v6291, %v6636
        %v6647 = vadd.f32 %v6292, %v6638
        %v6648 = vmax.f32 %v6640, 0.0
        %v6649 = vmax.f32 %v6641, 0.0
        %v6650 = vmax.f32 %v6642, 0.0
        %v6651 = vmax.f32 %v6643, 0.0
        %v6652 = vmax.f32 %v6644, 0.0
        %v6653 = vmax.f32 %v6645, 0.0
        %v6654 = vmax.f32 %v6646, 0.0
        %v6655 = vmax.f32 %v6647, 0.0
        %v6656 = vadd.f32 %v3712, %v6648
        %v6657 = vadd.f32 %v3713, %v6649
        %v6658 = vadd.f32 %v3714, %v6650
        %v6659 = vadd.f32 %v3715, %v6651
        %v6660 = vadd.f32 %v3716, %v6652
        %v6661 = vadd.f32 %v3717, %v6653
        %v6662 = vadd.f32 %v3718, %v6654
        %v6663 = vadd.f32 %v3719, %v6655
        %v6664 = vld [vmem:[#allocation2] sm:$0xff]
        %v6665 = vld [vmem:[#allocation2 + $0x8] sm:$0xff]
        %v6666 = vld [vmem:[#allocation2 + $0x10] sm:$0xff]
        %v6667 = vld [vmem:[#allocation2 + $0x18] sm:$0xff]
        %v6668 = vld [vmem:[#allocation2 + $0x20] sm:$0xff]
        %v6669 = vld [vmem:[#allocation2 + $0x28] sm:$0xff]
        %v6670 = vld [vmem:[#allocation2 + $0x30] sm:$0xff]
        %v6671 = vld [vmem:[#allocation2 + $0x38] sm:$0xff]
        %v6672 = vld [vmem:[#allocation2 + $0x40] sm:$0xff]
        %6682 = vrot.lane.b32.xlu0 %v6664, 16
        %v6683 = vpop.permute.xlu0 %6682
        %6684 = vrot.lane.b32.xlu0 %v6665, 16
        %v6685 = vpop.permute.xlu0 %6684
        %6686 = vrot.lane.b32.xlu0 %v6666, 16
        %v6687 = vpop.permute.xlu0 %6686
        %6688 = vrot.lane.b32.xlu0 %v6667, 16
        %v6689 = vpop.permute.xlu0 %6688
        %6690 = vrot.lane.b32.xlu0 %v6668, 16
        %v6691 = vpop.permute.xlu0 %6690
        %6692 = vrot.lane.b32.xlu0 %v6669, 16
        %v6693 = vpop.permute.xlu0 %6692
        %6694 = vrot.lane.b32.xlu0 %v6670, 16
        %v6695 = vpop.permute.xlu0 %6694
        %6696 = vrot.lane.b32.xlu0 %v6671, 16
        %v6697 = vpop.permute.xlu0 %6696
        %6698 = vrot.lane.b32.xlu0 %v6672, 16
        %v6699 = vpop.permute.xlu0 %6698
        %vm6700 = vcmask 130048
        %v6701 = vsel %vm6700, %v6683, %v6685
        %v6702 = vsel %vm6700, %v6685, %v6687
        %v6703 = vsel %vm6700, %v6687, %v6689
        %v6704 = vsel %vm6700, %v6689, %v6691
        %v6705 = vsel %vm6700, %v6691, %v6693
        %v6706 = vsel %vm6700, %v6693, %v6695
        %v6707 = vsel %vm6700, %v6695, %v6697
        %v6708 = vsel %vm6700, %v6697, %v6699
        %v6717 = vsel %vm398, %v6701, 0.0
        %v6718 = vsel %vm399, %v6702, 0.0
        %v6719 = vsel %vm400, %v6703, 0.0
        %v6720 = vsel %vm401, %v6704, 0.0
        %v6721 = vsel %vm402, %v6705, 0.0
        %v6722 = vsel %vm403, %v6706, 0.0
        %v6723 = vsel %vm404, %v6707, 0.0
        %v6724 = vsel %vm405, %v6708, 0.0
        %v6726 = vsel %vm807, %v253, 0
        %6728 = vmatprep.subr.mxu0 %v6666
        %6729 = vmatpush1.msra.mxu0 %v6665
        %6730 = vmatprep.subr.mxu0 0.0
        %6731 = vmatpush1.msra.mxu0 0.0
        %6732 = vmatprep.subr.mxu0 0.0
        %6733 = vmatpush1.msra.mxu0 0.0
        %6734 = vmatprep.subr.mxu0 0.0
        %6735 = vmatpush1.msra.mxu0 0.0
        %6736 = vmatprep.subr.mxu0 0.0
        %6737 = vmatpush1.msra.mxu0 0.0
        %6738 = vmatprep.subr.mxu0 0.0
        %6739 = vmatpush1.msra.mxu0 0.0
        %6740 = vmatprep.subr.mxu0 0.0
        %6741 = vmatpush1.msra.mxu0 0.0
        %6742 = vmatprep.subr.mxu0 0.0
        %6743 = vmatpush1.msra.mxu0 0.0
        %6744 = vmatprep.subr.mxu0 0.0
        %6745 = vmatpush1.msra.mxu0 0.0
        %6746 = vmatprep.subr.mxu0 0.0
        %6747 = vmatpush1.msra.mxu0 0.0
        %6748 = vmatprep.subr.mxu0 0.0
        %6749 = vmatpush1.msra.mxu0 0.0
        %6750 = vmatprep.subr.mxu0 0.0
        %6751 = vmatpush1.msra.mxu0 0.0
        %6752 = vmatprep.subr.mxu0 0.0
        %6753 = vmatpush1.msra.mxu0 0.0
        %6754 = vmatprep.subr.mxu0 0.0
        %6755 = vmatpush1.msra.mxu0 0.0
        %6756 = vmatprep.subr.mxu0 0.0
        %6757 = vmatpush1.msra.mxu0 0.0
        %6758 = vmatprep.subr.mxu0 0.0
        %6759 = vmatpush1.msra.mxu0 0.0
        %6760 = vmatprep.subr.mxu0 0.0
        %6761 = vmatpush1.msra.mxu0 0.0
        %6762 = vmatprep.subr.mxu0 0.0
        %6763 = vmatpush1.msra.mxu0 0.0
        %6764 = vmatprep.subr.mxu0 0.0
        %6765 = vmatpush1.msra.mxu0 0.0
        %6766 = vmatprep.subr.mxu0 0.0
        %6767 = vmatpush1.msra.mxu0 0.0
        %6768 = vmatprep.subr.mxu0 0.0
        %6769 = vmatpush1.msra.mxu0 0.0
        %6770 = vmatprep.subr.mxu0 0.0
        %6771 = vmatpush1.msra.mxu0 0.0
        %6772 = vmatprep.subr.mxu0 0.0
        %6773 = vmatpush1.msra.mxu0 0.0
        %6774 = vmatprep.subr.mxu0 0.0
        %6775 = vmatpush1.msra.mxu0 0.0
        %6776 = vmatprep.subr.mxu0 0.0
        %6777 = vmatpush1.msra.mxu0 0.0
        %6778 = vmatprep.subr.mxu0 0.0
        %6779 = vmatpush1.msra.mxu0 0.0
        %6780 = vmatprep.subr.mxu0 0.0
        %6781 = vmatpush1.msra.mxu0 0.0
        %6782 = vmatprep.subr.mxu0 0.0
        %6783 = vmatpush1.msra.mxu0 0.0
        %6784 = vmatprep.subr.mxu0 0.0
        %6785 = vmatpush1.msra.mxu0 0.0
        %6786 = vmatprep.subr.mxu0 0.0
        %6787 = vmatpush1.msra.mxu0 0.0
        %6788 = vmatprep.subr.mxu0 0.0
        %6789 = vmatpush1.msra.mxu0 0.0
        %6790 = vmatprep.subr.mxu0 0.0
        %6791 = vmatpush1.msra.mxu0 0.0
        %6792 = vmatprep.mubr.f32.mxu0 0.0
        %6793 = vmatmul.mubr.f32.gmra.mrb[0].mxu0 %v6726
        %v6794 = vpop.f32.mrb[0].mxu0
        %v6795 = vadd.f32 0.0, %v6794
        %v6796 = vpop.f32.mrb[0].mxu0
        %v6797 = vadd.f32 0.0, %v6796
        %6798 = vdwg.mxu0
        %6799 = vmatprep.subr.mxu0 %v6668
        %6800 = vmatpush1.msra.mxu0 %v6667
        %6801 = vmatprep.subr.mxu0 0.0
        %6802 = vmatpush1.msra.mxu0 0.0
        %6803 = vmatprep.subr.mxu0 0.0
        %6804 = vmatpush1.msra.mxu0 0.0
        %6805 = vmatprep.subr.mxu0 0.0
        %6806 = vmatpush1.msra.mxu0 0.0
        %6807 = vmatprep.subr.mxu0 0.0
        %6808 = vmatpush1.msra.mxu0 0.0
        %6809 = vmatprep.subr.mxu0 0.0
        %6810 = vmatpush1.msra.mxu0 0.0
        %6811 = vmatprep.subr.mxu0 0.0
        %6812 = vmatpush1.msra.mxu0 0.0
        %6813 = vmatprep.subr.mxu0 0.0
        %6814 = vmatpush1.msra.mxu0 0.0
        %6815 = vmatprep.subr.mxu0 0.0
        %6816 = vmatpush1.msra.mxu0 0.0
        %6817 = vmatprep.subr.mxu0 0.0
        %6818 = vmatpush1.msra.mxu0 0.0
        %6819 = vmatprep.subr.mxu0 0.0
        %6820 = vmatpush1.msra.mxu0 0.0
        %6821 = vmatprep.subr.mxu0 0.0
        %6822 = vmatpush1.msra.mxu0 0.0
        %6823 = vmatprep.subr.mxu0 0.0
        %6824 = vmatpush1.msra.mxu0 0.0
        %6825 = vmatprep.subr.mxu0 0.0
        %6826 = vmatpush1.msra.mxu0 0.0
        %6827 = vmatprep.subr.mxu0 0.0
        %6828 = vmatpush1.msra.mxu0 0.0
        %6829 = vmatprep.subr.mxu0 0.0
        %6830 = vmatpush1.msra.mxu0 0.0
        %6831 = vmatprep.subr.mxu0 0.0
        %6832 = vmatpush1.msra.mxu0 0.0
        %6833 = vmatprep.subr.mxu0 0.0
        %6834 = vmatpush1.msra.mxu0 0.0
        %6835 = vmatprep.subr.mxu0 0.0
        %6836 = vmatpush1.msra.mxu0 0.0
        %6837 = vmatprep.subr.mxu0 0.0
        %6838 = vmatpush1.msra.mxu0 0.0
        %6839 = vmatprep.subr.mxu0 0.0
        %6840 = vmatpush1.msra.mxu0 0.0
        %6841 = vmatprep.subr.mxu0 0.0
        %6842 = vmatpush1.msra.mxu0 0.0
        %6843 = vmatprep.subr.mxu0 0.0
        %6844 = vmatpush1.msra.mxu0 0.0
        %6845 = vmatprep.subr.mxu0 0.0
        %6846 = vmatpush1.msra.mxu0 0.0
        %6847 = vmatprep.subr.mxu0 0.0
        %6848 = vmatpush1.msra.mxu0 0.0
        %6849 = vmatprep.subr.mxu0 0.0
        %6850 = vmatpush1.msra.mxu0 0.0
        %6851 = vmatprep.subr.mxu0 0.0
        %6852 = vmatpush1.msra.mxu0 0.0
        %6853 = vmatprep.subr.mxu0 0.0
        %6854 = vmatpush1.msra.mxu0 0.0
        %6855 = vmatprep.subr.mxu0 0.0
        %6856 = vmatpush1.msra.mxu0 0.0
        %6857 = vmatprep.subr.mxu0 0.0
        %6858 = vmatpush1.msra.mxu0 0.0
        %6859 = vmatprep.subr.mxu0 0.0
        %6860 = vmatpush1.msra.mxu0 0.0
        %6861 = vmatprep.subr.mxu0 0.0
        %6862 = vmatpush1.msra.mxu0 0.0
        %6863 = vmatprep.mubr.f32.mxu0 0.0
        %6864 = vmatmul.mubr.f32.gmra.mrb[0].mxu0 %v6726
        %v6865 = vpop.f32.mrb[0].mxu0
        %v6866 = vadd.f32 0.0, %v6865
        %v6867 = vpop.f32.mrb[0].mxu0
        %v6868 = vadd.f32 0.0, %v6867
        %6869 = vdwg.mxu0
        %6870 = vmatprep.subr.mxu0 %v6670
        %6871 = vmatpush1.msra.mxu0 %v6669
        %6872 = vmatprep.subr.mxu0 0.0
        %6873 = vmatpush1.msra.mxu0 0.0
        %6874 = vmatprep.subr.mxu0 0.0
        %6875 = vmatpush1.msra.mxu0 0.0
        %6876 = vmatprep.subr.mxu0 0.0
        %6877 = vmatpush1.msra.mxu0 0.0
        %6878 = vmatprep.subr.mxu0 0.0
        %6879 = vmatpush1.msra.mxu0 0.0
        %6880 = vmatprep.subr.mxu0 0.0
        %6881 = vmatpush1.msra.mxu0 0.0
        %6882 = vmatprep.subr.mxu0 0.0
        %6883 = vmatpush1.msra.mxu0 0.0
        %6884 = vmatprep.subr.mxu0 0.0
        %6885 = vmatpush1.msra.mxu0 0.0
        %6886 = vmatprep.subr.mxu0 0.0
        %6887 = vmatpush1.msra.mxu0 0.0
        %6888 = vmatprep.subr.mxu0 0.0
        %6889 = vmatpush1.msra.mxu0 0.0
        %6890 = vmatprep.subr.mxu0 0.0
        %6891 = vmatpush1.msra.mxu0 0.0
        %6892 = vmatprep.subr.mxu0 0.0
        %6893 = vmatpush1.msra.mxu0 0.0
        %6894 = vmatprep.subr.mxu0 0.0
        %6895 = vmatpush1.msra.mxu0 0.0
        %6896 = vmatprep.subr.mxu0 0.0
        %6897 = vmatpush1.msra.mxu0 0.0
        %6898 = vmatprep.subr.mxu0 0.0
        %6899 = vmatpush1.msra.mxu0 0.0
        %6900 = vmatprep.subr.mxu0 0.0
        %6901 = vmatpush1.msra.mxu0 0.0
        %6902 = vmatprep.subr.mxu0 0.0
        %6903 = vmatpush1.msra.mxu0 0.0
        %6904 = vmatprep.subr.mxu0 0.0
        %6905 = vmatpush1.msra.mxu0 0.0
        %6906 = vmatprep.subr.mxu0 0.0
        %6907 = vmatpush1.msra.mxu0 0.0
        %6908 = vmatprep.subr.mxu0 0.0
        %6909 = vmatpush1.msra.mxu0 0.0
        %6910 = vmatprep.subr.mxu0 0.0
        %6911 = vmatpush1.msra.mxu0 0.0
        %6912 = vmatprep.subr.mxu0 0.0
        %6913 = vmatpush1.msra.mxu0 0.0
        %6914 = vmatprep.subr.mxu0 0.0
        %6915 = vmatpush1.msra.mxu0 0.0
        %6916 = vmatprep.subr.mxu0 0.0
        %6917 = vmatpush1.msra.mxu0 0.0
        %6918 = vmatprep.subr.mxu0 0.0
        %6919 = vmatpush1.msra.mxu0 0.0
        %6920 = vmatprep.subr.mxu0 0.0
        %6921 = vmatpush1.msra.mxu0 0.0
        %6922 = vmatprep.subr.mxu0 0.0
        %6923 = vmatpush1.msra.mxu0 0.0
        %6924 = vmatprep.subr.mxu0 0.0
        %6925 = vmatpush1.msra.mxu0 0.0
        %6926 = vmatprep.subr.mxu0 0.0
        %6927 = vmatpush1.msra.mxu0 0.0
        %6928 = vmatprep.subr.mxu0 0.0
        %6929 = vmatpush1.msra.mxu0 0.0
        %6930 = vmatprep.subr.mxu0 0.0
        %6931 = vmatpush1.msra.mxu0 0.0
        %6932 = vmatprep.subr.mxu0 0.0
        %6933 = vmatpush1.msra.mxu0 0.0
        %6934 = vmatprep.mubr.f32.mxu0 0.0
        %6935 = vmatmul.mubr.f32.gmra.mrb[0].mxu0 %v6726
        %v6936 = vpop.f32.mrb[0].mxu0
        %v6937 = vadd.f32 0.0, %v6936
        %v6938 = vpop.f32.mrb[0].mxu0
        %v6939 = vadd.f32 0.0, %v6938
        %6940 = vdwg.mxu0
        %6941 = vmatprep.subr.mxu0 %v6672
        %6942 = vmatpush1.msra.mxu0 %v6671
        %6943 = vmatprep.subr.mxu0 0.0
        %6944 = vmatpush1.msra.mxu0 0.0
        %6945 = vmatprep.subr.mxu0 0.0
        %6946 = vmatpush1.msra.mxu0 0.0
        %6947 = vmatprep.subr.mxu0 0.0
        %6948 = vmatpush1.msra.mxu0 0.0
        %6949 = vmatprep.subr.mxu0 0.0
        %6950 = vmatpush1.msra.mxu0 0.0
        %6951 = vmatprep.subr.mxu0 0.0
        %6952 = vmatpush1.msra.mxu0 0.0
        %6953 = vmatprep.subr.mxu0 0.0
        %6954 = vmatpush1.msra.mxu0 0.0
        %6955 = vmatprep.subr.mxu0 0.0
        %6956 = vmatpush1.msra.mxu0 0.0
        %6957 = vmatprep.subr.mxu0 0.0
        %6958 = vmatpush1.msra.mxu0 0.0
        %6959 = vmatprep.subr.mxu0 0.0
        %6960 = vmatpush1.msra.mxu0 0.0
        %6961 = vmatprep.subr.mxu0 0.0
        %6962 = vmatpush1.msra.mxu0 0.0
        %6963 = vmatprep.subr.mxu0 0.0
        %6964 = vmatpush1.msra.mxu0 0.0
        %6965 = vmatprep.subr.mxu0 0.0
        %6966 = vmatpush1.msra.mxu0 0.0
        %6967 = vmatprep.subr.mxu0 0.0
        %6968 = vmatpush1.msra.mxu0 0.0
        %6969 = vmatprep.subr.mxu0 0.0
        %6970 = vmatpush1.msra.mxu0 0.0
        %6971 = vmatprep.subr.mxu0 0.0
        %6972 = vmatpush1.msra.mxu0 0.0
        %6973 = vmatprep.subr.mxu0 0.0
        %6974 = vmatpush1.msra.mxu0 0.0
        %6975 = vmatprep.subr.mxu0 0.0
        %6976 = vmatpush1.msra.mxu0 0.0
        %6977 = vmatprep.subr.mxu0 0.0
        %6978 = vmatpush1.msra.mxu0 0.0
        %6979 = vmatprep.subr.mxu0 0.0
        %6980 = vmatpush1.msra.mxu0 0.0
        %6981 = vmatprep.subr.mxu0 0.0
        %6982 = vmatpush1.msra.mxu0 0.0
        %6983 = vmatprep.subr.mxu0 0.0
        %6984 = vmatpush1.msra.mxu0 0.0
        %6985 = vmatprep.subr.mxu0 0.0
        %6986 = vmatpush1.msra.mxu0 0.0
        %6987 = vmatprep.subr.mxu0 0.0
        %6988 = vmatpush1.msra.mxu0 0.0
        %6989 = vmatprep.subr.mxu0 0.0
        %6990 = vmatpush1.msra.mxu0 0.0
        %6991 = vmatprep.subr.mxu0 0.0
        %6992 = vmatpush1.msra.mxu0 0.0
        %6993 = vmatprep.subr.mxu0 0.0
        %6994 = vmatpush1.msra.mxu0 0.0
        %6995 = vmatprep.subr.mxu0 0.0
        %6996 = vmatpush1.msra.mxu0 0.0
        %6997 = vmatprep.subr.mxu0 0.0
        %6998 = vmatpush1.msra.mxu0 0.0
        %6999 = vmatprep.subr.mxu0 0.0
        %7000 = vmatpush1.msra.mxu0 0.0
        %7001 = vmatprep.subr.mxu0 0.0
        %7002 = vmatpush1.msra.mxu0 0.0
        %7003 = vmatprep.subr.mxu0 0.0
        %7004 = vmatpush1.msra.mxu0 0.0
        %7005 = vmatprep.mubr.f32.mxu0 0.0
        %7006 = vmatmul.mubr.f32.gmra.mrb[0].mxu0 %v6726
        %v7007 = vpop.f32.mrb[0].mxu0
        %v7008 = vadd.f32 0.0, %v7007
        %v7009 = vpop.f32.mrb[0].mxu0
        %v7010 = vadd.f32 0.0, %v7009
        %7011 = vdwg.mxu0
        %v7013 = vsel %vm807, %v252, 0
        %7015 = vmatprep.subr.mxu0 %v6718
        %7016 = vmatpush1.msra.mxu0 %v6717
        %7017 = vmatprep.subr.mxu0 0.0
        %7018 = vmatpush1.msra.mxu0 0.0
        %7019 = vmatprep.subr.mxu0 0.0
        %7020 = vmatpush1.msra.mxu0 0.0
        %7021 = vmatprep.subr.mxu0 0.0
        %7022 = vmatpush1.msra.mxu0 0.0
        %7023 = vmatprep.subr.mxu0 0.0
        %7024 = vmatpush1.msra.mxu0 0.0
        %7025 = vmatprep.subr.mxu0 0.0
        %7026 = vmatpush1.msra.mxu0 0.0
        %7027 = vmatprep.subr.mxu0 0.0
        %7028 = vmatpush1.msra.mxu0 0.0
        %7029 = vmatprep.subr.mxu0 0.0
        %7030 = vmatpush1.msra.mxu0 0.0
        %7031 = vmatprep.subr.mxu0 0.0
        %7032 = vmatpush1.msra.mxu0 0.0
        %7033 = vmatprep.subr.mxu0 0.0
        %7034 = vmatpush1.msra.mxu0 0.0
        %7035 = vmatprep.subr.mxu0 0.0
        %7036 = vmatpush1.msra.mxu0 0.0
        %7037 = vmatprep.subr.mxu0 0.0
        %7038 = vmatpush1.msra.mxu0 0.0
        %7039 = vmatprep.subr.mxu0 0.0
        %7040 = vmatpush1.msra.mxu0 0.0
        %7041 = vmatprep.subr.mxu0 0.0
        %7042 = vmatpush1.msra.mxu0 0.0
        %7043 = vmatprep.subr.mxu0 0.0
        %7044 = vmatpush1.msra.mxu0 0.0
        %7045 = vmatprep.subr.mxu0 0.0
        %7046 = vmatpush1.msra.mxu0 0.0
        %7047 = vmatprep.subr.mxu0 0.0
        %7048 = vmatpush1.msra.mxu0 0.0
        %7049 = vmatprep.subr.mxu0 0.0
        %7050 = vmatpush1.msra.mxu0 0.0
        %7051 = vmatprep.subr.mxu0 0.0
        %7052 = vmatpush1.msra.mxu0 0.0
        %7053 = vmatprep.subr.mxu0 0.0
        %7054 = vmatpush1.msra.mxu0 0.0
        %7055 = vmatprep.subr.mxu0 0.0
        %7056 = vmatpush1.msra.mxu0 0.0
        %7057 = vmatprep.subr.mxu0 0.0
        %7058 = vmatpush1.msra.mxu0 0.0
        %7059 = vmatprep.subr.mxu0 0.0
        %7060 = vmatpush1.msra.mxu0 0.0
        %7061 = vmatprep.subr.mxu0 0.0
        %7062 = vmatpush1.msra.mxu0 0.0
        %7063 = vmatprep.subr.mxu0 0.0
        %7064 = vmatpush1.msra.mxu0 0.0
        %7065 = vmatprep.subr.mxu0 0.0
        %7066 = vmatpush1.msra.mxu0 0.0
        %7067 = vmatprep.subr.mxu0 0.0
        %7068 = vmatpush1.msra.mxu0 0.0
        %7069 = vmatprep.subr.mxu0 0.0
        %7070 = vmatpush1.msra.mxu0 0.0
        %7071 = vmatprep.subr.mxu0 0.0
        %7072 = vmatpush1.msra.mxu0 0.0
        %7073 = vmatprep.subr.mxu0 0.0
        %7074 = vmatpush1.msra.mxu0 0.0
        %7075 = vmatprep.subr.mxu0 0.0
        %7076 = vmatpush1.msra.mxu0 0.0
        %7077 = vmatprep.subr.mxu0 0.0
        %7078 = vmatpush1.msra.mxu0 0.0
        %7079 = vmatprep.mubr.f32.mxu0 0.0
        %7080 = vmatmul.mubr.f32.gmra.mrb[0].mxu0 %v7013
        %v7081 = vpop.f32.mrb[0].mxu0
        %v7082 = vadd.f32 %v6795, %v7081
        %v7083 = vpop.f32.mrb[0].mxu0
        %v7084 = vadd.f32 %v6797, %v7083
        %7085 = vdwg.mxu0
        %7086 = vmatprep.subr.mxu0 %v6720
        %7087 = vmatpush1.msra.mxu0 %v6719
        %7088 = vmatprep.subr.mxu0 0.0
        %7089 = vmatpush1.msra.mxu0 0.0
        %7090 = vmatprep.subr.mxu0 0.0
        %7091 = vmatpush1.msra.mxu0 0.0
        %7092 = vmatprep.subr.mxu0 0.0
        %7093 = vmatpush1.msra.mxu0 0.0
        %7094 = vmatprep.subr.mxu0 0.0
        %7095 = vmatpush1.msra.mxu0 0.0
        %7096 = vmatprep.subr.mxu0 0.0
        %7097 = vmatpush1.msra.mxu0 0.0
        %7098 = vmatprep.subr.mxu0 0.0
        %7099 = vmatpush1.msra.mxu0 0.0
        %7100 = vmatprep.subr.mxu0 0.0
        %7101 = vmatpush1.msra.mxu0 0.0
        %7102 = vmatprep.subr.mxu0 0.0
        %7103 = vmatpush1.msra.mxu0 0.0
        %7104 = vmatprep.subr.mxu0 0.0
        %7105 = vmatpush1.msra.mxu0 0.0
        %7106 = vmatprep.subr.mxu0 0.0
        %7107 = vmatpush1.msra.mxu0 0.0
        %7108 = vmatprep.subr.mxu0 0.0
        %7109 = vmatpush1.msra.mxu0 0.0
        %7110 = vmatprep.subr.mxu0 0.0
        %7111 = vmatpush1.msra.mxu0 0.0
        %7112 = vmatprep.subr.mxu0 0.0
        %7113 = vmatpush1.msra.mxu0 0.0
        %7114 = vmatprep.subr.mxu0 0.0
        %7115 = vmatpush1.msra.mxu0 0.0
        %7116 = vmatprep.subr.mxu0 0.0
        %7117 = vmatpush1.msra.mxu0 0.0
        %7118 = vmatprep.subr.mxu0 0.0
        %7119 = vmatpush1.msra.mxu0 0.0
        %7120 = vmatprep.subr.mxu0 0.0
        %7121 = vmatpush1.msra.mxu0 0.0
        %7122 = vmatprep.subr.mxu0 0.0
        %7123 = vmatpush1.msra.mxu0 0.0
        %7124 = vmatprep.subr.mxu0 0.0
        %7125 = vmatpush1.msra.mxu0 0.0
        %7126 = vmatprep.subr.mxu0 0.0
        %7127 = vmatpush1.msra.mxu0 0.0
        %7128 = vmatprep.subr.mxu0 0.0
        %7129 = vmatpush1.msra.mxu0 0.0
        %7130 = vmatprep.subr.mxu0 0.0
        %7131 = vmatpush1.msra.mxu0 0.0
        %7132 = vmatprep.subr.mxu0 0.0
        %7133 = vmatpush1.msra.mxu0 0.0
        %7134 = vmatprep.subr.mxu0 0.0
        %7135 = vmatpush1.msra.mxu0 0.0
        %7136 = vmatprep.subr.mxu0 0.0
        %7137 = vmatpush1.msra.mxu0 0.0
        %7138 = vmatprep.subr.mxu0 0.0
        %7139 = vmatpush1.msra.mxu0 0.0
        %7140 = vmatprep.subr.mxu0 0.0
        %7141 = vmatpush1.msra.mxu0 0.0
        %7142 = vmatprep.subr.mxu0 0.0
        %7143 = vmatpush1.msra.mxu0 0.0
        %7144 = vmatprep.subr.mxu0 0.0
        %7145 = vmatpush1.msra.mxu0 0.0
        %7146 = vmatprep.subr.mxu0 0.0
        %7147 = vmatpush1.msra.mxu0 0.0
        %7148 = vmatprep.subr.mxu0 0.0
        %7149 = vmatpush1.msra.mxu0 0.0
        %7150 = vmatprep.mubr.f32.mxu0 0.0
        %7151 = vmatmul.mubr.f32.gmra.mrb[0].mxu0 %v7013
        %v7152 = vpop.f32.mrb[0].mxu0
        %v7153 = vadd.f32 %v6866, %v7152
        %v7154 = vpop.f32.mrb[0].mxu0
        %v7155 = vadd.f32 %v6868, %v7154
        %7156 = vdwg.mxu0
        %7157 = vmatprep.subr.mxu0 %v6722
        %7158 = vmatpush1.msra.mxu0 %v6721
        %7159 = vmatprep.subr.mxu0 0.0
        %7160 = vmatpush1.msra.mxu0 0.0
        %7161 = vmatprep.subr.mxu0 0.0
        %7162 = vmatpush1.msra.mxu0 0.0
        %7163 = vmatprep.subr.mxu0 0.0
        %7164 = vmatpush1.msra.mxu0 0.0
        %7165 = vmatprep.subr.mxu0 0.0
        %7166 = vmatpush1.msra.mxu0 0.0
        %7167 = vmatprep.subr.mxu0 0.0
        %7168 = vmatpush1.msra.mxu0 0.0
        %7169 = vmatprep.subr.mxu0 0.0
        %7170 = vmatpush1.msra.mxu0 0.0
        %7171 = vmatprep.subr.mxu0 0.0
        %7172 = vmatpush1.msra.mxu0 0.0
        %7173 = vmatprep.subr.mxu0 0.0
        %7174 = vmatpush1.msra.mxu0 0.0
        %7175 = vmatprep.subr.mxu0 0.0
        %7176 = vmatpush1.msra.mxu0 0.0
        %7177 = vmatprep.subr.mxu0 0.0
        %7178 = vmatpush1.msra.mxu0 0.0
        %7179 = vmatprep.subr.mxu0 0.0
        %7180 = vmatpush1.msra.mxu0 0.0
        %7181 = vmatprep.subr.mxu0 0.0
        %7182 = vmatpush1.msra.mxu0 0.0
        %7183 = vmatprep.subr.mxu0 0.0
        %7184 = vmatpush1.msra.mxu0 0.0
        %7185 = vmatprep.subr.mxu0 0.0
        %7186 = vmatpush1.msra.mxu0 0.0
        %7187 = vmatprep.subr.mxu0 0.0
        %7188 = vmatpush1.msra.mxu0 0.0
        %7189 = vmatprep.subr.mxu0 0.0
        %7190 = vmatpush1.msra.mxu0 0.0
        %7191 = vmatprep.subr.mxu0 0.0
        %7192 = vmatpush1.msra.mxu0 0.0
        %7193 = vmatprep.subr.mxu0 0.0
        %7194 = vmatpush1.msra.mxu0 0.0
        %7195 = vmatprep.subr.mxu0 0.0
        %7196 = vmatpush1.msra.mxu0 0.0
        %7197 = vmatprep.subr.mxu0 0.0
        %7198 = vmatpush1.msra.mxu0 0.0
        %7199 = vmatprep.subr.mxu0 0.0
        %7200 = vmatpush1.msra.mxu0 0.0
        %7201 = vmatprep.subr.mxu0 0.0
        %7202 = vmatpush1.msra.mxu0 0.0
        %7203 = vmatprep.subr.mxu0 0.0
        %7204 = vmatpush1.msra.mxu0 0.0
        %7205 = vmatprep.subr.mxu0 0.0
        %7206 = vmatpush1.msra.mxu0 0.0
        %7207 = vmatprep.subr.mxu0 0.0
        %7208 = vmatpush1.msra.mxu0 0.0
        %7209 = vmatprep.subr.mxu0 0.0
        %7210 = vmatpush1.msra.mxu0 0.0
        %7211 = vmatprep.subr.mxu0 0.0
        %7212 = vmatpush1.msra.mxu0 0.0
        %7213 = vmatprep.subr.mxu0 0.0
        %7214 = vmatpush1.msra.mxu0 0.0
        %7215 = vmatprep.subr.mxu0 0.0
        %7216 = vmatpush1.msra.mxu0 0.0
        %7217 = vmatprep.subr.mxu0 0.0
        %7218 = vmatpush1.msra.mxu0 0.0
        %7219 = vmatprep.subr.mxu0 0.0
        %7220 = vmatpush1.msra.mxu0 0.0
        %7221 = vmatprep.mubr.f32.mxu0 0.0
        %7222 = vmatmul.mubr.f32.gmra.mrb[0].mxu0 %v7013
        %v7223 = vpop.f32.mrb[0].mxu0
        %v7224 = vadd.f32 %v6937, %v7223
        %v7225 = vpop.f32.mrb[0].mxu0
        %v7226 = vadd.f32 %v6939, %v7225
        %7227 = vdwg.mxu0
        %7228 = vmatprep.subr.mxu0 %v6724
        %7229 = vmatpush1.msra.mxu0 %v6723
        %7230 = vmatprep.subr.mxu0 0.0
        %7231 = vmatpush1.msra.mxu0 0.0
        %7232 = vmatprep.subr.mxu0 0.0
        %7233 = vmatpush1.msra.mxu0 0.0
        %7234 = vmatprep.subr.mxu0 0.0
        %7235 = vmatpush1.msra.mxu0 0.0
        %7236 = vmatprep.subr.mxu0 0.0
        %7237 = vmatpush1.msra.mxu0 0.0
        %7238 = vmatprep.subr.mxu0 0.0
        %7239 = vmatpush1.msra.mxu0 0.0
        %7240 = vmatprep.subr.mxu0 0.0
        %7241 = vmatpush1.msra.mxu0 0.0
        %7242 = vmatprep.subr.mxu0 0.0
        %7243 = vmatpush1.msra.mxu0 0.0
        %7244 = vmatprep.subr.mxu0 0.0
        %7245 = vmatpush1.msra.mxu0 0.0
        %7246 = vmatprep.subr.mxu0 0.0
        %7247 = vmatpush1.msra.mxu0 0.0
        %7248 = vmatprep.subr.mxu0 0.0
        %7249 = vmatpush1.msra.mxu0 0.0
        %7250 = vmatprep.subr.mxu0 0.0
        %7251 = vmatpush1.msra.mxu0 0.0
        %7252 = vmatprep.subr.mxu0 0.0
        %7253 = vmatpush1.msra.mxu0 0.0
        %7254 = vmatprep.subr.mxu0 0.0
        %7255 = vmatpush1.msra.mxu0 0.0
        %7256 = vmatprep.subr.mxu0 0.0
        %7257 = vmatpush1.msra.mxu0 0.0
        %7258 = vmatprep.subr.mxu0 0.0
        %7259 = vmatpush1.msra.mxu0 0.0
        %7260 = vmatprep.subr.mxu0 0.0
        %7261 = vmatpush1.msra.mxu0 0.0
        %7262 = vmatprep.subr.mxu0 0.0
        %7263 = vmatpush1.msra.mxu0 0.0
        %7264 = vmatprep.subr.mxu0 0.0
        %7265 = vmatpush1.msra.mxu0 0.0
        %7266 = vmatprep.subr.mxu0 0.0
        %7267 = vmatpush1.msra.mxu0 0.0
        %7268 = vmatprep.subr.mxu0 0.0
        %7269 = vmatpush1.msra.mxu0 0.0
        %7270 = vmatprep.subr.mxu0 0.0
        %7271 = vmatpush1.msra.mxu0 0.0
        %7272 = vmatprep.subr.mxu0 0.0
        %7273 = vmatpush1.msra.mxu0 0.0
        %7274 = vmatprep.subr.mxu0 0.0
        %7275 = vmatpush1.msra.mxu0 0.0
        %7276 = vmatprep.subr.mxu0 0.0
        %7277 = vmatpush1.msra.mxu0 0.0
        %7278 = vmatprep.subr.mxu0 0.0
        %7279 = vmatpush1.msra.mxu0 0.0
        %7280 = vmatprep.subr.mxu0 0.0
        %7281 = vmatpush1.msra.mxu0 0.0
        %7282 = vmatprep.subr.mxu0 0.0
        %7283 = vmatpush1.msra.mxu0 0.0
        %7284 = vmatprep.subr.mxu0 0.0
        %7285 = vmatpush1.msra.mxu0 0.0
        %7286 = vmatprep.subr.mxu0 0.0
        %7287 = vmatpush1.msra.mxu0 0.0
        %7288 = vmatprep.subr.mxu0 0.0
        %7289 = vmatpush1.msra.mxu0 0.0
        %7290 = vmatprep.subr.mxu0 0.0
        %7291 = vmatpush1.msra.mxu0 0.0
        %7292 = vmatprep.mubr.f32.mxu0 0.0
        %7293 = vmatmul.mubr.f32.gmra.mrb[0].mxu0 %v7013
        %v7294 = vpop.f32.mrb[0].mxu0
        %v7295 = vadd.f32 %v7008, %v7294
        %v7296 = vpop.f32.mrb[0].mxu0
        %v7297 = vadd.f32 %v7010, %v7296
        %7298 = vdwg.mxu0
        %v7299 = vld [vmem:[#allocation2 + $0x8] sm:$0xff]
        %v7300 = vld [vmem:[#allocation2 + $0x10] sm:$0xff]
        %v7301 = vld [vmem:[#allocation2 + $0x18] sm:$0xff]
        %v7302 = vld [vmem:[#allocation2 + $0x20] sm:$0xff]
        %v7303 = vld [vmem:[#allocation2 + $0x28] sm:$0xff]
        %v7304 = vld [vmem:[#allocation2 + $0x30] sm:$0xff]
        %v7305 = vld [vmem:[#allocation2 + $0x38] sm:$0xff]
        %v7306 = vld [vmem:[#allocation2 + $0x40] sm:$0xff]
        %v7307 = vld [vmem:[#allocation2 + $0x48] sm:$0xff]
        %7317 = vrot.lane.b32.xlu0 %v7299, 112
        %v7318 = vpop.permute.xlu0 %7317
        %7319 = vrot.lane.b32.xlu0 %v7300, 112
        %v7320 = vpop.permute.xlu0 %7319
        %7321 = vrot.lane.b32.xlu0 %v7301, 112
        %v7322 = vpop.permute.xlu0 %7321
        %7323 = vrot.lane.b32.xlu0 %v7302, 112
        %v7324 = vpop.permute.xlu0 %7323
        %7325 = vrot.lane.b32.xlu0 %v7303, 112
        %v7326 = vpop.permute.xlu0 %7325
        %7327 = vrot.lane.b32.xlu0 %v7304, 112
        %v7328 = vpop.permute.xlu0 %7327
        %7329 = vrot.lane.b32.xlu0 %v7305, 112
        %v7330 = vpop.permute.xlu0 %7329
        %7331 = vrot.lane.b32.xlu0 %v7306, 112
        %v7332 = vpop.permute.xlu0 %7331
        %7333 = vrot.lane.b32.xlu0 %v7307, 112
        %v7334 = vpop.permute.xlu0 %7333
        %vm7335 = vcmask 916480
        %v7336 = vsel %vm7335, %v7318, %v7320
        %v7337 = vsel %vm7335, %v7320, %v7322
        %v7338 = vsel %vm7335, %v7322, %v7324
        %v7339 = vsel %vm7335, %v7324, %v7326
        %v7340 = vsel %vm7335, %v7326, %v7328
        %v7341 = vsel %vm7335, %v7328, %v7330
        %v7342 = vsel %vm7335, %v7330, %v7332
        %v7343 = vsel %vm7335, %v7332, %v7334
        %v7352 = vsel %vm406, %v7336, 0.0
        %v7353 = vsel %vm407, %v7337, 0.0
        %v7354 = vsel %vm408, %v7338, 0.0
        %v7355 = vsel %vm409, %v7339, 0.0
        %v7356 = vsel %vm410, %v7340, 0.0
        %v7357 = vsel %vm411, %v7341, 0.0
        %v7358 = vsel %vm412, %v7342, 0.0
        %v7359 = vsel %vm413, %v7343, 0.0
        %v7361 = vsel %vm807, %v254, 0
        %7363 = vmatprep.subr.mxu0 %v7353
        %7364 = vmatpush1.msra.mxu0 %v7352
        %7365 = vmatprep.subr.mxu0 0.0
        %7366 = vmatpush1.msra.mxu0 0.0
        %7367 = vmatprep.subr.mxu0 0.0
        %7368 = vmatpush1.msra.mxu0 0.0
        %7369 = vmatprep.subr.mxu0 0.0
        %7370 = vmatpush1.msra.mxu0 0.0
        %7371 = vmatprep.subr.mxu0 0.0
        %7372 = vmatpush1.msra.mxu0 0.0
        %7373 = vmatprep.subr.mxu0 0.0
        %7374 = vmatpush1.msra.mxu0 0.0
        %7375 = vmatprep.subr.mxu0 0.0
        %7376 = vmatpush1.msra.mxu0 0.0
        %7377 = vmatprep.subr.mxu0 0.0
        %7378 = vmatpush1.msra.mxu0 0.0
        %7379 = vmatprep.subr.mxu0 0.0
        %7380 = vmatpush1.msra.mxu0 0.0
        %7381 = vmatprep.subr.mxu0 0.0
        %7382 = vmatpush1.msra.mxu0 0.0
        %7383 = vmatprep.subr.mxu0 0.0
        %7384 = vmatpush1.msra.mxu0 0.0
        %7385 = vmatprep.subr.mxu0 0.0
        %7386 = vmatpush1.msra.mxu0 0.0
        %7387 = vmatprep.subr.mxu0 0.0
        %7388 = vmatpush1.msra.mxu0 0.0
        %7389 = vmatprep.subr.mxu0 0.0
        %7390 = vmatpush1.msra.mxu0 0.0
        %7391 = vmatprep.subr.mxu0 0.0
        %7392 = vmatpush1.msra.mxu0 0.0
        %7393 = vmatprep.subr.mxu0 0.0
        %7394 = vmatpush1.msra.mxu0 0.0
        %7395 = vmatprep.subr.mxu0 0.0
        %7396 = vmatpush1.msra.mxu0 0.0
        %7397 = vmatprep.subr.mxu0 0.0
        %7398 = vmatpush1.msra.mxu0 0.0
        %7399 = vmatprep.subr.mxu0 0.0
        %7400 = vmatpush1.msra.mxu0 0.0
        %7401 = vmatprep.subr.mxu0 0.0
        %7402 = vmatpush1.msra.mxu0 0.0
        %7403 = vmatprep.subr.mxu0 0.0
        %7404 = vmatpush1.msra.mxu0 0.0
        %7405 = vmatprep.subr.mxu0 0.0
        %7406 = vmatpush1.msra.mxu0 0.0
        %7407 = vmatprep.subr.mxu0 0.0
        %7408 = vmatpush1.msra.mxu0 0.0
        %7409 = vmatprep.subr.mxu0 0.0
        %7410 = vmatpush1.msra.mxu0 0.0
        %7411 = vmatprep.subr.mxu0 0.0
        %7412 = vmatpush1.msra.mxu0 0.0
        %7413 = vmatprep.subr.mxu0 0.0
        %7414 = vmatpush1.msra.mxu0 0.0
        %7415 = vmatprep.subr.mxu0 0.0
        %7416 = vmatpush1.msra.mxu0 0.0
        %7417 = vmatprep.subr.mxu0 0.0
        %7418 = vmatpush1.msra.mxu0 0.0
        %7419 = vmatprep.subr.mxu0 0.0
        %7420 = vmatpush1.msra.mxu0 0.0
        %7421 = vmatprep.subr.mxu0 0.0
        %7422 = vmatpush1.msra.mxu0 0.0
        %7423 = vmatprep.subr.mxu0 0.0
        %7424 = vmatpush1.msra.mxu0 0.0
        %7425 = vmatprep.subr.mxu0 0.0
        %7426 = vmatpush1.msra.mxu0 0.0
        %7427 = vmatprep.mubr.f32.mxu0 0.0
        %7428 = vmatmul.mubr.f32.gmra.mrb[0].mxu0 %v7361
        %v7429 = vpop.f32.mrb[0].mxu0
        %v7430 = vadd.f32 0.0, %v7429
        %v7431 = vpop.f32.mrb[0].mxu0
        %v7432 = vadd.f32 0.0, %v7431
        %7433 = vdwg.mxu0
        %7434 = vmatprep.subr.mxu0 %v7355
        %7435 = vmatpush1.msra.mxu0 %v7354
        %7436 = vmatprep.subr.mxu0 0.0
        %7437 = vmatpush1.msra.mxu0 0.0
        %7438 = vmatprep.subr.mxu0 0.0
        %7439 = vmatpush1.msra.mxu0 0.0
        %7440 = vmatprep.subr.mxu0 0.0
        %7441 = vmatpush1.msra.mxu0 0.0
        %7442 = vmatprep.subr.mxu0 0.0
        %7443 = vmatpush1.msra.mxu0 0.0
        %7444 = vmatprep.subr.mxu0 0.0
        %7445 = vmatpush1.msra.mxu0 0.0
        %7446 = vmatprep.subr.mxu0 0.0
        %7447 = vmatpush1.msra.mxu0 0.0
        %7448 = vmatprep.subr.mxu0 0.0
        %7449 = vmatpush1.msra.mxu0 0.0
        %7450 = vmatprep.subr.mxu0 0.0
        %7451 = vmatpush1.msra.mxu0 0.0
        %7452 = vmatprep.subr.mxu0 0.0
        %7453 = vmatpush1.msra.mxu0 0.0
        %7454 = vmatprep.subr.mxu0 0.0
        %7455 = vmatpush1.msra.mxu0 0.0
        %7456 = vmatprep.subr.mxu0 0.0
        %7457 = vmatpush1.msra.mxu0 0.0
        %7458 = vmatprep.subr.mxu0 0.0
        %7459 = vmatpush1.msra.mxu0 0.0
        %7460 = vmatprep.subr.mxu0 0.0
        %7461 = vmatpush1.msra.mxu0 0.0
        %7462 = vmatprep.subr.mxu0 0.0
        %7463 = vmatpush1.msra.mxu0 0.0
        %7464 = vmatprep.subr.mxu0 0.0
        %7465 = vmatpush1.msra.mxu0 0.0
        %7466 = vmatprep.subr.mxu0 0.0
        %7467 = vmatpush1.msra.mxu0 0.0
        %7468 = vmatprep.subr.mxu0 0.0
        %7469 = vmatpush1.msra.mxu0 0.0
        %7470 = vmatprep.subr.mxu0 0.0
        %7471 = vmatpush1.msra.mxu0 0.0
        %7472 = vmatprep.subr.mxu0 0.0
        %7473 = vmatpush1.msra.mxu0 0.0
        %7474 = vmatprep.subr.mxu0 0.0
        %7475 = vmatpush1.msra.mxu0 0.0
        %7476 = vmatprep.subr.mxu0 0.0
        %7477 = vmatpush1.msra.mxu0 0.0
        %7478 = vmatprep.subr.mxu0 0.0
        %7479 = vmatpush1.msra.mxu0 0.0
        %7480 = vmatprep.subr.mxu0 0.0
        %7481 = vmatpush1.msra.mxu0 0.0
        %7482 = vmatprep.subr.mxu0 0.0
        %7483 = vmatpush1.msra.mxu0 0.0
        %7484 = vmatprep.subr.mxu0 0.0
        %7485 = vmatpush1.msra.mxu0 0.0
        %7486 = vmatprep.subr.mxu0 0.0
        %7487 = vmatpush1.msra.mxu0 0.0
        %7488 = vmatprep.subr.mxu0 0.0
        %7489 = vmatpush1.msra.mxu0 0.0
        %7490 = vmatprep.subr.mxu0 0.0
        %7491 = vmatpush1.msra.mxu0 0.0
        %7492 = vmatprep.subr.mxu0 0.0
        %7493 = vmatpush1.msra.mxu0 0.0
        %7494 = vmatprep.subr.mxu0 0.0
        %7495 = vmatpush1.msra.mxu0 0.0
        %7496 = vmatprep.subr.mxu0 0.0
        %7497 = vmatpush1.msra.mxu0 0.0
        %7498 = vmatprep.mubr.f32.mxu0 0.0
        %7499 = vmatmul.mubr.f32.gmra.mrb[0].mxu0 %v7361
        %v7500 = vpop.f32.mrb[0].mxu0
        %v7501 = vadd.f32 0.0, %v7500
        %v7502 = vpop.f32.mrb[0].mxu0
        %v7503 = vadd.f32 0.0, %v7502
        %7504 = vdwg.mxu0
        %7505 = vmatprep.subr.mxu0 %v7357
        %7506 = vmatpush1.msra.mxu0 %v7356
        %7507 = vmatprep.subr.mxu0 0.0
        %7508 = vmatpush1.msra.mxu0 0.0
        %7509 = vmatprep.subr.mxu0 0.0
        %7510 = vmatpush1.msra.mxu0 0.0
        %7511 = vmatprep.subr.mxu0 0.0
        %7512 = vmatpush1.msra.mxu0 0.0
        %7513 = vmatprep.subr.mxu0 0.0
        %7514 = vmatpush1.msra.mxu0 0.0
        %7515 = vmatprep.subr.mxu0 0.0
        %7516 = vmatpush1.msra.mxu0 0.0
        %7517 = vmatprep.subr.mxu0 0.0
        %7518 = vmatpush1.msra.mxu0 0.0
        %7519 = vmatprep.subr.mxu0 0.0
        %7520 = vmatpush1.msra.mxu0 0.0
        %7521 = vmatprep.subr.mxu0 0.0
        %7522 = vmatpush1.msra.mxu0 0.0
        %7523 = vmatprep.subr.mxu0 0.0
        %7524 = vmatpush1.msra.mxu0 0.0
        %7525 = vmatprep.subr.mxu0 0.0
        %7526 = vmatpush1.msra.mxu0 0.0
        %7527 = vmatprep.subr.mxu0 0.0
        %7528 = vmatpush1.msra.mxu0 0.0
        %7529 = vmatprep.subr.mxu0 0.0
        %7530 = vmatpush1.msra.mxu0 0.0
        %7531 = vmatprep.subr.mxu0 0.0
        %7532 = vmatpush1.msra.mxu0 0.0
        %7533 = vmatprep.subr.mxu0 0.0
        %7534 = vmatpush1.msra.mxu0 0.0
        %7535 = vmatprep.subr.mxu0 0.0
        %7536 = vmatpush1.msra.mxu0 0.0
        %7537 = vmatprep.subr.mxu0 0.0
        %7538 = vmatpush1.msra.mxu0 0.0
        %7539 = vmatprep.subr.mxu0 0.0
        %7540 = vmatpush1.msra.mxu0 0.0
        %7541 = vmatprep.subr.mxu0 0.0
        %7542 = vmatpush1.msra.mxu0 0.0
        %7543 = vmatprep.subr.mxu0 0.0
        %7544 = vmatpush1.msra.mxu0 0.0
        %7545 = vmatprep.subr.mxu0 0.0
        %7546 = vmatpush1.msra.mxu0 0.0
        %7547 = vmatprep.subr.mxu0 0.0
        %7548 = vmatpush1.msra.mxu0 0.0
        %7549 = vmatprep.subr.mxu0 0.0
        %7550 = vmatpush1.msra.mxu0 0.0
        %7551 = vmatprep.subr.mxu0 0.0
        %7552 = vmatpush1.msra.mxu0 0.0
        %7553 = vmatprep.subr.mxu0 0.0
        %7554 = vmatpush1.msra.mxu0 0.0
        %7555 = vmatprep.subr.mxu0 0.0
        %7556 = vmatpush1.msra.mxu0 0.0
        %7557 = vmatprep.subr.mxu0 0.0
        %7558 = vmatpush1.msra.mxu0 0.0
        %7559 = vmatprep.subr.mxu0 0.0
        %7560 = vmatpush1.msra.mxu0 0.0
        %7561 = vmatprep.subr.mxu0 0.0
        %7562 = vmatpush1.msra.mxu0 0.0
        %7563 = vmatprep.subr.mxu0 0.0
        %7564 = vmatpush1.msra.mxu0 0.0
        %7565 = vmatprep.subr.mxu0 0.0
        %7566 = vmatpush1.msra.mxu0 0.0
        %7567 = vmatprep.subr.mxu0 0.0
        %7568 = vmatpush1.msra.mxu0 0.0
        %7569 = vmatprep.mubr.f32.mxu0 0.0
        %7570 = vmatmul.mubr.f32.gmra.mrb[0].mxu0 %v7361
        %v7571 = vpop.f32.mrb[0].mxu0
        %v7572 = vadd.f32 0.0, %v7571
        %v7573 = vpop.f32.mrb[0].mxu0
        %v7574 = vadd.f32 0.0, %v7573
        %7575 = vdwg.mxu0
        %7576 = vmatprep.subr.mxu0 %v7359
        %7577 = vmatpush1.msra.mxu0 %v7358
        %7578 = vmatprep.subr.mxu0 0.0
        %7579 = vmatpush1.msra.mxu0 0.0
        %7580 = vmatprep.subr.mxu0 0.0
        %7581 = vmatpush1.msra.mxu0 0.0
        %7582 = vmatprep.subr.mxu0 0.0
        %7583 = vmatpush1.msra.mxu0 0.0
        %7584 = vmatprep.subr.mxu0 0.0
        %7585 = vmatpush1.msra.mxu0 0.0
        %7586 = vmatprep.subr.mxu0 0.0
        %7587 = vmatpush1.msra.mxu0 0.0
        %7588 = vmatprep.subr.mxu0 0.0
        %7589 = vmatpush1.msra.mxu0 0.0
        %7590 = vmatprep.subr.mxu0 0.0
        %7591 = vmatpush1.msra.mxu0 0.0
        %7592 = vmatprep.subr.mxu0 0.0
        %7593 = vmatpush1.msra.mxu0 0.0
        %7594 = vmatprep.subr.mxu0 0.0
        %7595 = vmatpush1.msra.mxu0 0.0
        %7596 = vmatprep.subr.mxu0 0.0
        %7597 = vmatpush1.msra.mxu0 0.0
        %7598 = vmatprep.subr.mxu0 0.0
        %7599 = vmatpush1.msra.mxu0 0.0
        %7600 = vmatprep.subr.mxu0 0.0
        %7601 = vmatpush1.msra.mxu0 0.0
        %7602 = vmatprep.subr.mxu0 0.0
        %7603 = vmatpush1.msra.mxu0 0.0
        %7604 = vmatprep.subr.mxu0 0.0
        %7605 = vmatpush1.msra.mxu0 0.0
        %7606 = vmatprep.subr.mxu0 0.0
        %7607 = vmatpush1.msra.mxu0 0.0
        %7608 = vmatprep.subr.mxu0 0.0
        %7609 = vmatpush1.msra.mxu0 0.0
        %7610 = vmatprep.subr.mxu0 0.0
        %7611 = vmatpush1.msra.mxu0 0.0
        %7612 = vmatprep.subr.mxu0 0.0
        %7613 = vmatpush1.msra.mxu0 0.0
        %7614 = vmatprep.subr.mxu0 0.0
        %7615 = vmatpush1.msra.mxu0 0.0
        %7616 = vmatprep.subr.mxu0 0.0
        %7617 = vmatpush1.msra.mxu0 0.0
        %7618 = vmatprep.subr.mxu0 0.0
        %7619 = vmatpush1.msra.mxu0 0.0
        %7620 = vmatprep.subr.mxu0 0.0
        %7621 = vmatpush1.msra.mxu0 0.0
        %7622 = vmatprep.subr.mxu0 0.0
        %7623 = vmatpush1.msra.mxu0 0.0
        %7624 = vmatprep.subr.mxu0 0.0
        %7625 = vmatpush1.msra.mxu0 0.0
        %7626 = vmatprep.subr.mxu0 0.0
        %7627 = vmatpush1.msra.mxu0 0.0
        %7628 = vmatprep.subr.mxu0 0.0
        %7629 = vmatpush1.msra.mxu0 0.0
        %7630 = vmatprep.subr.mxu0 0.0
        %7631 = vmatpush1.msra.mxu0 0.0
        %7632 = vmatprep.subr.mxu0 0.0
        %7633 = vmatpush1.msra.mxu0 0.0
        %7634 = vmatprep.subr.mxu0 0.0
        %7635 = vmatpush1.msra.mxu0 0.0
        %7636 = vmatprep.subr.mxu0 0.0
        %7637 = vmatpush1.msra.mxu0 0.0
        %7638 = vmatprep.subr.mxu0 0.0
        %7639 = vmatpush1.msra.mxu0 0.0
        %7640 = vmatprep.mubr.f32.mxu0 0.0
        %7641 = vmatmul.mubr.f32.gmra.mrb[0].mxu0 %v7361
        %v7642 = vpop.f32.mrb[0].mxu0
        %v7643 = vadd.f32 0.0, %v7642
        %v7644 = vpop.f32.mrb[0].mxu0
        %v7645 = vadd.f32 0.0, %v7644
        %7646 = vdwg.mxu0
        %v7647 = vadd.f32 %v7082, %v7430
        %v7648 = vadd.f32 %v7084, %v7432
        %v7649 = vadd.f32 %v7153, %v7501
        %v7650 = vadd.f32 %v7155, %v7503
        %v7651 = vadd.f32 %v7224, %v7572
        %v7652 = vadd.f32 %v7226, %v7574
        %v7653 = vadd.f32 %v7295, %v7643
        %v7654 = vadd.f32 %v7297, %v7645
        %7655 = vrot.lane.b32.xlu0 %v1382, 16
        %v7656 = vpop.permute.xlu0 %7655
        %7657 = vrot.lane.b32.xlu0 %v1383, 16
        %v7658 = vpop.permute.xlu0 %7657
        %7659 = vrot.lane.b32.xlu0 %v1384, 16
        %v7660 = vpop.permute.xlu0 %7659
        %7661 = vrot.lane.b32.xlu0 %v1385, 16
        %v7662 = vpop.permute.xlu0 %7661
        %7663 = vrot.lane.b32.xlu0 %v1386, 16
        %v7664 = vpop.permute.xlu0 %7663
        %7665 = vrot.lane.b32.xlu0 %v1387, 16
        %v7666 = vpop.permute.xlu0 %7665
        %7667 = vrot.lane.b32.xlu0 %v1388, 16
        %v7668 = vpop.permute.xlu0 %7667
        %7669 = vrot.lane.b32.xlu0 %v1389, 16
        %v7670 = vpop.permute.xlu0 %7669
        %7671 = vrot.lane.b32.xlu0 %v1390, 16
        %v7672 = vpop.permute.xlu0 %7671
        %v7673 = vsel %vm6700, %v7656, %v7658
        %v7674 = vsel %vm6700, %v7658, %v7660
        %v7675 = vsel %vm6700, %v7660, %v7662
        %v7676 = vsel %vm6700, %v7662, %v7664
        %v7677 = vsel %vm6700, %v7664, %v7666
        %v7678 = vsel %vm6700, %v7666, %v7668
        %v7679 = vsel %vm6700, %v7668, %v7670
        %v7680 = vsel %vm6700, %v7670, %v7672
        %v7689 = vsel %vm398, %v7673, 0.0
        %v7690 = vsel %vm399, %v7674, 0.0
        %v7691 = vsel %vm400, %v7675, 0.0
        %v7692 = vsel %vm401, %v7676, 0.0
        %v7693 = vsel %vm402, %v7677, 0.0
        %v7694 = vsel %vm403, %v7678, 0.0
        %v7695 = vsel %vm404, %v7679, 0.0
        %v7696 = vsel %vm405, %v7680, 0.0
        %v7698 = vsel %vm807, %v255, 0
        %7700 = vmatprep.subr.mxu0 %v7690
        %7701 = vmatpush1.msra.mxu0 %v7689
        %7702 = vmatprep.subr.mxu0 0.0
        %7703 = vmatpush1.msra.mxu0 0.0
        %7704 = vmatprep.subr.mxu0 0.0
        %7705 = vmatpush1.msra.mxu0 0.0
        %7706 = vmatprep.subr.mxu0 0.0
        %7707 = vmatpush1.msra.mxu0 0.0
        %7708 = vmatprep.subr.mxu0 0.0
        %7709 = vmatpush1.msra.mxu0 0.0
        %7710 = vmatprep.subr.mxu0 0.0
        %7711 = vmatpush1.msra.mxu0 0.0
        %7712 = vmatprep.subr.mxu0 0.0
        %7713 = vmatpush1.msra.mxu0 0.0
        %7714 = vmatprep.subr.mxu0 0.0
        %7715 = vmatpush1.msra.mxu0 0.0
        %7716 = vmatprep.subr.mxu0 0.0
        %7717 = vmatpush1.msra.mxu0 0.0
        %7718 = vmatprep.subr.mxu0 0.0
        %7719 = vmatpush1.msra.mxu0 0.0
        %7720 = vmatprep.subr.mxu0 0.0
        %7721 = vmatpush1.msra.mxu0 0.0
        %7722 = vmatprep.subr.mxu0 0.0
        %7723 = vmatpush1.msra.mxu0 0.0
        %7724 = vmatprep.subr.mxu0 0.0
        %7725 = vmatpush1.msra.mxu0 0.0
        %7726 = vmatprep.subr.mxu0 0.0
        %7727 = vmatpush1.msra.mxu0 0.0
        %7728 = vmatprep.subr.mxu0 0.0
        %7729 = vmatpush1.msra.mxu0 0.0
        %7730 = vmatprep.subr.mxu0 0.0
        %7731 = vmatpush1.msra.mxu0 0.0
        %7732 = vmatprep.subr.mxu0 0.0
        %7733 = vmatpush1.msra.mxu0 0.0
        %7734 = vmatprep.subr.mxu0 0.0
        %7735 = vmatpush1.msra.mxu0 0.0
        %7736 = vmatprep.subr.mxu0 0.0
        %7737 = vmatpush1.msra.mxu0 0.0
        %7738 = vmatprep.subr.mxu0 0.0
        %7739 = vmatpush1.msra.mxu0 0.0
        %7740 = vmatprep.subr.mxu0 0.0
        %7741 = vmatpush1.msra.mxu0 0.0
        %7742 = vmatprep.subr.mxu0 0.0
        %7743 = vmatpush1.msra.mxu0 0.0
        %7744 = vmatprep.subr.mxu0 0.0
        %7745 = vmatpush1.msra.mxu0 0.0
        %7746 = vmatprep.subr.mxu0 0.0
        %7747 = vmatpush1.msra.mxu0 0.0
        %7748 = vmatprep.subr.mxu0 0.0
        %7749 = vmatpush1.msra.mxu0 0.0
        %7750 = vmatprep.subr.mxu0 0.0
        %7751 = vmatpush1.msra.mxu0 0.0
        %7752 = vmatprep.subr.mxu0 0.0
        %7753 = vmatpush1.msra.mxu0 0.0
        %7754 = vmatprep.subr.mxu0 0.0
        %7755 = vmatpush1.msra.mxu0 0.0
        %7756 = vmatprep.subr.mxu0 0.0
        %7757 = vmatpush1.msra.mxu0 0.0
        %7758 = vmatprep.subr.mxu0 0.0
        %7759 = vmatpush1.msra.mxu0 0.0
        %7760 = vmatprep.subr.mxu0 0.0
        %7761 = vmatpush1.msra.mxu0 0.0
        %7762 = vmatprep.subr.mxu0 0.0
        %7763 = vmatpush1.msra.mxu0 0.0
        %7764 = vmatprep.mubr.f32.mxu0 0.0
        %7765 = vmatmul.mubr.f32.gmra.mrb[0].mxu0 %v7698
        %v7766 = vpop.f32.mrb[0].mxu0
        %v7767 = vadd.f32 0.0, %v7766
        %v7768 = vpop.f32.mrb[0].mxu0
        %v7769 = vadd.f32 0.0, %v7768
        %7770 = vdwg.mxu0
        %7771 = vmatprep.subr.mxu0 %v7692
        %7772 = vmatpush1.msra.mxu0 %v7691
        %7773 = vmatprep.subr.mxu0 0.0
        %7774 = vmatpush1.msra.mxu0 0.0
        %7775 = vmatprep.subr.mxu0 0.0
        %7776 = vmatpush1.msra.mxu0 0.0
        %7777 = vmatprep.subr.mxu0 0.0
        %7778 = vmatpush1.msra.mxu0 0.0
        %7779 = vmatprep.subr.mxu0 0.0
        %7780 = vmatpush1.msra.mxu0 0.0
        %7781 = vmatprep.subr.mxu0 0.0
        %7782 = vmatpush1.msra.mxu0 0.0
        %7783 = vmatprep.subr.mxu0 0.0
        %7784 = vmatpush1.msra.mxu0 0.0
        %7785 = vmatprep.subr.mxu0 0.0
        %7786 = vmatpush1.msra.mxu0 0.0
        %7787 = vmatprep.subr.mxu0 0.0
        %7788 = vmatpush1.msra.mxu0 0.0
        %7789 = vmatprep.subr.mxu0 0.0
        %7790 = vmatpush1.msra.mxu0 0.0
        %7791 = vmatprep.subr.mxu0 0.0
        %7792 = vmatpush1.msra.mxu0 0.0
        %7793 = vmatprep.subr.mxu0 0.0
        %7794 = vmatpush1.msra.mxu0 0.0
        %7795 = vmatprep.subr.mxu0 0.0
        %7796 = vmatpush1.msra.mxu0 0.0
        %7797 = vmatprep.subr.mxu0 0.0
        %7798 = vmatpush1.msra.mxu0 0.0
        %7799 = vmatprep.subr.mxu0 0.0
        %7800 = vmatpush1.msra.mxu0 0.0
        %7801 = vmatprep.subr.mxu0 0.0
        %7802 = vmatpush1.msra.mxu0 0.0
        %7803 = vmatprep.subr.mxu0 0.0
        %7804 = vmatpush1.msra.mxu0 0.0
        %7805 = vmatprep.subr.mxu0 0.0
        %7806 = vmatpush1.msra.mxu0 0.0
        %7807 = vmatprep.subr.mxu0 0.0
        %7808 = vmatpush1.msra.mxu0 0.0
        %7809 = vmatprep.subr.mxu0 0.0
        %7810 = vmatpush1.msra.mxu0 0.0
        %7811 = vmatprep.subr.mxu0 0.0
        %7812 = vmatpush1.msra.mxu0 0.0
        %7813 = vmatprep.subr.mxu0 0.0
        %7814 = vmatpush1.msra.mxu0 0.0
        %7815 = vmatprep.subr.mxu0 0.0
        %7816 = vmatpush1.msra.mxu0 0.0
        %7817 = vmatprep.subr.mxu0 0.0
        %7818 = vmatpush1.msra.mxu0 0.0
        %7819 = vmatprep.subr.mxu0 0.0
        %7820 = vmatpush1.msra.mxu0 0.0
        %7821 = vmatprep.subr.mxu0 0.0
        %7822 = vmatpush1.msra.mxu0 0.0
        %7823 = vmatprep.subr.mxu0 0.0
        %7824 = vmatpush1.msra.mxu0 0.0
        %7825 = vmatprep.subr.mxu0 0.0
        %7826 = vmatpush1.msra.mxu0 0.0
        %7827 = vmatprep.subr.mxu0 0.0
        %7828 = vmatpush1.msra.mxu0 0.0
        %7829 = vmatprep.subr.mxu0 0.0
        %7830 = vmatpush1.msra.mxu0 0.0
        %7831 = vmatprep.subr.mxu0 0.0
        %7832 = vmatpush1.msra.mxu0 0.0
        %7833 = vmatprep.subr.mxu0 0.0
        %7834 = vmatpush1.msra.mxu0 0.0
        %7835 = vmatprep.mubr.f32.mxu0 0.0
        %7836 = vmatmul.mubr.f32.gmra.mrb[0].mxu0 %v7698
        %v7837 = vpop.f32.mrb[0].mxu0
        %v7838 = vadd.f32 0.0, %v7837
        %v7839 = vpop.f32.mrb[0].mxu0
        %v7840 = vadd.f32 0.0, %v7839
        %7841 = vdwg.mxu0
        %7842 = vmatprep.subr.mxu0 %v7694
        %7843 = vmatpush1.msra.mxu0 %v7693
        %7844 = vmatprep.subr.mxu0 0.0
        %7845 = vmatpush1.msra.mxu0 0.0
        %7846 = vmatprep.subr.mxu0 0.0
        %7847 = vmatpush1.msra.mxu0 0.0
        %7848 = vmatprep.subr.mxu0 0.0
        %7849 = vmatpush1.msra.mxu0 0.0
        %7850 = vmatprep.subr.mxu0 0.0
        %7851 = vmatpush1.msra.mxu0 0.0
        %7852 = vmatprep.subr.mxu0 0.0
        %7853 = vmatpush1.msra.mxu0 0.0
        %7854 = vmatprep.subr.mxu0 0.0
        %7855 = vmatpush1.msra.mxu0 0.0
        %7856 = vmatprep.subr.mxu0 0.0
        %7857 = vmatpush1.msra.mxu0 0.0
        %7858 = vmatprep.subr.mxu0 0.0
        %7859 = vmatpush1.msra.mxu0 0.0
        %7860 = vmatprep.subr.mxu0 0.0
        %7861 = vmatpush1.msra.mxu0 0.0
        %7862 = vmatprep.subr.mxu0 0.0
        %7863 = vmatpush1.msra.mxu0 0.0
        %7864 = vmatprep.subr.mxu0 0.0
        %7865 = vmatpush1.msra.mxu0 0.0
        %7866 = vmatprep.subr.mxu0 0.0
        %7867 = vmatpush1.msra.mxu0 0.0
        %7868 = vmatprep.subr.mxu0 0.0
        %7869 = vmatpush1.msra.mxu0 0.0
        %7870 = vmatprep.subr.mxu0 0.0
        %7871 = vmatpush1.msra.mxu0 0.0
        %7872 = vmatprep.subr.mxu0 0.0
        %7873 = vmatpush1.msra.mxu0 0.0
        %7874 = vmatprep.subr.mxu0 0.0
        %7875 = vmatpush1.msra.mxu0 0.0
        %7876 = vmatprep.subr.mxu0 0.0
        %7877 = vmatpush1.msra.mxu0 0.0
        %7878 = vmatprep.subr.mxu0 0.0
        %7879 = vmatpush1.msra.mxu0 0.0
        %7880 = vmatprep.subr.mxu0 0.0
        %7881 = vmatpush1.msra.mxu0 0.0
        %7882 = vmatprep.subr.mxu0 0.0
        %7883 = vmatpush1.msra.mxu0 0.0
        %7884 = vmatprep.subr.mxu0 0.0
        %7885 = vmatpush1.msra.mxu0 0.0
        %7886 = vmatprep.subr.mxu0 0.0
        %7887 = vmatpush1.msra.mxu0 0.0
        %7888 = vmatprep.subr.mxu0 0.0
        %7889 = vmatpush1.msra.mxu0 0.0
        %7890 = vmatprep.subr.mxu0 0.0
        %7891 = vmatpush1.msra.mxu0 0.0
        %7892 = vmatprep.subr.mxu0 0.0
        %7893 = vmatpush1.msra.mxu0 0.0
        %7894 = vmatprep.subr.mxu0 0.0
        %7895 = vmatpush1.msra.mxu0 0.0
        %7896 = vmatprep.subr.mxu0 0.0
        %7897 = vmatpush1.msra.mxu0 0.0
        %7898 = vmatprep.subr.mxu0 0.0
        %7899 = vmatpush1.msra.mxu0 0.0
        %7900 = vmatprep.subr.mxu0 0.0
        %7901 = vmatpush1.msra.mxu0 0.0
        %7902 = vmatprep.subr.mxu0 0.0
        %7903 = vmatpush1.msra.mxu0 0.0
        %7904 = vmatprep.subr.mxu0 0.0
        %7905 = vmatpush1.msra.mxu0 0.0
        %7906 = vmatprep.mubr.f32.mxu0 0.0
        %7907 = vmatmul.mubr.f32.gmra.mrb[0].mxu0 %v7698
        %v7908 = vpop.f32.mrb[0].mxu0
        %v7909 = vadd.f32 0.0, %v7908
        %v7910 = vpop.f32.mrb[0].mxu0
        %v7911 = vadd.f32 0.0, %v7910
        %7912 = vdwg.mxu0
        %7913 = vmatprep.subr.mxu0 %v7696
        %7914 = vmatpush1.msra.mxu0 %v7695
        %7915 = vmatprep.subr.mxu0 0.0
        %7916 = vmatpush1.msra.mxu0 0.0
        %7917 = vmatprep.subr.mxu0 0.0
        %7918 = vmatpush1.msra.mxu0 0.0
        %7919 = vmatprep.subr.mxu0 0.0
        %7920 = vmatpush1.msra.mxu0 0.0
        %7921 = vmatprep.subr.mxu0 0.0
        %7922 = vmatpush1.msra.mxu0 0.0
        %7923 = vmatprep.subr.mxu0 0.0
        %7924 = vmatpush1.msra.mxu0 0.0
        %7925 = vmatprep.subr.mxu0 0.0
        %7926 = vmatpush1.msra.mxu0 0.0
        %7927 = vmatprep.subr.mxu0 0.0
        %7928 = vmatpush1.msra.mxu0 0.0
        %7929 = vmatprep.subr.mxu0 0.0
        %7930 = vmatpush1.msra.mxu0 0.0
        %7931 = vmatprep.subr.mxu0 0.0
        %7932 = vmatpush1.msra.mxu0 0.0
        %7933 = vmatprep.subr.mxu0 0.0
        %7934 = vmatpush1.msra.mxu0 0.0
        %7935 = vmatprep.subr.mxu0 0.0
        %7936 = vmatpush1.msra.mxu0 0.0
        %7937 = vmatprep.subr.mxu0 0.0
        %7938 = vmatpush1.msra.mxu0 0.0
        %7939 = vmatprep.subr.mxu0 0.0
        %7940 = vmatpush1.msra.mxu0 0.0
        %7941 = vmatprep.subr.mxu0 0.0
        %7942 = vmatpush1.msra.mxu0 0.0
        %7943 = vmatprep.subr.mxu0 0.0
        %7944 = vmatpush1.msra.mxu0 0.0
        %7945 = vmatprep.subr.mxu0 0.0
        %7946 = vmatpush1.msra.mxu0 0.0
        %7947 = vmatprep.subr.mxu0 0.0
        %7948 = vmatpush1.msra.mxu0 0.0
        %7949 = vmatprep.subr.mxu0 0.0
        %7950 = vmatpush1.msra.mxu0 0.0
        %7951 = vmatprep.subr.mxu0 0.0
        %7952 = vmatpush1.msra.mxu0 0.0
        %7953 = vmatprep.subr.mxu0 0.0
        %7954 = vmatpush1.msra.mxu0 0.0
        %7955 = vmatprep.subr.mxu0 0.0
        %7956 = vmatpush1.msra.mxu0 0.0
        %7957 = vmatprep.subr.mxu0 0.0
        %7958 = vmatpush1.msra.mxu0 0.0
        %7959 = vmatprep.subr.mxu0 0.0
        %7960 = vmatpush1.msra.mxu0 0.0
        %7961 = vmatprep.subr.mxu0 0.0
        %7962 = vmatpush1.msra.mxu0 0.0
        %7963 = vmatprep.subr.mxu0 0.0
        %7964 = vmatpush1.msra.mxu0 0.0
        %7965 = vmatprep.subr.mxu0 0.0
        %7966 = vmatpush1.msra.mxu0 0.0
        %7967 = vmatprep.subr.mxu0 0.0
        %7968 = vmatpush1.msra.mxu0 0.0
        %7969 = vmatprep.subr.mxu0 0.0
        %7970 = vmatpush1.msra.mxu0 0.0
        %7971 = vmatprep.subr.mxu0 0.0
        %7972 = vmatpush1.msra.mxu0 0.0
        %7973 = vmatprep.subr.mxu0 0.0
        %7974 = vmatpush1.msra.mxu0 0.0
        %7975 = vmatprep.subr.mxu0 0.0
        %7976 = vmatpush1.msra.mxu0 0.0
        %7977 = vmatprep.mubr.f32.mxu0 0.0
        %7978 = vmatmul.mubr.f32.gmra.mrb[0].mxu0 %v7698
        %v7979 = vpop.f32.mrb[0].mxu0
        %v7980 = vadd.f32 0.0, %v7979
        %v7981 = vpop.f32.mrb[0].mxu0
        %v7982 = vadd.f32 0.0, %v7981
        %7983 = vdwg.mxu0
        %v7984 = vadd.f32 %v7647, %v7767
        %v7985 = vadd.f32 %v7648, %v7769
        %v7986 = vadd.f32 %v7649, %v7838
        %v7987 = vadd.f32 %v7650, %v7840
        %v7988 = vadd.f32 %v7651, %v7909
        %v7989 = vadd.f32 %v7652, %v7911
        %v7990 = vadd.f32 %v7653, %v7980
        %v7991 = vadd.f32 %v7654, %v7982
        %v7993 = vsel %vm807, %v256, 0
        %7995 = vmatprep.subr.mxu0 %v1384
        %7996 = vmatpush1.msra.mxu0 %v1383
        %7997 = vmatprep.subr.mxu0 0.0
        %7998 = vmatpush1.msra.mxu0 0.0
        %7999 = vmatprep.subr.mxu0 0.0
        %8000 = vmatpush1.msra.mxu0 0.0
        %8001 = vmatprep.subr.mxu0 0.0
        %8002 = vmatpush1.msra.mxu0 0.0
        %8003 = vmatprep.subr.mxu0 0.0
        %8004 = vmatpush1.msra.mxu0 0.0
        %8005 = vmatprep.subr.mxu0 0.0
        %8006 = vmatpush1.msra.mxu0 0.0
        %8007 = vmatprep.subr.mxu0 0.0
        %8008 = vmatpush1.msra.mxu0 0.0
        %8009 = vmatprep.subr.mxu0 0.0
        %8010 = vmatpush1.msra.mxu0 0.0
        %8011 = vmatprep.subr.mxu0 0.0
        %8012 = vmatpush1.msra.mxu0 0.0
        %8013 = vmatprep.subr.mxu0 0.0
        %8014 = vmatpush1.msra.mxu0 0.0
        %8015 = vmatprep.subr.mxu0 0.0
        %8016 = vmatpush1.msra.mxu0 0.0
        %8017 = vmatprep.subr.mxu0 0.0
        %8018 = vmatpush1.msra.mxu0 0.0
        %8019 = vmatprep.subr.mxu0 0.0
        %8020 = vmatpush1.msra.mxu0 0.0
        %8021 = vmatprep.subr.mxu0 0.0
        %8022 = vmatpush1.msra.mxu0 0.0
        %8023 = vmatprep.subr.mxu0 0.0
        %8024 = vmatpush1.msra.mxu0 0.0
        %8025 = vmatprep.subr.mxu0 0.0
        %8026 = vmatpush1.msra.mxu0 0.0
        %8027 = vmatprep.subr.mxu0 0.0
        %8028 = vmatpush1.msra.mxu0 0.0
        %8029 = vmatprep.subr.mxu0 0.0
        %8030 = vmatpush1.msra.mxu0 0.0
        %8031 = vmatprep.subr.mxu0 0.0
        %8032 = vmatpush1.msra.mxu0 0.0
        %8033 = vmatprep.subr.mxu0 0.0
        %8034 = vmatpush1.msra.mxu0 0.0
        %8035 = vmatprep.subr.mxu0 0.0
        %8036 = vmatpush1.msra.mxu0 0.0
        %8037 = vmatprep.subr.mxu0 0.0
        %8038 = vmatpush1.msra.mxu0 0.0
        %8039 = vmatprep.subr.mxu0 0.0
        %8040 = vmatpush1.msra.mxu0 0.0
        %8041 = vmatprep.subr.mxu0 0.0
        %8042 = vmatpush1.msra.mxu0 0.0
        %8043 = vmatprep.subr.mxu0 0.0
        %8044 = vmatpush1.msra.mxu0 0.0
        %8045 = vmatprep.subr.mxu0 0.0
        %8046 = vmatpush1.msra.mxu0 0.0
        %8047 = vmatprep.subr.mxu0 0.0
        %8048 = vmatpush1.msra.mxu0 0.0
        %8049 = vmatprep.subr.mxu0 0.0
        %8050 = vmatpush1.msra.mxu0 0.0
        %8051 = vmatprep.subr.mxu0 0.0
        %8052 = vmatpush1.msra.mxu0 0.0
        %8053 = vmatprep.subr.mxu0 0.0
        %8054 = vmatpush1.msra.mxu0 0.0
        %8055 = vmatprep.subr.mxu0 0.0
        %8056 = vmatpush1.msra.mxu0 0.0
        %8057 = vmatprep.subr.mxu0 0.0
        %8058 = vmatpush1.msra.mxu0 0.0
        %8059 = vmatprep.mubr.f32.mxu0 0.0
        %8060 = vmatmul.mubr.f32.gmra.mrb[0].mxu0 %v7993
        %v8061 = vpop.f32.mrb[0].mxu0
        %v8062 = vadd.f32 0.0, %v8061
        %v8063 = vpop.f32.mrb[0].mxu0
        %v8064 = vadd.f32 0.0, %v8063
        %8065 = vdwg.mxu0
        %8066 = vmatprep.subr.mxu0 %v1386
        %8067 = vmatpush1.msra.mxu0 %v1385
        %8068 = vmatprep.subr.mxu0 0.0
        %8069 = vmatpush1.msra.mxu0 0.0
        %8070 = vmatprep.subr.mxu0 0.0
        %8071 = vmatpush1.msra.mxu0 0.0
        %8072 = vmatprep.subr.mxu0 0.0
        %8073 = vmatpush1.msra.mxu0 0.0
        %8074 = vmatprep.subr.mxu0 0.0
        %8075 = vmatpush1.msra.mxu0 0.0
        %8076 = vmatprep.subr.mxu0 0.0
        %8077 = vmatpush1.msra.mxu0 0.0
        %8078 = vmatprep.subr.mxu0 0.0
        %8079 = vmatpush1.msra.mxu0 0.0
        %8080 = vmatprep.subr.mxu0 0.0
        %8081 = vmatpush1.msra.mxu0 0.0
        %8082 = vmatprep.subr.mxu0 0.0
        %8083 = vmatpush1.msra.mxu0 0.0
        %8084 = vmatprep.subr.mxu0 0.0
        %8085 = vmatpush1.msra.mxu0 0.0
        %8086 = vmatprep.subr.mxu0 0.0
        %8087 = vmatpush1.msra.mxu0 0.0
        %8088 = vmatprep.subr.mxu0 0.0
        %8089 = vmatpush1.msra.mxu0 0.0
        %8090 = vmatprep.subr.mxu0 0.0
        %8091 = vmatpush1.msra.mxu0 0.0
        %8092 = vmatprep.subr.mxu0 0.0
        %8093 = vmatpush1.msra.mxu0 0.0
        %8094 = vmatprep.subr.mxu0 0.0
        %8095 = vmatpush1.msra.mxu0 0.0
        %8096 = vmatprep.subr.mxu0 0.0
        %8097 = vmatpush1.msra.mxu0 0.0
        %8098 = vmatprep.subr.mxu0 0.0
        %8099 = vmatpush1.msra.mxu0 0.0
        %8100 = vmatprep.subr.mxu0 0.0
        %8101 = vmatpush1.msra.mxu0 0.0
        %8102 = vmatprep.subr.mxu0 0.0
        %8103 = vmatpush1.msra.mxu0 0.0
        %8104 = vmatprep.subr.mxu0 0.0
        %8105 = vmatpush1.msra.mxu0 0.0
        %8106 = vmatprep.subr.mxu0 0.0
        %8107 = vmatpush1.msra.mxu0 0.0
        %8108 = vmatprep.subr.mxu0 0.0
        %8109 = vmatpush1.msra.mxu0 0.0
        %8110 = vmatprep.subr.mxu0 0.0
        %8111 = vmatpush1.msra.mxu0 0.0
        %8112 = vmatprep.subr.mxu0 0.0
        %8113 = vmatpush1.msra.mxu0 0.0
        %8114 = vmatprep.subr.mxu0 0.0
        %8115 = vmatpush1.msra.mxu0 0.0
        %8116 = vmatprep.subr.mxu0 0.0
        %8117 = vmatpush1.msra.mxu0 0.0
        %8118 = vmatprep.subr.mxu0 0.0
        %8119 = vmatpush1.msra.mxu0 0.0
        %8120 = vmatprep.subr.mxu0 0.0
        %8121 = vmatpush1.msra.mxu0 0.0
        %8122 = vmatprep.subr.mxu0 0.0
        %8123 = vmatpush1.msra.mxu0 0.0
        %8124 = vmatprep.subr.mxu0 0.0
        %8125 = vmatpush1.msra.mxu0 0.0
        %8126 = vmatprep.subr.mxu0 0.0
        %8127 = vmatpush1.msra.mxu0 0.0
        %8128 = vmatprep.subr.mxu0 0.0
        %8129 = vmatpush1.msra.mxu0 0.0
        %8130 = vmatprep.mubr.f32.mxu0 0.0
        %8131 = vmatmul.mubr.f32.gmra.mrb[0].mxu0 %v7993
        %v8132 = vpop.f32.mrb[0].mxu0
        %v8133 = vadd.f32 0.0, %v8132
        %v8134 = vpop.f32.mrb[0].mxu0
        %v8135 = vadd.f32 0.0, %v8134
        %8136 = vdwg.mxu0
        %8137 = vmatprep.subr.mxu0 %v1388
        %8138 = vmatpush1.msra.mxu0 %v1387
        %8139 = vmatprep.subr.mxu0 0.0
        %8140 = vmatpush1.msra.mxu0 0.0
        %8141 = vmatprep.subr.mxu0 0.0
        %8142 = vmatpush1.msra.mxu0 0.0
        %8143 = vmatprep.subr.mxu0 0.0
        %8144 = vmatpush1.msra.mxu0 0.0
        %8145 = vmatprep.subr.mxu0 0.0
        %8146 = vmatpush1.msra.mxu0 0.0
        %8147 = vmatprep.subr.mxu0 0.0
        %8148 = vmatpush1.msra.mxu0 0.0
        %8149 = vmatprep.subr.mxu0 0.0
        %8150 = vmatpush1.msra.mxu0 0.0
        %8151 = vmatprep.subr.mxu0 0.0
        %8152 = vmatpush1.msra.mxu0 0.0
        %8153 = vmatprep.subr.mxu0 0.0
        %8154 = vmatpush1.msra.mxu0 0.0
        %8155 = vmatprep.subr.mxu0 0.0
        %8156 = vmatpush1.msra.mxu0 0.0
        %8157 = vmatprep.subr.mxu0 0.0
        %8158 = vmatpush1.msra.mxu0 0.0
        %8159 = vmatprep.subr.mxu0 0.0
        %8160 = vmatpush1.msra.mxu0 0.0
        %8161 = vmatprep.subr.mxu0 0.0
        %8162 = vmatpush1.msra.mxu0 0.0
        %8163 = vmatprep.subr.mxu0 0.0
        %8164 = vmatpush1.msra.mxu0 0.0
        %8165 = vmatprep.subr.mxu0 0.0
        %8166 = vmatpush1.msra.mxu0 0.0
        %8167 = vmatprep.subr.mxu0 0.0
        %8168 = vmatpush1.msra.mxu0 0.0
        %8169 = vmatprep.subr.mxu0 0.0
        %8170 = vmatpush1.msra.mxu0 0.0
        %8171 = vmatprep.subr.mxu0 0.0
        %8172 = vmatpush1.msra.mxu0 0.0
        %8173 = vmatprep.subr.mxu0 0.0
        %8174 = vmatpush1.msra.mxu0 0.0
        %8175 = vmatprep.subr.mxu0 0.0
        %8176 = vmatpush1.msra.mxu0 0.0
        %8177 = vmatprep.subr.mxu0 0.0
        %8178 = vmatpush1.msra.mxu0 0.0
        %8179 = vmatprep.subr.mxu0 0.0
        %8180 = vmatpush1.msra.mxu0 0.0
        %8181 = vmatprep.subr.mxu0 0.0
        %8182 = vmatpush1.msra.mxu0 0.0
        %8183 = vmatprep.subr.mxu0 0.0
        %8184 = vmatpush1.msra.mxu0 0.0
        %8185 = vmatprep.subr.mxu0 0.0
        %8186 = vmatpush1.msra.mxu0 0.0
        %8187 = vmatprep.subr.mxu0 0.0
        %8188 = vmatpush1.msra.mxu0 0.0
        %8189 = vmatprep.subr.mxu0 0.0
        %8190 = vmatpush1.msra.mxu0 0.0
        %8191 = vmatprep.subr.mxu0 0.0
        %8192 = vmatpush1.msra.mxu0 0.0
        %8193 = vmatprep.subr.mxu0 0.0
        %8194 = vmatpush1.msra.mxu0 0.0
        %8195 = vmatprep.subr.mxu0 0.0
        %8196 = vmatpush1.msra.mxu0 0.0
        %8197 = vmatprep.subr.mxu0 0.0
        %8198 = vmatpush1.msra.mxu0 0.0
        %8199 = vmatprep.subr.mxu0 0.0
        %8200 = vmatpush1.msra.mxu0 0.0
        %8201 = vmatprep.mubr.f32.mxu0 0.0
        %8202 = vmatmul.mubr.f32.gmra.mrb[0].mxu0 %v7993
        %v8203 = vpop.f32.mrb[0].mxu0
        %v8204 = vadd.f32 0.0, %v8203
        %v8205 = vpop.f32.mrb[0].mxu0
        %v8206 = vadd.f32 0.0, %v8205
        %8207 = vdwg.mxu0
        %8208 = vmatprep.subr.mxu0 %v1390
        %8209 = vmatpush1.msra.mxu0 %v1389
        %8210 = vmatprep.subr.mxu0 0.0
        %8211 = vmatpush1.msra.mxu0 0.0
        %8212 = vmatprep.subr.mxu0 0.0
        %8213 = vmatpush1.msra.mxu0 0.0
        %8214 = vmatprep.subr.mxu0 0.0
        %8215 = vmatpush1.msra.mxu0 0.0
        %8216 = vmatprep.subr.mxu0 0.0
        %8217 = vmatpush1.msra.mxu0 0.0
        %8218 = vmatprep.subr.mxu0 0.0
        %8219 = vmatpush1.msra.mxu0 0.0
        %8220 = vmatprep.subr.mxu0 0.0
        %8221 = vmatpush1.msra.mxu0 0.0
        %8222 = vmatprep.subr.mxu0 0.0
        %8223 = vmatpush1.msra.mxu0 0.0
        %8224 = vmatprep.subr.mxu0 0.0
        %8225 = vmatpush1.msra.mxu0 0.0
        %8226 = vmatprep.subr.mxu0 0.0
        %8227 = vmatpush1.msra.mxu0 0.0
        %8228 = vmatprep.subr.mxu0 0.0
        %8229 = vmatpush1.msra.mxu0 0.0
        %8230 = vmatprep.subr.mxu0 0.0
        %8231 = vmatpush1.msra.mxu0 0.0
        %8232 = vmatprep.subr.mxu0 0.0
        %8233 = vmatpush1.msra.mxu0 0.0
        %8234 = vmatprep.subr.mxu0 0.0
        %8235 = vmatpush1.msra.mxu0 0.0
        %8236 = vmatprep.subr.mxu0 0.0
        %8237 = vmatpush1.msra.mxu0 0.0
        %8238 = vmatprep.subr.mxu0 0.0
        %8239 = vmatpush1.msra.mxu0 0.0
        %8240 = vmatprep.subr.mxu0 0.0
        %8241 = vmatpush1.msra.mxu0 0.0
        %8242 = vmatprep.subr.mxu0 0.0
        %8243 = vmatpush1.msra.mxu0 0.0
        %8244 = vmatprep.subr.mxu0 0.0
        %8245 = vmatpush1.msra.mxu0 0.0
        %8246 = vmatprep.subr.mxu0 0.0
        %8247 = vmatpush1.msra.mxu0 0.0
        %8248 = vmatprep.subr.mxu0 0.0
        %8249 = vmatpush1.msra.mxu0 0.0
        %8250 = vmatprep.subr.mxu0 0.0
        %8251 = vmatpush1.msra.mxu0 0.0
        %8252 = vmatprep.subr.mxu0 0.0
        %8253 = vmatpush1.msra.mxu0 0.0
        %8254 = vmatprep.subr.mxu0 0.0
        %8255 = vmatpush1.msra.mxu0 0.0
        %8256 = vmatprep.subr.mxu0 0.0
        %8257 = vmatpush1.msra.mxu0 0.0
        %8258 = vmatprep.subr.mxu0 0.0
        %8259 = vmatpush1.msra.mxu0 0.0
        %8260 = vmatprep.subr.mxu0 0.0
        %8261 = vmatpush1.msra.mxu0 0.0
        %8262 = vmatprep.subr.mxu0 0.0
        %8263 = vmatpush1.msra.mxu0 0.0
        %8264 = vmatprep.subr.mxu0 0.0
        %8265 = vmatpush1.msra.mxu0 0.0
        %8266 = vmatprep.subr.mxu0 0.0
        %8267 = vmatpush1.msra.mxu0 0.0
        %8268 = vmatprep.subr.mxu0 0.0
        %8269 = vmatpush1.msra.mxu0 0.0
        %8270 = vmatprep.subr.mxu0 0.0
        %8271 = vmatpush1.msra.mxu0 0.0
        %8272 = vmatprep.mubr.f32.mxu0 0.0
        %8273 = vmatmul.mubr.f32.gmra.mrb[0].mxu0 %v7993
        %v8274 = vpop.f32.mrb[0].mxu0
        %v8275 = vadd.f32 0.0, %v8274
        %v8276 = vpop.f32.mrb[0].mxu0
        %v8277 = vadd.f32 0.0, %v8276
        %8278 = vdwg.mxu0
        %v8279 = vadd.f32 %v7984, %v8062
        %v8280 = vadd.f32 %v7985, %v8064
        %v8281 = vadd.f32 %v7986, %v8133
        %v8282 = vadd.f32 %v7987, %v8135
        %v8283 = vadd.f32 %v7988, %v8204
        %v8284 = vadd.f32 %v7989, %v8206
        %v8285 = vadd.f32 %v7990, %v8275
        %v8286 = vadd.f32 %v7991, %v8277
        %8287 = vrot.lane.b32.xlu0 %v2370, 112
        %v8288 = vpop.permute.xlu0 %8287
        %8289 = vrot.lane.b32.xlu0 %v2371, 112
        %v8290 = vpop.permute.xlu0 %8289
        %8291 = vrot.lane.b32.xlu0 %v2372, 112
        %v8292 = vpop.permute.xlu0 %8291
        %8293 = vrot.lane.b32.xlu0 %v2373, 112
        %v8294 = vpop.permute.xlu0 %8293
        %8295 = vrot.lane.b32.xlu0 %v2374, 112
        %v8296 = vpop.permute.xlu0 %8295
        %8297 = vrot.lane.b32.xlu0 %v2375, 112
        %v8298 = vpop.permute.xlu0 %8297
        %8299 = vrot.lane.b32.xlu0 %v2376, 112
        %v8300 = vpop.permute.xlu0 %8299
        %8301 = vrot.lane.b32.xlu0 %v2377, 112
        %v8302 = vpop.permute.xlu0 %8301
        %8303 = vrot.lane.b32.xlu0 %v2378, 112
        %v8304 = vpop.permute.xlu0 %8303
        %v8305 = vsel %vm7335, %v8288, %v8290
        %v8306 = vsel %vm7335, %v8290, %v8292
        %v8307 = vsel %vm7335, %v8292, %v8294
        %v8308 = vsel %vm7335, %v8294, %v8296
        %v8309 = vsel %vm7335, %v8296, %v8298
        %v8310 = vsel %vm7335, %v8298, %v8300
        %v8311 = vsel %vm7335, %v8300, %v8302
        %v8312 = vsel %vm7335, %v8302, %v8304
        %v8321 = vsel %vm406, %v8305, 0.0
        %v8322 = vsel %vm407, %v8306, 0.0
        %v8323 = vsel %vm408, %v8307, 0.0
        %v8324 = vsel %vm409, %v8308, 0.0
        %v8325 = vsel %vm410, %v8309, 0.0
        %v8326 = vsel %vm411, %v8310, 0.0
        %v8327 = vsel %vm412, %v8311, 0.0
        %v8328 = vsel %vm413, %v8312, 0.0
        %v8330 = vsel %vm807, %v257, 0
        %8332 = vmatprep.subr.mxu0 %v8322
        %8333 = vmatpush1.msra.mxu0 %v8321
        %8334 = vmatprep.subr.mxu0 0.0
        %8335 = vmatpush1.msra.mxu0 0.0
        %8336 = vmatprep.subr.mxu0 0.0
        %8337 = vmatpush1.msra.mxu0 0.0
        %8338 = vmatprep.subr.mxu0 0.0
        %8339 = vmatpush1.msra.mxu0 0.0
        %8340 = vmatprep.subr.mxu0 0.0
        %8341 = vmatpush1.msra.mxu0 0.0
        %8342 = vmatprep.subr.mxu0 0.0
        %8343 = vmatpush1.msra.mxu0 0.0
        %8344 = vmatprep.subr.mxu0 0.0
        %8345 = vmatpush1.msra.mxu0 0.0
        %8346 = vmatprep.subr.mxu0 0.0
        %8347 = vmatpush1.msra.mxu0 0.0
        %8348 = vmatprep.subr.mxu0 0.0
        %8349 = vmatpush1.msra.mxu0 0.0
        %8350 = vmatprep.subr.mxu0 0.0
        %8351 = vmatpush1.msra.mxu0 0.0
        %8352 = vmatprep.subr.mxu0 0.0
        %8353 = vmatpush1.msra.mxu0 0.0
        %8354 = vmatprep.subr.mxu0 0.0
        %8355 = vmatpush1.msra.mxu0 0.0
        %8356 = vmatprep.subr.mxu0 0.0
        %8357 = vmatpush1.msra.mxu0 0.0
        %8358 = vmatprep.subr.mxu0 0.0
        %8359 = vmatpush1.msra.mxu0 0.0
        %8360 = vmatprep.subr.mxu0 0.0
        %8361 = vmatpush1.msra.mxu0 0.0
        %8362 = vmatprep.subr.mxu0 0.0
        %8363 = vmatpush1.msra.mxu0 0.0
        %8364 = vmatprep.subr.mxu0 0.0
        %8365 = vmatpush1.msra.mxu0 0.0
        %8366 = vmatprep.subr.mxu0 0.0
        %8367 = vmatpush1.msra.mxu0 0.0
        %8368 = vmatprep.subr.mxu0 0.0
        %8369 = vmatpush1.msra.mxu0 0.0
        %8370 = vmatprep.subr.mxu0 0.0
        %8371 = vmatpush1.msra.mxu0 0.0
        %8372 = vmatprep.subr.mxu0 0.0
        %8373 = vmatpush1.msra.mxu0 0.0
        %8374 = vmatprep.subr.mxu0 0.0
        %8375 = vmatpush1.msra.mxu0 0.0
        %8376 = vmatprep.subr.mxu0 0.0
        %8377 = vmatpush1.msra.mxu0 0.0
        %8378 = vmatprep.subr.mxu0 0.0
        %8379 = vmatpush1.msra.mxu0 0.0
        %8380 = vmatprep.subr.mxu0 0.0
        %8381 = vmatpush1.msra.mxu0 0.0
        %8382 = vmatprep.subr.mxu0 0.0
        %8383 = vmatpush1.msra.mxu0 0.0
        %8384 = vmatprep.subr.mxu0 0.0
        %8385 = vmatpush1.msra.mxu0 0.0
        %8386 = vmatprep.subr.mxu0 0.0
        %8387 = vmatpush1.msra.mxu0 0.0
        %8388 = vmatprep.subr.mxu0 0.0
        %8389 = vmatpush1.msra.mxu0 0.0
        %8390 = vmatprep.subr.mxu0 0.0
        %8391 = vmatpush1.msra.mxu0 0.0
        %8392 = vmatprep.subr.mxu0 0.0
        %8393 = vmatpush1.msra.mxu0 0.0
        %8394 = vmatprep.subr.mxu0 0.0
        %8395 = vmatpush1.msra.mxu0 0.0
        %8396 = vmatprep.mubr.f32.mxu0 0.0
        %8397 = vmatmul.mubr.f32.gmra.mrb[0].mxu0 %v8330
        %v8398 = vpop.f32.mrb[0].mxu0
        %v8399 = vadd.f32 0.0, %v8398
        %v8400 = vpop.f32.mrb[0].mxu0
        %v8401 = vadd.f32 0.0, %v8400
        %8402 = vdwg.mxu0
        %8403 = vmatprep.subr.mxu0 %v8324
        %8404 = vmatpush1.msra.mxu0 %v8323
        %8405 = vmatprep.subr.mxu0 0.0
        %8406 = vmatpush1.msra.mxu0 0.0
        %8407 = vmatprep.subr.mxu0 0.0
        %8408 = vmatpush1.msra.mxu0 0.0
        %8409 = vmatprep.subr.mxu0 0.0
        %8410 = vmatpush1.msra.mxu0 0.0
        %8411 = vmatprep.subr.mxu0 0.0
        %8412 = vmatpush1.msra.mxu0 0.0
        %8413 = vmatprep.subr.mxu0 0.0
        %8414 = vmatpush1.msra.mxu0 0.0
        %8415 = vmatprep.subr.mxu0 0.0
        %8416 = vmatpush1.msra.mxu0 0.0
        %8417 = vmatprep.subr.mxu0 0.0
        %8418 = vmatpush1.msra.mxu0 0.0
        %8419 = vmatprep.subr.mxu0 0.0
        %8420 = vmatpush1.msra.mxu0 0.0
        %8421 = vmatprep.subr.mxu0 0.0
        %8422 = vmatpush1.msra.mxu0 0.0
        %8423 = vmatprep.subr.mxu0 0.0
        %8424 = vmatpush1.msra.mxu0 0.0
        %8425 = vmatprep.subr.mxu0 0.0
        %8426 = vmatpush1.msra.mxu0 0.0
        %8427 = vmatprep.subr.mxu0 0.0
        %8428 = vmatpush1.msra.mxu0 0.0
        %8429 = vmatprep.subr.mxu0 0.0
        %8430 = vmatpush1.msra.mxu0 0.0
        %8431 = vmatprep.subr.mxu0 0.0
        %8432 = vmatpush1.msra.mxu0 0.0
        %8433 = vmatprep.subr.mxu0 0.0
        %8434 = vmatpush1.msra.mxu0 0.0
        %8435 = vmatprep.subr.mxu0 0.0
        %8436 = vmatpush1.msra.mxu0 0.0
        %8437 = vmatprep.subr.mxu0 0.0
        %8438 = vmatpush1.msra.mxu0 0.0
        %8439 = vmatprep.subr.mxu0 0.0
        %8440 = vmatpush1.msra.mxu0 0.0
        %8441 = vmatprep.subr.mxu0 0.0
        %8442 = vmatpush1.msra.mxu0 0.0
        %8443 = vmatprep.subr.mxu0 0.0
        %8444 = vmatpush1.msra.mxu0 0.0
        %8445 = vmatprep.subr.mxu0 0.0
        %8446 = vmatpush1.msra.mxu0 0.0
        %8447 = vmatprep.subr.mxu0 0.0
        %8448 = vmatpush1.msra.mxu0 0.0
        %8449 = vmatprep.subr.mxu0 0.0
        %8450 = vmatpush1.msra.mxu0 0.0
        %8451 = vmatprep.subr.mxu0 0.0
        %8452 = vmatpush1.msra.mxu0 0.0
        %8453 = vmatprep.subr.mxu0 0.0
        %8454 = vmatpush1.msra.mxu0 0.0
        %8455 = vmatprep.subr.mxu0 0.0
        %8456 = vmatpush1.msra.mxu0 0.0
        %8457 = vmatprep.subr.mxu0 0.0
        %8458 = vmatpush1.msra.mxu0 0.0
        %8459 = vmatprep.subr.mxu0 0.0
        %8460 = vmatpush1.msra.mxu0 0.0
        %8461 = vmatprep.subr.mxu0 0.0
        %8462 = vmatpush1.msra.mxu0 0.0
        %8463 = vmatprep.subr.mxu0 0.0
        %8464 = vmatpush1.msra.mxu0 0.0
        %8465 = vmatprep.subr.mxu0 0.0
        %8466 = vmatpush1.msra.mxu0 0.0
        %8467 = vmatprep.mubr.f32.mxu0 0.0
        %8468 = vmatmul.mubr.f32.gmra.mrb[0].mxu0 %v8330
        %v8469 = vpop.f32.mrb[0].mxu0
        %v8470 = vadd.f32 0.0, %v8469
        %v8471 = vpop.f32.mrb[0].mxu0
        %v8472 = vadd.f32 0.0, %v8471
        %8473 = vdwg.mxu0
        %8474 = vmatprep.subr.mxu0 %v8326
        %8475 = vmatpush1.msra.mxu0 %v8325
        %8476 = vmatprep.subr.mxu0 0.0
        %8477 = vmatpush1.msra.mxu0 0.0
        %8478 = vmatprep.subr.mxu0 0.0
        %8479 = vmatpush1.msra.mxu0 0.0
        %8480 = vmatprep.subr.mxu0 0.0
        %8481 = vmatpush1.msra.mxu0 0.0
        %8482 = vmatprep.subr.mxu0 0.0
        %8483 = vmatpush1.msra.mxu0 0.0
        %8484 = vmatprep.subr.mxu0 0.0
        %8485 = vmatpush1.msra.mxu0 0.0
        %8486 = vmatprep.subr.mxu0 0.0
        %8487 = vmatpush1.msra.mxu0 0.0
        %8488 = vmatprep.subr.mxu0 0.0
        %8489 = vmatpush1.msra.mxu0 0.0
        %8490 = vmatprep.subr.mxu0 0.0
        %8491 = vmatpush1.msra.mxu0 0.0
        %8492 = vmatprep.subr.mxu0 0.0
        %8493 = vmatpush1.msra.mxu0 0.0
        %8494 = vmatprep.subr.mxu0 0.0
        %8495 = vmatpush1.msra.mxu0 0.0
        %8496 = vmatprep.subr.mxu0 0.0
        %8497 = vmatpush1.msra.mxu0 0.0
        %8498 = vmatprep.subr.mxu0 0.0
        %8499 = vmatpush1.msra.mxu0 0.0
        %8500 = vmatprep.subr.mxu0 0.0
        %8501 = vmatpush1.msra.mxu0 0.0
        %8502 = vmatprep.subr.mxu0 0.0
        %8503 = vmatpush1.msra.mxu0 0.0
        %8504 = vmatprep.subr.mxu0 0.0
        %8505 = vmatpush1.msra.mxu0 0.0
        %8506 = vmatprep.subr.mxu0 0.0
        %8507 = vmatpush1.msra.mxu0 0.0
        %8508 = vmatprep.subr.mxu0 0.0
        %8509 = vmatpush1.msra.mxu0 0.0
        %8510 = vmatprep.subr.mxu0 0.0
        %8511 = vmatpush1.msra.mxu0 0.0
        %8512 = vmatprep.subr.mxu0 0.0
        %8513 = vmatpush1.msra.mxu0 0.0
        %8514 = vmatprep.subr.mxu0 0.0
        %8515 = vmatpush1.msra.mxu0 0.0
        %8516 = vmatprep.subr.mxu0 0.0
        %8517 = vmatpush1.msra.mxu0 0.0
        %8518 = vmatprep.subr.mxu0 0.0
        %8519 = vmatpush1.msra.mxu0 0.0
        %8520 = vmatprep.subr.mxu0 0.0
        %8521 = vmatpush1.msra.mxu0 0.0
        %8522 = vmatprep.subr.mxu0 0.0
        %8523 = vmatpush1.msra.mxu0 0.0
        %8524 = vmatprep.subr.mxu0 0.0
        %8525 = vmatpush1.msra.mxu0 0.0
        %8526 = vmatprep.subr.mxu0 0.0
        %8527 = vmatpush1.msra.mxu0 0.0
        %8528 = vmatprep.subr.mxu0 0.0
        %8529 = vmatpush1.msra.mxu0 0.0
        %8530 = vmatprep.subr.mxu0 0.0
        %8531 = vmatpush1.msra.mxu0 0.0
        %8532 = vmatprep.subr.mxu0 0.0
        %8533 = vmatpush1.msra.mxu0 0.0
        %8534 = vmatprep.subr.mxu0 0.0
        %8535 = vmatpush1.msra.mxu0 0.0
        %8536 = vmatprep.subr.mxu0 0.0
        %8537 = vmatpush1.msra.mxu0 0.0
        %8538 = vmatprep.mubr.f32.mxu0 0.0
        %8539 = vmatmul.mubr.f32.gmra.mrb[0].mxu0 %v8330
        %v8540 = vpop.f32.mrb[0].mxu0
        %v8541 = vadd.f32 0.0, %v8540
        %v8542 = vpop.f32.mrb[0].mxu0
        %v8543 = vadd.f32 0.0, %v8542
        %8544 = vdwg.mxu0
        %8545 = vmatprep.subr.mxu0 %v8328
        %8546 = vmatpush1.msra.mxu0 %v8327
        %8547 = vmatprep.subr.mxu0 0.0
        %8548 = vmatpush1.msra.mxu0 0.0
        %8549 = vmatprep.subr.mxu0 0.0
        %8550 = vmatpush1.msra.mxu0 0.0
        %8551 = vmatprep.subr.mxu0 0.0
        %8552 = vmatpush1.msra.mxu0 0.0
        %8553 = vmatprep.subr.mxu0 0.0
        %8554 = vmatpush1.msra.mxu0 0.0
        %8555 = vmatprep.subr.mxu0 0.0
        %8556 = vmatpush1.msra.mxu0 0.0
        %8557 = vmatprep.subr.mxu0 0.0
        %8558 = vmatpush1.msra.mxu0 0.0
        %8559 = vmatprep.subr.mxu0 0.0
        %8560 = vmatpush1.msra.mxu0 0.0
        %8561 = vmatprep.subr.mxu0 0.0
        %8562 = vmatpush1.msra.mxu0 0.0
        %8563 = vmatprep.subr.mxu0 0.0
        %8564 = vmatpush1.msra.mxu0 0.0
        %8565 = vmatprep.subr.mxu0 0.0
        %8566 = vmatpush1.msra.mxu0 0.0
        %8567 = vmatprep.subr.mxu0 0.0
        %8568 = vmatpush1.msra.mxu0 0.0
        %8569 = vmatprep.subr.mxu0 0.0
        %8570 = vmatpush1.msra.mxu0 0.0
        %8571 = vmatprep.subr.mxu0 0.0
        %8572 = vmatpush1.msra.mxu0 0.0
        %8573 = vmatprep.subr.mxu0 0.0
        %8574 = vmatpush1.msra.mxu0 0.0
        %8575 = vmatprep.subr.mxu0 0.0
        %8576 = vmatpush1.msra.mxu0 0.0
        %8577 = vmatprep.subr.mxu0 0.0
        %8578 = vmatpush1.msra.mxu0 0.0
        %8579 = vmatprep.subr.mxu0 0.0
        %8580 = vmatpush1.msra.mxu0 0.0
        %8581 = vmatprep.subr.mxu0 0.0
        %8582 = vmatpush1.msra.mxu0 0.0
        %8583 = vmatprep.subr.mxu0 0.0
        %8584 = vmatpush1.msra.mxu0 0.0
        %8585 = vmatprep.subr.mxu0 0.0
        %8586 = vmatpush1.msra.mxu0 0.0
        %8587 = vmatprep.subr.mxu0 0.0
        %8588 = vmatpush1.msra.mxu0 0.0
        %8589 = vmatprep.subr.mxu0 0.0
        %8590 = vmatpush1.msra.mxu0 0.0
        %8591 = vmatprep.subr.mxu0 0.0
        %8592 = vmatpush1.msra.mxu0 0.0
        %8593 = vmatprep.subr.mxu0 0.0
        %8594 = vmatpush1.msra.mxu0 0.0
        %8595 = vmatprep.subr.mxu0 0.0
        %8596 = vmatpush1.msra.mxu0 0.0
        %8597 = vmatprep.subr.mxu0 0.0
        %8598 = vmatpush1.msra.mxu0 0.0
        %8599 = vmatprep.subr.mxu0 0.0
        %8600 = vmatpush1.msra.mxu0 0.0
        %8601 = vmatprep.subr.mxu0 0.0
        %8602 = vmatpush1.msra.mxu0 0.0
        %8603 = vmatprep.subr.mxu0 0.0
        %8604 = vmatpush1.msra.mxu0 0.0
        %8605 = vmatprep.subr.mxu0 0.0
        %8606 = vmatpush1.msra.mxu0 0.0
        %8607 = vmatprep.subr.mxu0 0.0
        %8608 = vmatpush1.msra.mxu0 0.0
        %8609 = vmatprep.mubr.f32.mxu0 0.0
        %8610 = vmatmul.mubr.f32.gmra.mrb[0].mxu0 %v8330
        %v8611 = vpop.f32.mrb[0].mxu0
        %v8612 = vadd.f32 0.0, %v8611
        %v8613 = vpop.f32.mrb[0].mxu0
        %v8614 = vadd.f32 0.0, %v8613
        %8615 = vdwg.mxu0
        %v8616 = vadd.f32 %v8279, %v8399
        %v8617 = vadd.f32 %v8280, %v8401
        %v8618 = vadd.f32 %v8281, %v8470
        %v8619 = vadd.f32 %v8282, %v8472
        %v8620 = vadd.f32 %v8283, %v8541
        %v8621 = vadd.f32 %v8284, %v8543
        %v8622 = vadd.f32 %v8285, %v8612
        %v8623 = vadd.f32 %v8286, %v8614
        %v8624 = vld [vmem:[#allocation2 + $0x40] sm:$0xff]
        %v8625 = vld [vmem:[#allocation2 + $0x48] sm:$0xff]
        %v8626 = vld [vmem:[#allocation2 + $0x50] sm:$0xff]
        %v8627 = vld [vmem:[#allocation2 + $0x58] sm:$0xff]
        %v8628 = vld [vmem:[#allocation2 + $0x60] sm:$0xff]
        %v8629 = vld [vmem:[#allocation2 + $0x68] sm:$0xff]
        %v8630 = vld [vmem:[#allocation2 + $0x70] sm:$0xff]
        %v8631 = vld [vmem:[#allocation2 + $0x78] sm:$0xff]
        %v8632 = vld [vmem:[#allocation2 + $0x80] sm:$0xff]
        %8642 = vrot.lane.b32.xlu0 %v8624, 16
        %v8643 = vpop.permute.xlu0 %8642
        %8644 = vrot.lane.b32.xlu0 %v8625, 16
        %v8645 = vpop.permute.xlu0 %8644
        %8646 = vrot.lane.b32.xlu0 %v8626, 16
        %v8647 = vpop.permute.xlu0 %8646
        %8648 = vrot.lane.b32.xlu0 %v8627, 16
        %v8649 = vpop.permute.xlu0 %8648
        %8650 = vrot.lane.b32.xlu0 %v8628, 16
        %v8651 = vpop.permute.xlu0 %8650
        %8652 = vrot.lane.b32.xlu0 %v8629, 16
        %v8653 = vpop.permute.xlu0 %8652
        %8654 = vrot.lane.b32.xlu0 %v8630, 16
        %v8655 = vpop.permute.xlu0 %8654
        %8656 = vrot.lane.b32.xlu0 %v8631, 16
        %v8657 = vpop.permute.xlu0 %8656
        %8658 = vrot.lane.b32.xlu0 %v8632, 16
        %v8659 = vpop.permute.xlu0 %8658
        %v8660 = vsel %vm6700, %v8643, %v8645
        %v8661 = vsel %vm6700, %v8645, %v8647
        %v8662 = vsel %vm6700, %v8647, %v8649
        %v8663 = vsel %vm6700, %v8649, %v8651
        %v8664 = vsel %vm6700, %v8651, %v8653
        %v8665 = vsel %vm6700, %v8653, %v8655
        %v8666 = vsel %vm6700, %v8655, %v8657
        %v8667 = vsel %vm6700, %v8657, %v8659
        %v8676 = vsel %vm398, %v8660, 0.0
        %v8677 = vsel %vm399, %v8661, 0.0
        %v8678 = vsel %vm400, %v8662, 0.0
        %v8679 = vsel %vm401, %v8663, 0.0
        %v8680 = vsel %vm402, %v8664, 0.0
        %v8681 = vsel %vm403, %v8665, 0.0
        %v8682 = vsel %vm404, %v8666, 0.0
        %v8683 = vsel %vm405, %v8667, 0.0
        %v8685 = vsel %vm807, %v258, 0
        %8687 = vmatprep.subr.mxu0 %v8677
        %8688 = vmatpush1.msra.mxu0 %v8676
        %8689 = vmatprep.subr.mxu0 0.0
        %8690 = vmatpush1.msra.mxu0 0.0
        %8691 = vmatprep.subr.mxu0 0.0
        %8692 = vmatpush1.msra.mxu0 0.0
        %8693 = vmatprep.subr.mxu0 0.0
        %8694 = vmatpush1.msra.mxu0 0.0
        %8695 = vmatprep.subr.mxu0 0.0
        %8696 = vmatpush1.msra.mxu0 0.0
        %8697 = vmatprep.subr.mxu0 0.0
        %8698 = vmatpush1.msra.mxu0 0.0
        %8699 = vmatprep.subr.mxu0 0.0
        %8700 = vmatpush1.msra.mxu0 0.0
        %8701 = vmatprep.subr.mxu0 0.0
        %8702 = vmatpush1.msra.mxu0 0.0
        %8703 = vmatprep.subr.mxu0 0.0
        %8704 = vmatpush1.msra.mxu0 0.0
        %8705 = vmatprep.subr.mxu0 0.0
        %8706 = vmatpush1.msra.mxu0 0.0
        %8707 = vmatprep.subr.mxu0 0.0
        %8708 = vmatpush1.msra.mxu0 0.0
        %8709 = vmatprep.subr.mxu0 0.0
        %8710 = vmatpush1.msra.mxu0 0.0
        %8711 = vmatprep.subr.mxu0 0.0
        %8712 = vmatpush1.msra.mxu0 0.0
        %8713 = vmatprep.subr.mxu0 0.0
        %8714 = vmatpush1.msra.mxu0 0.0
        %8715 = vmatprep.subr.mxu0 0.0
        %8716 = vmatpush1.msra.mxu0 0.0
        %8717 = vmatprep.subr.mxu0 0.0
        %8718 = vmatpush1.msra.mxu0 0.0
        %8719 = vmatprep.subr.mxu0 0.0
        %8720 = vmatpush1.msra.mxu0 0.0
        %8721 = vmatprep.subr.mxu0 0.0
        %8722 = vmatpush1.msra.mxu0 0.0
        %8723 = vmatprep.subr.mxu0 0.0
        %8724 = vmatpush1.msra.mxu0 0.0
        %8725 = vmatprep.subr.mxu0 0.0
        %8726 = vmatpush1.msra.mxu0 0.0
        %8727 = vmatprep.subr.mxu0 0.0
        %8728 = vmatpush1.msra.mxu0 0.0
        %8729 = vmatprep.subr.mxu0 0.0
        %8730 = vmatpush1.msra.mxu0 0.0
        %8731 = vmatprep.subr.mxu0 0.0
        %8732 = vmatpush1.msra.mxu0 0.0
        %8733 = vmatprep.subr.mxu0 0.0
        %8734 = vmatpush1.msra.mxu0 0.0
        %8735 = vmatprep.subr.mxu0 0.0
        %8736 = vmatpush1.msra.mxu0 0.0
        %8737 = vmatprep.subr.mxu0 0.0
        %8738 = vmatpush1.msra.mxu0 0.0
        %8739 = vmatprep.subr.mxu0 0.0
        %8740 = vmatpush1.msra.mxu0 0.0
        %8741 = vmatprep.subr.mxu0 0.0
        %8742 = vmatpush1.msra.mxu0 0.0
        %8743 = vmatprep.subr.mxu0 0.0
        %8744 = vmatpush1.msra.mxu0 0.0
        %8745 = vmatprep.subr.mxu0 0.0
        %8746 = vmatpush1.msra.mxu0 0.0
        %8747 = vmatprep.subr.mxu0 0.0
        %8748 = vmatpush1.msra.mxu0 0.0
        %8749 = vmatprep.subr.mxu0 0.0
        %8750 = vmatpush1.msra.mxu0 0.0
        %8751 = vmatprep.mubr.f32.mxu0 0.0
        %8752 = vmatmul.mubr.f32.gmra.mrb[0].mxu0 %v8685
        %v8753 = vpop.f32.mrb[0].mxu0
        %v8754 = vadd.f32 0.0, %v8753
        %v8755 = vpop.f32.mrb[0].mxu0
        %v8756 = vadd.f32 0.0, %v8755
        %8757 = vdwg.mxu0
        %8758 = vmatprep.subr.mxu0 %v8679
        %8759 = vmatpush1.msra.mxu0 %v8678
        %8760 = vmatprep.subr.mxu0 0.0
        %8761 = vmatpush1.msra.mxu0 0.0
        %8762 = vmatprep.subr.mxu0 0.0
        %8763 = vmatpush1.msra.mxu0 0.0
        %8764 = vmatprep.subr.mxu0 0.0
        %8765 = vmatpush1.msra.mxu0 0.0
        %8766 = vmatprep.subr.mxu0 0.0
        %8767 = vmatpush1.msra.mxu0 0.0
        %8768 = vmatprep.subr.mxu0 0.0
        %8769 = vmatpush1.msra.mxu0 0.0
        %8770 = vmatprep.subr.mxu0 0.0
        %8771 = vmatpush1.msra.mxu0 0.0
        %8772 = vmatprep.subr.mxu0 0.0
        %8773 = vmatpush1.msra.mxu0 0.0
        %8774 = vmatprep.subr.mxu0 0.0
        %8775 = vmatpush1.msra.mxu0 0.0
        %8776 = vmatprep.subr.mxu0 0.0
        %8777 = vmatpush1.msra.mxu0 0.0
        %8778 = vmatprep.subr.mxu0 0.0
        %8779 = vmatpush1.msra.mxu0 0.0
        %8780 = vmatprep.subr.mxu0 0.0
        %8781 = vmatpush1.msra.mxu0 0.0
        %8782 = vmatprep.subr.mxu0 0.0
        %8783 = vmatpush1.msra.mxu0 0.0
        %8784 = vmatprep.subr.mxu0 0.0
        %8785 = vmatpush1.msra.mxu0 0.0
        %8786 = vmatprep.subr.mxu0 0.0
        %8787 = vmatpush1.msra.mxu0 0.0
        %8788 = vmatprep.subr.mxu0 0.0
        %8789 = vmatpush1.msra.mxu0 0.0
        %8790 = vmatprep.subr.mxu0 0.0
        %8791 = vmatpush1.msra.mxu0 0.0
        %8792 = vmatprep.subr.mxu0 0.0
        %8793 = vmatpush1.msra.mxu0 0.0
        %8794 = vmatprep.subr.mxu0 0.0
        %8795 = vmatpush1.msra.mxu0 0.0
        %8796 = vmatprep.subr.mxu0 0.0
        %8797 = vmatpush1.msra.mxu0 0.0
        %8798 = vmatprep.subr.mxu0 0.0
        %8799 = vmatpush1.msra.mxu0 0.0
        %8800 = vmatprep.subr.mxu0 0.0
        %8801 = vmatpush1.msra.mxu0 0.0
        %8802 = vmatprep.subr.mxu0 0.0
        %8803 = vmatpush1.msra.mxu0 0.0
        %8804 = vmatprep.subr.mxu0 0.0
        %8805 = vmatpush1.msra.mxu0 0.0
        %8806 = vmatprep.subr.mxu0 0.0
        %8807 = vmatpush1.msra.mxu0 0.0
        %8808 = vmatprep.subr.mxu0 0.0
        %8809 = vmatpush1.msra.mxu0 0.0
        %8810 = vmatprep.subr.mxu0 0.0
        %8811 = vmatpush1.msra.mxu0 0.0
        %8812 = vmatprep.subr.mxu0 0.0
        %8813 = vmatpush1.msra.mxu0 0.0
        %8814 = vmatprep.subr.mxu0 0.0
        %8815 = vmatpush1.msra.mxu0 0.0
        %8816 = vmatprep.subr.mxu0 0.0
        %8817 = vmatpush1.msra.mxu0 0.0
        %8818 = vmatprep.subr.mxu0 0.0
        %8819 = vmatpush1.msra.mxu0 0.0
        %8820 = vmatprep.subr.mxu0 0.0
        %8821 = vmatpush1.msra.mxu0 0.0
        %8822 = vmatprep.mubr.f32.mxu0 0.0
        %8823 = vmatmul.mubr.f32.gmra.mrb[0].mxu0 %v8685
        %v8824 = vpop.f32.mrb[0].mxu0
        %v8825 = vadd.f32 0.0, %v8824
        %v8826 = vpop.f32.mrb[0].mxu0
        %v8827 = vadd.f32 0.0, %v8826
        %8828 = vdwg.mxu0
        %8829 = vmatprep.subr.mxu0 %v8681
        %8830 = vmatpush1.msra.mxu0 %v8680
        %8831 = vmatprep.subr.mxu0 0.0
        %8832 = vmatpush1.msra.mxu0 0.0
        %8833 = vmatprep.subr.mxu0 0.0
        %8834 = vmatpush1.msra.mxu0 0.0
        %8835 = vmatprep.subr.mxu0 0.0
        %8836 = vmatpush1.msra.mxu0 0.0
        %8837 = vmatprep.subr.mxu0 0.0
        %8838 = vmatpush1.msra.mxu0 0.0
        %8839 = vmatprep.subr.mxu0 0.0
        %8840 = vmatpush1.msra.mxu0 0.0
        %8841 = vmatprep.subr.mxu0 0.0
        %8842 = vmatpush1.msra.mxu0 0.0
        %8843 = vmatprep.subr.mxu0 0.0
        %8844 = vmatpush1.msra.mxu0 0.0
        %8845 = vmatprep.subr.mxu0 0.0
        %8846 = vmatpush1.msra.mxu0 0.0
        %8847 = vmatprep.subr.mxu0 0.0
        %8848 = vmatpush1.msra.mxu0 0.0
        %8849 = vmatprep.subr.mxu0 0.0
        %8850 = vmatpush1.msra.mxu0 0.0
        %8851 = vmatprep.subr.mxu0 0.0
        %8852 = vmatpush1.msra.mxu0 0.0
        %8853 = vmatprep.subr.mxu0 0.0
        %8854 = vmatpush1.msra.mxu0 0.0
        %8855 = vmatprep.subr.mxu0 0.0
        %8856 = vmatpush1.msra.mxu0 0.0
        %8857 = vmatprep.subr.mxu0 0.0
        %8858 = vmatpush1.msra.mxu0 0.0
        %8859 = vmatprep.subr.mxu0 0.0
        %8860 = vmatpush1.msra.mxu0 0.0
        %8861 = vmatprep.subr.mxu0 0.0
        %8862 = vmatpush1.msra.mxu0 0.0
        %8863 = vmatprep.subr.mxu0 0.0
        %8864 = vmatpush1.msra.mxu0 0.0
        %8865 = vmatprep.subr.mxu0 0.0
        %8866 = vmatpush1.msra.mxu0 0.0
        %8867 = vmatprep.subr.mxu0 0.0
        %8868 = vmatpush1.msra.mxu0 0.0
        %8869 = vmatprep.subr.mxu0 0.0
        %8870 = vmatpush1.msra.mxu0 0.0
        %8871 = vmatprep.subr.mxu0 0.0
        %8872 = vmatpush1.msra.mxu0 0.0
        %8873 = vmatprep.subr.mxu0 0.0
        %8874 = vmatpush1.msra.mxu0 0.0
        %8875 = vmatprep.subr.mxu0 0.0
        %8876 = vmatpush1.msra.mxu0 0.0
        %8877 = vmatprep.subr.mxu0 0.0
        %8878 = vmatpush1.msra.mxu0 0.0
        %8879 = vmatprep.subr.mxu0 0.0
        %8880 = vmatpush1.msra.mxu0 0.0
        %8881 = vmatprep.subr.mxu0 0.0
        %8882 = vmatpush1.msra.mxu0 0.0
        %8883 = vmatprep.subr.mxu0 0.0
        %8884 = vmatpush1.msra.mxu0 0.0
        %8885 = vmatprep.subr.mxu0 0.0
        %8886 = vmatpush1.msra.mxu0 0.0
        %8887 = vmatprep.subr.mxu0 0.0
        %8888 = vmatpush1.msra.mxu0 0.0
        %8889 = vmatprep.subr.mxu0 0.0
        %8890 = vmatpush1.msra.mxu0 0.0
        %8891 = vmatprep.subr.mxu0 0.0
        %8892 = vmatpush1.msra.mxu0 0.0
        %8893 = vmatprep.mubr.f32.mxu0 0.0
        %8894 = vmatmul.mubr.f32.gmra.mrb[0].mxu0 %v8685
        %v8895 = vpop.f32.mrb[0].mxu0
        %v8896 = vadd.f32 0.0, %v8895
        %v8897 = vpop.f32.mrb[0].mxu0
        %v8898 = vadd.f32 0.0, %v8897
        %8899 = vdwg.mxu0
        %8900 = vmatprep.subr.mxu0 %v8683
        %8901 = vmatpush1.msra.mxu0 %v8682
        %8902 = vmatprep.subr.mxu0 0.0
        %8903 = vmatpush1.msra.mxu0 0.0
        %8904 = vmatprep.subr.mxu0 0.0
        %8905 = vmatpush1.msra.mxu0 0.0
        %8906 = vmatprep.subr.mxu0 0.0
        %8907 = vmatpush1.msra.mxu0 0.0
        %8908 = vmatprep.subr.mxu0 0.0
        %8909 = vmatpush1.msra.mxu0 0.0
        %8910 = vmatprep.subr.mxu0 0.0
        %8911 = vmatpush1.msra.mxu0 0.0
        %8912 = vmatprep.subr.mxu0 0.0
        %8913 = vmatpush1.msra.mxu0 0.0
        %8914 = vmatprep.subr.mxu0 0.0
        %8915 = vmatpush1.msra.mxu0 0.0
        %8916 = vmatprep.subr.mxu0 0.0
        %8917 = vmatpush1.msra.mxu0 0.0
        %8918 = vmatprep.subr.mxu0 0.0
        %8919 = vmatpush1.msra.mxu0 0.0
        %8920 = vmatprep.subr.mxu0 0.0
        %8921 = vmatpush1.msra.mxu0 0.0
        %8922 = vmatprep.subr.mxu0 0.0
        %8923 = vmatpush1.msra.mxu0 0.0
        %8924 = vmatprep.subr.mxu0 0.0
        %8925 = vmatpush1.msra.mxu0 0.0
        %8926 = vmatprep.subr.mxu0 0.0
        %8927 = vmatpush1.msra.mxu0 0.0
        %8928 = vmatprep.subr.mxu0 0.0
        %8929 = vmatpush1.msra.mxu0 0.0
        %8930 = vmatprep.subr.mxu0 0.0
        %8931 = vmatpush1.msra.mxu0 0.0
        %8932 = vmatprep.subr.mxu0 0.0
        %8933 = vmatpush1.msra.mxu0 0.0
        %8934 = vmatprep.subr.mxu0 0.0
        %8935 = vmatpush1.msra.mxu0 0.0
        %8936 = vmatprep.subr.mxu0 0.0
        %8937 = vmatpush1.msra.mxu0 0.0
        %8938 = vmatprep.subr.mxu0 0.0
        %8939 = vmatpush1.msra.mxu0 0.0
        %8940 = vmatprep.subr.mxu0 0.0
        %8941 = vmatpush1.msra.mxu0 0.0
        %8942 = vmatprep.subr.mxu0 0.0
        %8943 = vmatpush1.msra.mxu0 0.0
        %8944 = vmatprep.subr.mxu0 0.0
        %8945 = vmatpush1.msra.mxu0 0.0
        %8946 = vmatprep.subr.mxu0 0.0
        %8947 = vmatpush1.msra.mxu0 0.0
        %8948 = vmatprep.subr.mxu0 0.0
        %8949 = vmatpush1.msra.mxu0 0.0
        %8950 = vmatprep.subr.mxu0 0.0
        %8951 = vmatpush1.msra.mxu0 0.0
        %8952 = vmatprep.subr.mxu0 0.0
        %8953 = vmatpush1.msra.mxu0 0.0
        %8954 = vmatprep.subr.mxu0 0.0
        %8955 = vmatpush1.msra.mxu0 0.0
        %8956 = vmatprep.subr.mxu0 0.0
        %8957 = vmatpush1.msra.mxu0 0.0
        %8958 = vmatprep.subr.mxu0 0.0
        %8959 = vmatpush1.msra.mxu0 0.0
        %8960 = vmatprep.subr.mxu0 0.0
        %8961 = vmatpush1.msra.mxu0 0.0
        %8962 = vmatprep.subr.mxu0 0.0
        %8963 = vmatpush1.msra.mxu0 0.0
        %8964 = vmatprep.mubr.f32.mxu0 0.0
        %8965 = vmatmul.mubr.f32.gmra.mrb[0].mxu0 %v8685
        %v8966 = vpop.f32.mrb[0].mxu0
        %v8967 = vadd.f32 0.0, %v8966
        %v8968 = vpop.f32.mrb[0].mxu0
        %v8969 = vadd.f32 0.0, %v8968
        %8970 = vdwg.mxu0
        %v8971 = vadd.f32 %v8616, %v8754
        %v8972 = vadd.f32 %v8617, %v8756
        %v8973 = vadd.f32 %v8618, %v8825
        %v8974 = vadd.f32 %v8619, %v8827
        %v8975 = vadd.f32 %v8620, %v8896
        %v8976 = vadd.f32 %v8621, %v8898
        %v8977 = vadd.f32 %v8622, %v8967
        %v8978 = vadd.f32 %v8623, %v8969
        %v8980 = vsel %vm807, %v259, 0
        %8982 = vmatprep.subr.mxu0 %v8626
        %8983 = vmatpush1.msra.mxu0 %v8625
        %8984 = vmatprep.subr.mxu0 0.0
        %8985 = vmatpush1.msra.mxu0 0.0
        %8986 = vmatprep.subr.mxu0 0.0
        %8987 = vmatpush1.msra.mxu0 0.0
        %8988 = vmatprep.subr.mxu0 0.0
        %8989 = vmatpush1.msra.mxu0 0.0
        %8990 = vmatprep.subr.mxu0 0.0
        %8991 = vmatpush1.msra.mxu0 0.0
        %8992 = vmatprep.subr.mxu0 0.0
        %8993 = vmatpush1.msra.mxu0 0.0
        %8994 = vmatprep.subr.mxu0 0.0
        %8995 = vmatpush1.msra.mxu0 0.0
        %8996 = vmatprep.subr.mxu0 0.0
        %8997 = vmatpush1.msra.mxu0 0.0
        %8998 = vmatprep.subr.mxu0 0.0
        %8999 = vmatpush1.msra.mxu0 0.0
        %9000 = vmatprep.subr.mxu0 0.0
        %9001 = vmatpush1.msra.mxu0 0.0
        %9002 = vmatprep.subr.mxu0 0.0
        %9003 = vmatpush1.msra.mxu0 0.0
        %9004 = vmatprep.subr.mxu0 0.0
        %9005 = vmatpush1.msra.mxu0 0.0
        %9006 = vmatprep.subr.mxu0 0.0
        %9007 = vmatpush1.msra.mxu0 0.0
        %9008 = vmatprep.subr.mxu0 0.0
        %9009 = vmatpush1.msra.mxu0 0.0
        %9010 = vmatprep.subr.mxu0 0.0
        %9011 = vmatpush1.msra.mxu0 0.0
        %9012 = vmatprep.subr.mxu0 0.0
        %9013 = vmatpush1.msra.mxu0 0.0
        %9014 = vmatprep.subr.mxu0 0.0
        %9015 = vmatpush1.msra.mxu0 0.0
        %9016 = vmatprep.subr.mxu0 0.0
        %9017 = vmatpush1.msra.mxu0 0.0
        %9018 = vmatprep.subr.mxu0 0.0
        %9019 = vmatpush1.msra.mxu0 0.0
        %9020 = vmatprep.subr.mxu0 0.0
        %9021 = vmatpush1.msra.mxu0 0.0
        %9022 = vmatprep.subr.mxu0 0.0
        %9023 = vmatpush1.msra.mxu0 0.0
        %9024 = vmatprep.subr.mxu0 0.0
        %9025 = vmatpush1.msra.mxu0 0.0
        %9026 = vmatprep.subr.mxu0 0.0
        %9027 = vmatpush1.msra.mxu0 0.0
        %9028 = vmatprep.subr.mxu0 0.0
        %9029 = vmatpush1.msra.mxu0 0.0
        %9030 = vmatprep.subr.mxu0 0.0
        %9031 = vmatpush1.msra.mxu0 0.0
        %9032 = vmatprep.subr.mxu0 0.0
        %9033 = vmatpush1.msra.mxu0 0.0
        %9034 = vmatprep.subr.mxu0 0.0
        %9035 = vmatpush1.msra.mxu0 0.0
        %9036 = vmatprep.subr.mxu0 0.0
        %9037 = vmatpush1.msra.mxu0 0.0
        %9038 = vmatprep.subr.mxu0 0.0
        %9039 = vmatpush1.msra.mxu0 0.0
        %9040 = vmatprep.subr.mxu0 0.0
        %9041 = vmatpush1.msra.mxu0 0.0
        %9042 = vmatprep.subr.mxu0 0.0
        %9043 = vmatpush1.msra.mxu0 0.0
        %9044 = vmatprep.subr.mxu0 0.0
        %9045 = vmatpush1.msra.mxu0 0.0
        %9046 = vmatprep.mubr.f32.mxu0 0.0
        %9047 = vmatmul.mubr.f32.gmra.mrb[0].mxu0 %v8980
        %v9048 = vpop.f32.mrb[0].mxu0
        %v9049 = vadd.f32 0.0, %v9048
        %v9050 = vpop.f32.mrb[0].mxu0
        %v9051 = vadd.f32 0.0, %v9050
        %9052 = vdwg.mxu0
        %9053 = vmatprep.subr.mxu0 %v8628
        %9054 = vmatpush1.msra.mxu0 %v8627
        %9055 = vmatprep.subr.mxu0 0.0
        %9056 = vmatpush1.msra.mxu0 0.0
        %9057 = vmatprep.subr.mxu0 0.0
        %9058 = vmatpush1.msra.mxu0 0.0
        %9059 = vmatprep.subr.mxu0 0.0
        %9060 = vmatpush1.msra.mxu0 0.0
        %9061 = vmatprep.subr.mxu0 0.0
        %9062 = vmatpush1.msra.mxu0 0.0
        %9063 = vmatprep.subr.mxu0 0.0
        %9064 = vmatpush1.msra.mxu0 0.0
        %9065 = vmatprep.subr.mxu0 0.0
        %9066 = vmatpush1.msra.mxu0 0.0
        %9067 = vmatprep.subr.mxu0 0.0
        %9068 = vmatpush1.msra.mxu0 0.0
        %9069 = vmatprep.subr.mxu0 0.0
        %9070 = vmatpush1.msra.mxu0 0.0
        %9071 = vmatprep.subr.mxu0 0.0
        %9072 = vmatpush1.msra.mxu0 0.0
        %9073 = vmatprep.subr.mxu0 0.0
        %9074 = vmatpush1.msra.mxu0 0.0
        %9075 = vmatprep.subr.mxu0 0.0
        %9076 = vmatpush1.msra.mxu0 0.0
        %9077 = vmatprep.subr.mxu0 0.0
        %9078 = vmatpush1.msra.mxu0 0.0
        %9079 = vmatprep.subr.mxu0 0.0
        %9080 = vmatpush1.msra.mxu0 0.0
        %9081 = vmatprep.subr.mxu0 0.0
        %9082 = vmatpush1.msra.mxu0 0.0
        %9083 = vmatprep.subr.mxu0 0.0
        %9084 = vmatpush1.msra.mxu0 0.0
        %9085 = vmatprep.subr.mxu0 0.0
        %9086 = vmatpush1.msra.mxu0 0.0
        %9087 = vmatprep.subr.mxu0 0.0
        %9088 = vmatpush1.msra.mxu0 0.0
        %9089 = vmatprep.subr.mxu0 0.0
        %9090 = vmatpush1.msra.mxu0 0.0
        %9091 = vmatprep.subr.mxu0 0.0
        %9092 = vmatpush1.msra.mxu0 0.0
        %9093 = vmatprep.subr.mxu0 0.0
        %9094 = vmatpush1.msra.mxu0 0.0
        %9095 = vmatprep.subr.mxu0 0.0
        %9096 = vmatpush1.msra.mxu0 0.0
        %9097 = vmatprep.subr.mxu0 0.0
        %9098 = vmatpush1.msra.mxu0 0.0
        %9099 = vmatprep.subr.mxu0 0.0
        %9100 = vmatpush1.msra.mxu0 0.0
        %9101 = vmatprep.subr.mxu0 0.0
        %9102 = vmatpush1.msra.mxu0 0.0
        %9103 = vmatprep.subr.mxu0 0.0
        %9104 = vmatpush1.msra.mxu0 0.0
        %9105 = vmatprep.subr.mxu0 0.0
        %9106 = vmatpush1.msra.mxu0 0.0
        %9107 = vmatprep.subr.mxu0 0.0
        %9108 = vmatpush1.msra.mxu0 0.0
        %9109 = vmatprep.subr.mxu0 0.0
        %9110 = vmatpush1.msra.mxu0 0.0
        %9111 = vmatprep.subr.mxu0 0.0
        %9112 = vmatpush1.msra.mxu0 0.0
        %9113 = vmatprep.subr.mxu0 0.0
        %9114 = vmatpush1.msra.mxu0 0.0
        %9115 = vmatprep.subr.mxu0 0.0
        %9116 = vmatpush1.msra.mxu0 0.0
        %9117 = vmatprep.mubr.f32.mxu0 0.0
        %9118 = vmatmul.mubr.f32.gmra.mrb[0].mxu0 %v8980
        %v9119 = vpop.f32.mrb[0].mxu0
        %v9120 = vadd.f32 0.0, %v9119
        %v9121 = vpop.f32.mrb[0].mxu0
        %v9122 = vadd.f32 0.0, %v9121
        %9123 = vdwg.mxu0
        %9124 = vmatprep.subr.mxu0 %v8630
        %9125 = vmatpush1.msra.mxu0 %v8629
        %9126 = vmatprep.subr.mxu0 0.0
        %9127 = vmatpush1.msra.mxu0 0.0
        %9128 = vmatprep.subr.mxu0 0.0
        %9129 = vmatpush1.msra.mxu0 0.0
        %9130 = vmatprep.subr.mxu0 0.0
        %9131 = vmatpush1.msra.mxu0 0.0
        %9132 = vmatprep.subr.mxu0 0.0
        %9133 = vmatpush1.msra.mxu0 0.0
        %9134 = vmatprep.subr.mxu0 0.0
        %9135 = vmatpush1.msra.mxu0 0.0
        %9136 = vmatprep.subr.mxu0 0.0
        %9137 = vmatpush1.msra.mxu0 0.0
        %9138 = vmatprep.subr.mxu0 0.0
        %9139 = vmatpush1.msra.mxu0 0.0
        %9140 = vmatprep.subr.mxu0 0.0
        %9141 = vmatpush1.msra.mxu0 0.0
        %9142 = vmatprep.subr.mxu0 0.0
        %9143 = vmatpush1.msra.mxu0 0.0
        %9144 = vmatprep.subr.mxu0 0.0
        %9145 = vmatpush1.msra.mxu0 0.0
        %9146 = vmatprep.subr.mxu0 0.0
        %9147 = vmatpush1.msra.mxu0 0.0
        %9148 = vmatprep.subr.mxu0 0.0
        %9149 = vmatpush1.msra.mxu0 0.0
        %9150 = vmatprep.subr.mxu0 0.0
        %9151 = vmatpush1.msra.mxu0 0.0
        %9152 = vmatprep.subr.mxu0 0.0
        %9153 = vmatpush1.msra.mxu0 0.0
        %9154 = vmatprep.subr.mxu0 0.0
        %9155 = vmatpush1.msra.mxu0 0.0
        %9156 = vmatprep.subr.mxu0 0.0
        %9157 = vmatpush1.msra.mxu0 0.0
        %9158 = vmatprep.subr.mxu0 0.0
        %9159 = vmatpush1.msra.mxu0 0.0
        %9160 = vmatprep.subr.mxu0 0.0
        %9161 = vmatpush1.msra.mxu0 0.0
        %9162 = vmatprep.subr.mxu0 0.0
        %9163 = vmatpush1.msra.mxu0 0.0
        %9164 = vmatprep.subr.mxu0 0.0
        %9165 = vmatpush1.msra.mxu0 0.0
        %9166 = vmatprep.subr.mxu0 0.0
        %9167 = vmatpush1.msra.mxu0 0.0
        %9168 = vmatprep.subr.mxu0 0.0
        %9169 = vmatpush1.msra.mxu0 0.0
        %9170 = vmatprep.subr.mxu0 0.0
        %9171 = vmatpush1.msra.mxu0 0.0
        %9172 = vmatprep.subr.mxu0 0.0
        %9173 = vmatpush1.msra.mxu0 0.0
        %9174 = vmatprep.subr.mxu0 0.0
        %9175 = vmatpush1.msra.mxu0 0.0
        %9176 = vmatprep.subr.mxu0 0.0
        %9177 = vmatpush1.msra.mxu0 0.0
        %9178 = vmatprep.subr.mxu0 0.0
        %9179 = vmatpush1.msra.mxu0 0.0
        %9180 = vmatprep.subr.mxu0 0.0
        %9181 = vmatpush1.msra.mxu0 0.0
        %9182 = vmatprep.subr.mxu0 0.0
        %9183 = vmatpush1.msra.mxu0 0.0
        %9184 = vmatprep.subr.mxu0 0.0
        %9185 = vmatpush1.msra.mxu0 0.0
        %9186 = vmatprep.subr.mxu0 0.0
        %9187 = vmatpush1.msra.mxu0 0.0
        %9188 = vmatprep.mubr.f32.mxu0 0.0
        %9189 = vmatmul.mubr.f32.gmra.mrb[0].mxu0 %v8980
        %v9190 = vpop.f32.mrb[0].mxu0
        %v9191 = vadd.f32 0.0, %v9190
        %v9192 = vpop.f32.mrb[0].mxu0
        %v9193 = vadd.f32 0.0, %v9192
        %9194 = vdwg.mxu0
        %9195 = vmatprep.subr.mxu0 %v8632
        %9196 = vmatpush1.msra.mxu0 %v8631
        %9197 = vmatprep.subr.mxu0 0.0
        %9198 = vmatpush1.msra.mxu0 0.0
        %9199 = vmatprep.subr.mxu0 0.0
        %9200 = vmatpush1.msra.mxu0 0.0
        %9201 = vmatprep.subr.mxu0 0.0
        %9202 = vmatpush1.msra.mxu0 0.0
        %9203 = vmatprep.subr.mxu0 0.0
        %9204 = vmatpush1.msra.mxu0 0.0
        %9205 = vmatprep.subr.mxu0 0.0
        %9206 = vmatpush1.msra.mxu0 0.0
        %9207 = vmatprep.subr.mxu0 0.0
        %9208 = vmatpush1.msra.mxu0 0.0
        %9209 = vmatprep.subr.mxu0 0.0
        %9210 = vmatpush1.msra.mxu0 0.0
        %9211 = vmatprep.subr.mxu0 0.0
        %9212 = vmatpush1.msra.mxu0 0.0
        %9213 = vmatprep.subr.mxu0 0.0
        %9214 = vmatpush1.msra.mxu0 0.0
        %9215 = vmatprep.subr.mxu0 0.0
        %9216 = vmatpush1.msra.mxu0 0.0
        %9217 = vmatprep.subr.mxu0 0.0
        %9218 = vmatpush1.msra.mxu0 0.0
        %9219 = vmatprep.subr.mxu0 0.0
        %9220 = vmatpush1.msra.mxu0 0.0
        %9221 = vmatprep.subr.mxu0 0.0
        %9222 = vmatpush1.msra.mxu0 0.0
        %9223 = vmatprep.subr.mxu0 0.0
        %9224 = vmatpush1.msra.mxu0 0.0
        %9225 = vmatprep.subr.mxu0 0.0
        %9226 = vmatpush1.msra.mxu0 0.0
        %9227 = vmatprep.subr.mxu0 0.0
        %9228 = vmatpush1.msra.mxu0 0.0
        %9229 = vmatprep.subr.mxu0 0.0
        %9230 = vmatpush1.msra.mxu0 0.0
        %9231 = vmatprep.subr.mxu0 0.0
        %9232 = vmatpush1.msra.mxu0 0.0
        %9233 = vmatprep.subr.mxu0 0.0
        %9234 = vmatpush1.msra.mxu0 0.0
        %9235 = vmatprep.subr.mxu0 0.0
        %9236 = vmatpush1.msra.mxu0 0.0
        %9237 = vmatprep.subr.mxu0 0.0
        %9238 = vmatpush1.msra.mxu0 0.0
        %9239 = vmatprep.subr.mxu0 0.0
        %9240 = vmatpush1.msra.mxu0 0.0
        %9241 = vmatprep.subr.mxu0 0.0
        %9242 = vmatpush1.msra.mxu0 0.0
        %9243 = vmatprep.subr.mxu0 0.0
        %9244 = vmatpush1.msra.mxu0 0.0
        %9245 = vmatprep.subr.mxu0 0.0
        %9246 = vmatpush1.msra.mxu0 0.0
        %9247 = vmatprep.subr.mxu0 0.0
        %9248 = vmatpush1.msra.mxu0 0.0
        %9249 = vmatprep.subr.mxu0 0.0
        %9250 = vmatpush1.msra.mxu0 0.0
        %9251 = vmatprep.subr.mxu0 0.0
        %9252 = vmatpush1.msra.mxu0 0.0
        %9253 = vmatprep.subr.mxu0 0.0
        %9254 = vmatpush1.msra.mxu0 0.0
        %9255 = vmatprep.subr.mxu0 0.0
        %9256 = vmatpush1.msra.mxu0 0.0
        %9257 = vmatprep.subr.mxu0 0.0
        %9258 = vmatpush1.msra.mxu0 0.0
        %9259 = vmatprep.mubr.f32.mxu0 0.0
        %9260 = vmatmul.mubr.f32.gmra.mrb[0].mxu0 %v8980
        %v9261 = vpop.f32.mrb[0].mxu0
        %v9262 = vadd.f32 0.0, %v9261
        %v9263 = vpop.f32.mrb[0].mxu0
        %v9264 = vadd.f32 0.0, %v9263
        %9265 = vdwg.mxu0
        %v9266 = vadd.f32 %v8971, %v9049
        %v9267 = vadd.f32 %v8972, %v9051
        %v9268 = vadd.f32 %v8973, %v9120
        %v9269 = vadd.f32 %v8974, %v9122
        %v9270 = vadd.f32 %v8975, %v9191
        %v9271 = vadd.f32 %v8976, %v9193
        %v9272 = vadd.f32 %v8977, %v9262
        %v9273 = vadd.f32 %v8978, %v9264
        %v9274 = vld [vmem:[#allocation2 + $0x48] sm:$0xff]
        %v9275 = vld [vmem:[#allocation2 + $0x50] sm:$0xff]
        %v9276 = vld [vmem:[#allocation2 + $0x58] sm:$0xff]
        %v9277 = vld [vmem:[#allocation2 + $0x60] sm:$0xff]
        %v9278 = vld [vmem:[#allocation2 + $0x68] sm:$0xff]
        %v9279 = vld [vmem:[#allocation2 + $0x70] sm:$0xff]
        %v9280 = vld [vmem:[#allocation2 + $0x78] sm:$0xff]
        %v9281 = vld [vmem:[#allocation2 + $0x80] sm:$0xff]
        %v9282 = vld [vmem:[#allocation2 + $0x88] sm:$0xff]
        %9292 = vrot.lane.b32.xlu0 %v9274, 112
        %v9293 = vpop.permute.xlu0 %9292
        %9294 = vrot.lane.b32.xlu0 %v9275, 112
        %v9295 = vpop.permute.xlu0 %9294
        %9296 = vrot.lane.b32.xlu0 %v9276, 112
        %v9297 = vpop.permute.xlu0 %9296
        %9298 = vrot.lane.b32.xlu0 %v9277, 112
        %v9299 = vpop.permute.xlu0 %9298
        %9300 = vrot.lane.b32.xlu0 %v9278, 112
        %v9301 = vpop.permute.xlu0 %9300
        %9302 = vrot.lane.b32.xlu0 %v9279, 112
        %v9303 = vpop.permute.xlu0 %9302
        %9304 = vrot.lane.b32.xlu0 %v9280, 112
        %v9305 = vpop.permute.xlu0 %9304
        %9306 = vrot.lane.b32.xlu0 %v9281, 112
        %v9307 = vpop.permute.xlu0 %9306
        %9308 = vrot.lane.b32.xlu0 %v9282, 112
        %v9309 = vpop.permute.xlu0 %9308
        %v9310 = vsel %vm7335, %v9293, %v9295
        %v9311 = vsel %vm7335, %v9295, %v9297
        %v9312 = vsel %vm7335, %v9297, %v9299
        %v9313 = vsel %vm7335, %v9299, %v9301
        %v9314 = vsel %vm7335, %v9301, %v9303
        %v9315 = vsel %vm7335, %v9303, %v9305
        %v9316 = vsel %vm7335, %v9305, %v9307
        %v9317 = vsel %vm7335, %v9307, %v9309
        %v9326 = vsel %vm406, %v9310, 0.0
        %v9327 = vsel %vm407, %v9311, 0.0
        %v9328 = vsel %vm408, %v9312, 0.0
        %v9329 = vsel %vm409, %v9313, 0.0
        %v9330 = vsel %vm410, %v9314, 0.0
        %v9331 = vsel %vm411, %v9315, 0.0
        %v9332 = vsel %vm412, %v9316, 0.0
        %v9333 = vsel %vm413, %v9317, 0.0
        %v9335 = vsel %vm807, %v260, 0
        %9337 = vmatprep.subr.mxu0 %v9327
        %9338 = vmatpush1.msra.mxu0 %v9326
        %9339 = vmatprep.subr.mxu0 0.0
        %9340 = vmatpush1.msra.mxu0 0.0
        %9341 = vmatprep.subr.mxu0 0.0
        %9342 = vmatpush1.msra.mxu0 0.0
        %9343 = vmatprep.subr.mxu0 0.0
        %9344 = vmatpush1.msra.mxu0 0.0
        %9345 = vmatprep.subr.mxu0 0.0
        %9346 = vmatpush1.msra.mxu0 0.0
        %9347 = vmatprep.subr.mxu0 0.0
        %9348 = vmatpush1.msra.mxu0 0.0
        %9349 = vmatprep.subr.mxu0 0.0
        %9350 = vmatpush1.msra.mxu0 0.0
        %9351 = vmatprep.subr.mxu0 0.0
        %9352 = vmatpush1.msra.mxu0 0.0
        %9353 = vmatprep.subr.mxu0 0.0
        %9354 = vmatpush1.msra.mxu0 0.0
        %9355 = vmatprep.subr.mxu0 0.0
        %9356 = vmatpush1.msra.mxu0 0.0
        %9357 = vmatprep.subr.mxu0 0.0
        %9358 = vmatpush1.msra.mxu0 0.0
        %9359 = vmatprep.subr.mxu0 0.0
        %9360 = vmatpush1.msra.mxu0 0.0
        %9361 = vmatprep.subr.mxu0 0.0
        %9362 = vmatpush1.msra.mxu0 0.0
        %9363 = vmatprep.subr.mxu0 0.0
        %9364 = vmatpush1.msra.mxu0 0.0
        %9365 = vmatprep.subr.mxu0 0.0
        %9366 = vmatpush1.msra.mxu0 0.0
        %9367 = vmatprep.subr.mxu0 0.0
        %9368 = vmatpush1.msra.mxu0 0.0
        %9369 = vmatprep.subr.mxu0 0.0
        %9370 = vmatpush1.msra.mxu0 0.0
        %9371 = vmatprep.subr.mxu0 0.0
        %9372 = vmatpush1.msra.mxu0 0.0
        %9373 = vmatprep.subr.mxu0 0.0
        %9374 = vmatpush1.msra.mxu0 0.0
        %9375 = vmatprep.subr.mxu0 0.0
        %9376 = vmatpush1.msra.mxu0 0.0
        %9377 = vmatprep.subr.mxu0 0.0
        %9378 = vmatpush1.msra.mxu0 0.0
        %9379 = vmatprep.subr.mxu0 0.0
        %9380 = vmatpush1.msra.mxu0 0.0
        %9381 = vmatprep.subr.mxu0 0.0
        %9382 = vmatpush1.msra.mxu0 0.0
        %9383 = vmatprep.subr.mxu0 0.0
        %9384 = vmatpush1.msra.mxu0 0.0
        %9385 = vmatprep.subr.mxu0 0.0
        %9386 = vmatpush1.msra.mxu0 0.0
        %9387 = vmatprep.subr.mxu0 0.0
        %9388 = vmatpush1.msra.mxu0 0.0
        %9389 = vmatprep.subr.mxu0 0.0
        %9390 = vmatpush1.msra.mxu0 0.0
        %9391 = vmatprep.subr.mxu0 0.0
        %9392 = vmatpush1.msra.mxu0 0.0
        %9393 = vmatprep.subr.mxu0 0.0
        %9394 = vmatpush1.msra.mxu0 0.0
        %9395 = vmatprep.subr.mxu0 0.0
        %9396 = vmatpush1.msra.mxu0 0.0
        %9397 = vmatprep.subr.mxu0 0.0
        %9398 = vmatpush1.msra.mxu0 0.0
        %9399 = vmatprep.subr.mxu0 0.0
        %9400 = vmatpush1.msra.mxu0 0.0
        %9401 = vmatprep.mubr.f32.mxu0 0.0
        %9402 = vmatmul.mubr.f32.gmra.mrb[0].mxu0 %v9335
        %v9403 = vpop.f32.mrb[0].mxu0
        %v9404 = vadd.f32 0.0, %v9403
        %v9405 = vpop.f32.mrb[0].mxu0
        %v9406 = vadd.f32 0.0, %v9405
        %9407 = vdwg.mxu0
        %9408 = vmatprep.subr.mxu0 %v9329
        %9409 = vmatpush1.msra.mxu0 %v9328
        %9410 = vmatprep.subr.mxu0 0.0
        %9411 = vmatpush1.msra.mxu0 0.0
        %9412 = vmatprep.subr.mxu0 0.0
        %9413 = vmatpush1.msra.mxu0 0.0
        %9414 = vmatprep.subr.mxu0 0.0
        %9415 = vmatpush1.msra.mxu0 0.0
        %9416 = vmatprep.subr.mxu0 0.0
        %9417 = vmatpush1.msra.mxu0 0.0
        %9418 = vmatprep.subr.mxu0 0.0
        %9419 = vmatpush1.msra.mxu0 0.0
        %9420 = vmatprep.subr.mxu0 0.0
        %9421 = vmatpush1.msra.mxu0 0.0
        %9422 = vmatprep.subr.mxu0 0.0
        %9423 = vmatpush1.msra.mxu0 0.0
        %9424 = vmatprep.subr.mxu0 0.0
        %9425 = vmatpush1.msra.mxu0 0.0
        %9426 = vmatprep.subr.mxu0 0.0
        %9427 = vmatpush1.msra.mxu0 0.0
        %9428 = vmatprep.subr.mxu0 0.0
        %9429 = vmatpush1.msra.mxu0 0.0
        %9430 = vmatprep.subr.mxu0 0.0
        %9431 = vmatpush1.msra.mxu0 0.0
        %9432 = vmatprep.subr.mxu0 0.0
        %9433 = vmatpush1.msra.mxu0 0.0
        %9434 = vmatprep.subr.mxu0 0.0
        %9435 = vmatpush1.msra.mxu0 0.0
        %9436 = vmatprep.subr.mxu0 0.0
        %9437 = vmatpush1.msra.mxu0 0.0
        %9438 = vmatprep.subr.mxu0 0.0
        %9439 = vmatpush1.msra.mxu0 0.0
        %9440 = vmatprep.subr.mxu0 0.0
        %9441 = vmatpush1.msra.mxu0 0.0
        %9442 = vmatprep.subr.mxu0 0.0
        %9443 = vmatpush1.msra.mxu0 0.0
        %9444 = vmatprep.subr.mxu0 0.0
        %9445 = vmatpush1.msra.mxu0 0.0
        %9446 = vmatprep.subr.mxu0 0.0
        %9447 = vmatpush1.msra.mxu0 0.0
        %9448 = vmatprep.subr.mxu0 0.0
        %9449 = vmatpush1.msra.mxu0 0.0
        %9450 = vmatprep.subr.mxu0 0.0
        %9451 = vmatpush1.msra.mxu0 0.0
        %9452 = vmatprep.subr.mxu0 0.0
        %9453 = vmatpush1.msra.mxu0 0.0
        %9454 = vmatprep.subr.mxu0 0.0
        %9455 = vmatpush1.msra.mxu0 0.0
        %9456 = vmatprep.subr.mxu0 0.0
        %9457 = vmatpush1.msra.mxu0 0.0
        %9458 = vmatprep.subr.mxu0 0.0
        %9459 = vmatpush1.msra.mxu0 0.0
        %9460 = vmatprep.subr.mxu0 0.0
        %9461 = vmatpush1.msra.mxu0 0.0
        %9462 = vmatprep.subr.mxu0 0.0
        %9463 = vmatpush1.msra.mxu0 0.0
        %9464 = vmatprep.subr.mxu0 0.0
        %9465 = vmatpush1.msra.mxu0 0.0
        %9466 = vmatprep.subr.mxu0 0.0
        %9467 = vmatpush1.msra.mxu0 0.0
        %9468 = vmatprep.subr.mxu0 0.0
        %9469 = vmatpush1.msra.mxu0 0.0
        %9470 = vmatprep.subr.mxu0 0.0
        %9471 = vmatpush1.msra.mxu0 0.0
        %9472 = vmatprep.mubr.f32.mxu0 0.0
        %9473 = vmatmul.mubr.f32.gmra.mrb[0].mxu0 %v9335
        %v9474 = vpop.f32.mrb[0].mxu0
        %v9475 = vadd.f32 0.0, %v9474
        %v9476 = vpop.f32.mrb[0].mxu0
        %v9477 = vadd.f32 0.0, %v9476
        %9478 = vdwg.mxu0
        %9479 = vmatprep.subr.mxu0 %v9331
        %9480 = vmatpush1.msra.mxu0 %v9330
        %9481 = vmatprep.subr.mxu0 0.0
        %9482 = vmatpush1.msra.mxu0 0.0
        %9483 = vmatprep.subr.mxu0 0.0
        %9484 = vmatpush1.msra.mxu0 0.0
        %9485 = vmatprep.subr.mxu0 0.0
        %9486 = vmatpush1.msra.mxu0 0.0
        %9487 = vmatprep.subr.mxu0 0.0
        %9488 = vmatpush1.msra.mxu0 0.0
        %9489 = vmatprep.subr.mxu0 0.0
        %9490 = vmatpush1.msra.mxu0 0.0
        %9491 = vmatprep.subr.mxu0 0.0
        %9492 = vmatpush1.msra.mxu0 0.0
        %9493 = vmatprep.subr.mxu0 0.0
        %9494 = vmatpush1.msra.mxu0 0.0
        %9495 = vmatprep.subr.mxu0 0.0
        %9496 = vmatpush1.msra.mxu0 0.0
        %9497 = vmatprep.subr.mxu0 0.0
        %9498 = vmatpush1.msra.mxu0 0.0
        %9499 = vmatprep.subr.mxu0 0.0
        %9500 = vmatpush1.msra.mxu0 0.0
        %9501 = vmatprep.subr.mxu0 0.0
        %9502 = vmatpush1.msra.mxu0 0.0
        %9503 = vmatprep.subr.mxu0 0.0
        %9504 = vmatpush1.msra.mxu0 0.0
        %9505 = vmatprep.subr.mxu0 0.0
        %9506 = vmatpush1.msra.mxu0 0.0
        %9507 = vmatprep.subr.mxu0 0.0
        %9508 = vmatpush1.msra.mxu0 0.0
        %9509 = vmatprep.subr.mxu0 0.0
        %9510 = vmatpush1.msra.mxu0 0.0
        %9511 = vmatprep.subr.mxu0 0.0
        %9512 = vmatpush1.msra.mxu0 0.0
        %9513 = vmatprep.subr.mxu0 0.0
        %9514 = vmatpush1.msra.mxu0 0.0
        %9515 = vmatprep.subr.mxu0 0.0
        %9516 = vmatpush1.msra.mxu0 0.0
        %9517 = vmatprep.subr.mxu0 0.0
        %9518 = vmatpush1.msra.mxu0 0.0
        %9519 = vmatprep.subr.mxu0 0.0
        %9520 = vmatpush1.msra.mxu0 0.0
        %9521 = vmatprep.subr.mxu0 0.0
        %9522 = vmatpush1.msra.mxu0 0.0
        %9523 = vmatprep.subr.mxu0 0.0
        %9524 = vmatpush1.msra.mxu0 0.0
        %9525 = vmatprep.subr.mxu0 0.0
        %9526 = vmatpush1.msra.mxu0 0.0
        %9527 = vmatprep.subr.mxu0 0.0
        %9528 = vmatpush1.msra.mxu0 0.0
        %9529 = vmatprep.subr.mxu0 0.0
        %9530 = vmatpush1.msra.mxu0 0.0
        %9531 = vmatprep.subr.mxu0 0.0
        %9532 = vmatpush1.msra.mxu0 0.0
        %9533 = vmatprep.subr.mxu0 0.0
        %9534 = vmatpush1.msra.mxu0 0.0
        %9535 = vmatprep.subr.mxu0 0.0
        %9536 = vmatpush1.msra.mxu0 0.0
        %9537 = vmatprep.subr.mxu0 0.0
        %9538 = vmatpush1.msra.mxu0 0.0
        %9539 = vmatprep.subr.mxu0 0.0
        %9540 = vmatpush1.msra.mxu0 0.0
        %9541 = vmatprep.subr.mxu0 0.0
        %9542 = vmatpush1.msra.mxu0 0.0
        %9543 = vmatprep.mubr.f32.mxu0 0.0
        %9544 = vmatmul.mubr.f32.gmra.mrb[0].mxu0 %v9335
        %v9545 = vpop.f32.mrb[0].mxu0
        %v9546 = vadd.f32 0.0, %v9545
        %v9547 = vpop.f32.mrb[0].mxu0
        %v9548 = vadd.f32 0.0, %v9547
        %9549 = vdwg.mxu0
        %9550 = vmatprep.subr.mxu0 %v9333
        %9551 = vmatpush1.msra.mxu0 %v9332
        %9552 = vmatprep.subr.mxu0 0.0
        %9553 = vmatpush1.msra.mxu0 0.0
        %9554 = vmatprep.subr.mxu0 0.0
        %9555 = vmatpush1.msra.mxu0 0.0
        %9556 = vmatprep.subr.mxu0 0.0
        %9557 = vmatpush1.msra.mxu0 0.0
        %9558 = vmatprep.subr.mxu0 0.0
        %9559 = vmatpush1.msra.mxu0 0.0
        %9560 = vmatprep.subr.mxu0 0.0
        %9561 = vmatpush1.msra.mxu0 0.0
        %9562 = vmatprep.subr.mxu0 0.0
        %9563 = vmatpush1.msra.mxu0 0.0
        %9564 = vmatprep.subr.mxu0 0.0
        %9565 = vmatpush1.msra.mxu0 0.0
        %9566 = vmatprep.subr.mxu0 0.0
        %9567 = vmatpush1.msra.mxu0 0.0
        %9568 = vmatprep.subr.mxu0 0.0
        %9569 = vmatpush1.msra.mxu0 0.0
        %9570 = vmatprep.subr.mxu0 0.0
        %9571 = vmatpush1.msra.mxu0 0.0
        %9572 = vmatprep.subr.mxu0 0.0
        %9573 = vmatpush1.msra.mxu0 0.0
        %9574 = vmatprep.subr.mxu0 0.0
        %9575 = vmatpush1.msra.mxu0 0.0
        %9576 = vmatprep.subr.mxu0 0.0
        %9577 = vmatpush1.msra.mxu0 0.0
        %9578 = vmatprep.subr.mxu0 0.0
        %9579 = vmatpush1.msra.mxu0 0.0
        %9580 = vmatprep.subr.mxu0 0.0
        %9581 = vmatpush1.msra.mxu0 0.0
        %9582 = vmatprep.subr.mxu0 0.0
        %9583 = vmatpush1.msra.mxu0 0.0
        %9584 = vmatprep.subr.mxu0 0.0
        %9585 = vmatpush1.msra.mxu0 0.0
        %9586 = vmatprep.subr.mxu0 0.0
        %9587 = vmatpush1.msra.mxu0 0.0
        %9588 = vmatprep.subr.mxu0 0.0
        %9589 = vmatpush1.msra.mxu0 0.0
        %9590 = vmatprep.subr.mxu0 0.0
        %9591 = vmatpush1.msra.mxu0 0.0
        %9592 = vmatprep.subr.mxu0 0.0
        %9593 = vmatpush1.msra.mxu0 0.0
        %9594 = vmatprep.subr.mxu0 0.0
        %9595 = vmatpush1.msra.mxu0 0.0
        %9596 = vmatprep.subr.mxu0 0.0
        %9597 = vmatpush1.msra.mxu0 0.0
        %9598 = vmatprep.subr.mxu0 0.0
        %9599 = vmatpush1.msra.mxu0 0.0
        %9600 = vmatprep.subr.mxu0 0.0
        %9601 = vmatpush1.msra.mxu0 0.0
        %9602 = vmatprep.subr.mxu0 0.0
        %9603 = vmatpush1.msra.mxu0 0.0
        %9604 = vmatprep.subr.mxu0 0.0
        %9605 = vmatpush1.msra.mxu0 0.0
        %9606 = vmatprep.subr.mxu0 0.0
        %9607 = vmatpush1.msra.mxu0 0.0
        %9608 = vmatprep.subr.mxu0 0.0
        %9609 = vmatpush1.msra.mxu0 0.0
        %9610 = vmatprep.subr.mxu0 0.0
        %9611 = vmatpush1.msra.mxu0 0.0
        %9612 = vmatprep.subr.mxu0 0.0
        %9613 = vmatpush1.msra.mxu0 0.0
        %9614 = vmatprep.mubr.f32.mxu0 0.0
        %9615 = vmatmul.mubr.f32.gmra.mrb[0].mxu0 %v9335
        %v9616 = vpop.f32.mrb[0].mxu0
        %v9617 = vadd.f32 0.0, %v9616
        %v9618 = vpop.f32.mrb[0].mxu0
        %v9619 = vadd.f32 0.0, %v9618
        %9620 = vdwg.mxu0
        %v9621 = vadd.f32 %v9266, %v9404
        %v9622 = vadd.f32 %v9267, %v9406
        %v9623 = vadd.f32 %v9268, %v9475
        %v9624 = vadd.f32 %v9269, %v9477
        %v9625 = vadd.f32 %v9270, %v9546
        %v9626 = vadd.f32 %v9271, %v9548
        %v9627 = vadd.f32 %v9272, %v9617
        %v9628 = vadd.f32 %v9273, %v9619
        %v9629 = vmax.f32 %v9621, 0.0
        %v9630 = vmax.f32 %v9622, 0.0
        %v9631 = vmax.f32 %v9623, 0.0
        %v9632 = vmax.f32 %v9624, 0.0
        %v9633 = vmax.f32 %v9625, 0.0
        %v9634 = vmax.f32 %v9626, 0.0
        %v9635 = vmax.f32 %v9627, 0.0
        %v9636 = vmax.f32 %v9628, 0.0
        %v9637 = vadd.f32 %v6656, %v9629
        %v9638 = vadd.f32 %v6657, %v9630
        %v9639 = vadd.f32 %v6658, %v9631
        %v9640 = vadd.f32 %v6659, %v9632
        %v9641 = vadd.f32 %v6660, %v9633
        %v9642 = vadd.f32 %v6661, %v9634
        %v9643 = vadd.f32 %v6662, %v9635
        %v9644 = vadd.f32 %v6663, %v9636
        %9645 = vst [vmem:[%s217] sm:$0xff] %v9637
        %9646 = vst [vmem:[%s217 + $0x8] sm:$0xff] %v9638
        %9647 = vst [vmem:[%s217 + $0x10] sm:$0xff] %v9639
        %9648 = vst [vmem:[%s217 + $0x18] sm:$0xff] %v9640
        %9649 = vst [vmem:[%s217 + $0x20] sm:$0xff] %v9641
        %9650 = vst [vmem:[%s217 + $0x28] sm:$0xff] %v9642
        %9651 = vst [vmem:[%s217 + $0x30] sm:$0xff] %v9643
        %9652 = vst [vmem:[%s217 + $0x38] sm:$0xff] %v9644
        %s9653 = sand.u32 %s137, 1
        %s9654 = scalar_lea.sflag [#allocation4], %s9653
        %s9655 = sand.u32 %s137, 1
        %s9656 = smul.addr %s9655, 64
        %s9657 = scalar_lea.vmem [#allocation3], %s9656
        // Predicated region
        $region41: #{tpu_custom_call.1} parent=39 // pred_check
          %p9658 = pneg %p147
        $region42: #{tpu_custom_call.1} parent=39 // pred_check_branch
          %9660 = sbr.rel (%p9658) target = $region44
        $region43: #{tpu_custom_call.1} parent=39 // pred_region
          %s9662 = ssub.s32 1024, 1024
          %9663 = vsyncadd %s9654, %s9662
          %s9664 = smul.addr %s19, 8
          %s9665 = smul.addr %s9664, 128
          %s9666 = scalar_lea.hbm %s5, %s9665
          %s9668 = sshll.u32 %s9657, 4
          %s9669 = int_to_ptr.vmem [resolvable:$true] %s9668
          %9671 = dma.vmem_to_hbm [thread:$0]  %s9669, 1024, %s9666, %s9654
        $region44: #{tpu_custom_call.1} parent=39 // pred_fallthru
          _
      $region40: #{tpu_custom_call.1} parent=5 // pred_fallthru
        _
      %p9672 = scmp.le.s32.totalorder 2, %s14
      // Predicated region
      $region45: #{tpu_custom_call.1} parent=5 // pred_check
        %p9673 = pneg %p9672
      $region46: #{tpu_custom_call.1} parent=5 // pred_check_branch
        %9675 = sbr.rel (%p9673) target = $region48
      $region47: #{tpu_custom_call.1} parent=5 // pred_region
        %s9676 = ssub.s32 %s14, 2
        // Predicated region
        $region49: #{tpu_custom_call.1} parent=47 // pred_check
          %p9677 = pneg %p153
        $region50: #{tpu_custom_call.1} parent=47 // pred_check_branch
          %9679 = sbr.rel (%p9677) target = $region52
        $region51: #{tpu_custom_call.1} parent=47 // pred_region
          %s9680 = sand.u32 %s138, 1
          %s9681 = scalar_lea.sflag [#allocation4], %s9680
          %s9682 = sand.u32 %s138, 1
          %s9683 = smul.addr %s9682, 64
          %s9684 = scalar_lea.vmem [#allocation3], %s9683
          %9685 = dma.done %s9681, 1024
        $region52: #{tpu_custom_call.1} parent=47 // pred_fallthru
          _
      $region48: #{tpu_custom_call.1} parent=5 // pred_fallthru
        _
    $region6: #{tpu_custom_call.1} parent=1 // loop_footer
      %s18 = sadd.s32 1, %s14
    $region7: #{tpu_custom_call.1} parent=1 // loop_footer_branch
      %13 = sbr.rel target = $region3
    $region8: #{tpu_custom_call.1} parent=1 // loop_exit
      _
    %9686 = vsyncpa [#allocation4], 1
    %s9687 = scalar_lea.sflag [#allocation4], 1
    %9688 = vsyncpa %s9687, 1

</llo_original>
